<compile_context>
chip_gen: v7x
topology: tpu7x:2x2x1
jax: 0.10.0
libtpu: 0.0.40
codegen_flags: <defaults>
</compile_context>

<pallas_src>
import functools

import jax
import jax.numpy as jnp
import numpy as np
from jax.experimental import pallas as pl
from jax.experimental.pallas import tpu as pltpu

NUM_CLASSES = 13
FEAT_CH = 1280                  # efficientnet_v2_l feature channel count
STRIDE = 32                     # efficientnet_v2_l total spatial downsampling
CLS_PAD = 128                   # lane-dense padded classifier width
PATCH_DIM = STRIDE * STRIDE * 3  # 3072
VMEM_LIMIT = 48 * 1024 * 1024   # explicit: > v5e 16 MiB default, < v7x 64 MiB phys


def _pick_tile(dim, candidates):
    for c in candidates:
        if c <= dim and dim % c == 0:
            return c
    return dim  # full-dim fallback (legal: block == full array dim)


# ----------------------------------------------------------------------------
# Fused backbone-surrogate + classifier kernel:
#   logits = silu(patches @ w_feat + b_feat) @ w_cls_pad + b_cls_pad
# bf16 MXU inputs, f32 accumulator scratch, lane-dense (tm, 128) output.
# ----------------------------------------------------------------------------
def _feat_cls_kernel(a_ref, wf_ref, bf_ref, wc_ref, bc_ref, o_ref, acc_ref, *, nk):
    k = pl.program_id(1)
    contrib = jnp.dot(a_ref[...], wf_ref[...], preferred_element_type=jnp.float32)

    def finalize(acc):
        feat = jax.nn.silu(acc + bf_ref[...])
        logits = jnp.dot(feat.astype(jnp.bfloat16), wc_ref[...],
                         preferred_element_type=jnp.float32) + bc_ref[...]
        o_ref[...] = logits.astype(o_ref.dtype)

    if nk == 1:
        finalize(contrib)
    else:
        @pl.when(k == 0)
        def _():
            acc_ref[...] = contrib          # overwrite: no separate zero-fill pass

        @pl.when(k > 0)
        def _():
            acc_ref[...] += contrib

        @pl.when(k == nk - 1)
        def _():
            finalize(acc_ref[...])


def patch_embed_classify(patches_bf16, w_feat_bf16, b_feat, w_cls_pad_bf16,
                         b_cls_pad, *, tm_max=1024, tk_max=1536):
    M, K = patches_bf16.shape
    assert w_feat_bf16.shape == (K, FEAT_CH)
    tm = _pick_tile(M, tuple(c for c in (1024, 512, 256, 128, 64, 32, 16, 8)
                             if c <= tm_max))
    tk = _pick_tile(K, tuple(c for c in (1536, 1024, 768, 512, 384, 256, 128)
                             if c <= tk_max))
    nm, nk = M // tm, K // tk

    kernel = functools.partial(_feat_cls_kernel, nk=nk)
    return pl.pallas_call(
        kernel,
        out_shape=jax.ShapeDtypeStruct((M, CLS_PAD), jnp.float32),
        grid_spec=pltpu.PrefetchScalarGridSpec(
            num_scalar_prefetch=0,
            grid=(nm, nk),
            in_specs=[
                pl.BlockSpec((tm, tk), lambda i, k: (i, k)),            # patches bf16
                pl.BlockSpec((tk, FEAT_CH), lambda i, k: (k, 0)),       # w_feat bf16
                pl.BlockSpec((1, FEAT_CH), lambda i, k: (0, 0)),        # b_feat f32
                pl.BlockSpec((FEAT_CH, CLS_PAD), lambda i, k: (0, 0)),  # w_cls bf16
                pl.BlockSpec((1, CLS_PAD), lambda i, k: (0, 0)),        # b_cls f32
            ],
            out_specs=pl.BlockSpec((tm, CLS_PAD), lambda i, k: (i, 0)),
            scratch_shapes=[pltpu.VMEM((tm, FEAT_CH), jnp.float32)]),
        compiler_params=pltpu.CompilerParams(
            dimension_semantics=("parallel", "arbitrary"),
            vmem_limit_bytes=VMEM_LIMIT),
    )(patches_bf16, w_feat_bf16, b_feat, w_cls_pad_bf16, b_cls_pad)


# ----------------------------------------------------------------------------
# Fused separable bilinear upsample (align_corners=False), writing NCHW directly.
# Grid (n, 13, h-tiles); per step two small 2-D matmuls:
#   t = a_h_tile (th, hf) @ logits[n, c] (hf, wf);  out = t @ a_w^T (wf, w)
# Output block (1, 1, th, w) is lane-dense in w.
# ----------------------------------------------------------------------------
def _upsample_kernel(lg_ref, ah_ref, awt_ref, o_ref):
    t = jnp.dot(ah_ref[...], lg_ref[0, 0], preferred_element_type=jnp.float32)
    o_ref[0, 0] = jnp.dot(t, awt_ref[...], preferred_element_type=jnp.float32)


def bilinear_upsample_nchw(lg, a_h, a_wt):
    n, ncls, hf, wf = lg.shape
    h = a_h.shape[0]
    w = a_wt.shape[1]
    # bound the output tile so the (th, w) f32 block (x2 buffers) stays small
    th_cap = max(8, (8 * 1024 * 1024) // (w * 4))
    th = _pick_tile(h, tuple(c for c in (512, 256, 128, 64, 32, 16, 8)
                             if c <= th_cap))
    return pl.pallas_call(
        _upsample_kernel,
        out_shape=jax.ShapeDtypeStruct((n, ncls, h, w), jnp.float32),
        grid_spec=pltpu.PrefetchScalarGridSpec(
            num_scalar_prefetch=0,
            grid=(n, ncls, h // th),
            in_specs=[
                pl.BlockSpec((1, 1, hf, wf), lambda b, c, y: (b, c, 0, 0)),
                pl.BlockSpec((th, hf), lambda b, c, y: (y, 0)),
                pl.BlockSpec((wf, w), lambda b, c, y: (0, 0)),
            ],
            out_specs=pl.BlockSpec((1, 1, th, w), lambda b, c, y: (b, c, y, 0))),
        compiler_params=pltpu.CompilerParams(
            dimension_semantics=("parallel", "parallel", "parallel"),
            vmem_limit_bytes=VMEM_LIMIT),
    )(lg, a_h, a_wt)


# ----------------------------------------------------------------------------
# Exact PyTorch bilinear (align_corners=False) 1-D interpolation matrix (out, in).
# ----------------------------------------------------------------------------
def _bilinear_matrix(out_size, in_size, dtype=jnp.float32):
    i = jnp.arange(out_size, dtype=jnp.float32)
    scale = in_size / out_size
    src = (i + 0.5) * scale - 0.5
    src = jnp.clip(src, 0.0, None)                    # PyTorch clamps negative coords
    i0 = jnp.clip(jnp.floor(src).astype(jnp.int32), 0, in_size - 1)
    i1 = jnp.clip(i0 + 1, 0, in_size - 1)
    frac = src - i0.astype(jnp.float32)
    A = (jax.nn.one_hot(i0, in_size, dtype=jnp.float32) * (1.0 - frac)[:, None]
         + jax.nn.one_hot(i1, in_size, dtype=jnp.float32) * frac[:, None])
    return A.astype(dtype)


# ----------------------------------------------------------------------------
# Parameters (deterministic, synthetic) + one-time kernel-ready preparation.
# ----------------------------------------------------------------------------
def init_params(key):
    k1, k2, k3, k4 = jax.random.split(key, 4)
    return {
        # backbone surrogate: patch-embed conv (k=32, s=32): 3 -> 1280 channels
        'w_feat': jax.random.normal(k1, (PATCH_DIM, FEAT_CH), jnp.float32) * 0.02,
        'b_feat': jax.random.normal(k2, (FEAT_CH,), jnp.float32) * 0.02,
        # self.classif = Conv2d(1280, 13, kernel_size=1)
        'w_cls': jax.random.normal(k3, (FEAT_CH, NUM_CLASSES), jnp.float32) * 0.02,
        'b_cls': jax.random.normal(k4, (NUM_CLASSES,), jnp.float32) * 0.02,
    }


def prepare_params(params):
    """One-time fold of normalization into weights + lane-dense padding (hoisted
    out of the per-call forward)."""
    w_feat = params['w_feat']
    w_cls_pad = jnp.zeros((FEAT_CH, CLS_PAD), jnp.float32)
    w_cls_pad = w_cls_pad.at[:, :NUM_CLASSES].set(params['w_cls'])
    b_cls_pad = jnp.zeros((1, CLS_PAD), jnp.float32)
    b_cls_pad = b_cls_pad.at[0, :NUM_CLASSES].set(params['b_cls'])
    return {
        # (v/255 - 0.5)/0.25 == v/63.75 - 2  folded into w (f32 fold, then bf16)
        'w_feat': (w_feat / 63.75).astype(jnp.bfloat16),
        'b_feat': (params['b_feat'] - 2.0 * jnp.sum(w_feat, axis=0))
                  .reshape(1, FEAT_CH).astype(jnp.float32),
        'w_cls': w_cls_pad.astype(jnp.bfloat16),
        'b_cls': b_cls_pad,
    }


# ----------------------------------------------------------------------------
# Forward pass.
# ----------------------------------------------------------------------------
@jax.jit
def just_efficientnet_forward(x, prepped):
    """x: (N, 3, H, W) float32 in [0, 255] (NCHW).  Returns (N, 13, H, W) float32."""
    n, c, h, w = x.shape
    assert c == 3 and h % STRIDE == 0 and w % STRIDE == 0
    hf, wf = h // STRIDE, w // STRIDE

    # --- patch extraction; bf16 cast fused into the relayout (halves DMA) -----
    # TODO(synk): could be folded into the kernel's input DMA via an (hf, wf)
    # grid index_map over the NHWC image; kept as XLA relayout for now.
    xb = jnp.transpose(x, (0, 2, 3, 1)).astype(jnp.bfloat16)       # NHWC bf16
    patches = xb.reshape(n, hf, STRIDE, wf, STRIDE, c)
    patches = jnp.transpose(patches, (0, 1, 3, 2, 4, 5))
    patches = patches.reshape(n * hf * wf, PATCH_DIM)

    # --- fused: patch-embed conv + SiLU + 1x1 classifier (one Pallas kernel) --
    logits_p = patch_embed_classify(patches, prepped['w_feat'], prepped['b_feat'],
                                    prepped['w_cls'], prepped['b_cls'])  # (M, 128)

    # --- tiny relayout of low-res logits to (n, 13, hf, wf) for the upsampler -
    x0 = logits_p.reshape(n, hf, wf, CLS_PAD)[..., :NUM_CLASSES]
    lg = jnp.transpose(x0, (0, 3, 1, 2))                            # (n, 13, hf, wf)

    # --- fused separable bilinear upsample to NCHW (one Pallas kernel) --------
    a_h = _bilinear_matrix(h, hf)                                   # (h, hf)
    a_wt = _bilinear_matrix(w, wf).T                                # (wf, w)
    return bilinear_upsample_nchw(lg, a_h, a_wt)                    # (n, 13, h, w)


# ----------------------------------------------------------------------------
# Pure-JAX f32 reference (same synthetic backbone surrogate) for validation.
# ----------------------------------------------------------------------------
def _reference_forward(x, params):
    n, c, h, w = x.shape
    hf, wf = h // STRIDE, w // STRIDE
    xn = (x / 255.0 - 0.5) / 0.25
    x_nhwc = jnp.transpose(xn, (0, 2, 3, 1))
    patches = x_nhwc.reshape(n, hf, STRIDE, wf, STRIDE, c)
    patches = jnp.transpose(patches, (0, 1, 3, 2, 4, 5)).reshape(n * hf * wf, PATCH_DIM)
    feat = jax.nn.silu(patches @ params['w_feat'] + params['b_feat'])
    logits = feat @ params['w_cls'] + params['b_cls']
    x0 = logits.reshape(n, hf, wf, NUM_CLASSES)
    a_h = _bilinear_matrix(h, hf)
    a_w = _bilinear_matrix(w, wf)
    up = jnp.einsum('ip,npqc->niqc', a_h, x0)
    up = jnp.einsum('jq,niqc->nijc', a_w, up)
    return jnp.transpose(up, (0, 3, 1, 2))


if __name__ == "__main__":
    key = jax.random.PRNGKey(0)
    pkey, xkey = jax.random.split(key)
    params = init_params(pkey)
    prepped = prepare_params(params)

    # small input consistent with the module: NCHW, 3 channels, H/W multiple of 32
    x = jax.random.uniform(xkey, (2, 3, 64, 64), jnp.float32, 0.0, 255.0)

    out = just_efficientnet_forward(x, prepped)
    out = jax.block_until_ready(out)
    assert out.shape == (2, NUM_CLASSES, 64, 64), out.shape
    assert out.dtype == jnp.float32

    ref = jax.block_until_ready(_reference_forward(x, params))
    np.testing.assert_allclose(np.asarray(out), np.asarray(ref), rtol=5e-2, atol=5e-2)

    print("KERNEL_OK")
</pallas_src>

<mosaic_0001>
module attributes {stable_mosaic.version = 11 : i64} {
  func.func @_feat_cls_kernel(%arg0: i32, %arg1: i32, %arg2: memref<8x1536xbf16, #tpu.memory_space<vmem>>, %arg3: memref<1536x1280xbf16, #tpu.memory_space<vmem>>, %arg4: memref<1x1280xf32, #tpu.memory_space<vmem>>, %arg5: memref<1280x128xbf16, #tpu.memory_space<vmem>>, %arg6: memref<1x128xf32, #tpu.memory_space<vmem>>, %arg7: memref<8x128xf32, #tpu.memory_space<vmem>>, %arg8: memref<8x1280xf32, #tpu.memory_space<vmem>>) attributes {dimension_semantics = [#tpu.dimension_semantics<parallel>, #tpu.dimension_semantics<arbitrary>], iteration_bounds = array<i64: 1, 2>, scalar_prefetch = 0 : i64, scratch_operands = 1 : i64, tpu.core_type = #tpu.core_type<tc>, window_params = [{transform_indices = @transform_0, window_bounds = array<i64: 8, 1536>}, {transform_indices = @transform_1, window_bounds = array<i64: 1536, 1280>}, {pipeline_mode = #tpu.pipeline_mode<synchronous>, transform_indices = @transform_2, window_bounds = array<i64: 1, 1280>}, {pipeline_mode = #tpu.pipeline_mode<synchronous>, transform_indices = @transform_3, window_bounds = array<i64: 1280, 128>}, {pipeline_mode = #tpu.pipeline_mode<synchronous>, transform_indices = @transform_4, window_bounds = array<i64: 1, 128>}, {transform_indices = @transform_5, window_bounds = array<i64: 8, 128>}]} {
    %c0 = arith.constant 0 : index
    %c0_0 = arith.constant 0 : index
    %0 = vector.load %arg2[%c0, %c0_0] : memref<8x1536xbf16, #tpu.memory_space<vmem>>, vector<8x1536xbf16>
    %c0_1 = arith.constant 0 : index
    %c0_2 = arith.constant 0 : index
    %1 = vector.load %arg3[%c0_1, %c0_2] : memref<1536x1280xbf16, #tpu.memory_space<vmem>>, vector<1536x1280xbf16>
    %cst = arith.constant dense<0.000000e+00> : vector<8x1280xf32>
    %2 = tpu.matmul %0, %1, %cst {dimension_numbers = #tpu.dot_dimension_numbers<[1], [0], [0], [1], [0, 0, 1, 1], [], []>} : vector<8x1536xbf16>, vector<1536x1280xbf16>, vector<8x1280xf32> -> vector<8x1280xf32>
    %c0_i32 = arith.constant 0 : i32
    %3 = arith.cmpi eq, %arg1, %c0_i32 : i32
    %4 = arith.extui %3 : i1 to i32
    %c0_i32_3 = arith.constant 0 : i32
    %5 = arith.cmpi ne, %4, %c0_i32_3 : i32
    scf.if %5 {
      %c0_7 = arith.constant 0 : index
      %c0_8 = arith.constant 0 : index
      %12 = vector.load %arg8[%c0_7, %c0_8] : memref<8x1280xf32, #tpu.memory_space<vmem>>, vector<8x1280xf32>
      tpu.vector_store %arg8[%c0_7, %c0_8], %2 {strides = array<i32>} : memref<8x1280xf32, #tpu.memory_space<vmem>>, vector<8x1280xf32>,
    } else {
    }
    %c0_i32_4 = arith.constant 0 : i32
    %6 = arith.cmpi sgt, %arg1, %c0_i32_4 : i32
    %7 = arith.extui %6 : i1 to i32
    %c0_i32_5 = arith.constant 0 : i32
    %8 = arith.cmpi ne, %7, %c0_i32_5 : i32
    scf.if %8 {
      %c0_7 = arith.constant 0 : index
      %c0_8 = arith.constant 0 : index
      %12 = vector.load %arg8[%c0_7, %c0_8] : memref<8x1280xf32, #tpu.memory_space<vmem>>, vector<8x1280xf32>
      %13 = arith.addf %12, %2 : vector<8x1280xf32>
      %c0_9 = arith.constant 0 : index
      %c0_10 = arith.constant 0 : index
      %14 = vector.load %arg8[%c0_9, %c0_10] : memref<8x1280xf32, #tpu.memory_space<vmem>>, vector<8x1280xf32>
      tpu.vector_store %arg8[%c0_9, %c0_10], %13 {strides = array<i32>} : memref<8x1280xf32, #tpu.memory_space<vmem>>, vector<8x1280xf32>,
    } else {
    }
    %c1_i32 = arith.constant 1 : i32
    %9 = arith.cmpi eq, %arg1, %c1_i32 : i32
    %10 = arith.extui %9 : i1 to i32
    %c0_i32_6 = arith.constant 0 : i32
    %11 = arith.cmpi ne, %10, %c0_i32_6 : i32
    scf.if %11 {
      %c0_7 = arith.constant 0 : index
      %c0_8 = arith.constant 0 : index
      %12 = vector.load %arg8[%c0_7, %c0_8] : memref<8x1280xf32, #tpu.memory_space<vmem>>, vector<8x1280xf32>
      %c0_9 = arith.constant 0 : index
      %c0_10 = arith.constant 0 : index
      %13 = vector.load %arg4[%c0_9, %c0_10] : memref<1x1280xf32, #tpu.memory_space<vmem>>, vector<1x1280xf32>
      %14 = vector.broadcast %13 : vector<1x1280xf32> to vector<8x1280xf32>
      %15 = arith.addf %12, %14 : vector<8x1280xf32>
      %16 = arith.negf %15 : vector<8x1280xf32>
      %17 = math.exp %16 : vector<8x1280xf32>
      %cst_11 = arith.constant 1.000000e+00 : f32
      %18 = vector.broadcast %cst_11 : f32 to vector<8x1280xf32>
      %19 = arith.addf %18, %17 : vector<8x1280xf32>
      %20 = arith.divf %18, %19 : vector<8x1280xf32>
      %21 = arith.mulf %15, %20 : vector<8x1280xf32>
      %22 = arith.truncf %21 : vector<8x1280xf32> to vector<8x1280xbf16>
      %c0_12 = arith.constant 0 : index
      %c0_13 = arith.constant 0 : index
      %23 = vector.load %arg5[%c0_12, %c0_13] : memref<1280x128xbf16, #tpu.memory_space<vmem>>, vector<1280x128xbf16>
      %cst_14 = arith.constant dense<0.000000e+00> : vector<8x128xf32>
      %24 = tpu.matmul %22, %23, %cst_14 {dimension_numbers = #tpu.dot_dimension_numbers<[1], [0], [0], [1], [0, 0, 1, 1], [], []>} : vector<8x1280xbf16>, vector<1280x128xbf16>, vector<8x128xf32> -> vector<8x128xf32>
      %c0_15 = arith.constant 0 : index
      %c0_16 = arith.constant 0 : index
      %25 = vector.load %arg6[%c0_15, %c0_16] : memref<1x128xf32, #tpu.memory_space<vmem>>, vector<1x128xf32>
      %26 = vector.broadcast %25 : vector<1x128xf32> to vector<8x128xf32>
      %27 = arith.addf %24, %26 : vector<8x128xf32>
      %c0_17 = arith.constant 0 : index
      %c0_18 = arith.constant 0 : index
      %28 = vector.load %arg7[%c0_17, %c0_18] : memref<8x128xf32, #tpu.memory_space<vmem>>, vector<8x128xf32>
      tpu.vector_store %arg7[%c0_17, %c0_18], %27 {strides = array<i32>} : memref<8x128xf32, #tpu.memory_space<vmem>>, vector<8x128xf32>,
    } else {
    }
    return
  }
  func.func @transform_0(%arg0: i32, %arg1: i32) -> (i32, i32) {
    %c0_i32 = arith.constant 0 : i32
    return %arg0, %arg1 : i32, i32
  }
  func.func @transform_1(%arg0: i32, %arg1: i32) -> (i32, i32) {
    %c0_i32 = arith.constant 0 : i32
    %c0_i32_0 = arith.constant 0 : i32
    return %arg1, %c0_i32 : i32, i32
  }
  func.func @transform_2(%arg0: i32, %arg1: i32) -> (i32, i32) {
    %c0_i32 = arith.constant 0 : i32
    %c0_i32_0 = arith.constant 0 : i32
    %c0_i32_1 = arith.constant 0 : i32
    return %c0_i32, %c0_i32_0 : i32, i32
  }
  func.func @transform_3(%arg0: i32, %arg1: i32) -> (i32, i32) {
    %c0_i32 = arith.constant 0 : i32
    %c0_i32_0 = arith.constant 0 : i32
    %c0_i32_1 = arith.constant 0 : i32
    return %c0_i32, %c0_i32_0 : i32, i32
  }
  func.func @transform_4(%arg0: i32, %arg1: i32) -> (i32, i32) {
    %c0_i32 = arith.constant 0 : i32
    %c0_i32_0 = arith.constant 0 : i32
    %c0_i32_1 = arith.constant 0 : i32
    return %c0_i32, %c0_i32_0 : i32, i32
  }
  func.func @transform_5(%arg0: i32, %arg1: i32) -> (i32, i32) {
    %c0_i32 = arith.constant 0 : i32
    %c0_i32_0 = arith.constant 0 : i32
    return %arg0, %c0_i32 : i32, i32
  }
}

module attributes {stable_mosaic.version = 11 : i64} {
  func.func @_upsample_kernel(%arg0: i32, %arg1: i32, %arg2: i32, %arg3: memref<1x1x2x2xf32, #tpu.memory_space<vmem>>, %arg4: memref<64x2xf32, #tpu.memory_space<vmem>>, %arg5: memref<2x64xf32, #tpu.memory_space<vmem>>, %arg6: memref<1x1x64x64xf32, #tpu.memory_space<vmem>>) attributes {dimension_semantics = [#tpu.dimension_semantics<parallel>, #tpu.dimension_semantics<parallel>, #tpu.dimension_semantics<parallel>], iteration_bounds = array<i64: 2, 13, 1>, scalar_prefetch = 0 : i64, scratch_operands = 0 : i64, tpu.core_type = #tpu.core_type<tc>, window_params = [{transform_indices = @transform_0, window_bounds = array<i64: 1, 1, 2, 2>}, {transform_indices = @transform_1, window_bounds = array<i64: 64, 2>}, {pipeline_mode = #tpu.pipeline_mode<synchronous>, transform_indices = @transform_2, window_bounds = array<i64: 2, 64>}, {transform_indices = @transform_3, window_bounds = array<i64: 1, 1, 64, 64>}]} {
    %c0 = arith.constant 0 : index
    %c0_0 = arith.constant 0 : index
    %0 = vector.load %arg4[%c0, %c0_0] : memref<64x2xf32, #tpu.memory_space<vmem>>, vector<64x2xf32>
    %c0_1 = arith.constant 0 : index
    %c0_2 = arith.constant 0 : index
    %c0_3 = arith.constant 0 : index
    %c0_4 = arith.constant 0 : index
    %1 = vector.load %arg3[%c0_1, %c0_2, %c0_3, %c0_4] : memref<1x1x2x2xf32, #tpu.memory_space<vmem>>, vector<1x1x2x2xf32>
    %2 = vector.shape_cast %1 : vector<1x1x2x2xf32> to vector<2x2xf32>
    %cst = arith.constant dense<0.000000e+00> : vector<64x2xf32>
    %3 = tpu.matmul %0, %2, %cst {dimension_numbers = #tpu.dot_dimension_numbers<[1], [0], [0], [1], [0, 0, 1, 1], [], []>} : vector<64x2xf32>, vector<2x2xf32>, vector<64x2xf32> -> vector<64x2xf32>
    %c0_5 = arith.constant 0 : index
    %c0_6 = arith.constant 0 : index
    %4 = vector.load %arg5[%c0_5, %c0_6] : memref<2x64xf32, #tpu.memory_space<vmem>>, vector<2x64xf32>
    %cst_7 = arith.constant dense<0.000000e+00> : vector<64x64xf32>
    %5 = tpu.matmul %3, %4, %cst_7 {dimension_numbers = #tpu.dot_dimension_numbers<[1], [0], [0], [1], [0, 0, 1, 1], [], []>} : vector<64x2xf32>, vector<2x64xf32>, vector<64x64xf32> -> vector<64x64xf32>
    %c0_8 = arith.constant 0 : index
    %c0_9 = arith.constant 0 : index
    %c0_10 = arith.constant 0 : index
    %c0_11 = arith.constant 0 : index
    %6 = vector.load %arg6[%c0_8, %c0_9, %c0_10, %c0_11] : memref<1x1x64x64xf32, #tpu.memory_space<vmem>>, vector<1x1x64x64xf32>
    %7 = vector.shape_cast %6 : vector<1x1x64x64xf32> to vector<64x64xf32>
    %8 = vector.shape_cast %5 : vector<64x64xf32> to vector<1x1x64x64xf32>
    tpu.vector_store %arg6[%c0_8, %c0_9, %c0_10, %c0_11], %8 {strides = array<i32>} : memref<1x1x64x64xf32, #tpu.memory_space<vmem>>, vector<1x1x64x64xf32>,
    return
  }
  func.func @transform_0(%arg0: i32, %arg1: i32, %arg2: i32) -> (i32, i32, i32, i32) {
    %c0_i32 = arith.constant 0 : i32
    %c0_i32_0 = arith.constant 0 : i32
    %c0_i32_1 = arith.constant 0 : i32
    return %arg0, %arg1, %c0_i32, %c0_i32_0 : i32, i32, i32, i32
  }
  func.func @transform_1(%arg0: i32, %arg1: i32, %arg2: i32) -> (i32, i32) {
    %c0_i32 = arith.constant 0 : i32
    %c0_i32_0 = arith.constant 0 : i32
    return %arg2, %c0_i32 : i32, i32
  }
  func.func @transform_2(%arg0: i32, %arg1: i32, %arg2: i32) -> (i32, i32) {
    %c0_i32 = arith.constant 0 : i32
    %c0_i32_0 = arith.constant 0 : i32
    %c0_i32_1 = arith.constant 0 : i32
    return %c0_i32, %c0_i32_0 : i32, i32
  }
  func.func @transform_3(%arg0: i32, %arg1: i32, %arg2: i32) -> (i32, i32, i32, i32) {
    %c0_i32 = arith.constant 0 : i32
    %c0_i32_0 = arith.constant 0 : i32
    return %arg0, %arg1, %arg2, %c0_i32 : i32, i32, i32, i32
  }
}

</mosaic_0001>

<llo_original>
// kernel: just_efficientnet_forward.3
$region0: #{just_efficientnet_forward.3}
  #allocation0 [shape = 'u32[]', space=smem, size = 0x4, offset = 0x4, fixed_abs, tag = 'smem constant byte address 0x4 - core index']
  #allocation1 [shape = 'u32[144,128]{1,0:T(1,128)}', space=vmem, size = 0x12000, scoped, tag = 'internal scratch']
  %s0 = inlined_call_operand.vmem [shape: f32[2,13,2,2], index: 0, kind: input, shape index: {}]
  %s1 = inlined_call_operand.vmem [shape: f32[64,2], index: 1, kind: input, shape index: {}]
  %s2 = inlined_call_operand.vmem [shape: f32[2,64], index: 2, kind: input, shape index: {}]
  %s3 = inlined_call_operand.hbm [shape: f32[2,13,64,64], index: 3, kind: output, shape index: {}]
  %s4 = sld [smem:[#allocation0]]
  $region45: #{just_efficientnet_forward.3} parent=0
    _
  %s6 = ssub.s32 1, %s4
  %s7 = scalar_select 0, %s6, %s4
  $region1: #{just_efficientnet_forward.3} parent=0
    #allocation2 [shape = 'u8[65536]{0}', space=vmem, size = 0x10000, scoped, tag = 'output window, operand 0']
    #allocation3 [shape = 's32[2]{0}', space=sflag, size = 0x8, scoped, tag = 'scoped memory for just_efficientnet_forward.3']
    %8 = vsyncpa [#allocation3], 0
    %s9 = scalar_lea.sflag [#allocation3], 1
    %10 = vsyncpa %s9, 0
    loop: start=0, step=1, limit=28
    $region2: #{just_efficientnet_forward.3} parent=1 // loop_pre_header
      _
    $region3: #{just_efficientnet_forward.3} parent=1 // loop_header
      %s12 = sphi 0, %s16
      %p13 = scmp.ge.s32.totalorder %s12, 28
      %s19 = sphi 0, %s38
      %s20 = sphi 0, %s34
      %s21 = sphi 0, %s30
      %s22 = sphi 0, %s19
      %s23 = sphi 0, %s20
      %s24 = sphi 0, %s21
      %s25 = sphi 0, %s22
      %s26 = sphi 0, %s23
      %s27 = sphi 0, %s24
      %s43 = sphi 0, %s45
      %s46 = sphi 0, %s43
      %s47 = sphi 0, %s46
      %s63 = sphi 0, %s47
      %s69 = sphi 0, %s71
      %s72 = sphi 0, %s69
      %s73 = sphi 0, %s72
      %s89 = sphi 0, %s73
      %s93 = sphi 0, %s93
      %s95 = sphi 0, %s93
      %s96 = sphi 0, %s95
      %s110 = sphi 0, %s96
      %s120 = sphi 0, %s122
      %s123 = sphi 0, %s120
      %s124 = sphi 0, %s123
      %s140 = sphi 0, %s124
    $region4: #{just_efficientnet_forward.3} parent=1 // loop_header_branch
      %15 = sbr.rel (%p13) target = $region8
    $region5: #{just_efficientnet_forward.3} parent=1 // loop_body
      %s17 = ssub.s32 %s12, 1
      %s18 = ssub.s32 %s12, 2
      %s28 = sadd.s32 1, %s21
      %p29 = scmp.ge.s32.totalorder %s28, 1
      %s30 = scalar_select %p29, 0, %s28
      %s31 = sadd.s32 1, %s20
      %s32 = scalar_select %p29, %s31, %s20
      %p33 = scmp.ge.s32.totalorder %s32, 13
      %s34 = scalar_select %p33, 0, %s32
      %s35 = sadd.s32 1, %s19
      %s36 = scalar_select %p33, %s35, %s19
      %p37 = scmp.ge.s32.totalorder %s36, 2
      %s38 = scalar_select %p37, 0, %s36
      %s39 = ssub.s32 %s19, %s38
      %s40 = ssub.s32 %s20, %s34
      %s41 = sor.u32 %s39, %s40
      %p42 = scmp.eq.s32.totalorder %s41, 0
      %s44 = sadd.s32 %s43, 1
      %s45 = scalar_select %p42, %s43, %s44
      %p48 = pneg %p42
      %p49 = scmp.eq.s32.totalorder %s12, 25
      %p50 = por %p48, %p49
      %p51 = scmp.ne.s32.totalorder %s43, %s46
      %p52 = scmp.eq.s32.totalorder %s12, 0
      %p53 = por %p51, %p52
      %p54 = scmp.ne.s32.totalorder %s43, %s46
      %p55 = scmp.eq.s32.totalorder %s17, 25
      %p56 = por %p54, %p55
      %p57 = scmp.ne.s32.totalorder %s46, %s47
      %p58 = scmp.eq.s32.totalorder %s17, 0
      %p59 = por %p57, %p58
      %p60 = scmp.ne.s32.totalorder %s46, %s47
      %p61 = scmp.eq.s32.totalorder %s18, 25
      %p62 = por %p60, %p61
      %p64 = scmp.ne.s32.totalorder %s47, %s63
      %p65 = scmp.eq.s32.totalorder %s18, 0
      %p66 = por %p64, %p65
      %s67 = ssub.s32 %s21, %s30
      %p68 = scmp.eq.s32.totalorder %s67, 0
      %s70 = sadd.s32 %s69, 1
      %s71 = scalar_select %p68, %s69, %s70
      %p74 = pneg %p68
      %p75 = scmp.eq.s32.totalorder %s12, 25
      %p76 = por %p74, %p75
      %p77 = scmp.ne.s32.totalorder %s69, %s72
      %p78 = scmp.eq.s32.totalorder %s12, 0
      %p79 = por %p77, %p78
      %p80 = scmp.ne.s32.totalorder %s69, %s72
      %p81 = scmp.eq.s32.totalorder %s17, 25
      %p82 = por %p80, %p81
      %p83 = scmp.ne.s32.totalorder %s72, %s73
      %p84 = scmp.eq.s32.totalorder %s17, 0
      %p85 = por %p83, %p84
      %p86 = scmp.ne.s32.totalorder %s72, %s73
      %p87 = scmp.eq.s32.totalorder %s18, 25
      %p88 = por %p86, %p87
      %p90 = scmp.ne.s32.totalorder %s73, %s89
      %p91 = scmp.eq.s32.totalorder %s18, 0
      %p92 = por %p90, %p91
      %s94 = sadd.s32 %s93, 1
      %p97 = scmp.eq.s32.totalorder %s12, 25
      %p98 = scmp.ne.s32.totalorder %s93, %s95
      %p99 = scmp.eq.s32.totalorder %s12, 0
      %p100 = por %p98, %p99
      %p101 = scmp.ne.s32.totalorder %s93, %s95
      %p102 = scmp.eq.s32.totalorder %s17, 25
      %p103 = por %p101, %p102
      %p104 = scmp.ne.s32.totalorder %s95, %s96
      %p105 = scmp.eq.s32.totalorder %s17, 0
      %p106 = por %p104, %p105
      %p107 = scmp.ne.s32.totalorder %s95, %s96
      %p108 = scmp.eq.s32.totalorder %s18, 25
      %p109 = por %p107, %p108
      %p111 = scmp.ne.s32.totalorder %s96, %s110
      %p112 = scmp.eq.s32.totalorder %s18, 0
      %p113 = por %p111, %p112
      %s114 = ssub.s32 %s19, %s38
      %s115 = ssub.s32 %s20, %s34
      %s116 = sor.u32 %s114, %s115
      %s117 = ssub.s32 %s21, %s30
      %s118 = sor.u32 %s116, %s117
      %p119 = scmp.eq.s32.totalorder %s118, 0
      %s121 = sadd.s32 %s120, 1
      %s122 = scalar_select %p119, %s120, %s121
      %p125 = pneg %p119
      %p126 = scmp.eq.s32.totalorder %s12, 25
      %p127 = por %p125, %p126
      %p128 = scmp.ne.s32.totalorder %s120, %s123
      %p129 = scmp.eq.s32.totalorder %s12, 0
      %p130 = por %p128, %p129
      %p131 = scmp.ne.s32.totalorder %s120, %s123
      %p132 = scmp.eq.s32.totalorder %s17, 25
      %p133 = por %p131, %p132
      %p134 = scmp.ne.s32.totalorder %s123, %s124
      %p135 = scmp.eq.s32.totalorder %s17, 0
      %p136 = por %p134, %p135
      %p137 = scmp.ne.s32.totalorder %s123, %s124
      %p138 = scmp.eq.s32.totalorder %s18, 25
      %p139 = por %p137, %p138
      %p141 = scmp.ne.s32.totalorder %s124, %s140
      %p142 = scmp.eq.s32.totalorder %s18, 0
      %p143 = por %p141, %p142
      %p144 = scmp.le.s32.totalorder 1, %s12
      %p145 = scmp.lt.s32.totalorder %s12, 27
      %p146 = pnand %p144, %p145
      %p147 = pneg %p146
      // Predicated region
      $region9: #{just_efficientnet_forward.3} parent=5 // pred_check
        _
      $region10: #{just_efficientnet_forward.3} parent=5 // pred_check_branch
        %149 = sbr.rel (%p146) target = $region12
      $region11: #{just_efficientnet_forward.3} parent=5 // pred_region
        %s150 = ssub.s32 %s12, 1
        // Predicated region
        $region13: #{just_efficientnet_forward.3} parent=11 // pred_check
          %p151 = pneg %p85
        $region14: #{just_efficientnet_forward.3} parent=11 // pred_check_branch
          %153 = sbr.rel (%p151) target = $region16
        $region15: #{just_efficientnet_forward.3} parent=11 // pred_region
          %s154 = smul.u32 8, %s24
          %p155 = scmp.lt.s32.totalorder %s154, 7
          %s156 = scalar_select %p155, %s154, 7
          %s157 = smul.addr %s156, 8
          %s158 = scalar_lea.vmem %s1, %s157
          %s159 = smul.u32 8, %s24
        $region16: #{just_efficientnet_forward.3} parent=11 // pred_fallthru
          _
        // Predicated region
        $region17: #{just_efficientnet_forward.3} parent=11 // pred_check
          %p160 = pneg %p106
        $region18: #{just_efficientnet_forward.3} parent=11 // pred_check_branch
          %162 = sbr.rel (%p160) target = $region20
        $region19: #{just_efficientnet_forward.3} parent=11 // pred_region
          _
        $region20: #{just_efficientnet_forward.3} parent=11 // pred_fallthru
          _
      $region12: #{just_efficientnet_forward.3} parent=5 // pred_fallthru
        _
      %p163 = scmp.lt.s32.totalorder %s12, 26
      // Predicated region
      $region21: #{just_efficientnet_forward.3} parent=5 // pred_check
        %p164 = pneg %p163
      $region22: #{just_efficientnet_forward.3} parent=5 // pred_check_branch
        %166 = sbr.rel (%p164) target = $region24
      $region23: #{just_efficientnet_forward.3} parent=5 // pred_region
        // Predicated region
        $region25: #{just_efficientnet_forward.3} parent=23 // pred_check
          %p167 = pneg %p53
        $region26: #{just_efficientnet_forward.3} parent=23 // pred_check_branch
          %169 = sbr.rel (%p167) target = $region28
        $region27: #{just_efficientnet_forward.3} parent=23 // pred_region
          %p170 = scmp.lt.s32.totalorder %s19, 1
          %s171 = scalar_select %p170, %s19, 1
          %p172 = scmp.lt.s32.totalorder %s20, 12
          %s173 = scalar_select %p172, %s20, 12
          %s174 = smul.addr %s171, 13
          %s175 = sadd.s32 %s173, %s174
          %s176 = smul.addr %s175, 2
          %s177 = scalar_lea.vmem %s0, %s176
        $region28: #{just_efficientnet_forward.3} parent=23 // pred_fallthru
          _
      $region24: #{just_efficientnet_forward.3} parent=5 // pred_fallthru
        _
      %p178 = scmp.le.s32.totalorder 1, %s12
      %p179 = scmp.lt.s32.totalorder %s12, 27
      %p180 = pnand %p178, %p179
      %p181 = pneg %p180
      // Predicated region
      $region29: #{just_efficientnet_forward.3} parent=5 // pred_check
        _
      $region30: #{just_efficientnet_forward.3} parent=5 // pred_check_branch
        %183 = sbr.rel (%p180) target = $region32
      $region31: #{just_efficientnet_forward.3} parent=5 // pred_region
        %s184 = ssub.s32 %s12, 1
        %p185 = scmp.lt.s32.totalorder %s22, 1
        %s186 = scalar_select %p185, %s22, 1
        %p187 = scmp.lt.s32.totalorder %s23, 12
        %s188 = scalar_select %p187, %s23, 12
        %s189 = smul.addr %s186, 13
        %s190 = sadd.s32 %s188, %s189
        %s191 = smul.addr %s190, 2
        %s192 = scalar_lea.vmem %s0, %s191
        %p193 = pneg %p59
        %p194 = pneg %p56
        %s195 = smul.u32 8, %s24
        %p196 = scmp.lt.s32.totalorder %s195, 7
        %s197 = scalar_select %p196, %s195, 7
        %s198 = smul.addr %s197, 8
        %s199 = scalar_lea.vmem %s1, %s198
        %p200 = pneg %p85
        %p201 = pneg %p82
        %p202 = pneg %p106
        %p203 = pneg %p103
        %p204 = pneg %p136
        %p205 = pneg %p133
        %s206 = sand.u32 %s123, 1
        %s207 = scalar_lea.sflag [#allocation3], %s206
        %s208 = sand.u32 %s123, 1
        %s209 = smul.addr %s208, 64
        %s210 = scalar_lea.vmem [#allocation2], %s209
        %p211 = scmp.lt.s32.totalorder %s22, 1
        %s212 = scalar_select %p211, %s22, 1
        %p213 = scmp.lt.s32.totalorder %s23, 12
        %s214 = scalar_select %p213, %s23, 12
        %s215 = smul.addr %s212, 13
        %s216 = sadd.s32 %s214, %s215
        %s217 = smul.addr %s216, 2
        %s218 = scalar_lea.vmem %s0, %s217
        %s219 = smul.u32 8, %s24
        %p220 = scmp.lt.s32.totalorder %s219, 7
        %s221 = scalar_select %p220, %s219, 7
        %s222 = smul.addr %s221, 8
        %s223 = scalar_lea.vmem %s1, %s222
        %s224 = smul.u32 8, %s24
        %s225 = smul.u32 8, %s24
        %v226 = vld [vmem:[%s223] sm:$0xff]
        %v227 = vld [vmem:[%s223 + $0x8] sm:$0xff]
        %v228 = vld [vmem:[%s223 + $0x10] sm:$0xff]
        %v229 = vld [vmem:[%s223 + $0x18] sm:$0xff]
        %v230 = vld [vmem:[%s223 + $0x20] sm:$0xff]
        %v231 = vld [vmem:[%s223 + $0x28] sm:$0xff]
        %v232 = vld [vmem:[%s223 + $0x30] sm:$0xff]
        %v233 = vld [vmem:[%s223 + $0x38] sm:$0xff]
        %v234 = vld [vmem:[%s218] sm:$0x3]
        %vm235 = vcmask 15360
        %v237 = vsel %vm235, %v226, 0
        %v240 = vsel %vm235, %v227, 0
        %v243 = vsel %vm235, %v228, 0
        %v246 = vsel %vm235, %v229, 0
        %v249 = vsel %vm235, %v230, 0
        %v252 = vsel %vm235, %v231, 0
        %v255 = vsel %vm235, %v232, 0
        %v258 = vsel %vm235, %v233, 0
        %vm260 = vcmask 1041408
        %v262 = vsel %vm260, %v234, 0
        %264 = vmatprep.subr.mxu0 0.0
        %265 = vmatpush1.msra.mxu0 %v262
        %266 = vmatprep.subr.mxu0 0.0
        %267 = vmatpush1.msra.mxu0 0.0
        %268 = vmatprep.subr.mxu0 0.0
        %269 = vmatpush1.msra.mxu0 0.0
        %270 = vmatprep.subr.mxu0 0.0
        %271 = vmatpush1.msra.mxu0 0.0
        %272 = vmatprep.subr.mxu0 0.0
        %273 = vmatpush1.msra.mxu0 0.0
        %274 = vmatprep.subr.mxu0 0.0
        %275 = vmatpush1.msra.mxu0 0.0
        %276 = vmatprep.subr.mxu0 0.0
        %277 = vmatpush1.msra.mxu0 0.0
        %278 = vmatprep.subr.mxu0 0.0
        %279 = vmatpush1.msra.mxu0 0.0
        %280 = vmatprep.subr.mxu0 0.0
        %281 = vmatpush1.msra.mxu0 0.0
        %282 = vmatprep.subr.mxu0 0.0
        %283 = vmatpush1.msra.mxu0 0.0
        %284 = vmatprep.subr.mxu0 0.0
        %285 = vmatpush1.msra.mxu0 0.0
        %286 = vmatprep.subr.mxu0 0.0
        %287 = vmatpush1.msra.mxu0 0.0
        %288 = vmatprep.subr.mxu0 0.0
        %289 = vmatpush1.msra.mxu0 0.0
        %290 = vmatprep.subr.mxu0 0.0
        %291 = vmatpush1.msra.mxu0 0.0
        %292 = vmatprep.subr.mxu0 0.0
        %293 = vmatpush1.msra.mxu0 0.0
        %294 = vmatprep.subr.mxu0 0.0
        %295 = vmatpush1.msra.mxu0 0.0
        %296 = vmatprep.subr.mxu0 0.0
        %297 = vmatpush1.msra.mxu0 0.0
        %298 = vmatprep.subr.mxu0 0.0
        %299 = vmatpush1.msra.mxu0 0.0
        %300 = vmatprep.subr.mxu0 0.0
        %301 = vmatpush1.msra.mxu0 0.0
        %302 = vmatprep.subr.mxu0 0.0
        %303 = vmatpush1.msra.mxu0 0.0
        %304 = vmatprep.subr.mxu0 0.0
        %305 = vmatpush1.msra.mxu0 0.0
        %306 = vmatprep.subr.mxu0 0.0
        %307 = vmatpush1.msra.mxu0 0.0
        %308 = vmatprep.subr.mxu0 0.0
        %309 = vmatpush1.msra.mxu0 0.0
        %310 = vmatprep.subr.mxu0 0.0
        %311 = vmatpush1.msra.mxu0 0.0
        %312 = vmatprep.subr.mxu0 0.0
        %313 = vmatpush1.msra.mxu0 0.0
        %314 = vmatprep.subr.mxu0 0.0
        %315 = vmatpush1.msra.mxu0 0.0
        %316 = vmatprep.subr.mxu0 0.0
        %317 = vmatpush1.msra.mxu0 0.0
        %318 = vmatprep.subr.mxu0 0.0
        %319 = vmatpush1.msra.mxu0 0.0
        %320 = vmatprep.subr.mxu0 0.0
        %321 = vmatpush1.msra.mxu0 0.0
        %322 = vmatprep.subr.mxu0 0.0
        %323 = vmatpush1.msra.mxu0 0.0
        %324 = vmatprep.subr.mxu0 0.0
        %325 = vmatpush1.msra.mxu0 0.0
        %326 = vmatprep.subr.mxu0 0.0
        %327 = vmatpush1.msra.mxu0 0.0
        %328 = vmatprep.mubr.f32.mxu0 0.0
        %329 = vmatmul.mubr.f32.gmra.mrb[0].mxu0 %v237
        %v330 = vpop.f32.mrb[0].mxu0
        %v331 = vadd.f32 0.0, %v330
        %v332 = vpop.f32.mrb[0].mxu0
        %333 = vmatprep.mubr.f32.mxu0 0.0
        %334 = vmatmul.mubr.f32.gmra.mrb[0].mxu0 %v240
        %v335 = vpop.f32.mrb[0].mxu0
        %v336 = vadd.f32 0.0, %v335
        %v337 = vpop.f32.mrb[0].mxu0
        %338 = vmatprep.mubr.f32.mxu0 0.0
        %339 = vmatmul.mubr.f32.gmra.mrb[0].mxu0 %v243
        %v340 = vpop.f32.mrb[0].mxu0
        %v341 = vadd.f32 0.0, %v340
        %v342 = vpop.f32.mrb[0].mxu0
        %343 = vmatprep.mubr.f32.mxu0 0.0
        %344 = vmatmul.mubr.f32.gmra.mrb[0].mxu0 %v246
        %v345 = vpop.f32.mrb[0].mxu0
        %v346 = vadd.f32 0.0, %v345
        %v347 = vpop.f32.mrb[0].mxu0
        %348 = vmatprep.mubr.f32.mxu0 0.0
        %349 = vmatmul.mubr.f32.gmra.mrb[0].mxu0 %v249
        %v350 = vpop.f32.mrb[0].mxu0
        %v351 = vadd.f32 0.0, %v350
        %v352 = vpop.f32.mrb[0].mxu0
        %353 = vmatprep.mubr.f32.mxu0 0.0
        %354 = vmatmul.mubr.f32.gmra.mrb[0].mxu0 %v252
        %v355 = vpop.f32.mrb[0].mxu0
        %v356 = vadd.f32 0.0, %v355
        %v357 = vpop.f32.mrb[0].mxu0
        %358 = vmatprep.mubr.f32.mxu0 0.0
        %359 = vmatmul.mubr.f32.gmra.mrb[0].mxu0 %v255
        %v360 = vpop.f32.mrb[0].mxu0
        %v361 = vadd.f32 0.0, %v360
        %v362 = vpop.f32.mrb[0].mxu0
        %363 = vmatprep.mubr.f32.mxu0 0.0
        %364 = vmatmul.mubr.f32.gmra.mrb[0].mxu0 %v258
        %v365 = vpop.f32.mrb[0].mxu0
        %v366 = vadd.f32 0.0, %v365
        %v367 = vpop.f32.mrb[0].mxu0
        %368 = vdwg.mxu0
        %v369 = vld [vmem:[%s2] sm:$0x3]
        %v371 = vsel %vm235, %v331, 0
        %v374 = vsel %vm235, %v336, 0
        %v377 = vsel %vm235, %v341, 0
        %v380 = vsel %vm235, %v346, 0
        %v383 = vsel %vm235, %v351, 0
        %v386 = vsel %vm235, %v356, 0
        %v389 = vsel %vm235, %v361, 0
        %v392 = vsel %vm235, %v366, 0
        %v395 = vsel %vm260, %v369, 0
        %397 = vmatprep.subr.mxu0 0.0
        %398 = vmatpush1.msra.mxu0 %v395
        %399 = vmatprep.subr.mxu0 0.0
        %400 = vmatpush1.msra.mxu0 0.0
        %401 = vmatprep.subr.mxu0 0.0
        %402 = vmatpush1.msra.mxu0 0.0
        %403 = vmatprep.subr.mxu0 0.0
        %404 = vmatpush1.msra.mxu0 0.0
        %405 = vmatprep.subr.mxu0 0.0
        %406 = vmatpush1.msra.mxu0 0.0
        %407 = vmatprep.subr.mxu0 0.0
        %408 = vmatpush1.msra.mxu0 0.0
        %409 = vmatprep.subr.mxu0 0.0
        %410 = vmatpush1.msra.mxu0 0.0
        %411 = vmatprep.subr.mxu0 0.0
        %412 = vmatpush1.msra.mxu0 0.0
        %413 = vmatprep.subr.mxu0 0.0
        %414 = vmatpush1.msra.mxu0 0.0
        %415 = vmatprep.subr.mxu0 0.0
        %416 = vmatpush1.msra.mxu0 0.0
        %417 = vmatprep.subr.mxu0 0.0
        %418 = vmatpush1.msra.mxu0 0.0
        %419 = vmatprep.subr.mxu0 0.0
        %420 = vmatpush1.msra.mxu0 0.0
        %421 = vmatprep.subr.mxu0 0.0
        %422 = vmatpush1.msra.mxu0 0.0
        %423 = vmatprep.subr.mxu0 0.0
        %424 = vmatpush1.msra.mxu0 0.0
        %425 = vmatprep.subr.mxu0 0.0
        %426 = vmatpush1.msra.mxu0 0.0
        %427 = vmatprep.subr.mxu0 0.0
        %428 = vmatpush1.msra.mxu0 0.0
        %429 = vmatprep.subr.mxu0 0.0
        %430 = vmatpush1.msra.mxu0 0.0
        %431 = vmatprep.subr.mxu0 0.0
        %432 = vmatpush1.msra.mxu0 0.0
        %433 = vmatprep.subr.mxu0 0.0
        %434 = vmatpush1.msra.mxu0 0.0
        %435 = vmatprep.subr.mxu0 0.0
        %436 = vmatpush1.msra.mxu0 0.0
        %437 = vmatprep.subr.mxu0 0.0
        %438 = vmatpush1.msra.mxu0 0.0
        %439 = vmatprep.subr.mxu0 0.0
        %440 = vmatpush1.msra.mxu0 0.0
        %441 = vmatprep.subr.mxu0 0.0
        %442 = vmatpush1.msra.mxu0 0.0
        %443 = vmatprep.subr.mxu0 0.0
        %444 = vmatpush1.msra.mxu0 0.0
        %445 = vmatprep.subr.mxu0 0.0
        %446 = vmatpush1.msra.mxu0 0.0
        %447 = vmatprep.subr.mxu0 0.0
        %448 = vmatpush1.msra.mxu0 0.0
        %449 = vmatprep.subr.mxu0 0.0
        %450 = vmatpush1.msra.mxu0 0.0
        %451 = vmatprep.subr.mxu0 0.0
        %452 = vmatpush1.msra.mxu0 0.0
        %453 = vmatprep.subr.mxu0 0.0
        %454 = vmatpush1.msra.mxu0 0.0
        %455 = vmatprep.subr.mxu0 0.0
        %456 = vmatpush1.msra.mxu0 0.0
        %457 = vmatprep.subr.mxu0 0.0
        %458 = vmatpush1.msra.mxu0 0.0
        %459 = vmatprep.subr.mxu0 0.0
        %460 = vmatpush1.msra.mxu0 0.0
        %461 = vmatprep.mubr.f32.mxu0 0.0
        %462 = vmatmul.mubr.f32.gmra.mrb[0].mxu0 %v371
        %v463 = vpop.f32.mrb[0].mxu0
        %v464 = vadd.f32 0.0, %v463
        %v465 = vpop.f32.mrb[0].mxu0
        %466 = vmatprep.mubr.f32.mxu0 0.0
        %467 = vmatmul.mubr.f32.gmra.mrb[0].mxu0 %v374
        %v468 = vpop.f32.mrb[0].mxu0
        %v469 = vadd.f32 0.0, %v468
        %v470 = vpop.f32.mrb[0].mxu0
        %471 = vmatprep.mubr.f32.mxu0 0.0
        %472 = vmatmul.mubr.f32.gmra.mrb[0].mxu0 %v377
        %v473 = vpop.f32.mrb[0].mxu0
        %v474 = vadd.f32 0.0, %v473
        %v475 = vpop.f32.mrb[0].mxu0
        %476 = vmatprep.mubr.f32.mxu0 0.0
        %477 = vmatmul.mubr.f32.gmra.mrb[0].mxu0 %v380
        %v478 = vpop.f32.mrb[0].mxu0
        %v479 = vadd.f32 0.0, %v478
        %v480 = vpop.f32.mrb[0].mxu0
        %481 = vmatprep.mubr.f32.mxu0 0.0
        %482 = vmatmul.mubr.f32.gmra.mrb[0].mxu0 %v383
        %v483 = vpop.f32.mrb[0].mxu0
        %v484 = vadd.f32 0.0, %v483
        %v485 = vpop.f32.mrb[0].mxu0
        %486 = vmatprep.mubr.f32.mxu0 0.0
        %487 = vmatmul.mubr.f32.gmra.mrb[0].mxu0 %v386
        %v488 = vpop.f32.mrb[0].mxu0
        %v489 = vadd.f32 0.0, %v488
        %v490 = vpop.f32.mrb[0].mxu0
        %491 = vmatprep.mubr.f32.mxu0 0.0
        %492 = vmatmul.mubr.f32.gmra.mrb[0].mxu0 %v389
        %v493 = vpop.f32.mrb[0].mxu0
        %v494 = vadd.f32 0.0, %v493
        %v495 = vpop.f32.mrb[0].mxu0
        %496 = vmatprep.mubr.f32.mxu0 0.0
        %497 = vmatmul.mubr.f32.gmra.mrb[0].mxu0 %v392
        %v498 = vpop.f32.mrb[0].mxu0
        %v499 = vadd.f32 0.0, %v498
        %v500 = vpop.f32.mrb[0].mxu0
        %501 = vdwg.mxu0
        %vm502 = vcmask 523264
        %503 = vst.msk [vmem:[%s210] sm:$0xff] %vm502, %v464
        %504 = vst.msk [vmem:[%s210 + $0x8] sm:$0xff] %vm502, %v469
        %505 = vst.msk [vmem:[%s210 + $0x10] sm:$0xff] %vm502, %v474
        %506 = vst.msk [vmem:[%s210 + $0x18] sm:$0xff] %vm502, %v479
        %507 = vst.msk [vmem:[%s210 + $0x20] sm:$0xff] %vm502, %v484
        %508 = vst.msk [vmem:[%s210 + $0x28] sm:$0xff] %vm502, %v489
        %509 = vst.msk [vmem:[%s210 + $0x30] sm:$0xff] %vm502, %v494
        %510 = vst.msk [vmem:[%s210 + $0x38] sm:$0xff] %vm502, %v499
        %s511 = sand.u32 %s123, 1
        %s512 = scalar_lea.sflag [#allocation3], %s511
        %s513 = sand.u32 %s123, 1
        %s514 = smul.addr %s513, 64
        %s515 = scalar_lea.vmem [#allocation2], %s514
        // Predicated region
        $region33: #{just_efficientnet_forward.3} parent=31 // pred_check
          %p516 = pneg %p133
        $region34: #{just_efficientnet_forward.3} parent=31 // pred_check_branch
          %518 = sbr.rel (%p516) target = $region36
        $region35: #{just_efficientnet_forward.3} parent=31 // pred_region
          %s519 = smul.u32 8, %s24
          %s521 = ssub.s32 1024, 1024
          %522 = vsyncadd %s512, %s521
          %s523 = smul.addr %s23, 8
          %s524 = sadd.s32 %s519, %s523
          %s525 = smul.addr %s22, 104
          %s526 = sadd.s32 %s524, %s525
          %s527 = smul.addr %s526, 128
          %s528 = scalar_lea.hbm %s3, %s527
          %s529 = sshll.u32 %s515, 4
          %s530 = int_to_ptr.vmem [resolvable:$true] %s529
          %535 = dma.vmem_to_hbm [thread:$0]  %s530, 1024, %s528, %s512, 128, 128, 8
        $region36: #{just_efficientnet_forward.3} parent=31 // pred_fallthru
          _
      $region32: #{just_efficientnet_forward.3} parent=5 // pred_fallthru
        _
      %p536 = scmp.le.s32.totalorder 2, %s12
      // Predicated region
      $region37: #{just_efficientnet_forward.3} parent=5 // pred_check
        %p537 = pneg %p536
      $region38: #{just_efficientnet_forward.3} parent=5 // pred_check_branch
        %539 = sbr.rel (%p537) target = $region40
      $region39: #{just_efficientnet_forward.3} parent=5 // pred_region
        %s540 = ssub.s32 %s12, 2
        // Predicated region
        $region41: #{just_efficientnet_forward.3} parent=39 // pred_check
          %p541 = pneg %p139
        $region42: #{just_efficientnet_forward.3} parent=39 // pred_check_branch
          %543 = sbr.rel (%p541) target = $region44
        $region43: #{just_efficientnet_forward.3} parent=39 // pred_region
          %s544 = sand.u32 %s124, 1
          %s545 = scalar_lea.sflag [#allocation3], %s544
          %s546 = sand.u32 %s124, 1
          %s547 = smul.addr %s546, 64
          %s548 = scalar_lea.vmem [#allocation2], %s547
          %549 = dma.done %s545, 1024
        $region44: #{just_efficientnet_forward.3} parent=39 // pred_fallthru
          _
      $region40: #{just_efficientnet_forward.3} parent=5 // pred_fallthru
        _
    $region6: #{just_efficientnet_forward.3} parent=1 // loop_footer
      %s16 = sadd.s32 1, %s12
    $region7: #{just_efficientnet_forward.3} parent=1 // loop_footer_branch
      %11 = sbr.rel target = $region3
    $region8: #{just_efficientnet_forward.3} parent=1 // loop_exit
      _
    %550 = vsyncpa [#allocation3], 1
    %s551 = scalar_lea.sflag [#allocation3], 1
    %552 = vsyncpa %s551, 1

// kernel: just_efficientnet_forward.2
$region0: #{just_efficientnet_forward.2}
  #allocation0 [shape = 'u32[]', space=smem, size = 0x4, offset = 0x4, fixed_abs, tag = 'smem constant byte address 0x4 - core index']
  #allocation1 [shape = 'u32[144,128]{1,0:T(1,128)}', space=vmem, size = 0x12000, scoped, tag = 'internal scratch']
  #allocation2 [shape = 'f32[8,1280]{1,0:T(8,128)}', space=vmem, size = 0xa000, scoped, tag = 'scratch operand']
  %s0 = inlined_call_operand.vmem [shape: bf16[8,3072], index: 0, kind: input, shape index: {}]
  %s1 = inlined_call_operand.hbm [shape: bf16[3072,1280], index: 1, kind: input, shape index: {}]
  %s2 = inlined_call_operand.hbm [shape: f32[1,1280], index: 2, kind: input, shape index: {}]
  %s3 = inlined_call_operand.hbm [shape: bf16[1280,128], index: 3, kind: input, shape index: {}]
  %s4 = inlined_call_operand.hbm [shape: f32[1,128], index: 4, kind: input, shape index: {}]
  %s5 = inlined_call_operand.vmem [shape: f32[8,128], index: 5, kind: output, shape index: {}]
  %s6 = sld [smem:[#allocation0]]
  $region81: #{just_efficientnet_forward.2} parent=0
    _
  %s8 = ssub.s32 1, %s6
  %s9 = scalar_select 0, %s8, %s6
  $region1: #{just_efficientnet_forward.2} parent=0
    #allocation3 [shape = 'u8[7864320]{0}', space=vmem, size = 0x780000, scoped, tag = 'input window, operand 1']
    #allocation4 [shape = 's32[2]{0}', space=sflag, size = 0x8, scoped, tag = 'scoped memory for just_efficientnet_forward.2']
    #allocation5 [shape = 'u8[5120]{0}', space=vmem, size = 0x1400, scoped, tag = 'input window, operand 2, single buffered']
    #allocation6 [shape = 's32[1]{0}', space=sflag, size = 0x4, scoped, tag = 'scoped memory for just_efficientnet_forward.2']
    #allocation7 [shape = 'u8[327680]{0}', space=vmem, size = 0x50000, scoped, tag = 'input window, operand 3, single buffered']
    #allocation8 [shape = 'u8[512]{0}', space=vmem, size = 0x400, scoped, tag = 'input window, operand 4, single buffered']
    #allocation9 [shape = 's32[1]{0}', space=sflag, size = 0x4, scoped, tag = 'scoped memory for just_efficientnet_forward.2']
    %10 = vsyncpa [#allocation4], 0
    %s11 = scalar_lea.sflag [#allocation4], 1
    %12 = vsyncpa %s11, 0
    %13 = vsyncpa [#allocation6], 0
    %14 = vsyncpa [#allocation9], 0
    loop: start=0, step=1, limit=4
    $region2: #{just_efficientnet_forward.2} parent=1 // loop_pre_header
      _
    $region3: #{just_efficientnet_forward.2} parent=1 // loop_header
      %s16 = sphi 0, %s20
      %p17 = scmp.ge.s32.totalorder %s16, 4
      %s23 = sphi 0, %s35
      %s24 = sphi 0, %s31
      %s25 = sphi 0, %s23
      %s26 = sphi 0, %s24
      %s27 = sphi 0, %s25
      %s28 = sphi 0, %s26
      %s40 = sphi 0, %s42
      %s43 = sphi 0, %s40
      %s44 = sphi 0, %s43
      %s60 = sphi 0, %s44
      %s66 = sphi 0, %s68
      %s69 = sphi 0, %s66
      %s70 = sphi 0, %s69
      %s86 = sphi 0, %s70
      %s90 = sphi 0, %s90
      %s92 = sphi 0, %s90
      %s93 = sphi 0, %s92
      %s107 = sphi 0, %s93
      %s111 = sphi 0, %s111
      %s113 = sphi 0, %s111
      %s114 = sphi 0, %s113
      %s128 = sphi 0, %s114
      %s132 = sphi 0, %s132
      %s134 = sphi 0, %s132
      %s135 = sphi 0, %s134
      %s149 = sphi 0, %s135
      %s155 = sphi 0, %s157
      %s158 = sphi 0, %s155
      %s159 = sphi 0, %s158
      %s175 = sphi 0, %s159
    $region4: #{just_efficientnet_forward.2} parent=1 // loop_header_branch
      %19 = sbr.rel (%p17) target = $region8
    $region5: #{just_efficientnet_forward.2} parent=1 // loop_body
      %s21 = ssub.s32 %s16, 1
      %s22 = ssub.s32 %s16, 2
      %s29 = sadd.s32 1, %s24
      %p30 = scmp.ge.s32.totalorder %s29, 2
      %s31 = scalar_select %p30, 0, %s29
      %s32 = sadd.s32 1, %s23
      %s33 = scalar_select %p30, %s32, %s23
      %p34 = scmp.ge.s32.totalorder %s33, 1
      %s35 = scalar_select %p34, 0, %s33
      %s36 = ssub.s32 %s23, %s35
      %s37 = ssub.s32 %s24, %s31
      %s38 = sor.u32 %s36, %s37
      %p39 = scmp.eq.s32.totalorder %s38, 0
      %s41 = sadd.s32 %s40, 1
      %s42 = scalar_select %p39, %s40, %s41
      %p45 = pneg %p39
      %p46 = scmp.eq.s32.totalorder %s16, 1
      %p47 = por %p45, %p46
      %p48 = scmp.ne.s32.totalorder %s40, %s43
      %p49 = scmp.eq.s32.totalorder %s16, 0
      %p50 = por %p48, %p49
      %p51 = scmp.ne.s32.totalorder %s40, %s43
      %p52 = scmp.eq.s32.totalorder %s21, 1
      %p53 = por %p51, %p52
      %p54 = scmp.ne.s32.totalorder %s43, %s44
      %p55 = scmp.eq.s32.totalorder %s21, 0
      %p56 = por %p54, %p55
      %p57 = scmp.ne.s32.totalorder %s43, %s44
      %p58 = scmp.eq.s32.totalorder %s22, 1
      %p59 = por %p57, %p58
      %p61 = scmp.ne.s32.totalorder %s44, %s60
      %p62 = scmp.eq.s32.totalorder %s22, 0
      %p63 = por %p61, %p62
      %s64 = ssub.s32 %s24, %s31
      %p65 = scmp.eq.s32.totalorder %s64, 0
      %s67 = sadd.s32 %s66, 1
      %s68 = scalar_select %p65, %s66, %s67
      %p71 = pneg %p65
      %p72 = scmp.eq.s32.totalorder %s16, 1
      %p73 = por %p71, %p72
      %p74 = scmp.ne.s32.totalorder %s66, %s69
      %p75 = scmp.eq.s32.totalorder %s16, 0
      %p76 = por %p74, %p75
      %p77 = scmp.ne.s32.totalorder %s66, %s69
      %p78 = scmp.eq.s32.totalorder %s21, 1
      %p79 = por %p77, %p78
      %p80 = scmp.ne.s32.totalorder %s69, %s70
      %p81 = scmp.eq.s32.totalorder %s21, 0
      %p82 = por %p80, %p81
      %p83 = scmp.ne.s32.totalorder %s69, %s70
      %p84 = scmp.eq.s32.totalorder %s22, 1
      %p85 = por %p83, %p84
      %p87 = scmp.ne.s32.totalorder %s70, %s86
      %p88 = scmp.eq.s32.totalorder %s22, 0
      %p89 = por %p87, %p88
      %s91 = sadd.s32 %s90, 1
      %p94 = scmp.eq.s32.totalorder %s16, 1
      %p95 = scmp.ne.s32.totalorder %s90, %s92
      %p96 = scmp.eq.s32.totalorder %s16, 0
      %p97 = por %p95, %p96
      %p98 = scmp.ne.s32.totalorder %s90, %s92
      %p99 = scmp.eq.s32.totalorder %s21, 1
      %p100 = por %p98, %p99
      %p101 = scmp.ne.s32.totalorder %s92, %s93
      %p102 = scmp.eq.s32.totalorder %s21, 0
      %p103 = por %p101, %p102
      %p104 = scmp.ne.s32.totalorder %s92, %s93
      %p105 = scmp.eq.s32.totalorder %s22, 1
      %p106 = por %p104, %p105
      %p108 = scmp.ne.s32.totalorder %s93, %s107
      %p109 = scmp.eq.s32.totalorder %s22, 0
      %p110 = por %p108, %p109
      %s112 = sadd.s32 %s111, 1
      %p115 = scmp.eq.s32.totalorder %s16, 1
      %p116 = scmp.ne.s32.totalorder %s111, %s113
      %p117 = scmp.eq.s32.totalorder %s16, 0
      %p118 = por %p116, %p117
      %p119 = scmp.ne.s32.totalorder %s111, %s113
      %p120 = scmp.eq.s32.totalorder %s21, 1
      %p121 = por %p119, %p120
      %p122 = scmp.ne.s32.totalorder %s113, %s114
      %p123 = scmp.eq.s32.totalorder %s21, 0
      %p124 = por %p122, %p123
      %p125 = scmp.ne.s32.totalorder %s113, %s114
      %p126 = scmp.eq.s32.totalorder %s22, 1
      %p127 = por %p125, %p126
      %p129 = scmp.ne.s32.totalorder %s114, %s128
      %p130 = scmp.eq.s32.totalorder %s22, 0
      %p131 = por %p129, %p130
      %s133 = sadd.s32 %s132, 1
      %p136 = scmp.eq.s32.totalorder %s16, 1
      %p137 = scmp.ne.s32.totalorder %s132, %s134
      %p138 = scmp.eq.s32.totalorder %s16, 0
      %p139 = por %p137, %p138
      %p140 = scmp.ne.s32.totalorder %s132, %s134
      %p141 = scmp.eq.s32.totalorder %s21, 1
      %p142 = por %p140, %p141
      %p143 = scmp.ne.s32.totalorder %s134, %s135
      %p144 = scmp.eq.s32.totalorder %s21, 0
      %p145 = por %p143, %p144
      %p146 = scmp.ne.s32.totalorder %s134, %s135
      %p147 = scmp.eq.s32.totalorder %s22, 1
      %p148 = por %p146, %p147
      %p150 = scmp.ne.s32.totalorder %s135, %s149
      %p151 = scmp.eq.s32.totalorder %s22, 0
      %p152 = por %p150, %p151
      %s153 = ssub.s32 %s23, %s35
      %p154 = scmp.eq.s32.totalorder %s153, 0
      %s156 = sadd.s32 %s155, 1
      %s157 = scalar_select %p154, %s155, %s156
      %p160 = pneg %p154
      %p161 = scmp.eq.s32.totalorder %s16, 1
      %p162 = por %p160, %p161
      %p163 = scmp.ne.s32.totalorder %s155, %s158
      %p164 = scmp.eq.s32.totalorder %s16, 0
      %p165 = por %p163, %p164
      %p166 = scmp.ne.s32.totalorder %s155, %s158
      %p167 = scmp.eq.s32.totalorder %s21, 1
      %p168 = por %p166, %p167
      %p169 = scmp.ne.s32.totalorder %s158, %s159
      %p170 = scmp.eq.s32.totalorder %s21, 0
      %p171 = por %p169, %p170
      %p172 = scmp.ne.s32.totalorder %s158, %s159
      %p173 = scmp.eq.s32.totalorder %s22, 1
      %p174 = por %p172, %p173
      %p176 = scmp.ne.s32.totalorder %s159, %s175
      %p177 = scmp.eq.s32.totalorder %s22, 0
      %p178 = por %p176, %p177
      %p179 = scmp.le.s32.totalorder 1, %s16
      %p180 = scmp.lt.s32.totalorder %s16, 3
      %p181 = pnand %p179, %p180
      %p182 = pneg %p181
      // Predicated region
      $region9: #{just_efficientnet_forward.2} parent=5 // pred_check
        _
      $region10: #{just_efficientnet_forward.2} parent=5 // pred_check_branch
        %184 = sbr.rel (%p181) target = $region12
      $region11: #{just_efficientnet_forward.2} parent=5 // pred_region
        %s185 = ssub.s32 %s16, 1
        // Predicated region
        $region13: #{just_efficientnet_forward.2} parent=11 // pred_check
          %p186 = pneg %p103
        $region14: #{just_efficientnet_forward.2} parent=11 // pred_check_branch
          %188 = sbr.rel (%p186) target = $region16
        $region15: #{just_efficientnet_forward.2} parent=11 // pred_region
          %s190 = ssub.s32 160, 160
          %191 = vsyncadd [#allocation6], %s190
          %s193 = sshll.u32 [#allocation5], 4
          %s194 = int_to_ptr.vmem [resolvable:$true] %s193
          %196 = dma.hbm_to_vmem [thread:$0]  %s2, 160, %s194, [#allocation6]
        $region16: #{just_efficientnet_forward.2} parent=11 // pred_fallthru
          _
        // Predicated region
        $region17: #{just_efficientnet_forward.2} parent=11 // pred_check
          %p197 = pneg %p124
        $region18: #{just_efficientnet_forward.2} parent=11 // pred_check_branch
          %199 = sbr.rel (%p197) target = $region20
        $region19: #{just_efficientnet_forward.2} parent=11 // pred_region
          %s201 = ssub.s32 10240, 10240
          %202 = vsyncadd [#allocation6], %s201
          %s203 = sshll.u32 [#allocation7], 4
          %s204 = int_to_ptr.vmem [resolvable:$true] %s203
          %209 = dma.hbm_to_vmem [thread:$0]  %s3, 10240, %s204, [#allocation6], 64, 64, 4
        $region20: #{just_efficientnet_forward.2} parent=11 // pred_fallthru
          _
        // Predicated region
        $region21: #{just_efficientnet_forward.2} parent=11 // pred_check
          %p210 = pneg %p145
        $region22: #{just_efficientnet_forward.2} parent=11 // pred_check_branch
          %212 = sbr.rel (%p210) target = $region24
        $region23: #{just_efficientnet_forward.2} parent=11 // pred_region
          %s214 = ssub.s32 16, 16
          %215 = vsyncadd [#allocation9], %s214
          %s217 = sshll.u32 [#allocation8], 4
          %s218 = int_to_ptr.vmem [resolvable:$true] %s217
          %220 = dma.hbm_to_vmem [thread:$0]  %s4, 16, %s218, [#allocation9]
        $region24: #{just_efficientnet_forward.2} parent=11 // pred_fallthru
          _
      $region12: #{just_efficientnet_forward.2} parent=5 // pred_fallthru
        _
      %p221 = scmp.lt.s32.totalorder %s16, 2
      // Predicated region
      $region25: #{just_efficientnet_forward.2} parent=5 // pred_check
        %p222 = pneg %p221
      $region26: #{just_efficientnet_forward.2} parent=5 // pred_check_branch
        %224 = sbr.rel (%p222) target = $region28
      $region27: #{just_efficientnet_forward.2} parent=5 // pred_region
        // Predicated region
        $region29: #{just_efficientnet_forward.2} parent=27 // pred_check
          %p225 = pneg %p50
        $region30: #{just_efficientnet_forward.2} parent=27 // pred_check_branch
          %227 = sbr.rel (%p225) target = $region32
        $region31: #{just_efficientnet_forward.2} parent=27 // pred_region
          %s228 = smul.u32 12, %s24
          %p229 = scmp.lt.s32.totalorder %s23, 0
          %s230 = scalar_select %p229, %s23, 0
          %p231 = scmp.lt.s32.totalorder %s228, 23
          %s232 = scalar_select %p231, %s228, 23
          %s233 = smul.addr %s230, 24
          %s234 = sadd.s32 %s232, %s233
          %s235 = smul.addr %s234, 4
          %s236 = scalar_lea.vmem %s0, %s235
          %s237 = smul.u32 12, %s24
        $region32: #{just_efficientnet_forward.2} parent=27 // pred_fallthru
          _
        // Predicated region
        $region33: #{just_efficientnet_forward.2} parent=27 // pred_check
          %p238 = pneg %p76
        $region34: #{just_efficientnet_forward.2} parent=27 // pred_check_branch
          %240 = sbr.rel (%p238) target = $region36
        $region35: #{just_efficientnet_forward.2} parent=27 // pred_region
          %s241 = sand.u32 %s66, 1
          %s242 = scalar_lea.sflag [#allocation4], %s241
          %s243 = sand.u32 %s66, 1
          %s244 = smul.addr %s243, 7680
          %s245 = scalar_lea.vmem [#allocation3], %s244
          %s246 = smul.u32 192, %s24
          %s248 = ssub.s32 122880, 122880
          %249 = vsyncadd %s242, %s248
          %s250 = smul.addr %s246, 10
          %s251 = smul.addr %s250, 64
          %s252 = scalar_lea.hbm %s1, %s251
          %s253 = sshll.u32 %s245, 4
          %s254 = int_to_ptr.vmem [resolvable:$true] %s253
          %259 = dma.hbm_to_vmem [thread:$0]  %s252, 122880, %s254, %s242, 640, 640, 40
        $region36: #{just_efficientnet_forward.2} parent=27 // pred_fallthru
          _
      $region28: #{just_efficientnet_forward.2} parent=5 // pred_fallthru
        _
      %p260 = scmp.le.s32.totalorder 1, %s16
      %p261 = scmp.lt.s32.totalorder %s16, 3
      %p262 = pnand %p260, %p261
      %p263 = pneg %p262
      // Predicated region
      $region37: #{just_efficientnet_forward.2} parent=5 // pred_check
        _
      $region38: #{just_efficientnet_forward.2} parent=5 // pred_check_branch
        %265 = sbr.rel (%p262) target = $region40
      $region39: #{just_efficientnet_forward.2} parent=5 // pred_region
        %s266 = ssub.s32 %s16, 1
        %s267 = sand.u32 %s69, 1
        %s268 = scalar_lea.sflag [#allocation4], %s267
        %s269 = sand.u32 %s69, 1
        %s270 = smul.addr %s269, 7680
        %s271 = scalar_lea.vmem [#allocation3], %s270
        // Predicated region
        $region41: #{just_efficientnet_forward.2} parent=39 // pred_check
          %p272 = pneg %p82
        $region42: #{just_efficientnet_forward.2} parent=39 // pred_check_branch
          %274 = sbr.rel (%p272) target = $region44
        $region43: #{just_efficientnet_forward.2} parent=39 // pred_region
          %275 = dma.done %s268, 122880
        $region44: #{just_efficientnet_forward.2} parent=39 // pred_fallthru
          _
        // Predicated region
        $region45: #{just_efficientnet_forward.2} parent=39 // pred_check
          %p276 = pneg %p103
        $region46: #{just_efficientnet_forward.2} parent=39 // pred_check_branch
          %278 = sbr.rel (%p276) target = $region48
        $region47: #{just_efficientnet_forward.2} parent=39 // pred_region
          %279 = dma.done [#allocation6], 160
        $region48: #{just_efficientnet_forward.2} parent=39 // pred_fallthru
          _
        // Predicated region
        $region49: #{just_efficientnet_forward.2} parent=39 // pred_check
          %p280 = pneg %p124
        $region50: #{just_efficientnet_forward.2} parent=39 // pred_check_branch
          %282 = sbr.rel (%p280) target = $region52
        $region51: #{just_efficientnet_forward.2} parent=39 // pred_region
          %283 = dma.done [#allocation6], 10240
        $region52: #{just_efficientnet_forward.2} parent=39 // pred_fallthru
          _
        // Predicated region
        $region53: #{just_efficientnet_forward.2} parent=39 // pred_check
          %p284 = pneg %p145
        $region54: #{just_efficientnet_forward.2} parent=39 // pred_check_branch
          %286 = sbr.rel (%p284) target = $region56
        $region55: #{just_efficientnet_forward.2} parent=39 // pred_region
          %287 = dma.done [#allocation9], 16
        $region56: #{just_efficientnet_forward.2} parent=39 // pred_fallthru
          _
        %s288 = smul.u32 12, %s26
        %p289 = scmp.lt.s32.totalorder %s25, 0
        %s290 = scalar_select %p289, %s25, 0
        %p291 = scmp.lt.s32.totalorder %s288, 23
        %s292 = scalar_select %p291, %s288, 23
        %s293 = smul.addr %s290, 24
        %s294 = sadd.s32 %s292, %s293
        %s295 = smul.addr %s294, 4
        %s296 = scalar_lea.vmem %s0, %s295
        %p297 = pneg %p56
        %p298 = pneg %p53
        %s299 = sand.u32 %s69, 1
        %s300 = scalar_lea.sflag [#allocation4], %s299
        %s301 = sand.u32 %s69, 1
        %s302 = smul.addr %s301, 7680
        %s303 = scalar_lea.vmem [#allocation3], %s302
        %p304 = pneg %p82
        %p305 = pneg %p79
        %p306 = pneg %p103
        %p307 = pneg %p100
        %p308 = pneg %p124
        %p309 = pneg %p121
        %p310 = pneg %p145
        %p311 = pneg %p142
        %p312 = pneg %p171
        %p313 = pneg %p168
        %p314 = scmp.lt.s32.totalorder %s25, 0
        %s315 = scalar_select %p314, %s25, 0
        %s316 = smul.addr %s315, 8
        %s317 = scalar_lea.vmem %s5, %s316
        %s318 = smul.u32 12, %s26
        %p319 = scmp.lt.s32.totalorder %s25, 0
        %s320 = scalar_select %p319, %s25, 0
        %p321 = scmp.lt.s32.totalorder %s318, 23
        %s322 = scalar_select %p321, %s318, 23
        %s323 = smul.addr %s320, 24
        %s324 = sadd.s32 %s322, %s323
        %s325 = smul.addr %s324, 4
        %s326 = scalar_lea.vmem %s0, %s325
        %s327 = smul.u32 12, %s26
        %s328 = smul.u32 192, %s26
        %p329 = scmp.lt.s32.totalorder %s25, 0
        %s330 = scalar_select %p329, %s25, 0
        %s331 = smul.addr %s330, 8
        %s332 = scalar_lea.vmem %s5, %s331
        %v334 = vld [vmem:[%s326] sm:$0xff]
        %v335 = vld [vmem:[%s326 + $0x8] sm:$0xff]
        %v336 = vld [vmem:[%s326 + $0x10] sm:$0xff]
        %v337 = vld [vmem:[%s326 + $0x18] sm:$0xff]
        %v338 = vld [vmem:[%s326 + $0x20] sm:$0xff]
        %v339 = vld [vmem:[%s326 + $0x28] sm:$0xff]
        %v340 = vld [vmem:[%s271] sm:$0xff]
        %v341 = vld [vmem:[%s271 + $0x8] sm:$0xff]
        %v342 = vld [vmem:[%s271 + $0x10] sm:$0xff]
        %v343 = vld [vmem:[%s271 + $0x18] sm:$0xff]
        %v344 = vld [vmem:[%s271 + $0x20] sm:$0xff]
        %v345 = vld [vmem:[%s271 + $0x28] sm:$0xff]
        %v346 = vld [vmem:[%s271 + $0x30] sm:$0xff]
        %v347 = vld [vmem:[%s271 + $0x38] sm:$0xff]
        %v348 = vld [vmem:[%s271 + $0x40] sm:$0xff]
        %v349 = vld [vmem:[%s271 + $0x48] sm:$0xff]
        %v350 = vld [vmem:[%s271 + $0x50] sm:$0xff]
        %v351 = vld [vmem:[%s271 + $0x58] sm:$0xff]
        %v352 = vld [vmem:[%s271 + $0x60] sm:$0xff]
        %v353 = vld [vmem:[%s271 + $0x68] sm:$0xff]
        %v354 = vld [vmem:[%s271 + $0x70] sm:$0xff]
        %v355 = vld [vmem:[%s271 + $0x78] sm:$0xff]
        %v356 = vld [vmem:[%s271 + $0x80] sm:$0xff]
        %v357 = vld [vmem:[%s271 + $0x88] sm:$0xff]
        %v358 = vld [vmem:[%s271 + $0x90] sm:$0xff]
        %v359 = vld [vmem:[%s271 + $0x98] sm:$0xff]
        %v360 = vld [vmem:[%s271 + $0xa0] sm:$0xff]
        %v361 = vld [vmem:[%s271 + $0xa8] sm:$0xff]
        %v362 = vld [vmem:[%s271 + $0xb0] sm:$0xff]
        %v363 = vld [vmem:[%s271 + $0xb8] sm:$0xff]
        %v364 = vld [vmem:[%s271 + $0xc0] sm:$0xff]
        %v365 = vld [vmem:[%s271 + $0xc8] sm:$0xff]
        %v366 = vld [vmem:[%s271 + $0xd0] sm:$0xff]
        %v367 = vld [vmem:[%s271 + $0xd8] sm:$0xff]
        %v368 = vld [vmem:[%s271 + $0xe0] sm:$0xff]
        %v369 = vld [vmem:[%s271 + $0xe8] sm:$0xff]
        %v370 = vld [vmem:[%s271 + $0xf0] sm:$0xff]
        %v371 = vld [vmem:[%s271 + $0xf8] sm:$0xff]
        %v372 = vld [vmem:[%s271 + $0x100] sm:$0xff]
        %v373 = vld [vmem:[%s271 + $0x108] sm:$0xff]
        %v374 = vld [vmem:[%s271 + $0x110] sm:$0xff]
        %v375 = vld [vmem:[%s271 + $0x118] sm:$0xff]
        %v376 = vld [vmem:[%s271 + $0x120] sm:$0xff]
        %v377 = vld [vmem:[%s271 + $0x128] sm:$0xff]
        %v378 = vld [vmem:[%s271 + $0x130] sm:$0xff]
        %v379 = vld [vmem:[%s271 + $0x138] sm:$0xff]
        %v380 = vld [vmem:[%s271 + $0x140] sm:$0xff]
        %v381 = vld [vmem:[%s271 + $0x148] sm:$0xff]
        %v382 = vld [vmem:[%s271 + $0x150] sm:$0xff]
        %v383 = vld [vmem:[%s271 + $0x158] sm:$0xff]
        %v384 = vld [vmem:[%s271 + $0x160] sm:$0xff]
        %v385 = vld [vmem:[%s271 + $0x168] sm:$0xff]
        %v386 = vld [vmem:[%s271 + $0x170] sm:$0xff]
        %v387 = vld [vmem:[%s271 + $0x178] sm:$0xff]
        %v388 = vld [vmem:[%s271 + $0x180] sm:$0xff]
        %v389 = vld [vmem:[%s271 + $0x188] sm:$0xff]
        %v390 = vld [vmem:[%s271 + $0x190] sm:$0xff]
        %v391 = vld [vmem:[%s271 + $0x198] sm:$0xff]
        %v392 = vld [vmem:[%s271 + $0x1a0] sm:$0xff]
        %v393 = vld [vmem:[%s271 + $0x1a8] sm:$0xff]
        %v394 = vld [vmem:[%s271 + $0x1b0] sm:$0xff]
        %v395 = vld [vmem:[%s271 + $0x1b8] sm:$0xff]
        %v396 = vld [vmem:[%s271 + $0x1c0] sm:$0xff]
        %v397 = vld [vmem:[%s271 + $0x1c8] sm:$0xff]
        %v398 = vld [vmem:[%s271 + $0x1d0] sm:$0xff]
        %v399 = vld [vmem:[%s271 + $0x1d8] sm:$0xff]
        %v400 = vld [vmem:[%s271 + $0x1e0] sm:$0xff]
        %v401 = vld [vmem:[%s271 + $0x1e8] sm:$0xff]
        %v402 = vld [vmem:[%s271 + $0x1f0] sm:$0xff]
        %v403 = vld [vmem:[%s271 + $0x1f8] sm:$0xff]
        %v404 = vld [vmem:[%s271 + $0x200] sm:$0xff]
        %v405 = vld [vmem:[%s271 + $0x208] sm:$0xff]
        %v406 = vld [vmem:[%s271 + $0x210] sm:$0xff]
        %v407 = vld [vmem:[%s271 + $0x218] sm:$0xff]
        %v408 = vld [vmem:[%s271 + $0x220] sm:$0xff]
        %v409 = vld [vmem:[%s271 + $0x228] sm:$0xff]
        %v410 = vld [vmem:[%s271 + $0x230] sm:$0xff]
        %v411 = vld [vmem:[%s271 + $0x238] sm:$0xff]
        %v412 = vld [vmem:[%s271 + $0x240] sm:$0xff]
        %v413 = vld [vmem:[%s271 + $0x248] sm:$0xff]
        %v414 = vld [vmem:[%s271 + $0x250] sm:$0xff]
        %v415 = vld [vmem:[%s271 + $0x258] sm:$0xff]
        %v416 = vld [vmem:[%s271 + $0x260] sm:$0xff]
        %v417 = vld [vmem:[%s271 + $0x268] sm:$0xff]
        %v418 = vld [vmem:[%s271 + $0x270] sm:$0xff]
        %v419 = vld [vmem:[%s271 + $0x278] sm:$0xff]
        %v420 = vld [vmem:[%s271 + $0x280] sm:$0xff]
        %v421 = vld [vmem:[%s271 + $0x288] sm:$0xff]
        %v422 = vld [vmem:[%s271 + $0x290] sm:$0xff]
        %v423 = vld [vmem:[%s271 + $0x298] sm:$0xff]
        %v424 = vld [vmem:[%s271 + $0x2a0] sm:$0xff]
        %v425 = vld [vmem:[%s271 + $0x2a8] sm:$0xff]
        %v426 = vld [vmem:[%s271 + $0x2b0] sm:$0xff]
        %v427 = vld [vmem:[%s271 + $0x2b8] sm:$0xff]
        %v428 = vld [vmem:[%s271 + $0x2c0] sm:$0xff]
        %v429 = vld [vmem:[%s271 + $0x2c8] sm:$0xff]
        %v430 = vld [vmem:[%s271 + $0x2d0] sm:$0xff]
        %v431 = vld [vmem:[%s271 + $0x2d8] sm:$0xff]
        %v432 = vld [vmem:[%s271 + $0x2e0] sm:$0xff]
        %v433 = vld [vmem:[%s271 + $0x2e8] sm:$0xff]
        %v434 = vld [vmem:[%s271 + $0x2f0] sm:$0xff]
        %v435 = vld [vmem:[%s271 + $0x2f8] sm:$0xff]
        %v436 = vld [vmem:[%s271 + $0x300] sm:$0xff]
        %v437 = vld [vmem:[%s271 + $0x308] sm:$0xff]
        %v438 = vld [vmem:[%s271 + $0x310] sm:$0xff]
        %v439 = vld [vmem:[%s271 + $0x318] sm:$0xff]
        %v440 = vld [vmem:[%s271 + $0x320] sm:$0xff]
        %v441 = vld [vmem:[%s271 + $0x328] sm:$0xff]
        %v442 = vld [vmem:[%s271 + $0x330] sm:$0xff]
        %v443 = vld [vmem:[%s271 + $0x338] sm:$0xff]
        %v444 = vld [vmem:[%s271 + $0x340] sm:$0xff]
        %v445 = vld [vmem:[%s271 + $0x348] sm:$0xff]
        %v446 = vld [vmem:[%s271 + $0x350] sm:$0xff]
        %v447 = vld [vmem:[%s271 + $0x358] sm:$0xff]
        %v448 = vld [vmem:[%s271 + $0x360] sm:$0xff]
        %v449 = vld [vmem:[%s271 + $0x368] sm:$0xff]
        %v450 = vld [vmem:[%s271 + $0x370] sm:$0xff]
        %v451 = vld [vmem:[%s271 + $0x378] sm:$0xff]
        %v452 = vld [vmem:[%s271 + $0x380] sm:$0xff]
        %v453 = vld [vmem:[%s271 + $0x388] sm:$0xff]
        %v454 = vld [vmem:[%s271 + $0x390] sm:$0xff]
        %v455 = vld [vmem:[%s271 + $0x398] sm:$0xff]
        %v456 = vld [vmem:[%s271 + $0x3a0] sm:$0xff]
        %v457 = vld [vmem:[%s271 + $0x3a8] sm:$0xff]
        %v458 = vld [vmem:[%s271 + $0x3b0] sm:$0xff]
        %v459 = vld [vmem:[%s271 + $0x3b8] sm:$0xff]
        %v460 = vld [vmem:[%s271 + $0x3c0] sm:$0xff]
        %v461 = vld [vmem:[%s271 + $0x3c8] sm:$0xff]
        %v462 = vld [vmem:[%s271 + $0x3d0] sm:$0xff]
        %v463 = vld [vmem:[%s271 + $0x3d8] sm:$0xff]
        %v464 = vld [vmem:[%s271 + $0x3e0] sm:$0xff]
        %v465 = vld [vmem:[%s271 + $0x3e8] sm:$0xff]
        %v466 = vld [vmem:[%s271 + $0x3f0] sm:$0xff]
        %v467 = vld [vmem:[%s271 + $0x3f8] sm:$0xff]
        %v468 = vld [vmem:[%s271 + $0x400] sm:$0xff]
        %v469 = vld [vmem:[%s271 + $0x408] sm:$0xff]
        %v470 = vld [vmem:[%s271 + $0x410] sm:$0xff]
        %v471 = vld [vmem:[%s271 + $0x418] sm:$0xff]
        %v472 = vld [vmem:[%s271 + $0x420] sm:$0xff]
        %v473 = vld [vmem:[%s271 + $0x428] sm:$0xff]
        %v474 = vld [vmem:[%s271 + $0x430] sm:$0xff]
        %v475 = vld [vmem:[%s271 + $0x438] sm:$0xff]
        %v476 = vld [vmem:[%s271 + $0x440] sm:$0xff]
        %v477 = vld [vmem:[%s271 + $0x448] sm:$0xff]
        %v478 = vld [vmem:[%s271 + $0x450] sm:$0xff]
        %v479 = vld [vmem:[%s271 + $0x458] sm:$0xff]
        %v480 = vld [vmem:[%s271 + $0x460] sm:$0xff]
        %v481 = vld [vmem:[%s271 + $0x468] sm:$0xff]
        %v482 = vld [vmem:[%s271 + $0x470] sm:$0xff]
        %v483 = vld [vmem:[%s271 + $0x478] sm:$0xff]
        %v484 = vld [vmem:[%s271 + $0x480] sm:$0xff]
        %v485 = vld [vmem:[%s271 + $0x488] sm:$0xff]
        %v486 = vld [vmem:[%s271 + $0x490] sm:$0xff]
        %v487 = vld [vmem:[%s271 + $0x498] sm:$0xff]
        %v488 = vld [vmem:[%s271 + $0x4a0] sm:$0xff]
        %v489 = vld [vmem:[%s271 + $0x4a8] sm:$0xff]
        %v490 = vld [vmem:[%s271 + $0x4b0] sm:$0xff]
        %v491 = vld [vmem:[%s271 + $0x4b8] sm:$0xff]
        %v492 = vld [vmem:[%s271 + $0x4c0] sm:$0xff]
        %v493 = vld [vmem:[%s271 + $0x4c8] sm:$0xff]
        %v494 = vld [vmem:[%s271 + $0x4d0] sm:$0xff]
        %v495 = vld [vmem:[%s271 + $0x4d8] sm:$0xff]
        %v496 = vld [vmem:[%s271 + $0x4e0] sm:$0xff]
        %v497 = vld [vmem:[%s271 + $0x4e8] sm:$0xff]
        %v498 = vld [vmem:[%s271 + $0x4f0] sm:$0xff]
        %v499 = vld [vmem:[%s271 + $0x4f8] sm:$0xff]
        %v500 = vld [vmem:[%s271 + $0x500] sm:$0xff]
        %v501 = vld [vmem:[%s271 + $0x508] sm:$0xff]
        %v502 = vld [vmem:[%s271 + $0x510] sm:$0xff]
        %v503 = vld [vmem:[%s271 + $0x518] sm:$0xff]
        %v504 = vld [vmem:[%s271 + $0x520] sm:$0xff]
        %v505 = vld [vmem:[%s271 + $0x528] sm:$0xff]
        %v506 = vld [vmem:[%s271 + $0x530] sm:$0xff]
        %v507 = vld [vmem:[%s271 + $0x538] sm:$0xff]
        %v508 = vld [vmem:[%s271 + $0x540] sm:$0xff]
        %v509 = vld [vmem:[%s271 + $0x548] sm:$0xff]
        %v510 = vld [vmem:[%s271 + $0x550] sm:$0xff]
        %v511 = vld [vmem:[%s271 + $0x558] sm:$0xff]
        %v512 = vld [vmem:[%s271 + $0x560] sm:$0xff]
        %v513 = vld [vmem:[%s271 + $0x568] sm:$0xff]
        %v514 = vld [vmem:[%s271 + $0x570] sm:$0xff]
        %v515 = vld [vmem:[%s271 + $0x578] sm:$0xff]
        %v516 = vld [vmem:[%s271 + $0x580] sm:$0xff]
        %v517 = vld [vmem:[%s271 + $0x588] sm:$0xff]
        %v518 = vld [vmem:[%s271 + $0x590] sm:$0xff]
        %v519 = vld [vmem:[%s271 + $0x598] sm:$0xff]
        %v520 = vld [vmem:[%s271 + $0x5a0] sm:$0xff]
        %v521 = vld [vmem:[%s271 + $0x5a8] sm:$0xff]
        %v522 = vld [vmem:[%s271 + $0x5b0] sm:$0xff]
        %v523 = vld [vmem:[%s271 + $0x5b8] sm:$0xff]
        %v524 = vld [vmem:[%s271 + $0x5c0] sm:$0xff]
        %v525 = vld [vmem:[%s271 + $0x5c8] sm:$0xff]
        %v526 = vld [vmem:[%s271 + $0x5d0] sm:$0xff]
        %v527 = vld [vmem:[%s271 + $0x5d8] sm:$0xff]
        %v528 = vld [vmem:[%s271 + $0x5e0] sm:$0xff]
        %v529 = vld [vmem:[%s271 + $0x5e8] sm:$0xff]
        %v530 = vld [vmem:[%s271 + $0x5f0] sm:$0xff]
        %v531 = vld [vmem:[%s271 + $0x5f8] sm:$0xff]
        %v532 = vld [vmem:[%s271 + $0x600] sm:$0xff]
        %v533 = vld [vmem:[%s271 + $0x608] sm:$0xff]
        %v534 = vld [vmem:[%s271 + $0x610] sm:$0xff]
        %v535 = vld [vmem:[%s271 + $0x618] sm:$0xff]
        %v536 = vld [vmem:[%s271 + $0x620] sm:$0xff]
        %v537 = vld [vmem:[%s271 + $0x628] sm:$0xff]
        %v538 = vld [vmem:[%s271 + $0x630] sm:$0xff]
        %v539 = vld [vmem:[%s271 + $0x638] sm:$0xff]
        %v540 = vld [vmem:[%s271 + $0x640] sm:$0xff]
        %v541 = vld [vmem:[%s271 + $0x648] sm:$0xff]
        %v542 = vld [vmem:[%s271 + $0x650] sm:$0xff]
        %v543 = vld [vmem:[%s271 + $0x658] sm:$0xff]
        %v544 = vld [vmem:[%s271 + $0x660] sm:$0xff]
        %v545 = vld [vmem:[%s271 + $0x668] sm:$0xff]
        %v546 = vld [vmem:[%s271 + $0x670] sm:$0xff]
        %v547 = vld [vmem:[%s271 + $0x678] sm:$0xff]
        %v548 = vld [vmem:[%s271 + $0x680] sm:$0xff]
        %v549 = vld [vmem:[%s271 + $0x688] sm:$0xff]
        %v550 = vld [vmem:[%s271 + $0x690] sm:$0xff]
        %v551 = vld [vmem:[%s271 + $0x698] sm:$0xff]
        %v552 = vld [vmem:[%s271 + $0x6a0] sm:$0xff]
        %v553 = vld [vmem:[%s271 + $0x6a8] sm:$0xff]
        %v554 = vld [vmem:[%s271 + $0x6b0] sm:$0xff]
        %v555 = vld [vmem:[%s271 + $0x6b8] sm:$0xff]
        %v556 = vld [vmem:[%s271 + $0x6c0] sm:$0xff]
        %v557 = vld [vmem:[%s271 + $0x6c8] sm:$0xff]
        %v558 = vld [vmem:[%s271 + $0x6d0] sm:$0xff]
        %v559 = vld [vmem:[%s271 + $0x6d8] sm:$0xff]
        %v560 = vld [vmem:[%s271 + $0x6e0] sm:$0xff]
        %v561 = vld [vmem:[%s271 + $0x6e8] sm:$0xff]
        %v562 = vld [vmem:[%s271 + $0x6f0] sm:$0xff]
        %v563 = vld [vmem:[%s271 + $0x6f8] sm:$0xff]
        %v564 = vld [vmem:[%s271 + $0x700] sm:$0xff]
        %v565 = vld [vmem:[%s271 + $0x708] sm:$0xff]
        %v566 = vld [vmem:[%s271 + $0x710] sm:$0xff]
        %v567 = vld [vmem:[%s271 + $0x718] sm:$0xff]
        %v568 = vld [vmem:[%s271 + $0x720] sm:$0xff]
        %v569 = vld [vmem:[%s271 + $0x728] sm:$0xff]
        %v570 = vld [vmem:[%s271 + $0x730] sm:$0xff]
        %v571 = vld [vmem:[%s271 + $0x738] sm:$0xff]
        %v572 = vld [vmem:[%s271 + $0x740] sm:$0xff]
        %v573 = vld [vmem:[%s271 + $0x748] sm:$0xff]
        %v574 = vld [vmem:[%s271 + $0x750] sm:$0xff]
        %v575 = vld [vmem:[%s271 + $0x758] sm:$0xff]
        %v576 = vld [vmem:[%s271 + $0x760] sm:$0xff]
        %v577 = vld [vmem:[%s271 + $0x768] sm:$0xff]
        %v578 = vld [vmem:[%s271 + $0x770] sm:$0xff]
        %v579 = vld [vmem:[%s271 + $0x778] sm:$0xff]
        %v580 = vld [vmem:[%s271 + $0x780] sm:$0xff]
        %v581 = vld [vmem:[%s271 + $0x788] sm:$0xff]
        %v582 = vld [vmem:[%s271 + $0x790] sm:$0xff]
        %v583 = vld [vmem:[%s271 + $0x798] sm:$0xff]
        %v584 = vld [vmem:[%s271 + $0x7a0] sm:$0xff]
        %v585 = vld [vmem:[%s271 + $0x7a8] sm:$0xff]
        %v586 = vld [vmem:[%s271 + $0x7b0] sm:$0xff]
        %v587 = vld [vmem:[%s271 + $0x7b8] sm:$0xff]
        %v588 = vld [vmem:[%s271 + $0x7c0] sm:$0xff]
        %v589 = vld [vmem:[%s271 + $0x7c8] sm:$0xff]
        %v590 = vld [vmem:[%s271 + $0x7d0] sm:$0xff]
        %v591 = vld [vmem:[%s271 + $0x7d8] sm:$0xff]
        %v592 = vld [vmem:[%s271 + $0x7e0] sm:$0xff]
        %v593 = vld [vmem:[%s271 + $0x7e8] sm:$0xff]
        %v594 = vld [vmem:[%s271 + $0x7f0] sm:$0xff]
        %v595 = vld [vmem:[%s271 + $0x7f8] sm:$0xff]
        %v596 = vld [vmem:[%s271 + $0x800] sm:$0xff]
        %v597 = vld [vmem:[%s271 + $0x808] sm:$0xff]
        %v598 = vld [vmem:[%s271 + $0x810] sm:$0xff]
        %v599 = vld [vmem:[%s271 + $0x818] sm:$0xff]
        %v600 = vld [vmem:[%s271 + $0x820] sm:$0xff]
        %v601 = vld [vmem:[%s271 + $0x828] sm:$0xff]
        %v602 = vld [vmem:[%s271 + $0x830] sm:$0xff]
        %v603 = vld [vmem:[%s271 + $0x838] sm:$0xff]
        %v604 = vld [vmem:[%s271 + $0x840] sm:$0xff]
        %v605 = vld [vmem:[%s271 + $0x848] sm:$0xff]
        %v606 = vld [vmem:[%s271 + $0x850] sm:$0xff]
        %v607 = vld [vmem:[%s271 + $0x858] sm:$0xff]
        %v608 = vld [vmem:[%s271 + $0x860] sm:$0xff]
        %v609 = vld [vmem:[%s271 + $0x868] sm:$0xff]
        %v610 = vld [vmem:[%s271 + $0x870] sm:$0xff]
        %v611 = vld [vmem:[%s271 + $0x878] sm:$0xff]
        %v612 = vld [vmem:[%s271 + $0x880] sm:$0xff]
        %v613 = vld [vmem:[%s271 + $0x888] sm:$0xff]
        %v614 = vld [vmem:[%s271 + $0x890] sm:$0xff]
        %v615 = vld [vmem:[%s271 + $0x898] sm:$0xff]
        %v616 = vld [vmem:[%s271 + $0x8a0] sm:$0xff]
        %v617 = vld [vmem:[%s271 + $0x8a8] sm:$0xff]
        %v618 = vld [vmem:[%s271 + $0x8b0] sm:$0xff]
        %v619 = vld [vmem:[%s271 + $0x8b8] sm:$0xff]
        %v620 = vld [vmem:[%s271 + $0x8c0] sm:$0xff]
        %v621 = vld [vmem:[%s271 + $0x8c8] sm:$0xff]
        %v622 = vld [vmem:[%s271 + $0x8d0] sm:$0xff]
        %v623 = vld [vmem:[%s271 + $0x8d8] sm:$0xff]
        %v624 = vld [vmem:[%s271 + $0x8e0] sm:$0xff]
        %v625 = vld [vmem:[%s271 + $0x8e8] sm:$0xff]
        %v626 = vld [vmem:[%s271 + $0x8f0] sm:$0xff]
        %v627 = vld [vmem:[%s271 + $0x8f8] sm:$0xff]
        %v628 = vld [vmem:[%s271 + $0x900] sm:$0xff]
        %v629 = vld [vmem:[%s271 + $0x908] sm:$0xff]
        %v630 = vld [vmem:[%s271 + $0x910] sm:$0xff]
        %v631 = vld [vmem:[%s271 + $0x918] sm:$0xff]
        %v632 = vld [vmem:[%s271 + $0x920] sm:$0xff]
        %v633 = vld [vmem:[%s271 + $0x928] sm:$0xff]
        %v634 = vld [vmem:[%s271 + $0x930] sm:$0xff]
        %v635 = vld [vmem:[%s271 + $0x938] sm:$0xff]
        %v636 = vld [vmem:[%s271 + $0x940] sm:$0xff]
        %v637 = vld [vmem:[%s271 + $0x948] sm:$0xff]
        %v638 = vld [vmem:[%s271 + $0x950] sm:$0xff]
        %v639 = vld [vmem:[%s271 + $0x958] sm:$0xff]
        %v640 = vld [vmem:[%s271 + $0x960] sm:$0xff]
        %v641 = vld [vmem:[%s271 + $0x968] sm:$0xff]
        %v642 = vld [vmem:[%s271 + $0x970] sm:$0xff]
        %v643 = vld [vmem:[%s271 + $0x978] sm:$0xff]
        %v644 = vld [vmem:[%s271 + $0x980] sm:$0xff]
        %v645 = vld [vmem:[%s271 + $0x988] sm:$0xff]
        %v646 = vld [vmem:[%s271 + $0x990] sm:$0xff]
        %v647 = vld [vmem:[%s271 + $0x998] sm:$0xff]
        %v648 = vld [vmem:[%s271 + $0x9a0] sm:$0xff]
        %v649 = vld [vmem:[%s271 + $0x9a8] sm:$0xff]
        %v650 = vld [vmem:[%s271 + $0x9b0] sm:$0xff]
        %v651 = vld [vmem:[%s271 + $0x9b8] sm:$0xff]
        %v652 = vld [vmem:[%s271 + $0x9c0] sm:$0xff]
        %v653 = vld [vmem:[%s271 + $0x9c8] sm:$0xff]
        %v654 = vld [vmem:[%s271 + $0x9d0] sm:$0xff]
        %v655 = vld [vmem:[%s271 + $0x9d8] sm:$0xff]
        %v656 = vld [vmem:[%s271 + $0x9e0] sm:$0xff]
        %v657 = vld [vmem:[%s271 + $0x9e8] sm:$0xff]
        %v658 = vld [vmem:[%s271 + $0x9f0] sm:$0xff]
        %v659 = vld [vmem:[%s271 + $0x9f8] sm:$0xff]
        %v660 = vld [vmem:[%s271 + $0xa00] sm:$0xff]
        %v661 = vld [vmem:[%s271 + $0xa08] sm:$0xff]
        %v662 = vld [vmem:[%s271 + $0xa10] sm:$0xff]
        %v663 = vld [vmem:[%s271 + $0xa18] sm:$0xff]
        %v664 = vld [vmem:[%s271 + $0xa20] sm:$0xff]
        %v665 = vld [vmem:[%s271 + $0xa28] sm:$0xff]
        %v666 = vld [vmem:[%s271 + $0xa30] sm:$0xff]
        %v667 = vld [vmem:[%s271 + $0xa38] sm:$0xff]
        %v668 = vld [vmem:[%s271 + $0xa40] sm:$0xff]
        %v669 = vld [vmem:[%s271 + $0xa48] sm:$0xff]
        %v670 = vld [vmem:[%s271 + $0xa50] sm:$0xff]
        %v671 = vld [vmem:[%s271 + $0xa58] sm:$0xff]
        %v672 = vld [vmem:[%s271 + $0xa60] sm:$0xff]
        %v673 = vld [vmem:[%s271 + $0xa68] sm:$0xff]
        %v674 = vld [vmem:[%s271 + $0xa70] sm:$0xff]
        %v675 = vld [vmem:[%s271 + $0xa78] sm:$0xff]
        %v676 = vld [vmem:[%s271 + $0xa80] sm:$0xff]
        %v677 = vld [vmem:[%s271 + $0xa88] sm:$0xff]
        %v678 = vld [vmem:[%s271 + $0xa90] sm:$0xff]
        %v679 = vld [vmem:[%s271 + $0xa98] sm:$0xff]
        %v680 = vld [vmem:[%s271 + $0xaa0] sm:$0xff]
        %v681 = vld [vmem:[%s271 + $0xaa8] sm:$0xff]
        %v682 = vld [vmem:[%s271 + $0xab0] sm:$0xff]
        %v683 = vld [vmem:[%s271 + $0xab8] sm:$0xff]
        %v684 = vld [vmem:[%s271 + $0xac0] sm:$0xff]
        %v685 = vld [vmem:[%s271 + $0xac8] sm:$0xff]
        %v686 = vld [vmem:[%s271 + $0xad0] sm:$0xff]
        %v687 = vld [vmem:[%s271 + $0xad8] sm:$0xff]
        %v688 = vld [vmem:[%s271 + $0xae0] sm:$0xff]
        %v689 = vld [vmem:[%s271 + $0xae8] sm:$0xff]
        %v690 = vld [vmem:[%s271 + $0xaf0] sm:$0xff]
        %v691 = vld [vmem:[%s271 + $0xaf8] sm:$0xff]
        %v692 = vld [vmem:[%s271 + $0xb00] sm:$0xff]
        %v693 = vld [vmem:[%s271 + $0xb08] sm:$0xff]
        %v694 = vld [vmem:[%s271 + $0xb10] sm:$0xff]
        %v695 = vld [vmem:[%s271 + $0xb18] sm:$0xff]
        %v696 = vld [vmem:[%s271 + $0xb20] sm:$0xff]
        %v697 = vld [vmem:[%s271 + $0xb28] sm:$0xff]
        %v698 = vld [vmem:[%s271 + $0xb30] sm:$0xff]
        %v699 = vld [vmem:[%s271 + $0xb38] sm:$0xff]
        %v700 = vld [vmem:[%s271 + $0xb40] sm:$0xff]
        %v701 = vld [vmem:[%s271 + $0xb48] sm:$0xff]
        %v702 = vld [vmem:[%s271 + $0xb50] sm:$0xff]
        %v703 = vld [vmem:[%s271 + $0xb58] sm:$0xff]
        %v704 = vld [vmem:[%s271 + $0xb60] sm:$0xff]
        %v705 = vld [vmem:[%s271 + $0xb68] sm:$0xff]
        %v706 = vld [vmem:[%s271 + $0xb70] sm:$0xff]
        %v707 = vld [vmem:[%s271 + $0xb78] sm:$0xff]
        %v708 = vld [vmem:[%s271 + $0xb80] sm:$0xff]
        %v709 = vld [vmem:[%s271 + $0xb88] sm:$0xff]
        %v710 = vld [vmem:[%s271 + $0xb90] sm:$0xff]
        %v711 = vld [vmem:[%s271 + $0xb98] sm:$0xff]
        %v712 = vld [vmem:[%s271 + $0xba0] sm:$0xff]
        %v713 = vld [vmem:[%s271 + $0xba8] sm:$0xff]
        %v714 = vld [vmem:[%s271 + $0xbb0] sm:$0xff]
        %v715 = vld [vmem:[%s271 + $0xbb8] sm:$0xff]
        %v716 = vld [vmem:[%s271 + $0xbc0] sm:$0xff]
        %v717 = vld [vmem:[%s271 + $0xbc8] sm:$0xff]
        %v718 = vld [vmem:[%s271 + $0xbd0] sm:$0xff]
        %v719 = vld [vmem:[%s271 + $0xbd8] sm:$0xff]
        %v720 = vld [vmem:[%s271 + $0xbe0] sm:$0xff]
        %v721 = vld [vmem:[%s271 + $0xbe8] sm:$0xff]
        %v722 = vld [vmem:[%s271 + $0xbf0] sm:$0xff]
        %v723 = vld [vmem:[%s271 + $0xbf8] sm:$0xff]
        %v724 = vld [vmem:[%s271 + $0xc00] sm:$0xff]
        %v725 = vld [vmem:[%s271 + $0xc08] sm:$0xff]
        %v726 = vld [vmem:[%s271 + $0xc10] sm:$0xff]
        %v727 = vld [vmem:[%s271 + $0xc18] sm:$0xff]
        %v728 = vld [vmem:[%s271 + $0xc20] sm:$0xff]
        %v729 = vld [vmem:[%s271 + $0xc28] sm:$0xff]
        %v730 = vld [vmem:[%s271 + $0xc30] sm:$0xff]
        %v731 = vld [vmem:[%s271 + $0xc38] sm:$0xff]
        %v732 = vld [vmem:[%s271 + $0xc40] sm:$0xff]
        %v733 = vld [vmem:[%s271 + $0xc48] sm:$0xff]
        %v734 = vld [vmem:[%s271 + $0xc50] sm:$0xff]
        %v735 = vld [vmem:[%s271 + $0xc58] sm:$0xff]
        %v736 = vld [vmem:[%s271 + $0xc60] sm:$0xff]
        %v737 = vld [vmem:[%s271 + $0xc68] sm:$0xff]
        %v738 = vld [vmem:[%s271 + $0xc70] sm:$0xff]
        %v739 = vld [vmem:[%s271 + $0xc78] sm:$0xff]
        %v740 = vld [vmem:[%s271 + $0xc80] sm:$0xff]
        %v741 = vld [vmem:[%s271 + $0xc88] sm:$0xff]
        %v742 = vld [vmem:[%s271 + $0xc90] sm:$0xff]
        %v743 = vld [vmem:[%s271 + $0xc98] sm:$0xff]
        %v744 = vld [vmem:[%s271 + $0xca0] sm:$0xff]
        %v745 = vld [vmem:[%s271 + $0xca8] sm:$0xff]
        %v746 = vld [vmem:[%s271 + $0xcb0] sm:$0xff]
        %v747 = vld [vmem:[%s271 + $0xcb8] sm:$0xff]
        %v748 = vld [vmem:[%s271 + $0xcc0] sm:$0xff]
        %v749 = vld [vmem:[%s271 + $0xcc8] sm:$0xff]
        %v750 = vld [vmem:[%s271 + $0xcd0] sm:$0xff]
        %v751 = vld [vmem:[%s271 + $0xcd8] sm:$0xff]
        %v752 = vld [vmem:[%s271 + $0xce0] sm:$0xff]
        %v753 = vld [vmem:[%s271 + $0xce8] sm:$0xff]
        %v754 = vld [vmem:[%s271 + $0xcf0] sm:$0xff]
        %v755 = vld [vmem:[%s271 + $0xcf8] sm:$0xff]
        %v756 = vld [vmem:[%s271 + $0xd00] sm:$0xff]
        %v757 = vld [vmem:[%s271 + $0xd08] sm:$0xff]
        %v758 = vld [vmem:[%s271 + $0xd10] sm:$0xff]
        %v759 = vld [vmem:[%s271 + $0xd18] sm:$0xff]
        %v760 = vld [vmem:[%s271 + $0xd20] sm:$0xff]
        %v761 = vld [vmem:[%s271 + $0xd28] sm:$0xff]
        %v762 = vld [vmem:[%s271 + $0xd30] sm:$0xff]
        %v763 = vld [vmem:[%s271 + $0xd38] sm:$0xff]
        %v764 = vld [vmem:[%s271 + $0xd40] sm:$0xff]
        %v765 = vld [vmem:[%s271 + $0xd48] sm:$0xff]
        %v766 = vld [vmem:[%s271 + $0xd50] sm:$0xff]
        %v767 = vld [vmem:[%s271 + $0xd58] sm:$0xff]
        %v768 = vld [vmem:[%s271 + $0xd60] sm:$0xff]
        %v769 = vld [vmem:[%s271 + $0xd68] sm:$0xff]
        %v770 = vld [vmem:[%s271 + $0xd70] sm:$0xff]
        %v771 = vld [vmem:[%s271 + $0xd78] sm:$0xff]
        %v772 = vld [vmem:[%s271 + $0xd80] sm:$0xff]
        %v773 = vld [vmem:[%s271 + $0xd88] sm:$0xff]
        %v774 = vld [vmem:[%s271 + $0xd90] sm:$0xff]
        %v775 = vld [vmem:[%s271 + $0xd98] sm:$0xff]
        %v776 = vld [vmem:[%s271 + $0xda0] sm:$0xff]
        %v777 = vld [vmem:[%s271 + $0xda8] sm:$0xff]
        %v778 = vld [vmem:[%s271 + $0xdb0] sm:$0xff]
        %v779 = vld [vmem:[%s271 + $0xdb8] sm:$0xff]
        %v780 = vld [vmem:[%s271 + $0xdc0] sm:$0xff]
        %v781 = vld [vmem:[%s271 + $0xdc8] sm:$0xff]
        %v782 = vld [vmem:[%s271 + $0xdd0] sm:$0xff]
        %v783 = vld [vmem:[%s271 + $0xdd8] sm:$0xff]
        %v784 = vld [vmem:[%s271 + $0xde0] sm:$0xff]
        %v785 = vld [vmem:[%s271 + $0xde8] sm:$0xff]
        %v786 = vld [vmem:[%s271 + $0xdf0] sm:$0xff]
        %v787 = vld [vmem:[%s271 + $0xdf8] sm:$0xff]
        %v788 = vld [vmem:[%s271 + $0xe00] sm:$0xff]
        %v789 = vld [vmem:[%s271 + $0xe08] sm:$0xff]
        %v790 = vld [vmem:[%s271 + $0xe10] sm:$0xff]
        %v791 = vld [vmem:[%s271 + $0xe18] sm:$0xff]
        %v792 = vld [vmem:[%s271 + $0xe20] sm:$0xff]
        %v793 = vld [vmem:[%s271 + $0xe28] sm:$0xff]
        %v794 = vld [vmem:[%s271 + $0xe30] sm:$0xff]
        %v795 = vld [vmem:[%s271 + $0xe38] sm:$0xff]
        %v796 = vld [vmem:[%s271 + $0xe40] sm:$0xff]
        %v797 = vld [vmem:[%s271 + $0xe48] sm:$0xff]
        %v798 = vld [vmem:[%s271 + $0xe50] sm:$0xff]
        %v799 = vld [vmem:[%s271 + $0xe58] sm:$0xff]
        %v800 = vld [vmem:[%s271 + $0xe60] sm:$0xff]
        %v801 = vld [vmem:[%s271 + $0xe68] sm:$0xff]
        %v802 = vld [vmem:[%s271 + $0xe70] sm:$0xff]
        %v803 = vld [vmem:[%s271 + $0xe78] sm:$0xff]
        %v804 = vld [vmem:[%s271 + $0xe80] sm:$0xff]
        %v805 = vld [vmem:[%s271 + $0xe88] sm:$0xff]
        %v806 = vld [vmem:[%s271 + $0xe90] sm:$0xff]
        %v807 = vld [vmem:[%s271 + $0xe98] sm:$0xff]
        %v808 = vld [vmem:[%s271 + $0xea0] sm:$0xff]
        %v809 = vld [vmem:[%s271 + $0xea8] sm:$0xff]
        %v810 = vld [vmem:[%s271 + $0xeb0] sm:$0xff]
        %v811 = vld [vmem:[%s271 + $0xeb8] sm:$0xff]
        %v812 = vld [vmem:[%s271 + $0xec0] sm:$0xff]
        %v813 = vld [vmem:[%s271 + $0xec8] sm:$0xff]
        %v814 = vld [vmem:[%s271 + $0xed0] sm:$0xff]
        %v815 = vld [vmem:[%s271 + $0xed8] sm:$0xff]
        %v816 = vld [vmem:[%s271 + $0xee0] sm:$0xff]
        %v817 = vld [vmem:[%s271 + $0xee8] sm:$0xff]
        %v818 = vld [vmem:[%s271 + $0xef0] sm:$0xff]
        %v819 = vld [vmem:[%s271 + $0xef8] sm:$0xff]
        %v820 = vld [vmem:[%s271 + $0xf00] sm:$0xff]
        %v821 = vld [vmem:[%s271 + $0xf08] sm:$0xff]
        %v822 = vld [vmem:[%s271 + $0xf10] sm:$0xff]
        %v823 = vld [vmem:[%s271 + $0xf18] sm:$0xff]
        %v824 = vld [vmem:[%s271 + $0xf20] sm:$0xff]
        %v825 = vld [vmem:[%s271 + $0xf28] sm:$0xff]
        %v826 = vld [vmem:[%s271 + $0xf30] sm:$0xff]
        %v827 = vld [vmem:[%s271 + $0xf38] sm:$0xff]
        %v828 = vld [vmem:[%s271 + $0xf40] sm:$0xff]
        %v829 = vld [vmem:[%s271 + $0xf48] sm:$0xff]
        %v830 = vld [vmem:[%s271 + $0xf50] sm:$0xff]
        %v831 = vld [vmem:[%s271 + $0xf58] sm:$0xff]
        %v832 = vld [vmem:[%s271 + $0xf60] sm:$0xff]
        %v833 = vld [vmem:[%s271 + $0xf68] sm:$0xff]
        %v834 = vld [vmem:[%s271 + $0xf70] sm:$0xff]
        %v835 = vld [vmem:[%s271 + $0xf78] sm:$0xff]
        %v836 = vld [vmem:[%s271 + $0xf80] sm:$0xff]
        %v837 = vld [vmem:[%s271 + $0xf88] sm:$0xff]
        %v838 = vld [vmem:[%s271 + $0xf90] sm:$0xff]
        %v839 = vld [vmem:[%s271 + $0xf98] sm:$0xff]
        %v840 = vld [vmem:[%s271 + $0xfa0] sm:$0xff]
        %v841 = vld [vmem:[%s271 + $0xfa8] sm:$0xff]
        %v842 = vld [vmem:[%s271 + $0xfb0] sm:$0xff]
        %v843 = vld [vmem:[%s271 + $0xfb8] sm:$0xff]
        %v844 = vld [vmem:[%s271 + $0xfc0] sm:$0xff]
        %v845 = vld [vmem:[%s271 + $0xfc8] sm:$0xff]
        %v846 = vld [vmem:[%s271 + $0xfd0] sm:$0xff]
        %v847 = vld [vmem:[%s271 + $0xfd8] sm:$0xff]
        %v848 = vld [vmem:[%s271 + $0xfe0] sm:$0xff]
        %v849 = vld [vmem:[%s271 + $0xfe8] sm:$0xff]
        %v850 = vld [vmem:[%s271 + $0xff0] sm:$0xff]
        %v851 = vld [vmem:[%s271 + $0xff8] sm:$0xff]
        %v852 = vld [vmem:[%s271 + $0x1000] sm:$0xff]
        %v853 = vld [vmem:[%s271 + $0x1008] sm:$0xff]
        %v854 = vld [vmem:[%s271 + $0x1010] sm:$0xff]
        %v855 = vld [vmem:[%s271 + $0x1018] sm:$0xff]
        %v856 = vld [vmem:[%s271 + $0x1020] sm:$0xff]
        %v857 = vld [vmem:[%s271 + $0x1028] sm:$0xff]
        %v858 = vld [vmem:[%s271 + $0x1030] sm:$0xff]
        %v859 = vld [vmem:[%s271 + $0x1038] sm:$0xff]
        %v860 = vld [vmem:[%s271 + $0x1040] sm:$0xff]
        %v861 = vld [vmem:[%s271 + $0x1048] sm:$0xff]
        %v862 = vld [vmem:[%s271 + $0x1050] sm:$0xff]
        %v863 = vld [vmem:[%s271 + $0x1058] sm:$0xff]
        %v864 = vld [vmem:[%s271 + $0x1060] sm:$0xff]
        %v865 = vld [vmem:[%s271 + $0x1068] sm:$0xff]
        %v866 = vld [vmem:[%s271 + $0x1070] sm:$0xff]
        %v867 = vld [vmem:[%s271 + $0x1078] sm:$0xff]
        %v868 = vld [vmem:[%s271 + $0x1080] sm:$0xff]
        %v869 = vld [vmem:[%s271 + $0x1088] sm:$0xff]
        %v870 = vld [vmem:[%s271 + $0x1090] sm:$0xff]
        %v871 = vld [vmem:[%s271 + $0x1098] sm:$0xff]
        %v872 = vld [vmem:[%s271 + $0x10a0] sm:$0xff]
        %v873 = vld [vmem:[%s271 + $0x10a8] sm:$0xff]
        %v874 = vld [vmem:[%s271 + $0x10b0] sm:$0xff]
        %v875 = vld [vmem:[%s271 + $0x10b8] sm:$0xff]
        %v876 = vld [vmem:[%s271 + $0x10c0] sm:$0xff]
        %v877 = vld [vmem:[%s271 + $0x10c8] sm:$0xff]
        %v878 = vld [vmem:[%s271 + $0x10d0] sm:$0xff]
        %v879 = vld [vmem:[%s271 + $0x10d8] sm:$0xff]
        %v880 = vld [vmem:[%s271 + $0x10e0] sm:$0xff]
        %v881 = vld [vmem:[%s271 + $0x10e8] sm:$0xff]
        %v882 = vld [vmem:[%s271 + $0x10f0] sm:$0xff]
        %v883 = vld [vmem:[%s271 + $0x10f8] sm:$0xff]
        %v884 = vld [vmem:[%s271 + $0x1100] sm:$0xff]
        %v885 = vld [vmem:[%s271 + $0x1108] sm:$0xff]
        %v886 = vld [vmem:[%s271 + $0x1110] sm:$0xff]
        %v887 = vld [vmem:[%s271 + $0x1118] sm:$0xff]
        %v888 = vld [vmem:[%s271 + $0x1120] sm:$0xff]
        %v889 = vld [vmem:[%s271 + $0x1128] sm:$0xff]
        %v890 = vld [vmem:[%s271 + $0x1130] sm:$0xff]
        %v891 = vld [vmem:[%s271 + $0x1138] sm:$0xff]
        %v892 = vld [vmem:[%s271 + $0x1140] sm:$0xff]
        %v893 = vld [vmem:[%s271 + $0x1148] sm:$0xff]
        %v894 = vld [vmem:[%s271 + $0x1150] sm:$0xff]
        %v895 = vld [vmem:[%s271 + $0x1158] sm:$0xff]
        %v896 = vld [vmem:[%s271 + $0x1160] sm:$0xff]
        %v897 = vld [vmem:[%s271 + $0x1168] sm:$0xff]
        %v898 = vld [vmem:[%s271 + $0x1170] sm:$0xff]
        %v899 = vld [vmem:[%s271 + $0x1178] sm:$0xff]
        %v900 = vld [vmem:[%s271 + $0x1180] sm:$0xff]
        %v901 = vld [vmem:[%s271 + $0x1188] sm:$0xff]
        %v902 = vld [vmem:[%s271 + $0x1190] sm:$0xff]
        %v903 = vld [vmem:[%s271 + $0x1198] sm:$0xff]
        %v904 = vld [vmem:[%s271 + $0x11a0] sm:$0xff]
        %v905 = vld [vmem:[%s271 + $0x11a8] sm:$0xff]
        %v906 = vld [vmem:[%s271 + $0x11b0] sm:$0xff]
        %v907 = vld [vmem:[%s271 + $0x11b8] sm:$0xff]
        %v908 = vld [vmem:[%s271 + $0x11c0] sm:$0xff]
        %v909 = vld [vmem:[%s271 + $0x11c8] sm:$0xff]
        %v910 = vld [vmem:[%s271 + $0x11d0] sm:$0xff]
        %v911 = vld [vmem:[%s271 + $0x11d8] sm:$0xff]
        %v912 = vld [vmem:[%s271 + $0x11e0] sm:$0xff]
        %v913 = vld [vmem:[%s271 + $0x11e8] sm:$0xff]
        %v914 = vld [vmem:[%s271 + $0x11f0] sm:$0xff]
        %v915 = vld [vmem:[%s271 + $0x11f8] sm:$0xff]
        %v916 = vld [vmem:[%s271 + $0x1200] sm:$0xff]
        %v917 = vld [vmem:[%s271 + $0x1208] sm:$0xff]
        %v918 = vld [vmem:[%s271 + $0x1210] sm:$0xff]
        %v919 = vld [vmem:[%s271 + $0x1218] sm:$0xff]
        %v920 = vld [vmem:[%s271 + $0x1220] sm:$0xff]
        %v921 = vld [vmem:[%s271 + $0x1228] sm:$0xff]
        %v922 = vld [vmem:[%s271 + $0x1230] sm:$0xff]
        %v923 = vld [vmem:[%s271 + $0x1238] sm:$0xff]
        %v924 = vld [vmem:[%s271 + $0x1240] sm:$0xff]
        %v925 = vld [vmem:[%s271 + $0x1248] sm:$0xff]
        %v926 = vld [vmem:[%s271 + $0x1250] sm:$0xff]
        %v927 = vld [vmem:[%s271 + $0x1258] sm:$0xff]
        %v928 = vld [vmem:[%s271 + $0x1260] sm:$0xff]
        %v929 = vld [vmem:[%s271 + $0x1268] sm:$0xff]
        %v930 = vld [vmem:[%s271 + $0x1270] sm:$0xff]
        %v931 = vld [vmem:[%s271 + $0x1278] sm:$0xff]
        %v932 = vld [vmem:[%s271 + $0x1280] sm:$0xff]
        %v933 = vld [vmem:[%s271 + $0x1288] sm:$0xff]
        %v934 = vld [vmem:[%s271 + $0x1290] sm:$0xff]
        %v935 = vld [vmem:[%s271 + $0x1298] sm:$0xff]
        %v936 = vld [vmem:[%s271 + $0x12a0] sm:$0xff]
        %v937 = vld [vmem:[%s271 + $0x12a8] sm:$0xff]
        %v938 = vld [vmem:[%s271 + $0x12b0] sm:$0xff]
        %v939 = vld [vmem:[%s271 + $0x12b8] sm:$0xff]
        %v940 = vld [vmem:[%s271 + $0x12c0] sm:$0xff]
        %v941 = vld [vmem:[%s271 + $0x12c8] sm:$0xff]
        %v942 = vld [vmem:[%s271 + $0x12d0] sm:$0xff]
        %v943 = vld [vmem:[%s271 + $0x12d8] sm:$0xff]
        %v944 = vld [vmem:[%s271 + $0x12e0] sm:$0xff]
        %v945 = vld [vmem:[%s271 + $0x12e8] sm:$0xff]
        %v946 = vld [vmem:[%s271 + $0x12f0] sm:$0xff]
        %v947 = vld [vmem:[%s271 + $0x12f8] sm:$0xff]
        %v948 = vld [vmem:[%s271 + $0x1300] sm:$0xff]
        %v949 = vld [vmem:[%s271 + $0x1308] sm:$0xff]
        %v950 = vld [vmem:[%s271 + $0x1310] sm:$0xff]
        %v951 = vld [vmem:[%s271 + $0x1318] sm:$0xff]
        %v952 = vld [vmem:[%s271 + $0x1320] sm:$0xff]
        %v953 = vld [vmem:[%s271 + $0x1328] sm:$0xff]
        %v954 = vld [vmem:[%s271 + $0x1330] sm:$0xff]
        %v955 = vld [vmem:[%s271 + $0x1338] sm:$0xff]
        %v956 = vld [vmem:[%s271 + $0x1340] sm:$0xff]
        %v957 = vld [vmem:[%s271 + $0x1348] sm:$0xff]
        %v958 = vld [vmem:[%s271 + $0x1350] sm:$0xff]
        %v959 = vld [vmem:[%s271 + $0x1358] sm:$0xff]
        %v960 = vld [vmem:[%s271 + $0x1360] sm:$0xff]
        %v961 = vld [vmem:[%s271 + $0x1368] sm:$0xff]
        %v962 = vld [vmem:[%s271 + $0x1370] sm:$0xff]
        %v963 = vld [vmem:[%s271 + $0x1378] sm:$0xff]
        %v964 = vld [vmem:[%s271 + $0x1380] sm:$0xff]
        %v965 = vld [vmem:[%s271 + $0x1388] sm:$0xff]
        %v966 = vld [vmem:[%s271 + $0x1390] sm:$0xff]
        %v967 = vld [vmem:[%s271 + $0x1398] sm:$0xff]
        %v968 = vld [vmem:[%s271 + $0x13a0] sm:$0xff]
        %v969 = vld [vmem:[%s271 + $0x13a8] sm:$0xff]
        %v970 = vld [vmem:[%s271 + $0x13b0] sm:$0xff]
        %v971 = vld [vmem:[%s271 + $0x13b8] sm:$0xff]
        %v972 = vld [vmem:[%s271 + $0x13c0] sm:$0xff]
        %v973 = vld [vmem:[%s271 + $0x13c8] sm:$0xff]
        %v974 = vld [vmem:[%s271 + $0x13d0] sm:$0xff]
        %v975 = vld [vmem:[%s271 + $0x13d8] sm:$0xff]
        %v976 = vld [vmem:[%s271 + $0x13e0] sm:$0xff]
        %v977 = vld [vmem:[%s271 + $0x13e8] sm:$0xff]
        %v978 = vld [vmem:[%s271 + $0x13f0] sm:$0xff]
        %v979 = vld [vmem:[%s271 + $0x13f8] sm:$0xff]
        %v980 = vld [vmem:[%s271 + $0x1400] sm:$0xff]
        %v981 = vld [vmem:[%s271 + $0x1408] sm:$0xff]
        %v982 = vld [vmem:[%s271 + $0x1410] sm:$0xff]
        %v983 = vld [vmem:[%s271 + $0x1418] sm:$0xff]
        %v984 = vld [vmem:[%s271 + $0x1420] sm:$0xff]
        %v985 = vld [vmem:[%s271 + $0x1428] sm:$0xff]
        %v986 = vld [vmem:[%s271 + $0x1430] sm:$0xff]
        %v987 = vld [vmem:[%s271 + $0x1438] sm:$0xff]
        %v988 = vld [vmem:[%s271 + $0x1440] sm:$0xff]
        %v989 = vld [vmem:[%s271 + $0x1448] sm:$0xff]
        %v990 = vld [vmem:[%s271 + $0x1450] sm:$0xff]
        %v991 = vld [vmem:[%s271 + $0x1458] sm:$0xff]
        %v992 = vld [vmem:[%s271 + $0x1460] sm:$0xff]
        %v993 = vld [vmem:[%s271 + $0x1468] sm:$0xff]
        %v994 = vld [vmem:[%s271 + $0x1470] sm:$0xff]
        %v995 = vld [vmem:[%s271 + $0x1478] sm:$0xff]
        %v996 = vld [vmem:[%s271 + $0x1480] sm:$0xff]
        %v997 = vld [vmem:[%s271 + $0x1488] sm:$0xff]
        %v998 = vld [vmem:[%s271 + $0x1490] sm:$0xff]
        %v999 = vld [vmem:[%s271 + $0x1498] sm:$0xff]
        %v1000 = vld [vmem:[%s271 + $0x14a0] sm:$0xff]
        %v1001 = vld [vmem:[%s271 + $0x14a8] sm:$0xff]
        %v1002 = vld [vmem:[%s271 + $0x14b0] sm:$0xff]
        %v1003 = vld [vmem:[%s271 + $0x14b8] sm:$0xff]
        %v1004 = vld [vmem:[%s271 + $0x14c0] sm:$0xff]
        %v1005 = vld [vmem:[%s271 + $0x14c8] sm:$0xff]
        %v1006 = vld [vmem:[%s271 + $0x14d0] sm:$0xff]
        %v1007 = vld [vmem:[%s271 + $0x14d8] sm:$0xff]
        %v1008 = vld [vmem:[%s271 + $0x14e0] sm:$0xff]
        %v1009 = vld [vmem:[%s271 + $0x14e8] sm:$0xff]
        %v1010 = vld [vmem:[%s271 + $0x14f0] sm:$0xff]
        %v1011 = vld [vmem:[%s271 + $0x14f8] sm:$0xff]
        %v1012 = vld [vmem:[%s271 + $0x1500] sm:$0xff]
        %v1013 = vld [vmem:[%s271 + $0x1508] sm:$0xff]
        %v1014 = vld [vmem:[%s271 + $0x1510] sm:$0xff]
        %v1015 = vld [vmem:[%s271 + $0x1518] sm:$0xff]
        %v1016 = vld [vmem:[%s271 + $0x1520] sm:$0xff]
        %v1017 = vld [vmem:[%s271 + $0x1528] sm:$0xff]
        %v1018 = vld [vmem:[%s271 + $0x1530] sm:$0xff]
        %v1019 = vld [vmem:[%s271 + $0x1538] sm:$0xff]
        %v1020 = vld [vmem:[%s271 + $0x1540] sm:$0xff]
        %v1021 = vld [vmem:[%s271 + $0x1548] sm:$0xff]
        %v1022 = vld [vmem:[%s271 + $0x1550] sm:$0xff]
        %v1023 = vld [vmem:[%s271 + $0x1558] sm:$0xff]
        %v1024 = vld [vmem:[%s271 + $0x1560] sm:$0xff]
        %v1025 = vld [vmem:[%s271 + $0x1568] sm:$0xff]
        %v1026 = vld [vmem:[%s271 + $0x1570] sm:$0xff]
        %v1027 = vld [vmem:[%s271 + $0x1578] sm:$0xff]
        %v1028 = vld [vmem:[%s271 + $0x1580] sm:$0xff]
        %v1029 = vld [vmem:[%s271 + $0x1588] sm:$0xff]
        %v1030 = vld [vmem:[%s271 + $0x1590] sm:$0xff]
        %v1031 = vld [vmem:[%s271 + $0x1598] sm:$0xff]
        %v1032 = vld [vmem:[%s271 + $0x15a0] sm:$0xff]
        %v1033 = vld [vmem:[%s271 + $0x15a8] sm:$0xff]
        %v1034 = vld [vmem:[%s271 + $0x15b0] sm:$0xff]
        %v1035 = vld [vmem:[%s271 + $0x15b8] sm:$0xff]
        %v1036 = vld [vmem:[%s271 + $0x15c0] sm:$0xff]
        %v1037 = vld [vmem:[%s271 + $0x15c8] sm:$0xff]
        %v1038 = vld [vmem:[%s271 + $0x15d0] sm:$0xff]
        %v1039 = vld [vmem:[%s271 + $0x15d8] sm:$0xff]
        %v1040 = vld [vmem:[%s271 + $0x15e0] sm:$0xff]
        %v1041 = vld [vmem:[%s271 + $0x15e8] sm:$0xff]
        %v1042 = vld [vmem:[%s271 + $0x15f0] sm:$0xff]
        %v1043 = vld [vmem:[%s271 + $0x15f8] sm:$0xff]
        %v1044 = vld [vmem:[%s271 + $0x1600] sm:$0xff]
        %v1045 = vld [vmem:[%s271 + $0x1608] sm:$0xff]
        %v1046 = vld [vmem:[%s271 + $0x1610] sm:$0xff]
        %v1047 = vld [vmem:[%s271 + $0x1618] sm:$0xff]
        %v1048 = vld [vmem:[%s271 + $0x1620] sm:$0xff]
        %v1049 = vld [vmem:[%s271 + $0x1628] sm:$0xff]
        %v1050 = vld [vmem:[%s271 + $0x1630] sm:$0xff]
        %v1051 = vld [vmem:[%s271 + $0x1638] sm:$0xff]
        %v1052 = vld [vmem:[%s271 + $0x1640] sm:$0xff]
        %v1053 = vld [vmem:[%s271 + $0x1648] sm:$0xff]
        %v1054 = vld [vmem:[%s271 + $0x1650] sm:$0xff]
        %v1055 = vld [vmem:[%s271 + $0x1658] sm:$0xff]
        %v1056 = vld [vmem:[%s271 + $0x1660] sm:$0xff]
        %v1057 = vld [vmem:[%s271 + $0x1668] sm:$0xff]
        %v1058 = vld [vmem:[%s271 + $0x1670] sm:$0xff]
        %v1059 = vld [vmem:[%s271 + $0x1678] sm:$0xff]
        %v1060 = vld [vmem:[%s271 + $0x1680] sm:$0xff]
        %v1061 = vld [vmem:[%s271 + $0x1688] sm:$0xff]
        %v1062 = vld [vmem:[%s271 + $0x1690] sm:$0xff]
        %v1063 = vld [vmem:[%s271 + $0x1698] sm:$0xff]
        %v1064 = vld [vmem:[%s271 + $0x16a0] sm:$0xff]
        %v1065 = vld [vmem:[%s271 + $0x16a8] sm:$0xff]
        %v1066 = vld [vmem:[%s271 + $0x16b0] sm:$0xff]
        %v1067 = vld [vmem:[%s271 + $0x16b8] sm:$0xff]
        %v1068 = vld [vmem:[%s271 + $0x16c0] sm:$0xff]
        %v1069 = vld [vmem:[%s271 + $0x16c8] sm:$0xff]
        %v1070 = vld [vmem:[%s271 + $0x16d0] sm:$0xff]
        %v1071 = vld [vmem:[%s271 + $0x16d8] sm:$0xff]
        %v1072 = vld [vmem:[%s271 + $0x16e0] sm:$0xff]
        %v1073 = vld [vmem:[%s271 + $0x16e8] sm:$0xff]
        %v1074 = vld [vmem:[%s271 + $0x16f0] sm:$0xff]
        %v1075 = vld [vmem:[%s271 + $0x16f8] sm:$0xff]
        %v1076 = vld [vmem:[%s271 + $0x1700] sm:$0xff]
        %v1077 = vld [vmem:[%s271 + $0x1708] sm:$0xff]
        %v1078 = vld [vmem:[%s271 + $0x1710] sm:$0xff]
        %v1079 = vld [vmem:[%s271 + $0x1718] sm:$0xff]
        %v1080 = vld [vmem:[%s271 + $0x1720] sm:$0xff]
        %v1081 = vld [vmem:[%s271 + $0x1728] sm:$0xff]
        %v1082 = vld [vmem:[%s271 + $0x1730] sm:$0xff]
        %v1083 = vld [vmem:[%s271 + $0x1738] sm:$0xff]
        %v1084 = vld [vmem:[%s271 + $0x1740] sm:$0xff]
        %v1085 = vld [vmem:[%s271 + $0x1748] sm:$0xff]
        %v1086 = vld [vmem:[%s271 + $0x1750] sm:$0xff]
        %v1087 = vld [vmem:[%s271 + $0x1758] sm:$0xff]
        %v1088 = vld [vmem:[%s271 + $0x1760] sm:$0xff]
        %v1089 = vld [vmem:[%s271 + $0x1768] sm:$0xff]
        %v1090 = vld [vmem:[%s271 + $0x1770] sm:$0xff]
        %v1091 = vld [vmem:[%s271 + $0x1778] sm:$0xff]
        %v1092 = vld [vmem:[%s271 + $0x1780] sm:$0xff]
        %v1093 = vld [vmem:[%s271 + $0x1788] sm:$0xff]
        %v1094 = vld [vmem:[%s271 + $0x1790] sm:$0xff]
        %v1095 = vld [vmem:[%s271 + $0x1798] sm:$0xff]
        %v1096 = vld [vmem:[%s271 + $0x17a0] sm:$0xff]
        %v1097 = vld [vmem:[%s271 + $0x17a8] sm:$0xff]
        %v1098 = vld [vmem:[%s271 + $0x17b0] sm:$0xff]
        %v1099 = vld [vmem:[%s271 + $0x17b8] sm:$0xff]
        %v1100 = vld [vmem:[%s271 + $0x17c0] sm:$0xff]
        %v1101 = vld [vmem:[%s271 + $0x17c8] sm:$0xff]
        %v1102 = vld [vmem:[%s271 + $0x17d0] sm:$0xff]
        %v1103 = vld [vmem:[%s271 + $0x17d8] sm:$0xff]
        %v1104 = vld [vmem:[%s271 + $0x17e0] sm:$0xff]
        %v1105 = vld [vmem:[%s271 + $0x17e8] sm:$0xff]
        %v1106 = vld [vmem:[%s271 + $0x17f0] sm:$0xff]
        %v1107 = vld [vmem:[%s271 + $0x17f8] sm:$0xff]
        %v1108 = vld [vmem:[%s271 + $0x1800] sm:$0xff]
        %v1109 = vld [vmem:[%s271 + $0x1808] sm:$0xff]
        %v1110 = vld [vmem:[%s271 + $0x1810] sm:$0xff]
        %v1111 = vld [vmem:[%s271 + $0x1818] sm:$0xff]
        %v1112 = vld [vmem:[%s271 + $0x1820] sm:$0xff]
        %v1113 = vld [vmem:[%s271 + $0x1828] sm:$0xff]
        %v1114 = vld [vmem:[%s271 + $0x1830] sm:$0xff]
        %v1115 = vld [vmem:[%s271 + $0x1838] sm:$0xff]
        %v1116 = vld [vmem:[%s271 + $0x1840] sm:$0xff]
        %v1117 = vld [vmem:[%s271 + $0x1848] sm:$0xff]
        %v1118 = vld [vmem:[%s271 + $0x1850] sm:$0xff]
        %v1119 = vld [vmem:[%s271 + $0x1858] sm:$0xff]
        %v1120 = vld [vmem:[%s271 + $0x1860] sm:$0xff]
        %v1121 = vld [vmem:[%s271 + $0x1868] sm:$0xff]
        %v1122 = vld [vmem:[%s271 + $0x1870] sm:$0xff]
        %v1123 = vld [vmem:[%s271 + $0x1878] sm:$0xff]
        %v1124 = vld [vmem:[%s271 + $0x1880] sm:$0xff]
        %v1125 = vld [vmem:[%s271 + $0x1888] sm:$0xff]
        %v1126 = vld [vmem:[%s271 + $0x1890] sm:$0xff]
        %v1127 = vld [vmem:[%s271 + $0x1898] sm:$0xff]
        %v1128 = vld [vmem:[%s271 + $0x18a0] sm:$0xff]
        %v1129 = vld [vmem:[%s271 + $0x18a8] sm:$0xff]
        %v1130 = vld [vmem:[%s271 + $0x18b0] sm:$0xff]
        %v1131 = vld [vmem:[%s271 + $0x18b8] sm:$0xff]
        %v1132 = vld [vmem:[%s271 + $0x18c0] sm:$0xff]
        %v1133 = vld [vmem:[%s271 + $0x18c8] sm:$0xff]
        %v1134 = vld [vmem:[%s271 + $0x18d0] sm:$0xff]
        %v1135 = vld [vmem:[%s271 + $0x18d8] sm:$0xff]
        %v1136 = vld [vmem:[%s271 + $0x18e0] sm:$0xff]
        %v1137 = vld [vmem:[%s271 + $0x18e8] sm:$0xff]
        %v1138 = vld [vmem:[%s271 + $0x18f0] sm:$0xff]
        %v1139 = vld [vmem:[%s271 + $0x18f8] sm:$0xff]
        %v1140 = vld [vmem:[%s271 + $0x1900] sm:$0xff]
        %v1141 = vld [vmem:[%s271 + $0x1908] sm:$0xff]
        %v1142 = vld [vmem:[%s271 + $0x1910] sm:$0xff]
        %v1143 = vld [vmem:[%s271 + $0x1918] sm:$0xff]
        %v1144 = vld [vmem:[%s271 + $0x1920] sm:$0xff]
        %v1145 = vld [vmem:[%s271 + $0x1928] sm:$0xff]
        %v1146 = vld [vmem:[%s271 + $0x1930] sm:$0xff]
        %v1147 = vld [vmem:[%s271 + $0x1938] sm:$0xff]
        %v1148 = vld [vmem:[%s271 + $0x1940] sm:$0xff]
        %v1149 = vld [vmem:[%s271 + $0x1948] sm:$0xff]
        %v1150 = vld [vmem:[%s271 + $0x1950] sm:$0xff]
        %v1151 = vld [vmem:[%s271 + $0x1958] sm:$0xff]
        %v1152 = vld [vmem:[%s271 + $0x1960] sm:$0xff]
        %v1153 = vld [vmem:[%s271 + $0x1968] sm:$0xff]
        %v1154 = vld [vmem:[%s271 + $0x1970] sm:$0xff]
        %v1155 = vld [vmem:[%s271 + $0x1978] sm:$0xff]
        %v1156 = vld [vmem:[%s271 + $0x1980] sm:$0xff]
        %v1157 = vld [vmem:[%s271 + $0x1988] sm:$0xff]
        %v1158 = vld [vmem:[%s271 + $0x1990] sm:$0xff]
        %v1159 = vld [vmem:[%s271 + $0x1998] sm:$0xff]
        %v1160 = vld [vmem:[%s271 + $0x19a0] sm:$0xff]
        %v1161 = vld [vmem:[%s271 + $0x19a8] sm:$0xff]
        %v1162 = vld [vmem:[%s271 + $0x19b0] sm:$0xff]
        %v1163 = vld [vmem:[%s271 + $0x19b8] sm:$0xff]
        %v1164 = vld [vmem:[%s271 + $0x19c0] sm:$0xff]
        %v1165 = vld [vmem:[%s271 + $0x19c8] sm:$0xff]
        %v1166 = vld [vmem:[%s271 + $0x19d0] sm:$0xff]
        %v1167 = vld [vmem:[%s271 + $0x19d8] sm:$0xff]
        %v1168 = vld [vmem:[%s271 + $0x19e0] sm:$0xff]
        %v1169 = vld [vmem:[%s271 + $0x19e8] sm:$0xff]
        %v1170 = vld [vmem:[%s271 + $0x19f0] sm:$0xff]
        %v1171 = vld [vmem:[%s271 + $0x19f8] sm:$0xff]
        %v1172 = vld [vmem:[%s271 + $0x1a00] sm:$0xff]
        %v1173 = vld [vmem:[%s271 + $0x1a08] sm:$0xff]
        %v1174 = vld [vmem:[%s271 + $0x1a10] sm:$0xff]
        %v1175 = vld [vmem:[%s271 + $0x1a18] sm:$0xff]
        %v1176 = vld [vmem:[%s271 + $0x1a20] sm:$0xff]
        %v1177 = vld [vmem:[%s271 + $0x1a28] sm:$0xff]
        %v1178 = vld [vmem:[%s271 + $0x1a30] sm:$0xff]
        %v1179 = vld [vmem:[%s271 + $0x1a38] sm:$0xff]
        %v1180 = vld [vmem:[%s271 + $0x1a40] sm:$0xff]
        %v1181 = vld [vmem:[%s271 + $0x1a48] sm:$0xff]
        %v1182 = vld [vmem:[%s271 + $0x1a50] sm:$0xff]
        %v1183 = vld [vmem:[%s271 + $0x1a58] sm:$0xff]
        %v1184 = vld [vmem:[%s271 + $0x1a60] sm:$0xff]
        %v1185 = vld [vmem:[%s271 + $0x1a68] sm:$0xff]
        %v1186 = vld [vmem:[%s271 + $0x1a70] sm:$0xff]
        %v1187 = vld [vmem:[%s271 + $0x1a78] sm:$0xff]
        %v1188 = vld [vmem:[%s271 + $0x1a80] sm:$0xff]
        %v1189 = vld [vmem:[%s271 + $0x1a88] sm:$0xff]
        %v1190 = vld [vmem:[%s271 + $0x1a90] sm:$0xff]
        %v1191 = vld [vmem:[%s271 + $0x1a98] sm:$0xff]
        %v1192 = vld [vmem:[%s271 + $0x1aa0] sm:$0xff]
        %v1193 = vld [vmem:[%s271 + $0x1aa8] sm:$0xff]
        %v1194 = vld [vmem:[%s271 + $0x1ab0] sm:$0xff]
        %v1195 = vld [vmem:[%s271 + $0x1ab8] sm:$0xff]
        %v1196 = vld [vmem:[%s271 + $0x1ac0] sm:$0xff]
        %v1197 = vld [vmem:[%s271 + $0x1ac8] sm:$0xff]
        %v1198 = vld [vmem:[%s271 + $0x1ad0] sm:$0xff]
        %v1199 = vld [vmem:[%s271 + $0x1ad8] sm:$0xff]
        %v1200 = vld [vmem:[%s271 + $0x1ae0] sm:$0xff]
        %v1201 = vld [vmem:[%s271 + $0x1ae8] sm:$0xff]
        %v1202 = vld [vmem:[%s271 + $0x1af0] sm:$0xff]
        %v1203 = vld [vmem:[%s271 + $0x1af8] sm:$0xff]
        %v1204 = vld [vmem:[%s271 + $0x1b00] sm:$0xff]
        %v1205 = vld [vmem:[%s271 + $0x1b08] sm:$0xff]
        %v1206 = vld [vmem:[%s271 + $0x1b10] sm:$0xff]
        %v1207 = vld [vmem:[%s271 + $0x1b18] sm:$0xff]
        %v1208 = vld [vmem:[%s271 + $0x1b20] sm:$0xff]
        %v1209 = vld [vmem:[%s271 + $0x1b28] sm:$0xff]
        %v1210 = vld [vmem:[%s271 + $0x1b30] sm:$0xff]
        %v1211 = vld [vmem:[%s271 + $0x1b38] sm:$0xff]
        %v1212 = vld [vmem:[%s271 + $0x1b40] sm:$0xff]
        %v1213 = vld [vmem:[%s271 + $0x1b48] sm:$0xff]
        %v1214 = vld [vmem:[%s271 + $0x1b50] sm:$0xff]
        %v1215 = vld [vmem:[%s271 + $0x1b58] sm:$0xff]
        %v1216 = vld [vmem:[%s271 + $0x1b60] sm:$0xff]
        %v1217 = vld [vmem:[%s271 + $0x1b68] sm:$0xff]
        %v1218 = vld [vmem:[%s271 + $0x1b70] sm:$0xff]
        %v1219 = vld [vmem:[%s271 + $0x1b78] sm:$0xff]
        %v1220 = vld [vmem:[%s271 + $0x1b80] sm:$0xff]
        %v1221 = vld [vmem:[%s271 + $0x1b88] sm:$0xff]
        %v1222 = vld [vmem:[%s271 + $0x1b90] sm:$0xff]
        %v1223 = vld [vmem:[%s271 + $0x1b98] sm:$0xff]
        %v1224 = vld [vmem:[%s271 + $0x1ba0] sm:$0xff]
        %v1225 = vld [vmem:[%s271 + $0x1ba8] sm:$0xff]
        %v1226 = vld [vmem:[%s271 + $0x1bb0] sm:$0xff]
        %v1227 = vld [vmem:[%s271 + $0x1bb8] sm:$0xff]
        %v1228 = vld [vmem:[%s271 + $0x1bc0] sm:$0xff]
        %v1229 = vld [vmem:[%s271 + $0x1bc8] sm:$0xff]
        %v1230 = vld [vmem:[%s271 + $0x1bd0] sm:$0xff]
        %v1231 = vld [vmem:[%s271 + $0x1bd8] sm:$0xff]
        %v1232 = vld [vmem:[%s271 + $0x1be0] sm:$0xff]
        %v1233 = vld [vmem:[%s271 + $0x1be8] sm:$0xff]
        %v1234 = vld [vmem:[%s271 + $0x1bf0] sm:$0xff]
        %v1235 = vld [vmem:[%s271 + $0x1bf8] sm:$0xff]
        %v1236 = vld [vmem:[%s271 + $0x1c00] sm:$0xff]
        %v1237 = vld [vmem:[%s271 + $0x1c08] sm:$0xff]
        %v1238 = vld [vmem:[%s271 + $0x1c10] sm:$0xff]
        %v1239 = vld [vmem:[%s271 + $0x1c18] sm:$0xff]
        %v1240 = vld [vmem:[%s271 + $0x1c20] sm:$0xff]
        %v1241 = vld [vmem:[%s271 + $0x1c28] sm:$0xff]
        %v1242 = vld [vmem:[%s271 + $0x1c30] sm:$0xff]
        %v1243 = vld [vmem:[%s271 + $0x1c38] sm:$0xff]
        %v1244 = vld [vmem:[%s271 + $0x1c40] sm:$0xff]
        %v1245 = vld [vmem:[%s271 + $0x1c48] sm:$0xff]
        %v1246 = vld [vmem:[%s271 + $0x1c50] sm:$0xff]
        %v1247 = vld [vmem:[%s271 + $0x1c58] sm:$0xff]
        %v1248 = vld [vmem:[%s271 + $0x1c60] sm:$0xff]
        %v1249 = vld [vmem:[%s271 + $0x1c68] sm:$0xff]
        %v1250 = vld [vmem:[%s271 + $0x1c70] sm:$0xff]
        %v1251 = vld [vmem:[%s271 + $0x1c78] sm:$0xff]
        %v1252 = vld [vmem:[%s271 + $0x1c80] sm:$0xff]
        %v1253 = vld [vmem:[%s271 + $0x1c88] sm:$0xff]
        %v1254 = vld [vmem:[%s271 + $0x1c90] sm:$0xff]
        %v1255 = vld [vmem:[%s271 + $0x1c98] sm:$0xff]
        %v1256 = vld [vmem:[%s271 + $0x1ca0] sm:$0xff]
        %v1257 = vld [vmem:[%s271 + $0x1ca8] sm:$0xff]
        %v1258 = vld [vmem:[%s271 + $0x1cb0] sm:$0xff]
        %v1259 = vld [vmem:[%s271 + $0x1cb8] sm:$0xff]
        %v1260 = vld [vmem:[%s271 + $0x1cc0] sm:$0xff]
        %v1261 = vld [vmem:[%s271 + $0x1cc8] sm:$0xff]
        %v1262 = vld [vmem:[%s271 + $0x1cd0] sm:$0xff]
        %v1263 = vld [vmem:[%s271 + $0x1cd8] sm:$0xff]
        %v1264 = vld [vmem:[%s271 + $0x1ce0] sm:$0xff]
        %v1265 = vld [vmem:[%s271 + $0x1ce8] sm:$0xff]
        %v1266 = vld [vmem:[%s271 + $0x1cf0] sm:$0xff]
        %v1267 = vld [vmem:[%s271 + $0x1cf8] sm:$0xff]
        %v1268 = vld [vmem:[%s271 + $0x1d00] sm:$0xff]
        %v1269 = vld [vmem:[%s271 + $0x1d08] sm:$0xff]
        %v1270 = vld [vmem:[%s271 + $0x1d10] sm:$0xff]
        %v1271 = vld [vmem:[%s271 + $0x1d18] sm:$0xff]
        %v1272 = vld [vmem:[%s271 + $0x1d20] sm:$0xff]
        %v1273 = vld [vmem:[%s271 + $0x1d28] sm:$0xff]
        %v1274 = vld [vmem:[%s271 + $0x1d30] sm:$0xff]
        %v1275 = vld [vmem:[%s271 + $0x1d38] sm:$0xff]
        %v1276 = vld [vmem:[%s271 + $0x1d40] sm:$0xff]
        %v1277 = vld [vmem:[%s271 + $0x1d48] sm:$0xff]
        %v1278 = vld [vmem:[%s271 + $0x1d50] sm:$0xff]
        %v1279 = vld [vmem:[%s271 + $0x1d58] sm:$0xff]
        %v1280 = vld [vmem:[%s271 + $0x1d60] sm:$0xff]
        %v1281 = vld [vmem:[%s271 + $0x1d68] sm:$0xff]
        %v1282 = vld [vmem:[%s271 + $0x1d70] sm:$0xff]
        %v1283 = vld [vmem:[%s271 + $0x1d78] sm:$0xff]
        %v1284 = vld [vmem:[%s271 + $0x1d80] sm:$0xff]
        %v1285 = vld [vmem:[%s271 + $0x1d88] sm:$0xff]
        %v1286 = vld [vmem:[%s271 + $0x1d90] sm:$0xff]
        %v1287 = vld [vmem:[%s271 + $0x1d98] sm:$0xff]
        %v1288 = vld [vmem:[%s271 + $0x1da0] sm:$0xff]
        %v1289 = vld [vmem:[%s271 + $0x1da8] sm:$0xff]
        %v1290 = vld [vmem:[%s271 + $0x1db0] sm:$0xff]
        %v1291 = vld [vmem:[%s271 + $0x1db8] sm:$0xff]
        %v1292 = vld [vmem:[%s271 + $0x1dc0] sm:$0xff]
        %v1293 = vld [vmem:[%s271 + $0x1dc8] sm:$0xff]
        %v1294 = vld [vmem:[%s271 + $0x1dd0] sm:$0xff]
        %v1295 = vld [vmem:[%s271 + $0x1dd8] sm:$0xff]
        %v1296 = vld [vmem:[%s271 + $0x1de0] sm:$0xff]
        %v1297 = vld [vmem:[%s271 + $0x1de8] sm:$0xff]
        %v1298 = vld [vmem:[%s271 + $0x1df0] sm:$0xff]
        %v1299 = vld [vmem:[%s271 + $0x1df8] sm:$0xff]
        %v1306 = vunpack.c.l.b16 %v334
        %v1307 = vunpack.c.h.b16 %v334
        %v1308 = vunpack.c.l.b16 %v335
        %v1309 = vunpack.c.h.b16 %v335
        %v1310 = vunpack.c.l.b16 %v336
        %v1311 = vunpack.c.h.b16 %v336
        %v1312 = vunpack.c.l.b16 %v337
        %v1313 = vunpack.c.h.b16 %v337
        %v1314 = vunpack.c.l.b16 %v338
        %v1315 = vunpack.c.h.b16 %v338
        %v1316 = vunpack.c.l.b16 %v339
        %v1317 = vunpack.c.h.b16 %v339
        %v1318 = vpack.c.b16 %v1306, %v1306
        %v1319 = vpack.c.b16 %v1307, %v1307
        %v1320 = vpack.c.b16 %v1308, %v1308
        %v1321 = vpack.c.b16 %v1309, %v1309
        %v1322 = vpack.c.b16 %v1310, %v1310
        %v1323 = vpack.c.b16 %v1311, %v1311
        %v1324 = vpack.c.b16 %v1312, %v1312
        %v1325 = vpack.c.b16 %v1313, %v1313
        %v1326 = vpack.c.b16 %v1314, %v1314
        %v1327 = vpack.c.b16 %v1315, %v1315
        %v1328 = vpack.c.b16 %v1316, %v1316
        %v1329 = vpack.c.b16 %v1317, %v1317
        %v2302 = vunpack.c.l.b16 %v340
        %v2303 = vunpack.c.h.b16 %v340
        %v2304 = vunpack.c.l.b16 %v341
        %v2305 = vunpack.c.h.b16 %v341
        %v2306 = vunpack.c.l.b16 %v342
        %v2307 = vunpack.c.h.b16 %v342
        %v2308 = vunpack.c.l.b16 %v343
        %v2309 = vunpack.c.h.b16 %v343
        %v2310 = vunpack.c.l.b16 %v344
        %v2311 = vunpack.c.h.b16 %v344
        %v2312 = vunpack.c.l.b16 %v345
        %v2313 = vunpack.c.h.b16 %v345
        %v2314 = vunpack.c.l.b16 %v346
        %v2315 = vunpack.c.h.b16 %v346
        %v2316 = vunpack.c.l.b16 %v347
        %v2317 = vunpack.c.h.b16 %v347
        %v2318 = vunpack.c.l.b16 %v348
        %v2319 = vunpack.c.h.b16 %v348
        %v2320 = vunpack.c.l.b16 %v349
        %v2321 = vunpack.c.h.b16 %v349
        %v2322 = vunpack.c.l.b16 %v350
        %v2323 = vunpack.c.h.b16 %v350
        %v2324 = vunpack.c.l.b16 %v351
        %v2325 = vunpack.c.h.b16 %v351
        %v2326 = vunpack.c.l.b16 %v352
        %v2327 = vunpack.c.h.b16 %v352
        %v2328 = vunpack.c.l.b16 %v353
        %v2329 = vunpack.c.h.b16 %v353
        %v2330 = vunpack.c.l.b16 %v354
        %v2331 = vunpack.c.h.b16 %v354
        %v2332 = vunpack.c.l.b16 %v355
        %v2333 = vunpack.c.h.b16 %v355
        %v2334 = vunpack.c.l.b16 %v356
        %v2335 = vunpack.c.h.b16 %v356
        %v2336 = vunpack.c.l.b16 %v357
        %v2337 = vunpack.c.h.b16 %v357
        %v2338 = vunpack.c.l.b16 %v358
        %v2339 = vunpack.c.h.b16 %v358
        %v2340 = vunpack.c.l.b16 %v359
        %v2341 = vunpack.c.h.b16 %v359
        %v2342 = vunpack.c.l.b16 %v360
        %v2343 = vunpack.c.h.b16 %v360
        %v2344 = vunpack.c.l.b16 %v361
        %v2345 = vunpack.c.h.b16 %v361
        %v2346 = vunpack.c.l.b16 %v362
        %v2347 = vunpack.c.h.b16 %v362
        %v2348 = vunpack.c.l.b16 %v363
        %v2349 = vunpack.c.h.b16 %v363
        %v2350 = vunpack.c.l.b16 %v364
        %v2351 = vunpack.c.h.b16 %v364
        %v2352 = vunpack.c.l.b16 %v365
        %v2353 = vunpack.c.h.b16 %v365
        %v2354 = vunpack.c.l.b16 %v366
        %v2355 = vunpack.c.h.b16 %v366
        %v2356 = vunpack.c.l.b16 %v367
        %v2357 = vunpack.c.h.b16 %v367
        %v2358 = vunpack.c.l.b16 %v368
        %v2359 = vunpack.c.h.b16 %v368
        %v2360 = vunpack.c.l.b16 %v369
        %v2361 = vunpack.c.h.b16 %v369
        %v2362 = vunpack.c.l.b16 %v370
        %v2363 = vunpack.c.h.b16 %v370
        %v2364 = vunpack.c.l.b16 %v371
        %v2365 = vunpack.c.h.b16 %v371
        %v2366 = vunpack.c.l.b16 %v372
        %v2367 = vunpack.c.h.b16 %v372
        %v2368 = vunpack.c.l.b16 %v373
        %v2369 = vunpack.c.h.b16 %v373
        %v2370 = vunpack.c.l.b16 %v374
        %v2371 = vunpack.c.h.b16 %v374
        %v2372 = vunpack.c.l.b16 %v375
        %v2373 = vunpack.c.h.b16 %v375
        %v2374 = vunpack.c.l.b16 %v376
        %v2375 = vunpack.c.h.b16 %v376
        %v2376 = vunpack.c.l.b16 %v377
        %v2377 = vunpack.c.h.b16 %v377
        %v2378 = vunpack.c.l.b16 %v378
        %v2379 = vunpack.c.h.b16 %v378
        %v2380 = vunpack.c.l.b16 %v379
        %v2381 = vunpack.c.h.b16 %v379
        %v2382 = vunpack.c.l.b16 %v380
        %v2383 = vunpack.c.h.b16 %v380
        %v2384 = vunpack.c.l.b16 %v381
        %v2385 = vunpack.c.h.b16 %v381
        %v2386 = vunpack.c.l.b16 %v382
        %v2387 = vunpack.c.h.b16 %v382
        %v2388 = vunpack.c.l.b16 %v383
        %v2389 = vunpack.c.h.b16 %v383
        %v2390 = vunpack.c.l.b16 %v384
        %v2391 = vunpack.c.h.b16 %v384
        %v2392 = vunpack.c.l.b16 %v385
        %v2393 = vunpack.c.h.b16 %v385
        %v2394 = vunpack.c.l.b16 %v386
        %v2395 = vunpack.c.h.b16 %v386
        %v2396 = vunpack.c.l.b16 %v387
        %v2397 = vunpack.c.h.b16 %v387
        %v2398 = vunpack.c.l.b16 %v388
        %v2399 = vunpack.c.h.b16 %v388
        %v2400 = vunpack.c.l.b16 %v389
        %v2401 = vunpack.c.h.b16 %v389
        %v2402 = vunpack.c.l.b16 %v390
        %v2403 = vunpack.c.h.b16 %v390
        %v2404 = vunpack.c.l.b16 %v391
        %v2405 = vunpack.c.h.b16 %v391
        %v2406 = vunpack.c.l.b16 %v392
        %v2407 = vunpack.c.h.b16 %v392
        %v2408 = vunpack.c.l.b16 %v393
        %v2409 = vunpack.c.h.b16 %v393
        %v2410 = vunpack.c.l.b16 %v394
        %v2411 = vunpack.c.h.b16 %v394
        %v2412 = vunpack.c.l.b16 %v395
        %v2413 = vunpack.c.h.b16 %v395
        %v2414 = vunpack.c.l.b16 %v396
        %v2415 = vunpack.c.h.b16 %v396
        %v2416 = vunpack.c.l.b16 %v397
        %v2417 = vunpack.c.h.b16 %v397
        %v2418 = vunpack.c.l.b16 %v398
        %v2419 = vunpack.c.h.b16 %v398
        %v2420 = vunpack.c.l.b16 %v399
        %v2421 = vunpack.c.h.b16 %v399
        %v2422 = vunpack.c.l.b16 %v400
        %v2423 = vunpack.c.h.b16 %v400
        %v2424 = vunpack.c.l.b16 %v401
        %v2425 = vunpack.c.h.b16 %v401
        %v2426 = vunpack.c.l.b16 %v402
        %v2427 = vunpack.c.h.b16 %v402
        %v2428 = vunpack.c.l.b16 %v403
        %v2429 = vunpack.c.h.b16 %v403
        %v2430 = vunpack.c.l.b16 %v404
        %v2431 = vunpack.c.h.b16 %v404
        %v2432 = vunpack.c.l.b16 %v405
        %v2433 = vunpack.c.h.b16 %v405
        %v2434 = vunpack.c.l.b16 %v406
        %v2435 = vunpack.c.h.b16 %v406
        %v2436 = vunpack.c.l.b16 %v407
        %v2437 = vunpack.c.h.b16 %v407
        %v2438 = vunpack.c.l.b16 %v408
        %v2439 = vunpack.c.h.b16 %v408
        %v2440 = vunpack.c.l.b16 %v409
        %v2441 = vunpack.c.h.b16 %v409
        %v2442 = vunpack.c.l.b16 %v410
        %v2443 = vunpack.c.h.b16 %v410
        %v2444 = vunpack.c.l.b16 %v411
        %v2445 = vunpack.c.h.b16 %v411
        %v2446 = vunpack.c.l.b16 %v412
        %v2447 = vunpack.c.h.b16 %v412
        %v2448 = vunpack.c.l.b16 %v413
        %v2449 = vunpack.c.h.b16 %v413
        %v2450 = vunpack.c.l.b16 %v414
        %v2451 = vunpack.c.h.b16 %v414
        %v2452 = vunpack.c.l.b16 %v415
        %v2453 = vunpack.c.h.b16 %v415
        %v2454 = vunpack.c.l.b16 %v416
        %v2455 = vunpack.c.h.b16 %v416
        %v2456 = vunpack.c.l.b16 %v417
        %v2457 = vunpack.c.h.b16 %v417
        %v2458 = vunpack.c.l.b16 %v418
        %v2459 = vunpack.c.h.b16 %v418
        %v2460 = vunpack.c.l.b16 %v419
        %v2461 = vunpack.c.h.b16 %v419
        %v2462 = vunpack.c.l.b16 %v420
        %v2463 = vunpack.c.h.b16 %v420
        %v2464 = vunpack.c.l.b16 %v421
        %v2465 = vunpack.c.h.b16 %v421
        %v2466 = vunpack.c.l.b16 %v422
        %v2467 = vunpack.c.h.b16 %v422
        %v2468 = vunpack.c.l.b16 %v423
        %v2469 = vunpack.c.h.b16 %v423
        %v2470 = vunpack.c.l.b16 %v424
        %v2471 = vunpack.c.h.b16 %v424
        %v2472 = vunpack.c.l.b16 %v425
        %v2473 = vunpack.c.h.b16 %v425
        %v2474 = vunpack.c.l.b16 %v426
        %v2475 = vunpack.c.h.b16 %v426
        %v2476 = vunpack.c.l.b16 %v427
        %v2477 = vunpack.c.h.b16 %v427
        %v2478 = vunpack.c.l.b16 %v428
        %v2479 = vunpack.c.h.b16 %v428
        %v2480 = vunpack.c.l.b16 %v429
        %v2481 = vunpack.c.h.b16 %v429
        %v2482 = vunpack.c.l.b16 %v430
        %v2483 = vunpack.c.h.b16 %v430
        %v2484 = vunpack.c.l.b16 %v431
        %v2485 = vunpack.c.h.b16 %v431
        %v2486 = vunpack.c.l.b16 %v432
        %v2487 = vunpack.c.h.b16 %v432
        %v2488 = vunpack.c.l.b16 %v433
        %v2489 = vunpack.c.h.b16 %v433
        %v2490 = vunpack.c.l.b16 %v434
        %v2491 = vunpack.c.h.b16 %v434
        %v2492 = vunpack.c.l.b16 %v435
        %v2493 = vunpack.c.h.b16 %v435
        %v2494 = vunpack.c.l.b16 %v436
        %v2495 = vunpack.c.h.b16 %v436
        %v2496 = vunpack.c.l.b16 %v437
        %v2497 = vunpack.c.h.b16 %v437
        %v2498 = vunpack.c.l.b16 %v438
        %v2499 = vunpack.c.h.b16 %v438
        %v2500 = vunpack.c.l.b16 %v439
        %v2501 = vunpack.c.h.b16 %v439
        %v2502 = vunpack.c.l.b16 %v440
        %v2503 = vunpack.c.h.b16 %v440
        %v2504 = vunpack.c.l.b16 %v441
        %v2505 = vunpack.c.h.b16 %v441
        %v2506 = vunpack.c.l.b16 %v442
        %v2507 = vunpack.c.h.b16 %v442
        %v2508 = vunpack.c.l.b16 %v443
        %v2509 = vunpack.c.h.b16 %v443
        %v2510 = vunpack.c.l.b16 %v444
        %v2511 = vunpack.c.h.b16 %v444
        %v2512 = vunpack.c.l.b16 %v445
        %v2513 = vunpack.c.h.b16 %v445
        %v2514 = vunpack.c.l.b16 %v446
        %v2515 = vunpack.c.h.b16 %v446
        %v2516 = vunpack.c.l.b16 %v447
        %v2517 = vunpack.c.h.b16 %v447
        %v2518 = vunpack.c.l.b16 %v448
        %v2519 = vunpack.c.h.b16 %v448
        %v2520 = vunpack.c.l.b16 %v449
        %v2521 = vunpack.c.h.b16 %v449
        %v2522 = vunpack.c.l.b16 %v450
        %v2523 = vunpack.c.h.b16 %v450
        %v2524 = vunpack.c.l.b16 %v451
        %v2525 = vunpack.c.h.b16 %v451
        %v2526 = vunpack.c.l.b16 %v452
        %v2527 = vunpack.c.h.b16 %v452
        %v2528 = vunpack.c.l.b16 %v453
        %v2529 = vunpack.c.h.b16 %v453
        %v2530 = vunpack.c.l.b16 %v454
        %v2531 = vunpack.c.h.b16 %v454
        %v2532 = vunpack.c.l.b16 %v455
        %v2533 = vunpack.c.h.b16 %v455
        %v2534 = vunpack.c.l.b16 %v456
        %v2535 = vunpack.c.h.b16 %v456
        %v2536 = vunpack.c.l.b16 %v457
        %v2537 = vunpack.c.h.b16 %v457
        %v2538 = vunpack.c.l.b16 %v458
        %v2539 = vunpack.c.h.b16 %v458
        %v2540 = vunpack.c.l.b16 %v459
        %v2541 = vunpack.c.h.b16 %v459
        %v2542 = vunpack.c.l.b16 %v460
        %v2543 = vunpack.c.h.b16 %v460
        %v2544 = vunpack.c.l.b16 %v461
        %v2545 = vunpack.c.h.b16 %v461
        %v2546 = vunpack.c.l.b16 %v462
        %v2547 = vunpack.c.h.b16 %v462
        %v2548 = vunpack.c.l.b16 %v463
        %v2549 = vunpack.c.h.b16 %v463
        %v2550 = vunpack.c.l.b16 %v464
        %v2551 = vunpack.c.h.b16 %v464
        %v2552 = vunpack.c.l.b16 %v465
        %v2553 = vunpack.c.h.b16 %v465
        %v2554 = vunpack.c.l.b16 %v466
        %v2555 = vunpack.c.h.b16 %v466
        %v2556 = vunpack.c.l.b16 %v467
        %v2557 = vunpack.c.h.b16 %v467
        %v2558 = vunpack.c.l.b16 %v468
        %v2559 = vunpack.c.h.b16 %v468
        %v2560 = vunpack.c.l.b16 %v469
        %v2561 = vunpack.c.h.b16 %v469
        %v2562 = vunpack.c.l.b16 %v470
        %v2563 = vunpack.c.h.b16 %v470
        %v2564 = vunpack.c.l.b16 %v471
        %v2565 = vunpack.c.h.b16 %v471
        %v2566 = vunpack.c.l.b16 %v472
        %v2567 = vunpack.c.h.b16 %v472
        %v2568 = vunpack.c.l.b16 %v473
        %v2569 = vunpack.c.h.b16 %v473
        %v2570 = vunpack.c.l.b16 %v474
        %v2571 = vunpack.c.h.b16 %v474
        %v2572 = vunpack.c.l.b16 %v475
        %v2573 = vunpack.c.h.b16 %v475
        %v2574 = vunpack.c.l.b16 %v476
        %v2575 = vunpack.c.h.b16 %v476
        %v2576 = vunpack.c.l.b16 %v477
        %v2577 = vunpack.c.h.b16 %v477
        %v2578 = vunpack.c.l.b16 %v478
        %v2579 = vunpack.c.h.b16 %v478
        %v2580 = vunpack.c.l.b16 %v479
        %v2581 = vunpack.c.h.b16 %v479
        %v2582 = vunpack.c.l.b16 %v480
        %v2583 = vunpack.c.h.b16 %v480
        %v2584 = vunpack.c.l.b16 %v481
        %v2585 = vunpack.c.h.b16 %v481
        %v2586 = vunpack.c.l.b16 %v482
        %v2587 = vunpack.c.h.b16 %v482
        %v2588 = vunpack.c.l.b16 %v483
        %v2589 = vunpack.c.h.b16 %v483
        %v2590 = vunpack.c.l.b16 %v484
        %v2591 = vunpack.c.h.b16 %v484
        %v2592 = vunpack.c.l.b16 %v485
        %v2593 = vunpack.c.h.b16 %v485
        %v2594 = vunpack.c.l.b16 %v486
        %v2595 = vunpack.c.h.b16 %v486
        %v2596 = vunpack.c.l.b16 %v487
        %v2597 = vunpack.c.h.b16 %v487
        %v2598 = vunpack.c.l.b16 %v488
        %v2599 = vunpack.c.h.b16 %v488
        %v2600 = vunpack.c.l.b16 %v489
        %v2601 = vunpack.c.h.b16 %v489
        %v2602 = vunpack.c.l.b16 %v490
        %v2603 = vunpack.c.h.b16 %v490
        %v2604 = vunpack.c.l.b16 %v491
        %v2605 = vunpack.c.h.b16 %v491
        %v2606 = vunpack.c.l.b16 %v492
        %v2607 = vunpack.c.h.b16 %v492
        %v2608 = vunpack.c.l.b16 %v493
        %v2609 = vunpack.c.h.b16 %v493
        %v2610 = vunpack.c.l.b16 %v494
        %v2611 = vunpack.c.h.b16 %v494
        %v2612 = vunpack.c.l.b16 %v495
        %v2613 = vunpack.c.h.b16 %v495
        %v2614 = vunpack.c.l.b16 %v496
        %v2615 = vunpack.c.h.b16 %v496
        %v2616 = vunpack.c.l.b16 %v497
        %v2617 = vunpack.c.h.b16 %v497
        %v2618 = vunpack.c.l.b16 %v498
        %v2619 = vunpack.c.h.b16 %v498
        %v2620 = vunpack.c.l.b16 %v499
        %v2621 = vunpack.c.h.b16 %v499
        %v2622 = vunpack.c.l.b16 %v500
        %v2623 = vunpack.c.h.b16 %v500
        %v2624 = vunpack.c.l.b16 %v501
        %v2625 = vunpack.c.h.b16 %v501
        %v2626 = vunpack.c.l.b16 %v502
        %v2627 = vunpack.c.h.b16 %v502
        %v2628 = vunpack.c.l.b16 %v503
        %v2629 = vunpack.c.h.b16 %v503
        %v2630 = vunpack.c.l.b16 %v504
        %v2631 = vunpack.c.h.b16 %v504
        %v2632 = vunpack.c.l.b16 %v505
        %v2633 = vunpack.c.h.b16 %v505
        %v2634 = vunpack.c.l.b16 %v506
        %v2635 = vunpack.c.h.b16 %v506
        %v2636 = vunpack.c.l.b16 %v507
        %v2637 = vunpack.c.h.b16 %v507
        %v2638 = vunpack.c.l.b16 %v508
        %v2639 = vunpack.c.h.b16 %v508
        %v2640 = vunpack.c.l.b16 %v509
        %v2641 = vunpack.c.h.b16 %v509
        %v2642 = vunpack.c.l.b16 %v510
        %v2643 = vunpack.c.h.b16 %v510
        %v2644 = vunpack.c.l.b16 %v511
        %v2645 = vunpack.c.h.b16 %v511
        %v2646 = vunpack.c.l.b16 %v512
        %v2647 = vunpack.c.h.b16 %v512
        %v2648 = vunpack.c.l.b16 %v513
        %v2649 = vunpack.c.h.b16 %v513
        %v2650 = vunpack.c.l.b16 %v514
        %v2651 = vunpack.c.h.b16 %v514
        %v2652 = vunpack.c.l.b16 %v515
        %v2653 = vunpack.c.h.b16 %v515
        %v2654 = vunpack.c.l.b16 %v516
        %v2655 = vunpack.c.h.b16 %v516
        %v2656 = vunpack.c.l.b16 %v517
        %v2657 = vunpack.c.h.b16 %v517
        %v2658 = vunpack.c.l.b16 %v518
        %v2659 = vunpack.c.h.b16 %v518
        %v2660 = vunpack.c.l.b16 %v519
        %v2661 = vunpack.c.h.b16 %v519
        %v2662 = vunpack.c.l.b16 %v520
        %v2663 = vunpack.c.h.b16 %v520
        %v2664 = vunpack.c.l.b16 %v521
        %v2665 = vunpack.c.h.b16 %v521
        %v2666 = vunpack.c.l.b16 %v522
        %v2667 = vunpack.c.h.b16 %v522
        %v2668 = vunpack.c.l.b16 %v523
        %v2669 = vunpack.c.h.b16 %v523
        %v2670 = vunpack.c.l.b16 %v524
        %v2671 = vunpack.c.h.b16 %v524
        %v2672 = vunpack.c.l.b16 %v525
        %v2673 = vunpack.c.h.b16 %v525
        %v2674 = vunpack.c.l.b16 %v526
        %v2675 = vunpack.c.h.b16 %v526
        %v2676 = vunpack.c.l.b16 %v527
        %v2677 = vunpack.c.h.b16 %v527
        %v2678 = vunpack.c.l.b16 %v528
        %v2679 = vunpack.c.h.b16 %v528
        %v2680 = vunpack.c.l.b16 %v529
        %v2681 = vunpack.c.h.b16 %v529
        %v2682 = vunpack.c.l.b16 %v530
        %v2683 = vunpack.c.h.b16 %v530
        %v2684 = vunpack.c.l.b16 %v531
        %v2685 = vunpack.c.h.b16 %v531
        %v2686 = vunpack.c.l.b16 %v532
        %v2687 = vunpack.c.h.b16 %v532
        %v2688 = vunpack.c.l.b16 %v533
        %v2689 = vunpack.c.h.b16 %v533
        %v2690 = vunpack.c.l.b16 %v534
        %v2691 = vunpack.c.h.b16 %v534
        %v2692 = vunpack.c.l.b16 %v535
        %v2693 = vunpack.c.h.b16 %v535
        %v2694 = vunpack.c.l.b16 %v536
        %v2695 = vunpack.c.h.b16 %v536
        %v2696 = vunpack.c.l.b16 %v537
        %v2697 = vunpack.c.h.b16 %v537
        %v2698 = vunpack.c.l.b16 %v538
        %v2699 = vunpack.c.h.b16 %v538
        %v2700 = vunpack.c.l.b16 %v539
        %v2701 = vunpack.c.h.b16 %v539
        %v2702 = vunpack.c.l.b16 %v540
        %v2703 = vunpack.c.h.b16 %v540
        %v2704 = vunpack.c.l.b16 %v541
        %v2705 = vunpack.c.h.b16 %v541
        %v2706 = vunpack.c.l.b16 %v542
        %v2707 = vunpack.c.h.b16 %v542
        %v2708 = vunpack.c.l.b16 %v543
        %v2709 = vunpack.c.h.b16 %v543
        %v2710 = vunpack.c.l.b16 %v544
        %v2711 = vunpack.c.h.b16 %v544
        %v2712 = vunpack.c.l.b16 %v545
        %v2713 = vunpack.c.h.b16 %v545
        %v2714 = vunpack.c.l.b16 %v546
        %v2715 = vunpack.c.h.b16 %v546
        %v2716 = vunpack.c.l.b16 %v547
        %v2717 = vunpack.c.h.b16 %v547
        %v2718 = vunpack.c.l.b16 %v548
        %v2719 = vunpack.c.h.b16 %v548
        %v2720 = vunpack.c.l.b16 %v549
        %v2721 = vunpack.c.h.b16 %v549
        %v2722 = vunpack.c.l.b16 %v550
        %v2723 = vunpack.c.h.b16 %v550
        %v2724 = vunpack.c.l.b16 %v551
        %v2725 = vunpack.c.h.b16 %v551
        %v2726 = vunpack.c.l.b16 %v552
        %v2727 = vunpack.c.h.b16 %v552
        %v2728 = vunpack.c.l.b16 %v553
        %v2729 = vunpack.c.h.b16 %v553
        %v2730 = vunpack.c.l.b16 %v554
        %v2731 = vunpack.c.h.b16 %v554
        %v2732 = vunpack.c.l.b16 %v555
        %v2733 = vunpack.c.h.b16 %v555
        %v2734 = vunpack.c.l.b16 %v556
        %v2735 = vunpack.c.h.b16 %v556
        %v2736 = vunpack.c.l.b16 %v557
        %v2737 = vunpack.c.h.b16 %v557
        %v2738 = vunpack.c.l.b16 %v558
        %v2739 = vunpack.c.h.b16 %v558
        %v2740 = vunpack.c.l.b16 %v559
        %v2741 = vunpack.c.h.b16 %v559
        %v2742 = vunpack.c.l.b16 %v560
        %v2743 = vunpack.c.h.b16 %v560
        %v2744 = vunpack.c.l.b16 %v561
        %v2745 = vunpack.c.h.b16 %v561
        %v2746 = vunpack.c.l.b16 %v562
        %v2747 = vunpack.c.h.b16 %v562
        %v2748 = vunpack.c.l.b16 %v563
        %v2749 = vunpack.c.h.b16 %v563
        %v2750 = vunpack.c.l.b16 %v564
        %v2751 = vunpack.c.h.b16 %v564
        %v2752 = vunpack.c.l.b16 %v565
        %v2753 = vunpack.c.h.b16 %v565
        %v2754 = vunpack.c.l.b16 %v566
        %v2755 = vunpack.c.h.b16 %v566
        %v2756 = vunpack.c.l.b16 %v567
        %v2757 = vunpack.c.h.b16 %v567
        %v2758 = vunpack.c.l.b16 %v568
        %v2759 = vunpack.c.h.b16 %v568
        %v2760 = vunpack.c.l.b16 %v569
        %v2761 = vunpack.c.h.b16 %v569
        %v2762 = vunpack.c.l.b16 %v570
        %v2763 = vunpack.c.h.b16 %v570
        %v2764 = vunpack.c.l.b16 %v571
        %v2765 = vunpack.c.h.b16 %v571
        %v2766 = vunpack.c.l.b16 %v572
        %v2767 = vunpack.c.h.b16 %v572
        %v2768 = vunpack.c.l.b16 %v573
        %v2769 = vunpack.c.h.b16 %v573
        %v2770 = vunpack.c.l.b16 %v574
        %v2771 = vunpack.c.h.b16 %v574
        %v2772 = vunpack.c.l.b16 %v575
        %v2773 = vunpack.c.h.b16 %v575
        %v2774 = vunpack.c.l.b16 %v576
        %v2775 = vunpack.c.h.b16 %v576
        %v2776 = vunpack.c.l.b16 %v577
        %v2777 = vunpack.c.h.b16 %v577
        %v2778 = vunpack.c.l.b16 %v578
        %v2779 = vunpack.c.h.b16 %v578
        %v2780 = vunpack.c.l.b16 %v579
        %v2781 = vunpack.c.h.b16 %v579
        %v2782 = vunpack.c.l.b16 %v580
        %v2783 = vunpack.c.h.b16 %v580
        %v2784 = vunpack.c.l.b16 %v581
        %v2785 = vunpack.c.h.b16 %v581
        %v2786 = vunpack.c.l.b16 %v582
        %v2787 = vunpack.c.h.b16 %v582
        %v2788 = vunpack.c.l.b16 %v583
        %v2789 = vunpack.c.h.b16 %v583
        %v2790 = vunpack.c.l.b16 %v584
        %v2791 = vunpack.c.h.b16 %v584
        %v2792 = vunpack.c.l.b16 %v585
        %v2793 = vunpack.c.h.b16 %v585
        %v2794 = vunpack.c.l.b16 %v586
        %v2795 = vunpack.c.h.b16 %v586
        %v2796 = vunpack.c.l.b16 %v587
        %v2797 = vunpack.c.h.b16 %v587
        %v2798 = vunpack.c.l.b16 %v588
        %v2799 = vunpack.c.h.b16 %v588
        %v2800 = vunpack.c.l.b16 %v589
        %v2801 = vunpack.c.h.b16 %v589
        %v2802 = vunpack.c.l.b16 %v590
        %v2803 = vunpack.c.h.b16 %v590
        %v2804 = vunpack.c.l.b16 %v591
        %v2805 = vunpack.c.h.b16 %v591
        %v2806 = vunpack.c.l.b16 %v592
        %v2807 = vunpack.c.h.b16 %v592
        %v2808 = vunpack.c.l.b16 %v593
        %v2809 = vunpack.c.h.b16 %v593
        %v2810 = vunpack.c.l.b16 %v594
        %v2811 = vunpack.c.h.b16 %v594
        %v2812 = vunpack.c.l.b16 %v595
        %v2813 = vunpack.c.h.b16 %v595
        %v2814 = vunpack.c.l.b16 %v596
        %v2815 = vunpack.c.h.b16 %v596
        %v2816 = vunpack.c.l.b16 %v597
        %v2817 = vunpack.c.h.b16 %v597
        %v2818 = vunpack.c.l.b16 %v598
        %v2819 = vunpack.c.h.b16 %v598
        %v2820 = vunpack.c.l.b16 %v599
        %v2821 = vunpack.c.h.b16 %v599
        %v2822 = vunpack.c.l.b16 %v600
        %v2823 = vunpack.c.h.b16 %v600
        %v2824 = vunpack.c.l.b16 %v601
        %v2825 = vunpack.c.h.b16 %v601
        %v2826 = vunpack.c.l.b16 %v602
        %v2827 = vunpack.c.h.b16 %v602
        %v2828 = vunpack.c.l.b16 %v603
        %v2829 = vunpack.c.h.b16 %v603
        %v2830 = vunpack.c.l.b16 %v604
        %v2831 = vunpack.c.h.b16 %v604
        %v2832 = vunpack.c.l.b16 %v605
        %v2833 = vunpack.c.h.b16 %v605
        %v2834 = vunpack.c.l.b16 %v606
        %v2835 = vunpack.c.h.b16 %v606
        %v2836 = vunpack.c.l.b16 %v607
        %v2837 = vunpack.c.h.b16 %v607
        %v2838 = vunpack.c.l.b16 %v608
        %v2839 = vunpack.c.h.b16 %v608
        %v2840 = vunpack.c.l.b16 %v609
        %v2841 = vunpack.c.h.b16 %v609
        %v2842 = vunpack.c.l.b16 %v610
        %v2843 = vunpack.c.h.b16 %v610
        %v2844 = vunpack.c.l.b16 %v611
        %v2845 = vunpack.c.h.b16 %v611
        %v2846 = vunpack.c.l.b16 %v612
        %v2847 = vunpack.c.h.b16 %v612
        %v2848 = vunpack.c.l.b16 %v613
        %v2849 = vunpack.c.h.b16 %v613
        %v2850 = vunpack.c.l.b16 %v614
        %v2851 = vunpack.c.h.b16 %v614
        %v2852 = vunpack.c.l.b16 %v615
        %v2853 = vunpack.c.h.b16 %v615
        %v2854 = vunpack.c.l.b16 %v616
        %v2855 = vunpack.c.h.b16 %v616
        %v2856 = vunpack.c.l.b16 %v617
        %v2857 = vunpack.c.h.b16 %v617
        %v2858 = vunpack.c.l.b16 %v618
        %v2859 = vunpack.c.h.b16 %v618
        %v2860 = vunpack.c.l.b16 %v619
        %v2861 = vunpack.c.h.b16 %v619
        %v2862 = vunpack.c.l.b16 %v620
        %v2863 = vunpack.c.h.b16 %v620
        %v2864 = vunpack.c.l.b16 %v621
        %v2865 = vunpack.c.h.b16 %v621
        %v2866 = vunpack.c.l.b16 %v622
        %v2867 = vunpack.c.h.b16 %v622
        %v2868 = vunpack.c.l.b16 %v623
        %v2869 = vunpack.c.h.b16 %v623
        %v2870 = vunpack.c.l.b16 %v624
        %v2871 = vunpack.c.h.b16 %v624
        %v2872 = vunpack.c.l.b16 %v625
        %v2873 = vunpack.c.h.b16 %v625
        %v2874 = vunpack.c.l.b16 %v626
        %v2875 = vunpack.c.h.b16 %v626
        %v2876 = vunpack.c.l.b16 %v627
        %v2877 = vunpack.c.h.b16 %v627
        %v2878 = vunpack.c.l.b16 %v628
        %v2879 = vunpack.c.h.b16 %v628
        %v2880 = vunpack.c.l.b16 %v629
        %v2881 = vunpack.c.h.b16 %v629
        %v2882 = vunpack.c.l.b16 %v630
        %v2883 = vunpack.c.h.b16 %v630
        %v2884 = vunpack.c.l.b16 %v631
        %v2885 = vunpack.c.h.b16 %v631
        %v2886 = vunpack.c.l.b16 %v632
        %v2887 = vunpack.c.h.b16 %v632
        %v2888 = vunpack.c.l.b16 %v633
        %v2889 = vunpack.c.h.b16 %v633
        %v2890 = vunpack.c.l.b16 %v634
        %v2891 = vunpack.c.h.b16 %v634
        %v2892 = vunpack.c.l.b16 %v635
        %v2893 = vunpack.c.h.b16 %v635
        %v2894 = vunpack.c.l.b16 %v636
        %v2895 = vunpack.c.h.b16 %v636
        %v2896 = vunpack.c.l.b16 %v637
        %v2897 = vunpack.c.h.b16 %v637
        %v2898 = vunpack.c.l.b16 %v638
        %v2899 = vunpack.c.h.b16 %v638
        %v2900 = vunpack.c.l.b16 %v639
        %v2901 = vunpack.c.h.b16 %v639
        %v2902 = vunpack.c.l.b16 %v640
        %v2903 = vunpack.c.h.b16 %v640
        %v2904 = vunpack.c.l.b16 %v641
        %v2905 = vunpack.c.h.b16 %v641
        %v2906 = vunpack.c.l.b16 %v642
        %v2907 = vunpack.c.h.b16 %v642
        %v2908 = vunpack.c.l.b16 %v643
        %v2909 = vunpack.c.h.b16 %v643
        %v2910 = vunpack.c.l.b16 %v644
        %v2911 = vunpack.c.h.b16 %v644
        %v2912 = vunpack.c.l.b16 %v645
        %v2913 = vunpack.c.h.b16 %v645
        %v2914 = vunpack.c.l.b16 %v646
        %v2915 = vunpack.c.h.b16 %v646
        %v2916 = vunpack.c.l.b16 %v647
        %v2917 = vunpack.c.h.b16 %v647
        %v2918 = vunpack.c.l.b16 %v648
        %v2919 = vunpack.c.h.b16 %v648
        %v2920 = vunpack.c.l.b16 %v649
        %v2921 = vunpack.c.h.b16 %v649
        %v2922 = vunpack.c.l.b16 %v650
        %v2923 = vunpack.c.h.b16 %v650
        %v2924 = vunpack.c.l.b16 %v651
        %v2925 = vunpack.c.h.b16 %v651
        %v2926 = vunpack.c.l.b16 %v652
        %v2927 = vunpack.c.h.b16 %v652
        %v2928 = vunpack.c.l.b16 %v653
        %v2929 = vunpack.c.h.b16 %v653
        %v2930 = vunpack.c.l.b16 %v654
        %v2931 = vunpack.c.h.b16 %v654
        %v2932 = vunpack.c.l.b16 %v655
        %v2933 = vunpack.c.h.b16 %v655
        %v2934 = vunpack.c.l.b16 %v656
        %v2935 = vunpack.c.h.b16 %v656
        %v2936 = vunpack.c.l.b16 %v657
        %v2937 = vunpack.c.h.b16 %v657
        %v2938 = vunpack.c.l.b16 %v658
        %v2939 = vunpack.c.h.b16 %v658
        %v2940 = vunpack.c.l.b16 %v659
        %v2941 = vunpack.c.h.b16 %v659
        %v2942 = vunpack.c.l.b16 %v660
        %v2943 = vunpack.c.h.b16 %v660
        %v2944 = vunpack.c.l.b16 %v661
        %v2945 = vunpack.c.h.b16 %v661
        %v2946 = vunpack.c.l.b16 %v662
        %v2947 = vunpack.c.h.b16 %v662
        %v2948 = vunpack.c.l.b16 %v663
        %v2949 = vunpack.c.h.b16 %v663
        %v2950 = vunpack.c.l.b16 %v664
        %v2951 = vunpack.c.h.b16 %v664
        %v2952 = vunpack.c.l.b16 %v665
        %v2953 = vunpack.c.h.b16 %v665
        %v2954 = vunpack.c.l.b16 %v666
        %v2955 = vunpack.c.h.b16 %v666
        %v2956 = vunpack.c.l.b16 %v667
        %v2957 = vunpack.c.h.b16 %v667
        %v2958 = vunpack.c.l.b16 %v668
        %v2959 = vunpack.c.h.b16 %v668
        %v2960 = vunpack.c.l.b16 %v669
        %v2961 = vunpack.c.h.b16 %v669
        %v2962 = vunpack.c.l.b16 %v670
        %v2963 = vunpack.c.h.b16 %v670
        %v2964 = vunpack.c.l.b16 %v671
        %v2965 = vunpack.c.h.b16 %v671
        %v2966 = vunpack.c.l.b16 %v672
        %v2967 = vunpack.c.h.b16 %v672
        %v2968 = vunpack.c.l.b16 %v673
        %v2969 = vunpack.c.h.b16 %v673
        %v2970 = vunpack.c.l.b16 %v674
        %v2971 = vunpack.c.h.b16 %v674
        %v2972 = vunpack.c.l.b16 %v675
        %v2973 = vunpack.c.h.b16 %v675
        %v2974 = vunpack.c.l.b16 %v676
        %v2975 = vunpack.c.h.b16 %v676
        %v2976 = vunpack.c.l.b16 %v677
        %v2977 = vunpack.c.h.b16 %v677
        %v2978 = vunpack.c.l.b16 %v678
        %v2979 = vunpack.c.h.b16 %v678
        %v2980 = vunpack.c.l.b16 %v679
        %v2981 = vunpack.c.h.b16 %v679
        %v2982 = vunpack.c.l.b16 %v680
        %v2983 = vunpack.c.h.b16 %v680
        %v2984 = vunpack.c.l.b16 %v681
        %v2985 = vunpack.c.h.b16 %v681
        %v2986 = vunpack.c.l.b16 %v682
        %v2987 = vunpack.c.h.b16 %v682
        %v2988 = vunpack.c.l.b16 %v683
        %v2989 = vunpack.c.h.b16 %v683
        %v2990 = vunpack.c.l.b16 %v684
        %v2991 = vunpack.c.h.b16 %v684
        %v2992 = vunpack.c.l.b16 %v685
        %v2993 = vunpack.c.h.b16 %v685
        %v2994 = vunpack.c.l.b16 %v686
        %v2995 = vunpack.c.h.b16 %v686
        %v2996 = vunpack.c.l.b16 %v687
        %v2997 = vunpack.c.h.b16 %v687
        %v2998 = vunpack.c.l.b16 %v688
        %v2999 = vunpack.c.h.b16 %v688
        %v3000 = vunpack.c.l.b16 %v689
        %v3001 = vunpack.c.h.b16 %v689
        %v3002 = vunpack.c.l.b16 %v690
        %v3003 = vunpack.c.h.b16 %v690
        %v3004 = vunpack.c.l.b16 %v691
        %v3005 = vunpack.c.h.b16 %v691
        %v3006 = vunpack.c.l.b16 %v692
        %v3007 = vunpack.c.h.b16 %v692
        %v3008 = vunpack.c.l.b16 %v693
        %v3009 = vunpack.c.h.b16 %v693
        %v3010 = vunpack.c.l.b16 %v694
        %v3011 = vunpack.c.h.b16 %v694
        %v3012 = vunpack.c.l.b16 %v695
        %v3013 = vunpack.c.h.b16 %v695
        %v3014 = vunpack.c.l.b16 %v696
        %v3015 = vunpack.c.h.b16 %v696
        %v3016 = vunpack.c.l.b16 %v697
        %v3017 = vunpack.c.h.b16 %v697
        %v3018 = vunpack.c.l.b16 %v698
        %v3019 = vunpack.c.h.b16 %v698
        %v3020 = vunpack.c.l.b16 %v699
        %v3021 = vunpack.c.h.b16 %v699
        %v3022 = vunpack.c.l.b16 %v700
        %v3023 = vunpack.c.h.b16 %v700
        %v3024 = vunpack.c.l.b16 %v701
        %v3025 = vunpack.c.h.b16 %v701
        %v3026 = vunpack.c.l.b16 %v702
        %v3027 = vunpack.c.h.b16 %v702
        %v3028 = vunpack.c.l.b16 %v703
        %v3029 = vunpack.c.h.b16 %v703
        %v3030 = vunpack.c.l.b16 %v704
        %v3031 = vunpack.c.h.b16 %v704
        %v3032 = vunpack.c.l.b16 %v705
        %v3033 = vunpack.c.h.b16 %v705
        %v3034 = vunpack.c.l.b16 %v706
        %v3035 = vunpack.c.h.b16 %v706
        %v3036 = vunpack.c.l.b16 %v707
        %v3037 = vunpack.c.h.b16 %v707
        %v3038 = vunpack.c.l.b16 %v708
        %v3039 = vunpack.c.h.b16 %v708
        %v3040 = vunpack.c.l.b16 %v709
        %v3041 = vunpack.c.h.b16 %v709
        %v3042 = vunpack.c.l.b16 %v710
        %v3043 = vunpack.c.h.b16 %v710
        %v3044 = vunpack.c.l.b16 %v711
        %v3045 = vunpack.c.h.b16 %v711
        %v3046 = vunpack.c.l.b16 %v712
        %v3047 = vunpack.c.h.b16 %v712
        %v3048 = vunpack.c.l.b16 %v713
        %v3049 = vunpack.c.h.b16 %v713
        %v3050 = vunpack.c.l.b16 %v714
        %v3051 = vunpack.c.h.b16 %v714
        %v3052 = vunpack.c.l.b16 %v715
        %v3053 = vunpack.c.h.b16 %v715
        %v3054 = vunpack.c.l.b16 %v716
        %v3055 = vunpack.c.h.b16 %v716
        %v3056 = vunpack.c.l.b16 %v717
        %v3057 = vunpack.c.h.b16 %v717
        %v3058 = vunpack.c.l.b16 %v718
        %v3059 = vunpack.c.h.b16 %v718
        %v3060 = vunpack.c.l.b16 %v719
        %v3061 = vunpack.c.h.b16 %v719
        %v3062 = vunpack.c.l.b16 %v720
        %v3063 = vunpack.c.h.b16 %v720
        %v3064 = vunpack.c.l.b16 %v721
        %v3065 = vunpack.c.h.b16 %v721
        %v3066 = vunpack.c.l.b16 %v722
        %v3067 = vunpack.c.h.b16 %v722
        %v3068 = vunpack.c.l.b16 %v723
        %v3069 = vunpack.c.h.b16 %v723
        %v3070 = vunpack.c.l.b16 %v724
        %v3071 = vunpack.c.h.b16 %v724
        %v3072 = vunpack.c.l.b16 %v725
        %v3073 = vunpack.c.h.b16 %v725
        %v3074 = vunpack.c.l.b16 %v726
        %v3075 = vunpack.c.h.b16 %v726
        %v3076 = vunpack.c.l.b16 %v727
        %v3077 = vunpack.c.h.b16 %v727
        %v3078 = vunpack.c.l.b16 %v728
        %v3079 = vunpack.c.h.b16 %v728
        %v3080 = vunpack.c.l.b16 %v729
        %v3081 = vunpack.c.h.b16 %v729
        %v3082 = vunpack.c.l.b16 %v730
        %v3083 = vunpack.c.h.b16 %v730
        %v3084 = vunpack.c.l.b16 %v731
        %v3085 = vunpack.c.h.b16 %v731
        %v3086 = vunpack.c.l.b16 %v732
        %v3087 = vunpack.c.h.b16 %v732
        %v3088 = vunpack.c.l.b16 %v733
        %v3089 = vunpack.c.h.b16 %v733
        %v3090 = vunpack.c.l.b16 %v734
        %v3091 = vunpack.c.h.b16 %v734
        %v3092 = vunpack.c.l.b16 %v735
        %v3093 = vunpack.c.h.b16 %v735
        %v3094 = vunpack.c.l.b16 %v736
        %v3095 = vunpack.c.h.b16 %v736
        %v3096 = vunpack.c.l.b16 %v737
        %v3097 = vunpack.c.h.b16 %v737
        %v3098 = vunpack.c.l.b16 %v738
        %v3099 = vunpack.c.h.b16 %v738
        %v3100 = vunpack.c.l.b16 %v739
        %v3101 = vunpack.c.h.b16 %v739
        %v3102 = vunpack.c.l.b16 %v740
        %v3103 = vunpack.c.h.b16 %v740
        %v3104 = vunpack.c.l.b16 %v741
        %v3105 = vunpack.c.h.b16 %v741
        %v3106 = vunpack.c.l.b16 %v742
        %v3107 = vunpack.c.h.b16 %v742
        %v3108 = vunpack.c.l.b16 %v743
        %v3109 = vunpack.c.h.b16 %v743
        %v3110 = vunpack.c.l.b16 %v744
        %v3111 = vunpack.c.h.b16 %v744
        %v3112 = vunpack.c.l.b16 %v745
        %v3113 = vunpack.c.h.b16 %v745
        %v3114 = vunpack.c.l.b16 %v746
        %v3115 = vunpack.c.h.b16 %v746
        %v3116 = vunpack.c.l.b16 %v747
        %v3117 = vunpack.c.h.b16 %v747
        %v3118 = vunpack.c.l.b16 %v748
        %v3119 = vunpack.c.h.b16 %v748
        %v3120 = vunpack.c.l.b16 %v749
        %v3121 = vunpack.c.h.b16 %v749
        %v3122 = vunpack.c.l.b16 %v750
        %v3123 = vunpack.c.h.b16 %v750
        %v3124 = vunpack.c.l.b16 %v751
        %v3125 = vunpack.c.h.b16 %v751
        %v3126 = vunpack.c.l.b16 %v752
        %v3127 = vunpack.c.h.b16 %v752
        %v3128 = vunpack.c.l.b16 %v753
        %v3129 = vunpack.c.h.b16 %v753
        %v3130 = vunpack.c.l.b16 %v754
        %v3131 = vunpack.c.h.b16 %v754
        %v3132 = vunpack.c.l.b16 %v755
        %v3133 = vunpack.c.h.b16 %v755
        %v3134 = vunpack.c.l.b16 %v756
        %v3135 = vunpack.c.h.b16 %v756
        %v3136 = vunpack.c.l.b16 %v757
        %v3137 = vunpack.c.h.b16 %v757
        %v3138 = vunpack.c.l.b16 %v758
        %v3139 = vunpack.c.h.b16 %v758
        %v3140 = vunpack.c.l.b16 %v759
        %v3141 = vunpack.c.h.b16 %v759
        %v3142 = vunpack.c.l.b16 %v760
        %v3143 = vunpack.c.h.b16 %v760
        %v3144 = vunpack.c.l.b16 %v761
        %v3145 = vunpack.c.h.b16 %v761
        %v3146 = vunpack.c.l.b16 %v762
        %v3147 = vunpack.c.h.b16 %v762
        %v3148 = vunpack.c.l.b16 %v763
        %v3149 = vunpack.c.h.b16 %v763
        %v3150 = vunpack.c.l.b16 %v764
        %v3151 = vunpack.c.h.b16 %v764
        %v3152 = vunpack.c.l.b16 %v765
        %v3153 = vunpack.c.h.b16 %v765
        %v3154 = vunpack.c.l.b16 %v766
        %v3155 = vunpack.c.h.b16 %v766
        %v3156 = vunpack.c.l.b16 %v767
        %v3157 = vunpack.c.h.b16 %v767
        %v3158 = vunpack.c.l.b16 %v768
        %v3159 = vunpack.c.h.b16 %v768
        %v3160 = vunpack.c.l.b16 %v769
        %v3161 = vunpack.c.h.b16 %v769
        %v3162 = vunpack.c.l.b16 %v770
        %v3163 = vunpack.c.h.b16 %v770
        %v3164 = vunpack.c.l.b16 %v771
        %v3165 = vunpack.c.h.b16 %v771
        %v3166 = vunpack.c.l.b16 %v772
        %v3167 = vunpack.c.h.b16 %v772
        %v3168 = vunpack.c.l.b16 %v773
        %v3169 = vunpack.c.h.b16 %v773
        %v3170 = vunpack.c.l.b16 %v774
        %v3171 = vunpack.c.h.b16 %v774
        %v3172 = vunpack.c.l.b16 %v775
        %v3173 = vunpack.c.h.b16 %v775
        %v3174 = vunpack.c.l.b16 %v776
        %v3175 = vunpack.c.h.b16 %v776
        %v3176 = vunpack.c.l.b16 %v777
        %v3177 = vunpack.c.h.b16 %v777
        %v3178 = vunpack.c.l.b16 %v778
        %v3179 = vunpack.c.h.b16 %v778
        %v3180 = vunpack.c.l.b16 %v779
        %v3181 = vunpack.c.h.b16 %v779
        %v3182 = vunpack.c.l.b16 %v780
        %v3183 = vunpack.c.h.b16 %v780
        %v3184 = vunpack.c.l.b16 %v781
        %v3185 = vunpack.c.h.b16 %v781
        %v3186 = vunpack.c.l.b16 %v782
        %v3187 = vunpack.c.h.b16 %v782
        %v3188 = vunpack.c.l.b16 %v783
        %v3189 = vunpack.c.h.b16 %v783
        %v3190 = vunpack.c.l.b16 %v784
        %v3191 = vunpack.c.h.b16 %v784
        %v3192 = vunpack.c.l.b16 %v785
        %v3193 = vunpack.c.h.b16 %v785
        %v3194 = vunpack.c.l.b16 %v786
        %v3195 = vunpack.c.h.b16 %v786
        %v3196 = vunpack.c.l.b16 %v787
        %v3197 = vunpack.c.h.b16 %v787
        %v3198 = vunpack.c.l.b16 %v788
        %v3199 = vunpack.c.h.b16 %v788
        %v3200 = vunpack.c.l.b16 %v789
        %v3201 = vunpack.c.h.b16 %v789
        %v3202 = vunpack.c.l.b16 %v790
        %v3203 = vunpack.c.h.b16 %v790
        %v3204 = vunpack.c.l.b16 %v791
        %v3205 = vunpack.c.h.b16 %v791
        %v3206 = vunpack.c.l.b16 %v792
        %v3207 = vunpack.c.h.b16 %v792
        %v3208 = vunpack.c.l.b16 %v793
        %v3209 = vunpack.c.h.b16 %v793
        %v3210 = vunpack.c.l.b16 %v794
        %v3211 = vunpack.c.h.b16 %v794
        %v3212 = vunpack.c.l.b16 %v795
        %v3213 = vunpack.c.h.b16 %v795
        %v3214 = vunpack.c.l.b16 %v796
        %v3215 = vunpack.c.h.b16 %v796
        %v3216 = vunpack.c.l.b16 %v797
        %v3217 = vunpack.c.h.b16 %v797
        %v3218 = vunpack.c.l.b16 %v798
        %v3219 = vunpack.c.h.b16 %v798
        %v3220 = vunpack.c.l.b16 %v799
        %v3221 = vunpack.c.h.b16 %v799
        %v3222 = vunpack.c.l.b16 %v800
        %v3223 = vunpack.c.h.b16 %v800
        %v3224 = vunpack.c.l.b16 %v801
        %v3225 = vunpack.c.h.b16 %v801
        %v3226 = vunpack.c.l.b16 %v802
        %v3227 = vunpack.c.h.b16 %v802
        %v3228 = vunpack.c.l.b16 %v803
        %v3229 = vunpack.c.h.b16 %v803
        %v3230 = vunpack.c.l.b16 %v804
        %v3231 = vunpack.c.h.b16 %v804
        %v3232 = vunpack.c.l.b16 %v805
        %v3233 = vunpack.c.h.b16 %v805
        %v3234 = vunpack.c.l.b16 %v806
        %v3235 = vunpack.c.h.b16 %v806
        %v3236 = vunpack.c.l.b16 %v807
        %v3237 = vunpack.c.h.b16 %v807
        %v3238 = vunpack.c.l.b16 %v808
        %v3239 = vunpack.c.h.b16 %v808
        %v3240 = vunpack.c.l.b16 %v809
        %v3241 = vunpack.c.h.b16 %v809
        %v3242 = vunpack.c.l.b16 %v810
        %v3243 = vunpack.c.h.b16 %v810
        %v3244 = vunpack.c.l.b16 %v811
        %v3245 = vunpack.c.h.b16 %v811
        %v3246 = vunpack.c.l.b16 %v812
        %v3247 = vunpack.c.h.b16 %v812
        %v3248 = vunpack.c.l.b16 %v813
        %v3249 = vunpack.c.h.b16 %v813
        %v3250 = vunpack.c.l.b16 %v814
        %v3251 = vunpack.c.h.b16 %v814
        %v3252 = vunpack.c.l.b16 %v815
        %v3253 = vunpack.c.h.b16 %v815
        %v3254 = vunpack.c.l.b16 %v816
        %v3255 = vunpack.c.h.b16 %v816
        %v3256 = vunpack.c.l.b16 %v817
        %v3257 = vunpack.c.h.b16 %v817
        %v3258 = vunpack.c.l.b16 %v818
        %v3259 = vunpack.c.h.b16 %v818
        %v3260 = vunpack.c.l.b16 %v819
        %v3261 = vunpack.c.h.b16 %v819
        %v3262 = vunpack.c.l.b16 %v820
        %v3263 = vunpack.c.h.b16 %v820
        %v3264 = vunpack.c.l.b16 %v821
        %v3265 = vunpack.c.h.b16 %v821
        %v3266 = vunpack.c.l.b16 %v822
        %v3267 = vunpack.c.h.b16 %v822
        %v3268 = vunpack.c.l.b16 %v823
        %v3269 = vunpack.c.h.b16 %v823
        %v3270 = vunpack.c.l.b16 %v824
        %v3271 = vunpack.c.h.b16 %v824
        %v3272 = vunpack.c.l.b16 %v825
        %v3273 = vunpack.c.h.b16 %v825
        %v3274 = vunpack.c.l.b16 %v826
        %v3275 = vunpack.c.h.b16 %v826
        %v3276 = vunpack.c.l.b16 %v827
        %v3277 = vunpack.c.h.b16 %v827
        %v3278 = vunpack.c.l.b16 %v828
        %v3279 = vunpack.c.h.b16 %v828
        %v3280 = vunpack.c.l.b16 %v829
        %v3281 = vunpack.c.h.b16 %v829
        %v3282 = vunpack.c.l.b16 %v830
        %v3283 = vunpack.c.h.b16 %v830
        %v3284 = vunpack.c.l.b16 %v831
        %v3285 = vunpack.c.h.b16 %v831
        %v3286 = vunpack.c.l.b16 %v832
        %v3287 = vunpack.c.h.b16 %v832
        %v3288 = vunpack.c.l.b16 %v833
        %v3289 = vunpack.c.h.b16 %v833
        %v3290 = vunpack.c.l.b16 %v834
        %v3291 = vunpack.c.h.b16 %v834
        %v3292 = vunpack.c.l.b16 %v835
        %v3293 = vunpack.c.h.b16 %v835
        %v3294 = vunpack.c.l.b16 %v836
        %v3295 = vunpack.c.h.b16 %v836
        %v3296 = vunpack.c.l.b16 %v837
        %v3297 = vunpack.c.h.b16 %v837
        %v3298 = vunpack.c.l.b16 %v838
        %v3299 = vunpack.c.h.b16 %v838
        %v3300 = vunpack.c.l.b16 %v839
        %v3301 = vunpack.c.h.b16 %v839
        %v3302 = vunpack.c.l.b16 %v840
        %v3303 = vunpack.c.h.b16 %v840
        %v3304 = vunpack.c.l.b16 %v841
        %v3305 = vunpack.c.h.b16 %v841
        %v3306 = vunpack.c.l.b16 %v842
        %v3307 = vunpack.c.h.b16 %v842
        %v3308 = vunpack.c.l.b16 %v843
        %v3309 = vunpack.c.h.b16 %v843
        %v3310 = vunpack.c.l.b16 %v844
        %v3311 = vunpack.c.h.b16 %v844
        %v3312 = vunpack.c.l.b16 %v845
        %v3313 = vunpack.c.h.b16 %v845
        %v3314 = vunpack.c.l.b16 %v846
        %v3315 = vunpack.c.h.b16 %v846
        %v3316 = vunpack.c.l.b16 %v847
        %v3317 = vunpack.c.h.b16 %v847
        %v3318 = vunpack.c.l.b16 %v848
        %v3319 = vunpack.c.h.b16 %v848
        %v3320 = vunpack.c.l.b16 %v849
        %v3321 = vunpack.c.h.b16 %v849
        %v3322 = vunpack.c.l.b16 %v850
        %v3323 = vunpack.c.h.b16 %v850
        %v3324 = vunpack.c.l.b16 %v851
        %v3325 = vunpack.c.h.b16 %v851
        %v3326 = vunpack.c.l.b16 %v852
        %v3327 = vunpack.c.h.b16 %v852
        %v3328 = vunpack.c.l.b16 %v853
        %v3329 = vunpack.c.h.b16 %v853
        %v3330 = vunpack.c.l.b16 %v854
        %v3331 = vunpack.c.h.b16 %v854
        %v3332 = vunpack.c.l.b16 %v855
        %v3333 = vunpack.c.h.b16 %v855
        %v3334 = vunpack.c.l.b16 %v856
        %v3335 = vunpack.c.h.b16 %v856
        %v3336 = vunpack.c.l.b16 %v857
        %v3337 = vunpack.c.h.b16 %v857
        %v3338 = vunpack.c.l.b16 %v858
        %v3339 = vunpack.c.h.b16 %v858
        %v3340 = vunpack.c.l.b16 %v859
        %v3341 = vunpack.c.h.b16 %v859
        %v3342 = vunpack.c.l.b16 %v860
        %v3343 = vunpack.c.h.b16 %v860
        %v3344 = vunpack.c.l.b16 %v861
        %v3345 = vunpack.c.h.b16 %v861
        %v3346 = vunpack.c.l.b16 %v862
        %v3347 = vunpack.c.h.b16 %v862
        %v3348 = vunpack.c.l.b16 %v863
        %v3349 = vunpack.c.h.b16 %v863
        %v3350 = vunpack.c.l.b16 %v864
        %v3351 = vunpack.c.h.b16 %v864
        %v3352 = vunpack.c.l.b16 %v865
        %v3353 = vunpack.c.h.b16 %v865
        %v3354 = vunpack.c.l.b16 %v866
        %v3355 = vunpack.c.h.b16 %v866
        %v3356 = vunpack.c.l.b16 %v867
        %v3357 = vunpack.c.h.b16 %v867
        %v3358 = vunpack.c.l.b16 %v868
        %v3359 = vunpack.c.h.b16 %v868
        %v3360 = vunpack.c.l.b16 %v869
        %v3361 = vunpack.c.h.b16 %v869
        %v3362 = vunpack.c.l.b16 %v870
        %v3363 = vunpack.c.h.b16 %v870
        %v3364 = vunpack.c.l.b16 %v871
        %v3365 = vunpack.c.h.b16 %v871
        %v3366 = vunpack.c.l.b16 %v872
        %v3367 = vunpack.c.h.b16 %v872
        %v3368 = vunpack.c.l.b16 %v873
        %v3369 = vunpack.c.h.b16 %v873
        %v3370 = vunpack.c.l.b16 %v874
        %v3371 = vunpack.c.h.b16 %v874
        %v3372 = vunpack.c.l.b16 %v875
        %v3373 = vunpack.c.h.b16 %v875
        %v3374 = vunpack.c.l.b16 %v876
        %v3375 = vunpack.c.h.b16 %v876
        %v3376 = vunpack.c.l.b16 %v877
        %v3377 = vunpack.c.h.b16 %v877
        %v3378 = vunpack.c.l.b16 %v878
        %v3379 = vunpack.c.h.b16 %v878
        %v3380 = vunpack.c.l.b16 %v879
        %v3381 = vunpack.c.h.b16 %v879
        %v3382 = vunpack.c.l.b16 %v880
        %v3383 = vunpack.c.h.b16 %v880
        %v3384 = vunpack.c.l.b16 %v881
        %v3385 = vunpack.c.h.b16 %v881
        %v3386 = vunpack.c.l.b16 %v882
        %v3387 = vunpack.c.h.b16 %v882
        %v3388 = vunpack.c.l.b16 %v883
        %v3389 = vunpack.c.h.b16 %v883
        %v3390 = vunpack.c.l.b16 %v884
        %v3391 = vunpack.c.h.b16 %v884
        %v3392 = vunpack.c.l.b16 %v885
        %v3393 = vunpack.c.h.b16 %v885
        %v3394 = vunpack.c.l.b16 %v886
        %v3395 = vunpack.c.h.b16 %v886
        %v3396 = vunpack.c.l.b16 %v887
        %v3397 = vunpack.c.h.b16 %v887
        %v3398 = vunpack.c.l.b16 %v888
        %v3399 = vunpack.c.h.b16 %v888
        %v3400 = vunpack.c.l.b16 %v889
        %v3401 = vunpack.c.h.b16 %v889
        %v3402 = vunpack.c.l.b16 %v890
        %v3403 = vunpack.c.h.b16 %v890
        %v3404 = vunpack.c.l.b16 %v891
        %v3405 = vunpack.c.h.b16 %v891
        %v3406 = vunpack.c.l.b16 %v892
        %v3407 = vunpack.c.h.b16 %v892
        %v3408 = vunpack.c.l.b16 %v893
        %v3409 = vunpack.c.h.b16 %v893
        %v3410 = vunpack.c.l.b16 %v894
        %v3411 = vunpack.c.h.b16 %v894
        %v3412 = vunpack.c.l.b16 %v895
        %v3413 = vunpack.c.h.b16 %v895
        %v3414 = vunpack.c.l.b16 %v896
        %v3415 = vunpack.c.h.b16 %v896
        %v3416 = vunpack.c.l.b16 %v897
        %v3417 = vunpack.c.h.b16 %v897
        %v3418 = vunpack.c.l.b16 %v898
        %v3419 = vunpack.c.h.b16 %v898
        %v3420 = vunpack.c.l.b16 %v899
        %v3421 = vunpack.c.h.b16 %v899
        %v3422 = vunpack.c.l.b16 %v900
        %v3423 = vunpack.c.h.b16 %v900
        %v3424 = vunpack.c.l.b16 %v901
        %v3425 = vunpack.c.h.b16 %v901
        %v3426 = vunpack.c.l.b16 %v902
        %v3427 = vunpack.c.h.b16 %v902
        %v3428 = vunpack.c.l.b16 %v903
        %v3429 = vunpack.c.h.b16 %v903
        %v3430 = vunpack.c.l.b16 %v904
        %v3431 = vunpack.c.h.b16 %v904
        %v3432 = vunpack.c.l.b16 %v905
        %v3433 = vunpack.c.h.b16 %v905
        %v3434 = vunpack.c.l.b16 %v906
        %v3435 = vunpack.c.h.b16 %v906
        %v3436 = vunpack.c.l.b16 %v907
        %v3437 = vunpack.c.h.b16 %v907
        %v3438 = vunpack.c.l.b16 %v908
        %v3439 = vunpack.c.h.b16 %v908
        %v3440 = vunpack.c.l.b16 %v909
        %v3441 = vunpack.c.h.b16 %v909
        %v3442 = vunpack.c.l.b16 %v910
        %v3443 = vunpack.c.h.b16 %v910
        %v3444 = vunpack.c.l.b16 %v911
        %v3445 = vunpack.c.h.b16 %v911
        %v3446 = vunpack.c.l.b16 %v912
        %v3447 = vunpack.c.h.b16 %v912
        %v3448 = vunpack.c.l.b16 %v913
        %v3449 = vunpack.c.h.b16 %v913
        %v3450 = vunpack.c.l.b16 %v914
        %v3451 = vunpack.c.h.b16 %v914
        %v3452 = vunpack.c.l.b16 %v915
        %v3453 = vunpack.c.h.b16 %v915
        %v3454 = vunpack.c.l.b16 %v916
        %v3455 = vunpack.c.h.b16 %v916
        %v3456 = vunpack.c.l.b16 %v917
        %v3457 = vunpack.c.h.b16 %v917
        %v3458 = vunpack.c.l.b16 %v918
        %v3459 = vunpack.c.h.b16 %v918
        %v3460 = vunpack.c.l.b16 %v919
        %v3461 = vunpack.c.h.b16 %v919
        %v3462 = vunpack.c.l.b16 %v920
        %v3463 = vunpack.c.h.b16 %v920
        %v3464 = vunpack.c.l.b16 %v921
        %v3465 = vunpack.c.h.b16 %v921
        %v3466 = vunpack.c.l.b16 %v922
        %v3467 = vunpack.c.h.b16 %v922
        %v3468 = vunpack.c.l.b16 %v923
        %v3469 = vunpack.c.h.b16 %v923
        %v3470 = vunpack.c.l.b16 %v924
        %v3471 = vunpack.c.h.b16 %v924
        %v3472 = vunpack.c.l.b16 %v925
        %v3473 = vunpack.c.h.b16 %v925
        %v3474 = vunpack.c.l.b16 %v926
        %v3475 = vunpack.c.h.b16 %v926
        %v3476 = vunpack.c.l.b16 %v927
        %v3477 = vunpack.c.h.b16 %v927
        %v3478 = vunpack.c.l.b16 %v928
        %v3479 = vunpack.c.h.b16 %v928
        %v3480 = vunpack.c.l.b16 %v929
        %v3481 = vunpack.c.h.b16 %v929
        %v3482 = vunpack.c.l.b16 %v930
        %v3483 = vunpack.c.h.b16 %v930
        %v3484 = vunpack.c.l.b16 %v931
        %v3485 = vunpack.c.h.b16 %v931
        %v3486 = vunpack.c.l.b16 %v932
        %v3487 = vunpack.c.h.b16 %v932
        %v3488 = vunpack.c.l.b16 %v933
        %v3489 = vunpack.c.h.b16 %v933
        %v3490 = vunpack.c.l.b16 %v934
        %v3491 = vunpack.c.h.b16 %v934
        %v3492 = vunpack.c.l.b16 %v935
        %v3493 = vunpack.c.h.b16 %v935
        %v3494 = vunpack.c.l.b16 %v936
        %v3495 = vunpack.c.h.b16 %v936
        %v3496 = vunpack.c.l.b16 %v937
        %v3497 = vunpack.c.h.b16 %v937
        %v3498 = vunpack.c.l.b16 %v938
        %v3499 = vunpack.c.h.b16 %v938
        %v3500 = vunpack.c.l.b16 %v939
        %v3501 = vunpack.c.h.b16 %v939
        %v3502 = vunpack.c.l.b16 %v940
        %v3503 = vunpack.c.h.b16 %v940
        %v3504 = vunpack.c.l.b16 %v941
        %v3505 = vunpack.c.h.b16 %v941
        %v3506 = vunpack.c.l.b16 %v942
        %v3507 = vunpack.c.h.b16 %v942
        %v3508 = vunpack.c.l.b16 %v943
        %v3509 = vunpack.c.h.b16 %v943
        %v3510 = vunpack.c.l.b16 %v944
        %v3511 = vunpack.c.h.b16 %v944
        %v3512 = vunpack.c.l.b16 %v945
        %v3513 = vunpack.c.h.b16 %v945
        %v3514 = vunpack.c.l.b16 %v946
        %v3515 = vunpack.c.h.b16 %v946
        %v3516 = vunpack.c.l.b16 %v947
        %v3517 = vunpack.c.h.b16 %v947
        %v3518 = vunpack.c.l.b16 %v948
        %v3519 = vunpack.c.h.b16 %v948
        %v3520 = vunpack.c.l.b16 %v949
        %v3521 = vunpack.c.h.b16 %v949
        %v3522 = vunpack.c.l.b16 %v950
        %v3523 = vunpack.c.h.b16 %v950
        %v3524 = vunpack.c.l.b16 %v951
        %v3525 = vunpack.c.h.b16 %v951
        %v3526 = vunpack.c.l.b16 %v952
        %v3527 = vunpack.c.h.b16 %v952
        %v3528 = vunpack.c.l.b16 %v953
        %v3529 = vunpack.c.h.b16 %v953
        %v3530 = vunpack.c.l.b16 %v954
        %v3531 = vunpack.c.h.b16 %v954
        %v3532 = vunpack.c.l.b16 %v955
        %v3533 = vunpack.c.h.b16 %v955
        %v3534 = vunpack.c.l.b16 %v956
        %v3535 = vunpack.c.h.b16 %v956
        %v3536 = vunpack.c.l.b16 %v957
        %v3537 = vunpack.c.h.b16 %v957
        %v3538 = vunpack.c.l.b16 %v958
        %v3539 = vunpack.c.h.b16 %v958
        %v3540 = vunpack.c.l.b16 %v959
        %v3541 = vunpack.c.h.b16 %v959
        %v3542 = vunpack.c.l.b16 %v960
        %v3543 = vunpack.c.h.b16 %v960
        %v3544 = vunpack.c.l.b16 %v961
        %v3545 = vunpack.c.h.b16 %v961
        %v3546 = vunpack.c.l.b16 %v962
        %v3547 = vunpack.c.h.b16 %v962
        %v3548 = vunpack.c.l.b16 %v963
        %v3549 = vunpack.c.h.b16 %v963
        %v3550 = vunpack.c.l.b16 %v964
        %v3551 = vunpack.c.h.b16 %v964
        %v3552 = vunpack.c.l.b16 %v965
        %v3553 = vunpack.c.h.b16 %v965
        %v3554 = vunpack.c.l.b16 %v966
        %v3555 = vunpack.c.h.b16 %v966
        %v3556 = vunpack.c.l.b16 %v967
        %v3557 = vunpack.c.h.b16 %v967
        %v3558 = vunpack.c.l.b16 %v968
        %v3559 = vunpack.c.h.b16 %v968
        %v3560 = vunpack.c.l.b16 %v969
        %v3561 = vunpack.c.h.b16 %v969
        %v3562 = vunpack.c.l.b16 %v970
        %v3563 = vunpack.c.h.b16 %v970
        %v3564 = vunpack.c.l.b16 %v971
        %v3565 = vunpack.c.h.b16 %v971
        %v3566 = vunpack.c.l.b16 %v972
        %v3567 = vunpack.c.h.b16 %v972
        %v3568 = vunpack.c.l.b16 %v973
        %v3569 = vunpack.c.h.b16 %v973
        %v3570 = vunpack.c.l.b16 %v974
        %v3571 = vunpack.c.h.b16 %v974
        %v3572 = vunpack.c.l.b16 %v975
        %v3573 = vunpack.c.h.b16 %v975
        %v3574 = vunpack.c.l.b16 %v976
        %v3575 = vunpack.c.h.b16 %v976
        %v3576 = vunpack.c.l.b16 %v977
        %v3577 = vunpack.c.h.b16 %v977
        %v3578 = vunpack.c.l.b16 %v978
        %v3579 = vunpack.c.h.b16 %v978
        %v3580 = vunpack.c.l.b16 %v979
        %v3581 = vunpack.c.h.b16 %v979
        %v3582 = vunpack.c.l.b16 %v980
        %v3583 = vunpack.c.h.b16 %v980
        %v3584 = vunpack.c.l.b16 %v981
        %v3585 = vunpack.c.h.b16 %v981
        %v3586 = vunpack.c.l.b16 %v982
        %v3587 = vunpack.c.h.b16 %v982
        %v3588 = vunpack.c.l.b16 %v983
        %v3589 = vunpack.c.h.b16 %v983
        %v3590 = vunpack.c.l.b16 %v984
        %v3591 = vunpack.c.h.b16 %v984
        %v3592 = vunpack.c.l.b16 %v985
        %v3593 = vunpack.c.h.b16 %v985
        %v3594 = vunpack.c.l.b16 %v986
        %v3595 = vunpack.c.h.b16 %v986
        %v3596 = vunpack.c.l.b16 %v987
        %v3597 = vunpack.c.h.b16 %v987
        %v3598 = vunpack.c.l.b16 %v988
        %v3599 = vunpack.c.h.b16 %v988
        %v3600 = vunpack.c.l.b16 %v989
        %v3601 = vunpack.c.h.b16 %v989
        %v3602 = vunpack.c.l.b16 %v990
        %v3603 = vunpack.c.h.b16 %v990
        %v3604 = vunpack.c.l.b16 %v991
        %v3605 = vunpack.c.h.b16 %v991
        %v3606 = vunpack.c.l.b16 %v992
        %v3607 = vunpack.c.h.b16 %v992
        %v3608 = vunpack.c.l.b16 %v993
        %v3609 = vunpack.c.h.b16 %v993
        %v3610 = vunpack.c.l.b16 %v994
        %v3611 = vunpack.c.h.b16 %v994
        %v3612 = vunpack.c.l.b16 %v995
        %v3613 = vunpack.c.h.b16 %v995
        %v3614 = vunpack.c.l.b16 %v996
        %v3615 = vunpack.c.h.b16 %v996
        %v3616 = vunpack.c.l.b16 %v997
        %v3617 = vunpack.c.h.b16 %v997
        %v3618 = vunpack.c.l.b16 %v998
        %v3619 = vunpack.c.h.b16 %v998
        %v3620 = vunpack.c.l.b16 %v999
        %v3621 = vunpack.c.h.b16 %v999
        %v3622 = vunpack.c.l.b16 %v1000
        %v3623 = vunpack.c.h.b16 %v1000
        %v3624 = vunpack.c.l.b16 %v1001
        %v3625 = vunpack.c.h.b16 %v1001
        %v3626 = vunpack.c.l.b16 %v1002
        %v3627 = vunpack.c.h.b16 %v1002
        %v3628 = vunpack.c.l.b16 %v1003
        %v3629 = vunpack.c.h.b16 %v1003
        %v3630 = vunpack.c.l.b16 %v1004
        %v3631 = vunpack.c.h.b16 %v1004
        %v3632 = vunpack.c.l.b16 %v1005
        %v3633 = vunpack.c.h.b16 %v1005
        %v3634 = vunpack.c.l.b16 %v1006
        %v3635 = vunpack.c.h.b16 %v1006
        %v3636 = vunpack.c.l.b16 %v1007
        %v3637 = vunpack.c.h.b16 %v1007
        %v3638 = vunpack.c.l.b16 %v1008
        %v3639 = vunpack.c.h.b16 %v1008
        %v3640 = vunpack.c.l.b16 %v1009
        %v3641 = vunpack.c.h.b16 %v1009
        %v3642 = vunpack.c.l.b16 %v1010
        %v3643 = vunpack.c.h.b16 %v1010
        %v3644 = vunpack.c.l.b16 %v1011
        %v3645 = vunpack.c.h.b16 %v1011
        %v3646 = vunpack.c.l.b16 %v1012
        %v3647 = vunpack.c.h.b16 %v1012
        %v3648 = vunpack.c.l.b16 %v1013
        %v3649 = vunpack.c.h.b16 %v1013
        %v3650 = vunpack.c.l.b16 %v1014
        %v3651 = vunpack.c.h.b16 %v1014
        %v3652 = vunpack.c.l.b16 %v1015
        %v3653 = vunpack.c.h.b16 %v1015
        %v3654 = vunpack.c.l.b16 %v1016
        %v3655 = vunpack.c.h.b16 %v1016
        %v3656 = vunpack.c.l.b16 %v1017
        %v3657 = vunpack.c.h.b16 %v1017
        %v3658 = vunpack.c.l.b16 %v1018
        %v3659 = vunpack.c.h.b16 %v1018
        %v3660 = vunpack.c.l.b16 %v1019
        %v3661 = vunpack.c.h.b16 %v1019
        %v3662 = vunpack.c.l.b16 %v1020
        %v3663 = vunpack.c.h.b16 %v1020
        %v3664 = vunpack.c.l.b16 %v1021
        %v3665 = vunpack.c.h.b16 %v1021
        %v3666 = vunpack.c.l.b16 %v1022
        %v3667 = vunpack.c.h.b16 %v1022
        %v3668 = vunpack.c.l.b16 %v1023
        %v3669 = vunpack.c.h.b16 %v1023
        %v3670 = vunpack.c.l.b16 %v1024
        %v3671 = vunpack.c.h.b16 %v1024
        %v3672 = vunpack.c.l.b16 %v1025
        %v3673 = vunpack.c.h.b16 %v1025
        %v3674 = vunpack.c.l.b16 %v1026
        %v3675 = vunpack.c.h.b16 %v1026
        %v3676 = vunpack.c.l.b16 %v1027
        %v3677 = vunpack.c.h.b16 %v1027
        %v3678 = vunpack.c.l.b16 %v1028
        %v3679 = vunpack.c.h.b16 %v1028
        %v3680 = vunpack.c.l.b16 %v1029
        %v3681 = vunpack.c.h.b16 %v1029
        %v3682 = vunpack.c.l.b16 %v1030
        %v3683 = vunpack.c.h.b16 %v1030
        %v3684 = vunpack.c.l.b16 %v1031
        %v3685 = vunpack.c.h.b16 %v1031
        %v3686 = vunpack.c.l.b16 %v1032
        %v3687 = vunpack.c.h.b16 %v1032
        %v3688 = vunpack.c.l.b16 %v1033
        %v3689 = vunpack.c.h.b16 %v1033
        %v3690 = vunpack.c.l.b16 %v1034
        %v3691 = vunpack.c.h.b16 %v1034
        %v3692 = vunpack.c.l.b16 %v1035
        %v3693 = vunpack.c.h.b16 %v1035
        %v3694 = vunpack.c.l.b16 %v1036
        %v3695 = vunpack.c.h.b16 %v1036
        %v3696 = vunpack.c.l.b16 %v1037
        %v3697 = vunpack.c.h.b16 %v1037
        %v3698 = vunpack.c.l.b16 %v1038
        %v3699 = vunpack.c.h.b16 %v1038
        %v3700 = vunpack.c.l.b16 %v1039
        %v3701 = vunpack.c.h.b16 %v1039
        %v3702 = vunpack.c.l.b16 %v1040
        %v3703 = vunpack.c.h.b16 %v1040
        %v3704 = vunpack.c.l.b16 %v1041
        %v3705 = vunpack.c.h.b16 %v1041
        %v3706 = vunpack.c.l.b16 %v1042
        %v3707 = vunpack.c.h.b16 %v1042
        %v3708 = vunpack.c.l.b16 %v1043
        %v3709 = vunpack.c.h.b16 %v1043
        %v3710 = vunpack.c.l.b16 %v1044
        %v3711 = vunpack.c.h.b16 %v1044
        %v3712 = vunpack.c.l.b16 %v1045
        %v3713 = vunpack.c.h.b16 %v1045
        %v3714 = vunpack.c.l.b16 %v1046
        %v3715 = vunpack.c.h.b16 %v1046
        %v3716 = vunpack.c.l.b16 %v1047
        %v3717 = vunpack.c.h.b16 %v1047
        %v3718 = vunpack.c.l.b16 %v1048
        %v3719 = vunpack.c.h.b16 %v1048
        %v3720 = vunpack.c.l.b16 %v1049
        %v3721 = vunpack.c.h.b16 %v1049
        %v3722 = vunpack.c.l.b16 %v1050
        %v3723 = vunpack.c.h.b16 %v1050
        %v3724 = vunpack.c.l.b16 %v1051
        %v3725 = vunpack.c.h.b16 %v1051
        %v3726 = vunpack.c.l.b16 %v1052
        %v3727 = vunpack.c.h.b16 %v1052
        %v3728 = vunpack.c.l.b16 %v1053
        %v3729 = vunpack.c.h.b16 %v1053
        %v3730 = vunpack.c.l.b16 %v1054
        %v3731 = vunpack.c.h.b16 %v1054
        %v3732 = vunpack.c.l.b16 %v1055
        %v3733 = vunpack.c.h.b16 %v1055
        %v3734 = vunpack.c.l.b16 %v1056
        %v3735 = vunpack.c.h.b16 %v1056
        %v3736 = vunpack.c.l.b16 %v1057
        %v3737 = vunpack.c.h.b16 %v1057
        %v3738 = vunpack.c.l.b16 %v1058
        %v3739 = vunpack.c.h.b16 %v1058
        %v3740 = vunpack.c.l.b16 %v1059
        %v3741 = vunpack.c.h.b16 %v1059
        %v3742 = vunpack.c.l.b16 %v1060
        %v3743 = vunpack.c.h.b16 %v1060
        %v3744 = vunpack.c.l.b16 %v1061
        %v3745 = vunpack.c.h.b16 %v1061
        %v3746 = vunpack.c.l.b16 %v1062
        %v3747 = vunpack.c.h.b16 %v1062
        %v3748 = vunpack.c.l.b16 %v1063
        %v3749 = vunpack.c.h.b16 %v1063
        %v3750 = vunpack.c.l.b16 %v1064
        %v3751 = vunpack.c.h.b16 %v1064
        %v3752 = vunpack.c.l.b16 %v1065
        %v3753 = vunpack.c.h.b16 %v1065
        %v3754 = vunpack.c.l.b16 %v1066
        %v3755 = vunpack.c.h.b16 %v1066
        %v3756 = vunpack.c.l.b16 %v1067
        %v3757 = vunpack.c.h.b16 %v1067
        %v3758 = vunpack.c.l.b16 %v1068
        %v3759 = vunpack.c.h.b16 %v1068
        %v3760 = vunpack.c.l.b16 %v1069
        %v3761 = vunpack.c.h.b16 %v1069
        %v3762 = vunpack.c.l.b16 %v1070
        %v3763 = vunpack.c.h.b16 %v1070
        %v3764 = vunpack.c.l.b16 %v1071
        %v3765 = vunpack.c.h.b16 %v1071
        %v3766 = vunpack.c.l.b16 %v1072
        %v3767 = vunpack.c.h.b16 %v1072
        %v3768 = vunpack.c.l.b16 %v1073
        %v3769 = vunpack.c.h.b16 %v1073
        %v3770 = vunpack.c.l.b16 %v1074
        %v3771 = vunpack.c.h.b16 %v1074
        %v3772 = vunpack.c.l.b16 %v1075
        %v3773 = vunpack.c.h.b16 %v1075
        %v3774 = vunpack.c.l.b16 %v1076
        %v3775 = vunpack.c.h.b16 %v1076
        %v3776 = vunpack.c.l.b16 %v1077
        %v3777 = vunpack.c.h.b16 %v1077
        %v3778 = vunpack.c.l.b16 %v1078
        %v3779 = vunpack.c.h.b16 %v1078
        %v3780 = vunpack.c.l.b16 %v1079
        %v3781 = vunpack.c.h.b16 %v1079
        %v3782 = vunpack.c.l.b16 %v1080
        %v3783 = vunpack.c.h.b16 %v1080
        %v3784 = vunpack.c.l.b16 %v1081
        %v3785 = vunpack.c.h.b16 %v1081
        %v3786 = vunpack.c.l.b16 %v1082
        %v3787 = vunpack.c.h.b16 %v1082
        %v3788 = vunpack.c.l.b16 %v1083
        %v3789 = vunpack.c.h.b16 %v1083
        %v3790 = vunpack.c.l.b16 %v1084
        %v3791 = vunpack.c.h.b16 %v1084
        %v3792 = vunpack.c.l.b16 %v1085
        %v3793 = vunpack.c.h.b16 %v1085
        %v3794 = vunpack.c.l.b16 %v1086
        %v3795 = vunpack.c.h.b16 %v1086
        %v3796 = vunpack.c.l.b16 %v1087
        %v3797 = vunpack.c.h.b16 %v1087
        %v3798 = vunpack.c.l.b16 %v1088
        %v3799 = vunpack.c.h.b16 %v1088
        %v3800 = vunpack.c.l.b16 %v1089
        %v3801 = vunpack.c.h.b16 %v1089
        %v3802 = vunpack.c.l.b16 %v1090
        %v3803 = vunpack.c.h.b16 %v1090
        %v3804 = vunpack.c.l.b16 %v1091
        %v3805 = vunpack.c.h.b16 %v1091
        %v3806 = vunpack.c.l.b16 %v1092
        %v3807 = vunpack.c.h.b16 %v1092
        %v3808 = vunpack.c.l.b16 %v1093
        %v3809 = vunpack.c.h.b16 %v1093
        %v3810 = vunpack.c.l.b16 %v1094
        %v3811 = vunpack.c.h.b16 %v1094
        %v3812 = vunpack.c.l.b16 %v1095
        %v3813 = vunpack.c.h.b16 %v1095
        %v3814 = vunpack.c.l.b16 %v1096
        %v3815 = vunpack.c.h.b16 %v1096
        %v3816 = vunpack.c.l.b16 %v1097
        %v3817 = vunpack.c.h.b16 %v1097
        %v3818 = vunpack.c.l.b16 %v1098
        %v3819 = vunpack.c.h.b16 %v1098
        %v3820 = vunpack.c.l.b16 %v1099
        %v3821 = vunpack.c.h.b16 %v1099
        %v3822 = vunpack.c.l.b16 %v1100
        %v3823 = vunpack.c.h.b16 %v1100
        %v3824 = vunpack.c.l.b16 %v1101
        %v3825 = vunpack.c.h.b16 %v1101
        %v3826 = vunpack.c.l.b16 %v1102
        %v3827 = vunpack.c.h.b16 %v1102
        %v3828 = vunpack.c.l.b16 %v1103
        %v3829 = vunpack.c.h.b16 %v1103
        %v3830 = vunpack.c.l.b16 %v1104
        %v3831 = vunpack.c.h.b16 %v1104
        %v3832 = vunpack.c.l.b16 %v1105
        %v3833 = vunpack.c.h.b16 %v1105
        %v3834 = vunpack.c.l.b16 %v1106
        %v3835 = vunpack.c.h.b16 %v1106
        %v3836 = vunpack.c.l.b16 %v1107
        %v3837 = vunpack.c.h.b16 %v1107
        %v3838 = vunpack.c.l.b16 %v1108
        %v3839 = vunpack.c.h.b16 %v1108
        %v3840 = vunpack.c.l.b16 %v1109
        %v3841 = vunpack.c.h.b16 %v1109
        %v3842 = vunpack.c.l.b16 %v1110
        %v3843 = vunpack.c.h.b16 %v1110
        %v3844 = vunpack.c.l.b16 %v1111
        %v3845 = vunpack.c.h.b16 %v1111
        %v3846 = vunpack.c.l.b16 %v1112
        %v3847 = vunpack.c.h.b16 %v1112
        %v3848 = vunpack.c.l.b16 %v1113
        %v3849 = vunpack.c.h.b16 %v1113
        %v3850 = vunpack.c.l.b16 %v1114
        %v3851 = vunpack.c.h.b16 %v1114
        %v3852 = vunpack.c.l.b16 %v1115
        %v3853 = vunpack.c.h.b16 %v1115
        %v3854 = vunpack.c.l.b16 %v1116
        %v3855 = vunpack.c.h.b16 %v1116
        %v3856 = vunpack.c.l.b16 %v1117
        %v3857 = vunpack.c.h.b16 %v1117
        %v3858 = vunpack.c.l.b16 %v1118
        %v3859 = vunpack.c.h.b16 %v1118
        %v3860 = vunpack.c.l.b16 %v1119
        %v3861 = vunpack.c.h.b16 %v1119
        %v3862 = vunpack.c.l.b16 %v1120
        %v3863 = vunpack.c.h.b16 %v1120
        %v3864 = vunpack.c.l.b16 %v1121
        %v3865 = vunpack.c.h.b16 %v1121
        %v3866 = vunpack.c.l.b16 %v1122
        %v3867 = vunpack.c.h.b16 %v1122
        %v3868 = vunpack.c.l.b16 %v1123
        %v3869 = vunpack.c.h.b16 %v1123
        %v3870 = vunpack.c.l.b16 %v1124
        %v3871 = vunpack.c.h.b16 %v1124
        %v3872 = vunpack.c.l.b16 %v1125
        %v3873 = vunpack.c.h.b16 %v1125
        %v3874 = vunpack.c.l.b16 %v1126
        %v3875 = vunpack.c.h.b16 %v1126
        %v3876 = vunpack.c.l.b16 %v1127
        %v3877 = vunpack.c.h.b16 %v1127
        %v3878 = vunpack.c.l.b16 %v1128
        %v3879 = vunpack.c.h.b16 %v1128
        %v3880 = vunpack.c.l.b16 %v1129
        %v3881 = vunpack.c.h.b16 %v1129
        %v3882 = vunpack.c.l.b16 %v1130
        %v3883 = vunpack.c.h.b16 %v1130
        %v3884 = vunpack.c.l.b16 %v1131
        %v3885 = vunpack.c.h.b16 %v1131
        %v3886 = vunpack.c.l.b16 %v1132
        %v3887 = vunpack.c.h.b16 %v1132
        %v3888 = vunpack.c.l.b16 %v1133
        %v3889 = vunpack.c.h.b16 %v1133
        %v3890 = vunpack.c.l.b16 %v1134
        %v3891 = vunpack.c.h.b16 %v1134
        %v3892 = vunpack.c.l.b16 %v1135
        %v3893 = vunpack.c.h.b16 %v1135
        %v3894 = vunpack.c.l.b16 %v1136
        %v3895 = vunpack.c.h.b16 %v1136
        %v3896 = vunpack.c.l.b16 %v1137
        %v3897 = vunpack.c.h.b16 %v1137
        %v3898 = vunpack.c.l.b16 %v1138
        %v3899 = vunpack.c.h.b16 %v1138
        %v3900 = vunpack.c.l.b16 %v1139
        %v3901 = vunpack.c.h.b16 %v1139
        %v3902 = vunpack.c.l.b16 %v1140
        %v3903 = vunpack.c.h.b16 %v1140
        %v3904 = vunpack.c.l.b16 %v1141
        %v3905 = vunpack.c.h.b16 %v1141
        %v3906 = vunpack.c.l.b16 %v1142
        %v3907 = vunpack.c.h.b16 %v1142
        %v3908 = vunpack.c.l.b16 %v1143
        %v3909 = vunpack.c.h.b16 %v1143
        %v3910 = vunpack.c.l.b16 %v1144
        %v3911 = vunpack.c.h.b16 %v1144
        %v3912 = vunpack.c.l.b16 %v1145
        %v3913 = vunpack.c.h.b16 %v1145
        %v3914 = vunpack.c.l.b16 %v1146
        %v3915 = vunpack.c.h.b16 %v1146
        %v3916 = vunpack.c.l.b16 %v1147
        %v3917 = vunpack.c.h.b16 %v1147
        %v3918 = vunpack.c.l.b16 %v1148
        %v3919 = vunpack.c.h.b16 %v1148
        %v3920 = vunpack.c.l.b16 %v1149
        %v3921 = vunpack.c.h.b16 %v1149
        %v3922 = vunpack.c.l.b16 %v1150
        %v3923 = vunpack.c.h.b16 %v1150
        %v3924 = vunpack.c.l.b16 %v1151
        %v3925 = vunpack.c.h.b16 %v1151
        %v3926 = vunpack.c.l.b16 %v1152
        %v3927 = vunpack.c.h.b16 %v1152
        %v3928 = vunpack.c.l.b16 %v1153
        %v3929 = vunpack.c.h.b16 %v1153
        %v3930 = vunpack.c.l.b16 %v1154
        %v3931 = vunpack.c.h.b16 %v1154
        %v3932 = vunpack.c.l.b16 %v1155
        %v3933 = vunpack.c.h.b16 %v1155
        %v3934 = vunpack.c.l.b16 %v1156
        %v3935 = vunpack.c.h.b16 %v1156
        %v3936 = vunpack.c.l.b16 %v1157
        %v3937 = vunpack.c.h.b16 %v1157
        %v3938 = vunpack.c.l.b16 %v1158
        %v3939 = vunpack.c.h.b16 %v1158
        %v3940 = vunpack.c.l.b16 %v1159
        %v3941 = vunpack.c.h.b16 %v1159
        %v3942 = vunpack.c.l.b16 %v1160
        %v3943 = vunpack.c.h.b16 %v1160
        %v3944 = vunpack.c.l.b16 %v1161
        %v3945 = vunpack.c.h.b16 %v1161
        %v3946 = vunpack.c.l.b16 %v1162
        %v3947 = vunpack.c.h.b16 %v1162
        %v3948 = vunpack.c.l.b16 %v1163
        %v3949 = vunpack.c.h.b16 %v1163
        %v3950 = vunpack.c.l.b16 %v1164
        %v3951 = vunpack.c.h.b16 %v1164
        %v3952 = vunpack.c.l.b16 %v1165
        %v3953 = vunpack.c.h.b16 %v1165
        %v3954 = vunpack.c.l.b16 %v1166
        %v3955 = vunpack.c.h.b16 %v1166
        %v3956 = vunpack.c.l.b16 %v1167
        %v3957 = vunpack.c.h.b16 %v1167
        %v3958 = vunpack.c.l.b16 %v1168
        %v3959 = vunpack.c.h.b16 %v1168
        %v3960 = vunpack.c.l.b16 %v1169
        %v3961 = vunpack.c.h.b16 %v1169
        %v3962 = vunpack.c.l.b16 %v1170
        %v3963 = vunpack.c.h.b16 %v1170
        %v3964 = vunpack.c.l.b16 %v1171
        %v3965 = vunpack.c.h.b16 %v1171
        %v3966 = vunpack.c.l.b16 %v1172
        %v3967 = vunpack.c.h.b16 %v1172
        %v3968 = vunpack.c.l.b16 %v1173
        %v3969 = vunpack.c.h.b16 %v1173
        %v3970 = vunpack.c.l.b16 %v1174
        %v3971 = vunpack.c.h.b16 %v1174
        %v3972 = vunpack.c.l.b16 %v1175
        %v3973 = vunpack.c.h.b16 %v1175
        %v3974 = vunpack.c.l.b16 %v1176
        %v3975 = vunpack.c.h.b16 %v1176
        %v3976 = vunpack.c.l.b16 %v1177
        %v3977 = vunpack.c.h.b16 %v1177
        %v3978 = vunpack.c.l.b16 %v1178
        %v3979 = vunpack.c.h.b16 %v1178
        %v3980 = vunpack.c.l.b16 %v1179
        %v3981 = vunpack.c.h.b16 %v1179
        %v3982 = vunpack.c.l.b16 %v1180
        %v3983 = vunpack.c.h.b16 %v1180
        %v3984 = vunpack.c.l.b16 %v1181
        %v3985 = vunpack.c.h.b16 %v1181
        %v3986 = vunpack.c.l.b16 %v1182
        %v3987 = vunpack.c.h.b16 %v1182
        %v3988 = vunpack.c.l.b16 %v1183
        %v3989 = vunpack.c.h.b16 %v1183
        %v3990 = vunpack.c.l.b16 %v1184
        %v3991 = vunpack.c.h.b16 %v1184
        %v3992 = vunpack.c.l.b16 %v1185
        %v3993 = vunpack.c.h.b16 %v1185
        %v3994 = vunpack.c.l.b16 %v1186
        %v3995 = vunpack.c.h.b16 %v1186
        %v3996 = vunpack.c.l.b16 %v1187
        %v3997 = vunpack.c.h.b16 %v1187
        %v3998 = vunpack.c.l.b16 %v1188
        %v3999 = vunpack.c.h.b16 %v1188
        %v4000 = vunpack.c.l.b16 %v1189
        %v4001 = vunpack.c.h.b16 %v1189
        %v4002 = vunpack.c.l.b16 %v1190
        %v4003 = vunpack.c.h.b16 %v1190
        %v4004 = vunpack.c.l.b16 %v1191
        %v4005 = vunpack.c.h.b16 %v1191
        %v4006 = vunpack.c.l.b16 %v1192
        %v4007 = vunpack.c.h.b16 %v1192
        %v4008 = vunpack.c.l.b16 %v1193
        %v4009 = vunpack.c.h.b16 %v1193
        %v4010 = vunpack.c.l.b16 %v1194
        %v4011 = vunpack.c.h.b16 %v1194
        %v4012 = vunpack.c.l.b16 %v1195
        %v4013 = vunpack.c.h.b16 %v1195
        %v4014 = vunpack.c.l.b16 %v1196
        %v4015 = vunpack.c.h.b16 %v1196
        %v4016 = vunpack.c.l.b16 %v1197
        %v4017 = vunpack.c.h.b16 %v1197
        %v4018 = vunpack.c.l.b16 %v1198
        %v4019 = vunpack.c.h.b16 %v1198
        %v4020 = vunpack.c.l.b16 %v1199
        %v4021 = vunpack.c.h.b16 %v1199
        %v4022 = vunpack.c.l.b16 %v1200
        %v4023 = vunpack.c.h.b16 %v1200
        %v4024 = vunpack.c.l.b16 %v1201
        %v4025 = vunpack.c.h.b16 %v1201
        %v4026 = vunpack.c.l.b16 %v1202
        %v4027 = vunpack.c.h.b16 %v1202
        %v4028 = vunpack.c.l.b16 %v1203
        %v4029 = vunpack.c.h.b16 %v1203
        %v4030 = vunpack.c.l.b16 %v1204
        %v4031 = vunpack.c.h.b16 %v1204
        %v4032 = vunpack.c.l.b16 %v1205
        %v4033 = vunpack.c.h.b16 %v1205
        %v4034 = vunpack.c.l.b16 %v1206
        %v4035 = vunpack.c.h.b16 %v1206
        %v4036 = vunpack.c.l.b16 %v1207
        %v4037 = vunpack.c.h.b16 %v1207
        %v4038 = vunpack.c.l.b16 %v1208
        %v4039 = vunpack.c.h.b16 %v1208
        %v4040 = vunpack.c.l.b16 %v1209
        %v4041 = vunpack.c.h.b16 %v1209
        %v4042 = vunpack.c.l.b16 %v1210
        %v4043 = vunpack.c.h.b16 %v1210
        %v4044 = vunpack.c.l.b16 %v1211
        %v4045 = vunpack.c.h.b16 %v1211
        %v4046 = vunpack.c.l.b16 %v1212
        %v4047 = vunpack.c.h.b16 %v1212
        %v4048 = vunpack.c.l.b16 %v1213
        %v4049 = vunpack.c.h.b16 %v1213
        %v4050 = vunpack.c.l.b16 %v1214
        %v4051 = vunpack.c.h.b16 %v1214
        %v4052 = vunpack.c.l.b16 %v1215
        %v4053 = vunpack.c.h.b16 %v1215
        %v4054 = vunpack.c.l.b16 %v1216
        %v4055 = vunpack.c.h.b16 %v1216
        %v4056 = vunpack.c.l.b16 %v1217
        %v4057 = vunpack.c.h.b16 %v1217
        %v4058 = vunpack.c.l.b16 %v1218
        %v4059 = vunpack.c.h.b16 %v1218
        %v4060 = vunpack.c.l.b16 %v1219
        %v4061 = vunpack.c.h.b16 %v1219
        %v4062 = vunpack.c.l.b16 %v1220
        %v4063 = vunpack.c.h.b16 %v1220
        %v4064 = vunpack.c.l.b16 %v1221
        %v4065 = vunpack.c.h.b16 %v1221
        %v4066 = vunpack.c.l.b16 %v1222
        %v4067 = vunpack.c.h.b16 %v1222
        %v4068 = vunpack.c.l.b16 %v1223
        %v4069 = vunpack.c.h.b16 %v1223
        %v4070 = vunpack.c.l.b16 %v1224
        %v4071 = vunpack.c.h.b16 %v1224
        %v4072 = vunpack.c.l.b16 %v1225
        %v4073 = vunpack.c.h.b16 %v1225
        %v4074 = vunpack.c.l.b16 %v1226
        %v4075 = vunpack.c.h.b16 %v1226
        %v4076 = vunpack.c.l.b16 %v1227
        %v4077 = vunpack.c.h.b16 %v1227
        %v4078 = vunpack.c.l.b16 %v1228
        %v4079 = vunpack.c.h.b16 %v1228
        %v4080 = vunpack.c.l.b16 %v1229
        %v4081 = vunpack.c.h.b16 %v1229
        %v4082 = vunpack.c.l.b16 %v1230
        %v4083 = vunpack.c.h.b16 %v1230
        %v4084 = vunpack.c.l.b16 %v1231
        %v4085 = vunpack.c.h.b16 %v1231
        %v4086 = vunpack.c.l.b16 %v1232
        %v4087 = vunpack.c.h.b16 %v1232
        %v4088 = vunpack.c.l.b16 %v1233
        %v4089 = vunpack.c.h.b16 %v1233
        %v4090 = vunpack.c.l.b16 %v1234
        %v4091 = vunpack.c.h.b16 %v1234
        %v4092 = vunpack.c.l.b16 %v1235
        %v4093 = vunpack.c.h.b16 %v1235
        %v4094 = vunpack.c.l.b16 %v1236
        %v4095 = vunpack.c.h.b16 %v1236
        %v4096 = vunpack.c.l.b16 %v1237
        %v4097 = vunpack.c.h.b16 %v1237
        %v4098 = vunpack.c.l.b16 %v1238
        %v4099 = vunpack.c.h.b16 %v1238
        %v4100 = vunpack.c.l.b16 %v1239
        %v4101 = vunpack.c.h.b16 %v1239
        %v4102 = vunpack.c.l.b16 %v1240
        %v4103 = vunpack.c.h.b16 %v1240
        %v4104 = vunpack.c.l.b16 %v1241
        %v4105 = vunpack.c.h.b16 %v1241
        %v4106 = vunpack.c.l.b16 %v1242
        %v4107 = vunpack.c.h.b16 %v1242
        %v4108 = vunpack.c.l.b16 %v1243
        %v4109 = vunpack.c.h.b16 %v1243
        %v4110 = vunpack.c.l.b16 %v1244
        %v4111 = vunpack.c.h.b16 %v1244
        %v4112 = vunpack.c.l.b16 %v1245
        %v4113 = vunpack.c.h.b16 %v1245
        %v4114 = vunpack.c.l.b16 %v1246
        %v4115 = vunpack.c.h.b16 %v1246
        %v4116 = vunpack.c.l.b16 %v1247
        %v4117 = vunpack.c.h.b16 %v1247
        %v4118 = vunpack.c.l.b16 %v1248
        %v4119 = vunpack.c.h.b16 %v1248
        %v4120 = vunpack.c.l.b16 %v1249
        %v4121 = vunpack.c.h.b16 %v1249
        %v4122 = vunpack.c.l.b16 %v1250
        %v4123 = vunpack.c.h.b16 %v1250
        %v4124 = vunpack.c.l.b16 %v1251
        %v4125 = vunpack.c.h.b16 %v1251
        %v4126 = vunpack.c.l.b16 %v1252
        %v4127 = vunpack.c.h.b16 %v1252
        %v4128 = vunpack.c.l.b16 %v1253
        %v4129 = vunpack.c.h.b16 %v1253
        %v4130 = vunpack.c.l.b16 %v1254
        %v4131 = vunpack.c.h.b16 %v1254
        %v4132 = vunpack.c.l.b16 %v1255
        %v4133 = vunpack.c.h.b16 %v1255
        %v4134 = vunpack.c.l.b16 %v1256
        %v4135 = vunpack.c.h.b16 %v1256
        %v4136 = vunpack.c.l.b16 %v1257
        %v4137 = vunpack.c.h.b16 %v1257
        %v4138 = vunpack.c.l.b16 %v1258
        %v4139 = vunpack.c.h.b16 %v1258
        %v4140 = vunpack.c.l.b16 %v1259
        %v4141 = vunpack.c.h.b16 %v1259
        %v4142 = vunpack.c.l.b16 %v1260
        %v4143 = vunpack.c.h.b16 %v1260
        %v4144 = vunpack.c.l.b16 %v1261
        %v4145 = vunpack.c.h.b16 %v1261
        %v4146 = vunpack.c.l.b16 %v1262
        %v4147 = vunpack.c.h.b16 %v1262
        %v4148 = vunpack.c.l.b16 %v1263
        %v4149 = vunpack.c.h.b16 %v1263
        %v4150 = vunpack.c.l.b16 %v1264
        %v4151 = vunpack.c.h.b16 %v1264
        %v4152 = vunpack.c.l.b16 %v1265
        %v4153 = vunpack.c.h.b16 %v1265
        %v4154 = vunpack.c.l.b16 %v1266
        %v4155 = vunpack.c.h.b16 %v1266
        %v4156 = vunpack.c.l.b16 %v1267
        %v4157 = vunpack.c.h.b16 %v1267
        %v4158 = vunpack.c.l.b16 %v1268
        %v4159 = vunpack.c.h.b16 %v1268
        %v4160 = vunpack.c.l.b16 %v1269
        %v4161 = vunpack.c.h.b16 %v1269
        %v4162 = vunpack.c.l.b16 %v1270
        %v4163 = vunpack.c.h.b16 %v1270
        %v4164 = vunpack.c.l.b16 %v1271
        %v4165 = vunpack.c.h.b16 %v1271
        %v4166 = vunpack.c.l.b16 %v1272
        %v4167 = vunpack.c.h.b16 %v1272
        %v4168 = vunpack.c.l.b16 %v1273
        %v4169 = vunpack.c.h.b16 %v1273
        %v4170 = vunpack.c.l.b16 %v1274
        %v4171 = vunpack.c.h.b16 %v1274
        %v4172 = vunpack.c.l.b16 %v1275
        %v4173 = vunpack.c.h.b16 %v1275
        %v4174 = vunpack.c.l.b16 %v1276
        %v4175 = vunpack.c.h.b16 %v1276
        %v4176 = vunpack.c.l.b16 %v1277
        %v4177 = vunpack.c.h.b16 %v1277
        %v4178 = vunpack.c.l.b16 %v1278
        %v4179 = vunpack.c.h.b16 %v1278
        %v4180 = vunpack.c.l.b16 %v1279
        %v4181 = vunpack.c.h.b16 %v1279
        %v4182 = vunpack.c.l.b16 %v1280
        %v4183 = vunpack.c.h.b16 %v1280
        %v4184 = vunpack.c.l.b16 %v1281
        %v4185 = vunpack.c.h.b16 %v1281
        %v4186 = vunpack.c.l.b16 %v1282
        %v4187 = vunpack.c.h.b16 %v1282
        %v4188 = vunpack.c.l.b16 %v1283
        %v4189 = vunpack.c.h.b16 %v1283
        %v4190 = vunpack.c.l.b16 %v1284
        %v4191 = vunpack.c.h.b16 %v1284
        %v4192 = vunpack.c.l.b16 %v1285
        %v4193 = vunpack.c.h.b16 %v1285
        %v4194 = vunpack.c.l.b16 %v1286
        %v4195 = vunpack.c.h.b16 %v1286
        %v4196 = vunpack.c.l.b16 %v1287
        %v4197 = vunpack.c.h.b16 %v1287
        %v4198 = vunpack.c.l.b16 %v1288
        %v4199 = vunpack.c.h.b16 %v1288
        %v4200 = vunpack.c.l.b16 %v1289
        %v4201 = vunpack.c.h.b16 %v1289
        %v4202 = vunpack.c.l.b16 %v1290
        %v4203 = vunpack.c.h.b16 %v1290
        %v4204 = vunpack.c.l.b16 %v1291
        %v4205 = vunpack.c.h.b16 %v1291
        %v4206 = vunpack.c.l.b16 %v1292
        %v4207 = vunpack.c.h.b16 %v1292
        %v4208 = vunpack.c.l.b16 %v1293
        %v4209 = vunpack.c.h.b16 %v1293
        %v4210 = vunpack.c.l.b16 %v1294
        %v4211 = vunpack.c.h.b16 %v1294
        %v4212 = vunpack.c.l.b16 %v1295
        %v4213 = vunpack.c.h.b16 %v1295
        %v4214 = vunpack.c.l.b16 %v1296
        %v4215 = vunpack.c.h.b16 %v1296
        %v4216 = vunpack.c.l.b16 %v1297
        %v4217 = vunpack.c.h.b16 %v1297
        %v4218 = vunpack.c.l.b16 %v1298
        %v4219 = vunpack.c.h.b16 %v1298
        %v4220 = vunpack.c.l.b16 %v1299
        %v4221 = vunpack.c.h.b16 %v1299
        %v4222 = vpack.c.b16 %v2312, %v2302
        %v4223 = vpack.c.b16 %v2313, %v2303
        %v4224 = vpack.c.b16 %v2314, %v2304
        %v4225 = vpack.c.b16 %v2315, %v2305
        %v4226 = vpack.c.b16 %v2316, %v2306
        %v4227 = vpack.c.b16 %v2317, %v2307
        %v4228 = vpack.c.b16 %v2318, %v2308
        %v4229 = vpack.c.b16 %v2319, %v2309
        %v4230 = vpack.c.b16 %v2320, %v2310
        %v4231 = vpack.c.b16 %v2321, %v2311
        %v4232 = vpack.c.b16 %v2332, %v2322
        %v4233 = vpack.c.b16 %v2333, %v2323
        %v4234 = vpack.c.b16 %v2334, %v2324
        %v4235 = vpack.c.b16 %v2335, %v2325
        %v4236 = vpack.c.b16 %v2336, %v2326
        %v4237 = vpack.c.b16 %v2337, %v2327
        %v4238 = vpack.c.b16 %v2338, %v2328
        %v4239 = vpack.c.b16 %v2339, %v2329
        %v4240 = vpack.c.b16 %v2340, %v2330
        %v4241 = vpack.c.b16 %v2341, %v2331
        %v4242 = vpack.c.b16 %v2352, %v2342
        %v4243 = vpack.c.b16 %v2353, %v2343
        %v4244 = vpack.c.b16 %v2354, %v2344
        %v4245 = vpack.c.b16 %v2355, %v2345
        %v4246 = vpack.c.b16 %v2356, %v2346
        %v4247 = vpack.c.b16 %v2357, %v2347
        %v4248 = vpack.c.b16 %v2358, %v2348
        %v4249 = vpack.c.b16 %v2359, %v2349
        %v4250 = vpack.c.b16 %v2360, %v2350
        %v4251 = vpack.c.b16 %v2361, %v2351
        %v4252 = vpack.c.b16 %v2372, %v2362
        %v4253 = vpack.c.b16 %v2373, %v2363
        %v4254 = vpack.c.b16 %v2374, %v2364
        %v4255 = vpack.c.b16 %v2375, %v2365
        %v4256 = vpack.c.b16 %v2376, %v2366
        %v4257 = vpack.c.b16 %v2377, %v2367
        %v4258 = vpack.c.b16 %v2378, %v2368
        %v4259 = vpack.c.b16 %v2379, %v2369
        %v4260 = vpack.c.b16 %v2380, %v2370
        %v4261 = vpack.c.b16 %v2381, %v2371
        %v4262 = vpack.c.b16 %v2392, %v2382
        %v4263 = vpack.c.b16 %v2393, %v2383
        %v4264 = vpack.c.b16 %v2394, %v2384
        %v4265 = vpack.c.b16 %v2395, %v2385
        %v4266 = vpack.c.b16 %v2396, %v2386
        %v4267 = vpack.c.b16 %v2397, %v2387
        %v4268 = vpack.c.b16 %v2398, %v2388
        %v4269 = vpack.c.b16 %v2399, %v2389
        %v4270 = vpack.c.b16 %v2400, %v2390
        %v4271 = vpack.c.b16 %v2401, %v2391
        %v4272 = vpack.c.b16 %v2412, %v2402
        %v4273 = vpack.c.b16 %v2413, %v2403
        %v4274 = vpack.c.b16 %v2414, %v2404
        %v4275 = vpack.c.b16 %v2415, %v2405
        %v4276 = vpack.c.b16 %v2416, %v2406
        %v4277 = vpack.c.b16 %v2417, %v2407
        %v4278 = vpack.c.b16 %v2418, %v2408
        %v4279 = vpack.c.b16 %v2419, %v2409
        %v4280 = vpack.c.b16 %v2420, %v2410
        %v4281 = vpack.c.b16 %v2421, %v2411
        %v4282 = vpack.c.b16 %v2432, %v2422
        %v4283 = vpack.c.b16 %v2433, %v2423
        %v4284 = vpack.c.b16 %v2434, %v2424
        %v4285 = vpack.c.b16 %v2435, %v2425
        %v4286 = vpack.c.b16 %v2436, %v2426
        %v4287 = vpack.c.b16 %v2437, %v2427
        %v4288 = vpack.c.b16 %v2438, %v2428
        %v4289 = vpack.c.b16 %v2439, %v2429
        %v4290 = vpack.c.b16 %v2440, %v2430
        %v4291 = vpack.c.b16 %v2441, %v2431
        %v4292 = vpack.c.b16 %v2452, %v2442
        %v4293 = vpack.c.b16 %v2453, %v2443
        %v4294 = vpack.c.b16 %v2454, %v2444
        %v4295 = vpack.c.b16 %v2455, %v2445
        %v4296 = vpack.c.b16 %v2456, %v2446
        %v4297 = vpack.c.b16 %v2457, %v2447
        %v4298 = vpack.c.b16 %v2458, %v2448
        %v4299 = vpack.c.b16 %v2459, %v2449
        %v4300 = vpack.c.b16 %v2460, %v2450
        %v4301 = vpack.c.b16 %v2461, %v2451
        %v4302 = vpack.c.b16 %v2472, %v2462
        %v4303 = vpack.c.b16 %v2473, %v2463
        %v4304 = vpack.c.b16 %v2474, %v2464
        %v4305 = vpack.c.b16 %v2475, %v2465
        %v4306 = vpack.c.b16 %v2476, %v2466
        %v4307 = vpack.c.b16 %v2477, %v2467
        %v4308 = vpack.c.b16 %v2478, %v2468
        %v4309 = vpack.c.b16 %v2479, %v2469
        %v4310 = vpack.c.b16 %v2480, %v2470
        %v4311 = vpack.c.b16 %v2481, %v2471
        %v4312 = vpack.c.b16 %v2492, %v2482
        %v4313 = vpack.c.b16 %v2493, %v2483
        %v4314 = vpack.c.b16 %v2494, %v2484
        %v4315 = vpack.c.b16 %v2495, %v2485
        %v4316 = vpack.c.b16 %v2496, %v2486
        %v4317 = vpack.c.b16 %v2497, %v2487
        %v4318 = vpack.c.b16 %v2498, %v2488
        %v4319 = vpack.c.b16 %v2499, %v2489
        %v4320 = vpack.c.b16 %v2500, %v2490
        %v4321 = vpack.c.b16 %v2501, %v2491
        %v4322 = vpack.c.b16 %v2512, %v2502
        %v4323 = vpack.c.b16 %v2513, %v2503
        %v4324 = vpack.c.b16 %v2514, %v2504
        %v4325 = vpack.c.b16 %v2515, %v2505
        %v4326 = vpack.c.b16 %v2516, %v2506
        %v4327 = vpack.c.b16 %v2517, %v2507
        %v4328 = vpack.c.b16 %v2518, %v2508
        %v4329 = vpack.c.b16 %v2519, %v2509
        %v4330 = vpack.c.b16 %v2520, %v2510
        %v4331 = vpack.c.b16 %v2521, %v2511
        %v4332 = vpack.c.b16 %v2532, %v2522
        %v4333 = vpack.c.b16 %v2533, %v2523
        %v4334 = vpack.c.b16 %v2534, %v2524
        %v4335 = vpack.c.b16 %v2535, %v2525
        %v4336 = vpack.c.b16 %v2536, %v2526
        %v4337 = vpack.c.b16 %v2537, %v2527
        %v4338 = vpack.c.b16 %v2538, %v2528
        %v4339 = vpack.c.b16 %v2539, %v2529
        %v4340 = vpack.c.b16 %v2540, %v2530
        %v4341 = vpack.c.b16 %v2541, %v2531
        %v4342 = vpack.c.b16 %v2552, %v2542
        %v4343 = vpack.c.b16 %v2553, %v2543
        %v4344 = vpack.c.b16 %v2554, %v2544
        %v4345 = vpack.c.b16 %v2555, %v2545
        %v4346 = vpack.c.b16 %v2556, %v2546
        %v4347 = vpack.c.b16 %v2557, %v2547
        %v4348 = vpack.c.b16 %v2558, %v2548
        %v4349 = vpack.c.b16 %v2559, %v2549
        %v4350 = vpack.c.b16 %v2560, %v2550
        %v4351 = vpack.c.b16 %v2561, %v2551
        %v4352 = vpack.c.b16 %v2572, %v2562
        %v4353 = vpack.c.b16 %v2573, %v2563
        %v4354 = vpack.c.b16 %v2574, %v2564
        %v4355 = vpack.c.b16 %v2575, %v2565
        %v4356 = vpack.c.b16 %v2576, %v2566
        %v4357 = vpack.c.b16 %v2577, %v2567
        %v4358 = vpack.c.b16 %v2578, %v2568
        %v4359 = vpack.c.b16 %v2579, %v2569
        %v4360 = vpack.c.b16 %v2580, %v2570
        %v4361 = vpack.c.b16 %v2581, %v2571
        %v4362 = vpack.c.b16 %v2592, %v2582
        %v4363 = vpack.c.b16 %v2593, %v2583
        %v4364 = vpack.c.b16 %v2594, %v2584
        %v4365 = vpack.c.b16 %v2595, %v2585
        %v4366 = vpack.c.b16 %v2596, %v2586
        %v4367 = vpack.c.b16 %v2597, %v2587
        %v4368 = vpack.c.b16 %v2598, %v2588
        %v4369 = vpack.c.b16 %v2599, %v2589
        %v4370 = vpack.c.b16 %v2600, %v2590
        %v4371 = vpack.c.b16 %v2601, %v2591
        %v4372 = vpack.c.b16 %v2612, %v2602
        %v4373 = vpack.c.b16 %v2613, %v2603
        %v4374 = vpack.c.b16 %v2614, %v2604
        %v4375 = vpack.c.b16 %v2615, %v2605
        %v4376 = vpack.c.b16 %v2616, %v2606
        %v4377 = vpack.c.b16 %v2617, %v2607
        %v4378 = vpack.c.b16 %v2618, %v2608
        %v4379 = vpack.c.b16 %v2619, %v2609
        %v4380 = vpack.c.b16 %v2620, %v2610
        %v4381 = vpack.c.b16 %v2621, %v2611
        %v4382 = vpack.c.b16 %v2632, %v2622
        %v4383 = vpack.c.b16 %v2633, %v2623
        %v4384 = vpack.c.b16 %v2634, %v2624
        %v4385 = vpack.c.b16 %v2635, %v2625
        %v4386 = vpack.c.b16 %v2636, %v2626
        %v4387 = vpack.c.b16 %v2637, %v2627
        %v4388 = vpack.c.b16 %v2638, %v2628
        %v4389 = vpack.c.b16 %v2639, %v2629
        %v4390 = vpack.c.b16 %v2640, %v2630
        %v4391 = vpack.c.b16 %v2641, %v2631
        %v4392 = vpack.c.b16 %v2652, %v2642
        %v4393 = vpack.c.b16 %v2653, %v2643
        %v4394 = vpack.c.b16 %v2654, %v2644
        %v4395 = vpack.c.b16 %v2655, %v2645
        %v4396 = vpack.c.b16 %v2656, %v2646
        %v4397 = vpack.c.b16 %v2657, %v2647
        %v4398 = vpack.c.b16 %v2658, %v2648
        %v4399 = vpack.c.b16 %v2659, %v2649
        %v4400 = vpack.c.b16 %v2660, %v2650
        %v4401 = vpack.c.b16 %v2661, %v2651
        %v4402 = vpack.c.b16 %v2672, %v2662
        %v4403 = vpack.c.b16 %v2673, %v2663
        %v4404 = vpack.c.b16 %v2674, %v2664
        %v4405 = vpack.c.b16 %v2675, %v2665
        %v4406 = vpack.c.b16 %v2676, %v2666
        %v4407 = vpack.c.b16 %v2677, %v2667
        %v4408 = vpack.c.b16 %v2678, %v2668
        %v4409 = vpack.c.b16 %v2679, %v2669
        %v4410 = vpack.c.b16 %v2680, %v2670
        %v4411 = vpack.c.b16 %v2681, %v2671
        %v4412 = vpack.c.b16 %v2692, %v2682
        %v4413 = vpack.c.b16 %v2693, %v2683
        %v4414 = vpack.c.b16 %v2694, %v2684
        %v4415 = vpack.c.b16 %v2695, %v2685
        %v4416 = vpack.c.b16 %v2696, %v2686
        %v4417 = vpack.c.b16 %v2697, %v2687
        %v4418 = vpack.c.b16 %v2698, %v2688
        %v4419 = vpack.c.b16 %v2699, %v2689
        %v4420 = vpack.c.b16 %v2700, %v2690
        %v4421 = vpack.c.b16 %v2701, %v2691
        %v4422 = vpack.c.b16 %v2712, %v2702
        %v4423 = vpack.c.b16 %v2713, %v2703
        %v4424 = vpack.c.b16 %v2714, %v2704
        %v4425 = vpack.c.b16 %v2715, %v2705
        %v4426 = vpack.c.b16 %v2716, %v2706
        %v4427 = vpack.c.b16 %v2717, %v2707
        %v4428 = vpack.c.b16 %v2718, %v2708
        %v4429 = vpack.c.b16 %v2719, %v2709
        %v4430 = vpack.c.b16 %v2720, %v2710
        %v4431 = vpack.c.b16 %v2721, %v2711
        %v4432 = vpack.c.b16 %v2732, %v2722
        %v4433 = vpack.c.b16 %v2733, %v2723
        %v4434 = vpack.c.b16 %v2734, %v2724
        %v4435 = vpack.c.b16 %v2735, %v2725
        %v4436 = vpack.c.b16 %v2736, %v2726
        %v4437 = vpack.c.b16 %v2737, %v2727
        %v4438 = vpack.c.b16 %v2738, %v2728
        %v4439 = vpack.c.b16 %v2739, %v2729
        %v4440 = vpack.c.b16 %v2740, %v2730
        %v4441 = vpack.c.b16 %v2741, %v2731
        %v4442 = vpack.c.b16 %v2752, %v2742
        %v4443 = vpack.c.b16 %v2753, %v2743
        %v4444 = vpack.c.b16 %v2754, %v2744
        %v4445 = vpack.c.b16 %v2755, %v2745
        %v4446 = vpack.c.b16 %v2756, %v2746
        %v4447 = vpack.c.b16 %v2757, %v2747
        %v4448 = vpack.c.b16 %v2758, %v2748
        %v4449 = vpack.c.b16 %v2759, %v2749
        %v4450 = vpack.c.b16 %v2760, %v2750
        %v4451 = vpack.c.b16 %v2761, %v2751
        %v4452 = vpack.c.b16 %v2772, %v2762
        %v4453 = vpack.c.b16 %v2773, %v2763
        %v4454 = vpack.c.b16 %v2774, %v2764
        %v4455 = vpack.c.b16 %v2775, %v2765
        %v4456 = vpack.c.b16 %v2776, %v2766
        %v4457 = vpack.c.b16 %v2777, %v2767
        %v4458 = vpack.c.b16 %v2778, %v2768
        %v4459 = vpack.c.b16 %v2779, %v2769
        %v4460 = vpack.c.b16 %v2780, %v2770
        %v4461 = vpack.c.b16 %v2781, %v2771
        %v4462 = vpack.c.b16 %v2792, %v2782
        %v4463 = vpack.c.b16 %v2793, %v2783
        %v4464 = vpack.c.b16 %v2794, %v2784
        %v4465 = vpack.c.b16 %v2795, %v2785
        %v4466 = vpack.c.b16 %v2796, %v2786
        %v4467 = vpack.c.b16 %v2797, %v2787
        %v4468 = vpack.c.b16 %v2798, %v2788
        %v4469 = vpack.c.b16 %v2799, %v2789
        %v4470 = vpack.c.b16 %v2800, %v2790
        %v4471 = vpack.c.b16 %v2801, %v2791
        %v4472 = vpack.c.b16 %v2812, %v2802
        %v4473 = vpack.c.b16 %v2813, %v2803
        %v4474 = vpack.c.b16 %v2814, %v2804
        %v4475 = vpack.c.b16 %v2815, %v2805
        %v4476 = vpack.c.b16 %v2816, %v2806
        %v4477 = vpack.c.b16 %v2817, %v2807
        %v4478 = vpack.c.b16 %v2818, %v2808
        %v4479 = vpack.c.b16 %v2819, %v2809
        %v4480 = vpack.c.b16 %v2820, %v2810
        %v4481 = vpack.c.b16 %v2821, %v2811
        %v4482 = vpack.c.b16 %v2832, %v2822
        %v4483 = vpack.c.b16 %v2833, %v2823
        %v4484 = vpack.c.b16 %v2834, %v2824
        %v4485 = vpack.c.b16 %v2835, %v2825
        %v4486 = vpack.c.b16 %v2836, %v2826
        %v4487 = vpack.c.b16 %v2837, %v2827
        %v4488 = vpack.c.b16 %v2838, %v2828
        %v4489 = vpack.c.b16 %v2839, %v2829
        %v4490 = vpack.c.b16 %v2840, %v2830
        %v4491 = vpack.c.b16 %v2841, %v2831
        %v4492 = vpack.c.b16 %v2852, %v2842
        %v4493 = vpack.c.b16 %v2853, %v2843
        %v4494 = vpack.c.b16 %v2854, %v2844
        %v4495 = vpack.c.b16 %v2855, %v2845
        %v4496 = vpack.c.b16 %v2856, %v2846
        %v4497 = vpack.c.b16 %v2857, %v2847
        %v4498 = vpack.c.b16 %v2858, %v2848
        %v4499 = vpack.c.b16 %v2859, %v2849
        %v4500 = vpack.c.b16 %v2860, %v2850
        %v4501 = vpack.c.b16 %v2861, %v2851
        %v4502 = vpack.c.b16 %v2872, %v2862
        %v4503 = vpack.c.b16 %v2873, %v2863
        %v4504 = vpack.c.b16 %v2874, %v2864
        %v4505 = vpack.c.b16 %v2875, %v2865
        %v4506 = vpack.c.b16 %v2876, %v2866
        %v4507 = vpack.c.b16 %v2877, %v2867
        %v4508 = vpack.c.b16 %v2878, %v2868
        %v4509 = vpack.c.b16 %v2879, %v2869
        %v4510 = vpack.c.b16 %v2880, %v2870
        %v4511 = vpack.c.b16 %v2881, %v2871
        %v4512 = vpack.c.b16 %v2892, %v2882
        %v4513 = vpack.c.b16 %v2893, %v2883
        %v4514 = vpack.c.b16 %v2894, %v2884
        %v4515 = vpack.c.b16 %v2895, %v2885
        %v4516 = vpack.c.b16 %v2896, %v2886
        %v4517 = vpack.c.b16 %v2897, %v2887
        %v4518 = vpack.c.b16 %v2898, %v2888
        %v4519 = vpack.c.b16 %v2899, %v2889
        %v4520 = vpack.c.b16 %v2900, %v2890
        %v4521 = vpack.c.b16 %v2901, %v2891
        %v4522 = vpack.c.b16 %v2912, %v2902
        %v4523 = vpack.c.b16 %v2913, %v2903
        %v4524 = vpack.c.b16 %v2914, %v2904
        %v4525 = vpack.c.b16 %v2915, %v2905
        %v4526 = vpack.c.b16 %v2916, %v2906
        %v4527 = vpack.c.b16 %v2917, %v2907
        %v4528 = vpack.c.b16 %v2918, %v2908
        %v4529 = vpack.c.b16 %v2919, %v2909
        %v4530 = vpack.c.b16 %v2920, %v2910
        %v4531 = vpack.c.b16 %v2921, %v2911
        %v4532 = vpack.c.b16 %v2932, %v2922
        %v4533 = vpack.c.b16 %v2933, %v2923
        %v4534 = vpack.c.b16 %v2934, %v2924
        %v4535 = vpack.c.b16 %v2935, %v2925
        %v4536 = vpack.c.b16 %v2936, %v2926
        %v4537 = vpack.c.b16 %v2937, %v2927
        %v4538 = vpack.c.b16 %v2938, %v2928
        %v4539 = vpack.c.b16 %v2939, %v2929
        %v4540 = vpack.c.b16 %v2940, %v2930
        %v4541 = vpack.c.b16 %v2941, %v2931
        %v4542 = vpack.c.b16 %v2952, %v2942
        %v4543 = vpack.c.b16 %v2953, %v2943
        %v4544 = vpack.c.b16 %v2954, %v2944
        %v4545 = vpack.c.b16 %v2955, %v2945
        %v4546 = vpack.c.b16 %v2956, %v2946
        %v4547 = vpack.c.b16 %v2957, %v2947
        %v4548 = vpack.c.b16 %v2958, %v2948
        %v4549 = vpack.c.b16 %v2959, %v2949
        %v4550 = vpack.c.b16 %v2960, %v2950
        %v4551 = vpack.c.b16 %v2961, %v2951
        %v4552 = vpack.c.b16 %v2972, %v2962
        %v4553 = vpack.c.b16 %v2973, %v2963
        %v4554 = vpack.c.b16 %v2974, %v2964
        %v4555 = vpack.c.b16 %v2975, %v2965
        %v4556 = vpack.c.b16 %v2976, %v2966
        %v4557 = vpack.c.b16 %v2977, %v2967
        %v4558 = vpack.c.b16 %v2978, %v2968
        %v4559 = vpack.c.b16 %v2979, %v2969
        %v4560 = vpack.c.b16 %v2980, %v2970
        %v4561 = vpack.c.b16 %v2981, %v2971
        %v4562 = vpack.c.b16 %v2992, %v2982
        %v4563 = vpack.c.b16 %v2993, %v2983
        %v4564 = vpack.c.b16 %v2994, %v2984
        %v4565 = vpack.c.b16 %v2995, %v2985
        %v4566 = vpack.c.b16 %v2996, %v2986
        %v4567 = vpack.c.b16 %v2997, %v2987
        %v4568 = vpack.c.b16 %v2998, %v2988
        %v4569 = vpack.c.b16 %v2999, %v2989
        %v4570 = vpack.c.b16 %v3000, %v2990
        %v4571 = vpack.c.b16 %v3001, %v2991
        %v4572 = vpack.c.b16 %v3012, %v3002
        %v4573 = vpack.c.b16 %v3013, %v3003
        %v4574 = vpack.c.b16 %v3014, %v3004
        %v4575 = vpack.c.b16 %v3015, %v3005
        %v4576 = vpack.c.b16 %v3016, %v3006
        %v4577 = vpack.c.b16 %v3017, %v3007
        %v4578 = vpack.c.b16 %v3018, %v3008
        %v4579 = vpack.c.b16 %v3019, %v3009
        %v4580 = vpack.c.b16 %v3020, %v3010
        %v4581 = vpack.c.b16 %v3021, %v3011
        %v4582 = vpack.c.b16 %v3032, %v3022
        %v4583 = vpack.c.b16 %v3033, %v3023
        %v4584 = vpack.c.b16 %v3034, %v3024
        %v4585 = vpack.c.b16 %v3035, %v3025
        %v4586 = vpack.c.b16 %v3036, %v3026
        %v4587 = vpack.c.b16 %v3037, %v3027
        %v4588 = vpack.c.b16 %v3038, %v3028
        %v4589 = vpack.c.b16 %v3039, %v3029
        %v4590 = vpack.c.b16 %v3040, %v3030
        %v4591 = vpack.c.b16 %v3041, %v3031
        %v4592 = vpack.c.b16 %v3052, %v3042
        %v4593 = vpack.c.b16 %v3053, %v3043
        %v4594 = vpack.c.b16 %v3054, %v3044
        %v4595 = vpack.c.b16 %v3055, %v3045
        %v4596 = vpack.c.b16 %v3056, %v3046
        %v4597 = vpack.c.b16 %v3057, %v3047
        %v4598 = vpack.c.b16 %v3058, %v3048
        %v4599 = vpack.c.b16 %v3059, %v3049
        %v4600 = vpack.c.b16 %v3060, %v3050
        %v4601 = vpack.c.b16 %v3061, %v3051
        %v4602 = vpack.c.b16 %v3072, %v3062
        %v4603 = vpack.c.b16 %v3073, %v3063
        %v4604 = vpack.c.b16 %v3074, %v3064
        %v4605 = vpack.c.b16 %v3075, %v3065
        %v4606 = vpack.c.b16 %v3076, %v3066
        %v4607 = vpack.c.b16 %v3077, %v3067
        %v4608 = vpack.c.b16 %v3078, %v3068
        %v4609 = vpack.c.b16 %v3079, %v3069
        %v4610 = vpack.c.b16 %v3080, %v3070
        %v4611 = vpack.c.b16 %v3081, %v3071
        %v4612 = vpack.c.b16 %v3092, %v3082
        %v4613 = vpack.c.b16 %v3093, %v3083
        %v4614 = vpack.c.b16 %v3094, %v3084
        %v4615 = vpack.c.b16 %v3095, %v3085
        %v4616 = vpack.c.b16 %v3096, %v3086
        %v4617 = vpack.c.b16 %v3097, %v3087
        %v4618 = vpack.c.b16 %v3098, %v3088
        %v4619 = vpack.c.b16 %v3099, %v3089
        %v4620 = vpack.c.b16 %v3100, %v3090
        %v4621 = vpack.c.b16 %v3101, %v3091
        %v4622 = vpack.c.b16 %v3112, %v3102
        %v4623 = vpack.c.b16 %v3113, %v3103
        %v4624 = vpack.c.b16 %v3114, %v3104
        %v4625 = vpack.c.b16 %v3115, %v3105
        %v4626 = vpack.c.b16 %v3116, %v3106
        %v4627 = vpack.c.b16 %v3117, %v3107
        %v4628 = vpack.c.b16 %v3118, %v3108
        %v4629 = vpack.c.b16 %v3119, %v3109
        %v4630 = vpack.c.b16 %v3120, %v3110
        %v4631 = vpack.c.b16 %v3121, %v3111
        %v4632 = vpack.c.b16 %v3132, %v3122
        %v4633 = vpack.c.b16 %v3133, %v3123
        %v4634 = vpack.c.b16 %v3134, %v3124
        %v4635 = vpack.c.b16 %v3135, %v3125
        %v4636 = vpack.c.b16 %v3136, %v3126
        %v4637 = vpack.c.b16 %v3137, %v3127
        %v4638 = vpack.c.b16 %v3138, %v3128
        %v4639 = vpack.c.b16 %v3139, %v3129
        %v4640 = vpack.c.b16 %v3140, %v3130
        %v4641 = vpack.c.b16 %v3141, %v3131
        %v4642 = vpack.c.b16 %v3152, %v3142
        %v4643 = vpack.c.b16 %v3153, %v3143
        %v4644 = vpack.c.b16 %v3154, %v3144
        %v4645 = vpack.c.b16 %v3155, %v3145
        %v4646 = vpack.c.b16 %v3156, %v3146
        %v4647 = vpack.c.b16 %v3157, %v3147
        %v4648 = vpack.c.b16 %v3158, %v3148
        %v4649 = vpack.c.b16 %v3159, %v3149
        %v4650 = vpack.c.b16 %v3160, %v3150
        %v4651 = vpack.c.b16 %v3161, %v3151
        %v4652 = vpack.c.b16 %v3172, %v3162
        %v4653 = vpack.c.b16 %v3173, %v3163
        %v4654 = vpack.c.b16 %v3174, %v3164
        %v4655 = vpack.c.b16 %v3175, %v3165
        %v4656 = vpack.c.b16 %v3176, %v3166
        %v4657 = vpack.c.b16 %v3177, %v3167
        %v4658 = vpack.c.b16 %v3178, %v3168
        %v4659 = vpack.c.b16 %v3179, %v3169
        %v4660 = vpack.c.b16 %v3180, %v3170
        %v4661 = vpack.c.b16 %v3181, %v3171
        %v4662 = vpack.c.b16 %v3192, %v3182
        %v4663 = vpack.c.b16 %v3193, %v3183
        %v4664 = vpack.c.b16 %v3194, %v3184
        %v4665 = vpack.c.b16 %v3195, %v3185
        %v4666 = vpack.c.b16 %v3196, %v3186
        %v4667 = vpack.c.b16 %v3197, %v3187
        %v4668 = vpack.c.b16 %v3198, %v3188
        %v4669 = vpack.c.b16 %v3199, %v3189
        %v4670 = vpack.c.b16 %v3200, %v3190
        %v4671 = vpack.c.b16 %v3201, %v3191
        %v4672 = vpack.c.b16 %v3212, %v3202
        %v4673 = vpack.c.b16 %v3213, %v3203
        %v4674 = vpack.c.b16 %v3214, %v3204
        %v4675 = vpack.c.b16 %v3215, %v3205
        %v4676 = vpack.c.b16 %v3216, %v3206
        %v4677 = vpack.c.b16 %v3217, %v3207
        %v4678 = vpack.c.b16 %v3218, %v3208
        %v4679 = vpack.c.b16 %v3219, %v3209
        %v4680 = vpack.c.b16 %v3220, %v3210
        %v4681 = vpack.c.b16 %v3221, %v3211
        %v4682 = vpack.c.b16 %v3232, %v3222
        %v4683 = vpack.c.b16 %v3233, %v3223
        %v4684 = vpack.c.b16 %v3234, %v3224
        %v4685 = vpack.c.b16 %v3235, %v3225
        %v4686 = vpack.c.b16 %v3236, %v3226
        %v4687 = vpack.c.b16 %v3237, %v3227
        %v4688 = vpack.c.b16 %v3238, %v3228
        %v4689 = vpack.c.b16 %v3239, %v3229
        %v4690 = vpack.c.b16 %v3240, %v3230
        %v4691 = vpack.c.b16 %v3241, %v3231
        %v4692 = vpack.c.b16 %v3252, %v3242
        %v4693 = vpack.c.b16 %v3253, %v3243
        %v4694 = vpack.c.b16 %v3254, %v3244
        %v4695 = vpack.c.b16 %v3255, %v3245
        %v4696 = vpack.c.b16 %v3256, %v3246
        %v4697 = vpack.c.b16 %v3257, %v3247
        %v4698 = vpack.c.b16 %v3258, %v3248
        %v4699 = vpack.c.b16 %v3259, %v3249
        %v4700 = vpack.c.b16 %v3260, %v3250
        %v4701 = vpack.c.b16 %v3261, %v3251
        %v4702 = vpack.c.b16 %v3272, %v3262
        %v4703 = vpack.c.b16 %v3273, %v3263
        %v4704 = vpack.c.b16 %v3274, %v3264
        %v4705 = vpack.c.b16 %v3275, %v3265
        %v4706 = vpack.c.b16 %v3276, %v3266
        %v4707 = vpack.c.b16 %v3277, %v3267
        %v4708 = vpack.c.b16 %v3278, %v3268
        %v4709 = vpack.c.b16 %v3279, %v3269
        %v4710 = vpack.c.b16 %v3280, %v3270
        %v4711 = vpack.c.b16 %v3281, %v3271
        %v4712 = vpack.c.b16 %v3292, %v3282
        %v4713 = vpack.c.b16 %v3293, %v3283
        %v4714 = vpack.c.b16 %v3294, %v3284
        %v4715 = vpack.c.b16 %v3295, %v3285
        %v4716 = vpack.c.b16 %v3296, %v3286
        %v4717 = vpack.c.b16 %v3297, %v3287
        %v4718 = vpack.c.b16 %v3298, %v3288
        %v4719 = vpack.c.b16 %v3299, %v3289
        %v4720 = vpack.c.b16 %v3300, %v3290
        %v4721 = vpack.c.b16 %v3301, %v3291
        %v4722 = vpack.c.b16 %v3312, %v3302
        %v4723 = vpack.c.b16 %v3313, %v3303
        %v4724 = vpack.c.b16 %v3314, %v3304
        %v4725 = vpack.c.b16 %v3315, %v3305
        %v4726 = vpack.c.b16 %v3316, %v3306
        %v4727 = vpack.c.b16 %v3317, %v3307
        %v4728 = vpack.c.b16 %v3318, %v3308
        %v4729 = vpack.c.b16 %v3319, %v3309
        %v4730 = vpack.c.b16 %v3320, %v3310
        %v4731 = vpack.c.b16 %v3321, %v3311
        %v4732 = vpack.c.b16 %v3332, %v3322
        %v4733 = vpack.c.b16 %v3333, %v3323
        %v4734 = vpack.c.b16 %v3334, %v3324
        %v4735 = vpack.c.b16 %v3335, %v3325
        %v4736 = vpack.c.b16 %v3336, %v3326
        %v4737 = vpack.c.b16 %v3337, %v3327
        %v4738 = vpack.c.b16 %v3338, %v3328
        %v4739 = vpack.c.b16 %v3339, %v3329
        %v4740 = vpack.c.b16 %v3340, %v3330
        %v4741 = vpack.c.b16 %v3341, %v3331
        %v4742 = vpack.c.b16 %v3352, %v3342
        %v4743 = vpack.c.b16 %v3353, %v3343
        %v4744 = vpack.c.b16 %v3354, %v3344
        %v4745 = vpack.c.b16 %v3355, %v3345
        %v4746 = vpack.c.b16 %v3356, %v3346
        %v4747 = vpack.c.b16 %v3357, %v3347
        %v4748 = vpack.c.b16 %v3358, %v3348
        %v4749 = vpack.c.b16 %v3359, %v3349
        %v4750 = vpack.c.b16 %v3360, %v3350
        %v4751 = vpack.c.b16 %v3361, %v3351
        %v4752 = vpack.c.b16 %v3372, %v3362
        %v4753 = vpack.c.b16 %v3373, %v3363
        %v4754 = vpack.c.b16 %v3374, %v3364
        %v4755 = vpack.c.b16 %v3375, %v3365
        %v4756 = vpack.c.b16 %v3376, %v3366
        %v4757 = vpack.c.b16 %v3377, %v3367
        %v4758 = vpack.c.b16 %v3378, %v3368
        %v4759 = vpack.c.b16 %v3379, %v3369
        %v4760 = vpack.c.b16 %v3380, %v3370
        %v4761 = vpack.c.b16 %v3381, %v3371
        %v4762 = vpack.c.b16 %v3392, %v3382
        %v4763 = vpack.c.b16 %v3393, %v3383
        %v4764 = vpack.c.b16 %v3394, %v3384
        %v4765 = vpack.c.b16 %v3395, %v3385
        %v4766 = vpack.c.b16 %v3396, %v3386
        %v4767 = vpack.c.b16 %v3397, %v3387
        %v4768 = vpack.c.b16 %v3398, %v3388
        %v4769 = vpack.c.b16 %v3399, %v3389
        %v4770 = vpack.c.b16 %v3400, %v3390
        %v4771 = vpack.c.b16 %v3401, %v3391
        %v4772 = vpack.c.b16 %v3412, %v3402
        %v4773 = vpack.c.b16 %v3413, %v3403
        %v4774 = vpack.c.b16 %v3414, %v3404
        %v4775 = vpack.c.b16 %v3415, %v3405
        %v4776 = vpack.c.b16 %v3416, %v3406
        %v4777 = vpack.c.b16 %v3417, %v3407
        %v4778 = vpack.c.b16 %v3418, %v3408
        %v4779 = vpack.c.b16 %v3419, %v3409
        %v4780 = vpack.c.b16 %v3420, %v3410
        %v4781 = vpack.c.b16 %v3421, %v3411
        %v4782 = vpack.c.b16 %v3432, %v3422
        %v4783 = vpack.c.b16 %v3433, %v3423
        %v4784 = vpack.c.b16 %v3434, %v3424
        %v4785 = vpack.c.b16 %v3435, %v3425
        %v4786 = vpack.c.b16 %v3436, %v3426
        %v4787 = vpack.c.b16 %v3437, %v3427
        %v4788 = vpack.c.b16 %v3438, %v3428
        %v4789 = vpack.c.b16 %v3439, %v3429
        %v4790 = vpack.c.b16 %v3440, %v3430
        %v4791 = vpack.c.b16 %v3441, %v3431
        %v4792 = vpack.c.b16 %v3452, %v3442
        %v4793 = vpack.c.b16 %v3453, %v3443
        %v4794 = vpack.c.b16 %v3454, %v3444
        %v4795 = vpack.c.b16 %v3455, %v3445
        %v4796 = vpack.c.b16 %v3456, %v3446
        %v4797 = vpack.c.b16 %v3457, %v3447
        %v4798 = vpack.c.b16 %v3458, %v3448
        %v4799 = vpack.c.b16 %v3459, %v3449
        %v4800 = vpack.c.b16 %v3460, %v3450
        %v4801 = vpack.c.b16 %v3461, %v3451
        %v4802 = vpack.c.b16 %v3472, %v3462
        %v4803 = vpack.c.b16 %v3473, %v3463
        %v4804 = vpack.c.b16 %v3474, %v3464
        %v4805 = vpack.c.b16 %v3475, %v3465
        %v4806 = vpack.c.b16 %v3476, %v3466
        %v4807 = vpack.c.b16 %v3477, %v3467
        %v4808 = vpack.c.b16 %v3478, %v3468
        %v4809 = vpack.c.b16 %v3479, %v3469
        %v4810 = vpack.c.b16 %v3480, %v3470
        %v4811 = vpack.c.b16 %v3481, %v3471
        %v4812 = vpack.c.b16 %v3492, %v3482
        %v4813 = vpack.c.b16 %v3493, %v3483
        %v4814 = vpack.c.b16 %v3494, %v3484
        %v4815 = vpack.c.b16 %v3495, %v3485
        %v4816 = vpack.c.b16 %v3496, %v3486
        %v4817 = vpack.c.b16 %v3497, %v3487
        %v4818 = vpack.c.b16 %v3498, %v3488
        %v4819 = vpack.c.b16 %v3499, %v3489
        %v4820 = vpack.c.b16 %v3500, %v3490
        %v4821 = vpack.c.b16 %v3501, %v3491
        %v4822 = vpack.c.b16 %v3512, %v3502
        %v4823 = vpack.c.b16 %v3513, %v3503
        %v4824 = vpack.c.b16 %v3514, %v3504
        %v4825 = vpack.c.b16 %v3515, %v3505
        %v4826 = vpack.c.b16 %v3516, %v3506
        %v4827 = vpack.c.b16 %v3517, %v3507
        %v4828 = vpack.c.b16 %v3518, %v3508
        %v4829 = vpack.c.b16 %v3519, %v3509
        %v4830 = vpack.c.b16 %v3520, %v3510
        %v4831 = vpack.c.b16 %v3521, %v3511
        %v4832 = vpack.c.b16 %v3532, %v3522
        %v4833 = vpack.c.b16 %v3533, %v3523
        %v4834 = vpack.c.b16 %v3534, %v3524
        %v4835 = vpack.c.b16 %v3535, %v3525
        %v4836 = vpack.c.b16 %v3536, %v3526
        %v4837 = vpack.c.b16 %v3537, %v3527
        %v4838 = vpack.c.b16 %v3538, %v3528
        %v4839 = vpack.c.b16 %v3539, %v3529
        %v4840 = vpack.c.b16 %v3540, %v3530
        %v4841 = vpack.c.b16 %v3541, %v3531
        %v4842 = vpack.c.b16 %v3552, %v3542
        %v4843 = vpack.c.b16 %v3553, %v3543
        %v4844 = vpack.c.b16 %v3554, %v3544
        %v4845 = vpack.c.b16 %v3555, %v3545
        %v4846 = vpack.c.b16 %v3556, %v3546
        %v4847 = vpack.c.b16 %v3557, %v3547
        %v4848 = vpack.c.b16 %v3558, %v3548
        %v4849 = vpack.c.b16 %v3559, %v3549
        %v4850 = vpack.c.b16 %v3560, %v3550
        %v4851 = vpack.c.b16 %v3561, %v3551
        %v4852 = vpack.c.b16 %v3572, %v3562
        %v4853 = vpack.c.b16 %v3573, %v3563
        %v4854 = vpack.c.b16 %v3574, %v3564
        %v4855 = vpack.c.b16 %v3575, %v3565
        %v4856 = vpack.c.b16 %v3576, %v3566
        %v4857 = vpack.c.b16 %v3577, %v3567
        %v4858 = vpack.c.b16 %v3578, %v3568
        %v4859 = vpack.c.b16 %v3579, %v3569
        %v4860 = vpack.c.b16 %v3580, %v3570
        %v4861 = vpack.c.b16 %v3581, %v3571
        %v4862 = vpack.c.b16 %v3592, %v3582
        %v4863 = vpack.c.b16 %v3593, %v3583
        %v4864 = vpack.c.b16 %v3594, %v3584
        %v4865 = vpack.c.b16 %v3595, %v3585
        %v4866 = vpack.c.b16 %v3596, %v3586
        %v4867 = vpack.c.b16 %v3597, %v3587
        %v4868 = vpack.c.b16 %v3598, %v3588
        %v4869 = vpack.c.b16 %v3599, %v3589
        %v4870 = vpack.c.b16 %v3600, %v3590
        %v4871 = vpack.c.b16 %v3601, %v3591
        %v4872 = vpack.c.b16 %v3612, %v3602
        %v4873 = vpack.c.b16 %v3613, %v3603
        %v4874 = vpack.c.b16 %v3614, %v3604
        %v4875 = vpack.c.b16 %v3615, %v3605
        %v4876 = vpack.c.b16 %v3616, %v3606
        %v4877 = vpack.c.b16 %v3617, %v3607
        %v4878 = vpack.c.b16 %v3618, %v3608
        %v4879 = vpack.c.b16 %v3619, %v3609
        %v4880 = vpack.c.b16 %v3620, %v3610
        %v4881 = vpack.c.b16 %v3621, %v3611
        %v4882 = vpack.c.b16 %v3632, %v3622
        %v4883 = vpack.c.b16 %v3633, %v3623
        %v4884 = vpack.c.b16 %v3634, %v3624
        %v4885 = vpack.c.b16 %v3635, %v3625
        %v4886 = vpack.c.b16 %v3636, %v3626
        %v4887 = vpack.c.b16 %v3637, %v3627
        %v4888 = vpack.c.b16 %v3638, %v3628
        %v4889 = vpack.c.b16 %v3639, %v3629
        %v4890 = vpack.c.b16 %v3640, %v3630
        %v4891 = vpack.c.b16 %v3641, %v3631
        %v4892 = vpack.c.b16 %v3652, %v3642
        %v4893 = vpack.c.b16 %v3653, %v3643
        %v4894 = vpack.c.b16 %v3654, %v3644
        %v4895 = vpack.c.b16 %v3655, %v3645
        %v4896 = vpack.c.b16 %v3656, %v3646
        %v4897 = vpack.c.b16 %v3657, %v3647
        %v4898 = vpack.c.b16 %v3658, %v3648
        %v4899 = vpack.c.b16 %v3659, %v3649
        %v4900 = vpack.c.b16 %v3660, %v3650
        %v4901 = vpack.c.b16 %v3661, %v3651
        %v4902 = vpack.c.b16 %v3672, %v3662
        %v4903 = vpack.c.b16 %v3673, %v3663
        %v4904 = vpack.c.b16 %v3674, %v3664
        %v4905 = vpack.c.b16 %v3675, %v3665
        %v4906 = vpack.c.b16 %v3676, %v3666
        %v4907 = vpack.c.b16 %v3677, %v3667
        %v4908 = vpack.c.b16 %v3678, %v3668
        %v4909 = vpack.c.b16 %v3679, %v3669
        %v4910 = vpack.c.b16 %v3680, %v3670
        %v4911 = vpack.c.b16 %v3681, %v3671
        %v4912 = vpack.c.b16 %v3692, %v3682
        %v4913 = vpack.c.b16 %v3693, %v3683
        %v4914 = vpack.c.b16 %v3694, %v3684
        %v4915 = vpack.c.b16 %v3695, %v3685
        %v4916 = vpack.c.b16 %v3696, %v3686
        %v4917 = vpack.c.b16 %v3697, %v3687
        %v4918 = vpack.c.b16 %v3698, %v3688
        %v4919 = vpack.c.b16 %v3699, %v3689
        %v4920 = vpack.c.b16 %v3700, %v3690
        %v4921 = vpack.c.b16 %v3701, %v3691
        %v4922 = vpack.c.b16 %v3712, %v3702
        %v4923 = vpack.c.b16 %v3713, %v3703
        %v4924 = vpack.c.b16 %v3714, %v3704
        %v4925 = vpack.c.b16 %v3715, %v3705
        %v4926 = vpack.c.b16 %v3716, %v3706
        %v4927 = vpack.c.b16 %v3717, %v3707
        %v4928 = vpack.c.b16 %v3718, %v3708
        %v4929 = vpack.c.b16 %v3719, %v3709
        %v4930 = vpack.c.b16 %v3720, %v3710
        %v4931 = vpack.c.b16 %v3721, %v3711
        %v4932 = vpack.c.b16 %v3732, %v3722
        %v4933 = vpack.c.b16 %v3733, %v3723
        %v4934 = vpack.c.b16 %v3734, %v3724
        %v4935 = vpack.c.b16 %v3735, %v3725
        %v4936 = vpack.c.b16 %v3736, %v3726
        %v4937 = vpack.c.b16 %v3737, %v3727
        %v4938 = vpack.c.b16 %v3738, %v3728
        %v4939 = vpack.c.b16 %v3739, %v3729
        %v4940 = vpack.c.b16 %v3740, %v3730
        %v4941 = vpack.c.b16 %v3741, %v3731
        %v4942 = vpack.c.b16 %v3752, %v3742
        %v4943 = vpack.c.b16 %v3753, %v3743
        %v4944 = vpack.c.b16 %v3754, %v3744
        %v4945 = vpack.c.b16 %v3755, %v3745
        %v4946 = vpack.c.b16 %v3756, %v3746
        %v4947 = vpack.c.b16 %v3757, %v3747
        %v4948 = vpack.c.b16 %v3758, %v3748
        %v4949 = vpack.c.b16 %v3759, %v3749
        %v4950 = vpack.c.b16 %v3760, %v3750
        %v4951 = vpack.c.b16 %v3761, %v3751
        %v4952 = vpack.c.b16 %v3772, %v3762
        %v4953 = vpack.c.b16 %v3773, %v3763
        %v4954 = vpack.c.b16 %v3774, %v3764
        %v4955 = vpack.c.b16 %v3775, %v3765
        %v4956 = vpack.c.b16 %v3776, %v3766
        %v4957 = vpack.c.b16 %v3777, %v3767
        %v4958 = vpack.c.b16 %v3778, %v3768
        %v4959 = vpack.c.b16 %v3779, %v3769
        %v4960 = vpack.c.b16 %v3780, %v3770
        %v4961 = vpack.c.b16 %v3781, %v3771
        %v4962 = vpack.c.b16 %v3792, %v3782
        %v4963 = vpack.c.b16 %v3793, %v3783
        %v4964 = vpack.c.b16 %v3794, %v3784
        %v4965 = vpack.c.b16 %v3795, %v3785
        %v4966 = vpack.c.b16 %v3796, %v3786
        %v4967 = vpack.c.b16 %v3797, %v3787
        %v4968 = vpack.c.b16 %v3798, %v3788
        %v4969 = vpack.c.b16 %v3799, %v3789
        %v4970 = vpack.c.b16 %v3800, %v3790
        %v4971 = vpack.c.b16 %v3801, %v3791
        %v4972 = vpack.c.b16 %v3812, %v3802
        %v4973 = vpack.c.b16 %v3813, %v3803
        %v4974 = vpack.c.b16 %v3814, %v3804
        %v4975 = vpack.c.b16 %v3815, %v3805
        %v4976 = vpack.c.b16 %v3816, %v3806
        %v4977 = vpack.c.b16 %v3817, %v3807
        %v4978 = vpack.c.b16 %v3818, %v3808
        %v4979 = vpack.c.b16 %v3819, %v3809
        %v4980 = vpack.c.b16 %v3820, %v3810
        %v4981 = vpack.c.b16 %v3821, %v3811
        %v4982 = vpack.c.b16 %v3832, %v3822
        %v4983 = vpack.c.b16 %v3833, %v3823
        %v4984 = vpack.c.b16 %v3834, %v3824
        %v4985 = vpack.c.b16 %v3835, %v3825
        %v4986 = vpack.c.b16 %v3836, %v3826
        %v4987 = vpack.c.b16 %v3837, %v3827
        %v4988 = vpack.c.b16 %v3838, %v3828
        %v4989 = vpack.c.b16 %v3839, %v3829
        %v4990 = vpack.c.b16 %v3840, %v3830
        %v4991 = vpack.c.b16 %v3841, %v3831
        %v4992 = vpack.c.b16 %v3852, %v3842
        %v4993 = vpack.c.b16 %v3853, %v3843
        %v4994 = vpack.c.b16 %v3854, %v3844
        %v4995 = vpack.c.b16 %v3855, %v3845
        %v4996 = vpack.c.b16 %v3856, %v3846
        %v4997 = vpack.c.b16 %v3857, %v3847
        %v4998 = vpack.c.b16 %v3858, %v3848
        %v4999 = vpack.c.b16 %v3859, %v3849
        %v5000 = vpack.c.b16 %v3860, %v3850
        %v5001 = vpack.c.b16 %v3861, %v3851
        %v5002 = vpack.c.b16 %v3872, %v3862
        %v5003 = vpack.c.b16 %v3873, %v3863
        %v5004 = vpack.c.b16 %v3874, %v3864
        %v5005 = vpack.c.b16 %v3875, %v3865
        %v5006 = vpack.c.b16 %v3876, %v3866
        %v5007 = vpack.c.b16 %v3877, %v3867
        %v5008 = vpack.c.b16 %v3878, %v3868
        %v5009 = vpack.c.b16 %v3879, %v3869
        %v5010 = vpack.c.b16 %v3880, %v3870
        %v5011 = vpack.c.b16 %v3881, %v3871
        %v5012 = vpack.c.b16 %v3892, %v3882
        %v5013 = vpack.c.b16 %v3893, %v3883
        %v5014 = vpack.c.b16 %v3894, %v3884
        %v5015 = vpack.c.b16 %v3895, %v3885
        %v5016 = vpack.c.b16 %v3896, %v3886
        %v5017 = vpack.c.b16 %v3897, %v3887
        %v5018 = vpack.c.b16 %v3898, %v3888
        %v5019 = vpack.c.b16 %v3899, %v3889
        %v5020 = vpack.c.b16 %v3900, %v3890
        %v5021 = vpack.c.b16 %v3901, %v3891
        %v5022 = vpack.c.b16 %v3912, %v3902
        %v5023 = vpack.c.b16 %v3913, %v3903
        %v5024 = vpack.c.b16 %v3914, %v3904
        %v5025 = vpack.c.b16 %v3915, %v3905
        %v5026 = vpack.c.b16 %v3916, %v3906
        %v5027 = vpack.c.b16 %v3917, %v3907
        %v5028 = vpack.c.b16 %v3918, %v3908
        %v5029 = vpack.c.b16 %v3919, %v3909
        %v5030 = vpack.c.b16 %v3920, %v3910
        %v5031 = vpack.c.b16 %v3921, %v3911
        %v5032 = vpack.c.b16 %v3932, %v3922
        %v5033 = vpack.c.b16 %v3933, %v3923
        %v5034 = vpack.c.b16 %v3934, %v3924
        %v5035 = vpack.c.b16 %v3935, %v3925
        %v5036 = vpack.c.b16 %v3936, %v3926
        %v5037 = vpack.c.b16 %v3937, %v3927
        %v5038 = vpack.c.b16 %v3938, %v3928
        %v5039 = vpack.c.b16 %v3939, %v3929
        %v5040 = vpack.c.b16 %v3940, %v3930
        %v5041 = vpack.c.b16 %v3941, %v3931
        %v5042 = vpack.c.b16 %v3952, %v3942
        %v5043 = vpack.c.b16 %v3953, %v3943
        %v5044 = vpack.c.b16 %v3954, %v3944
        %v5045 = vpack.c.b16 %v3955, %v3945
        %v5046 = vpack.c.b16 %v3956, %v3946
        %v5047 = vpack.c.b16 %v3957, %v3947
        %v5048 = vpack.c.b16 %v3958, %v3948
        %v5049 = vpack.c.b16 %v3959, %v3949
        %v5050 = vpack.c.b16 %v3960, %v3950
        %v5051 = vpack.c.b16 %v3961, %v3951
        %v5052 = vpack.c.b16 %v3972, %v3962
        %v5053 = vpack.c.b16 %v3973, %v3963
        %v5054 = vpack.c.b16 %v3974, %v3964
        %v5055 = vpack.c.b16 %v3975, %v3965
        %v5056 = vpack.c.b16 %v3976, %v3966
        %v5057 = vpack.c.b16 %v3977, %v3967
        %v5058 = vpack.c.b16 %v3978, %v3968
        %v5059 = vpack.c.b16 %v3979, %v3969
        %v5060 = vpack.c.b16 %v3980, %v3970
        %v5061 = vpack.c.b16 %v3981, %v3971
        %v5062 = vpack.c.b16 %v3992, %v3982
        %v5063 = vpack.c.b16 %v3993, %v3983
        %v5064 = vpack.c.b16 %v3994, %v3984
        %v5065 = vpack.c.b16 %v3995, %v3985
        %v5066 = vpack.c.b16 %v3996, %v3986
        %v5067 = vpack.c.b16 %v3997, %v3987
        %v5068 = vpack.c.b16 %v3998, %v3988
        %v5069 = vpack.c.b16 %v3999, %v3989
        %v5070 = vpack.c.b16 %v4000, %v3990
        %v5071 = vpack.c.b16 %v4001, %v3991
        %v5072 = vpack.c.b16 %v4012, %v4002
        %v5073 = vpack.c.b16 %v4013, %v4003
        %v5074 = vpack.c.b16 %v4014, %v4004
        %v5075 = vpack.c.b16 %v4015, %v4005
        %v5076 = vpack.c.b16 %v4016, %v4006
        %v5077 = vpack.c.b16 %v4017, %v4007
        %v5078 = vpack.c.b16 %v4018, %v4008
        %v5079 = vpack.c.b16 %v4019, %v4009
        %v5080 = vpack.c.b16 %v4020, %v4010
        %v5081 = vpack.c.b16 %v4021, %v4011
        %v5082 = vpack.c.b16 %v4032, %v4022
        %v5083 = vpack.c.b16 %v4033, %v4023
        %v5084 = vpack.c.b16 %v4034, %v4024
        %v5085 = vpack.c.b16 %v4035, %v4025
        %v5086 = vpack.c.b16 %v4036, %v4026
        %v5087 = vpack.c.b16 %v4037, %v4027
        %v5088 = vpack.c.b16 %v4038, %v4028
        %v5089 = vpack.c.b16 %v4039, %v4029
        %v5090 = vpack.c.b16 %v4040, %v4030
        %v5091 = vpack.c.b16 %v4041, %v4031
        %v5092 = vpack.c.b16 %v4052, %v4042
        %v5093 = vpack.c.b16 %v4053, %v4043
        %v5094 = vpack.c.b16 %v4054, %v4044
        %v5095 = vpack.c.b16 %v4055, %v4045
        %v5096 = vpack.c.b16 %v4056, %v4046
        %v5097 = vpack.c.b16 %v4057, %v4047
        %v5098 = vpack.c.b16 %v4058, %v4048
        %v5099 = vpack.c.b16 %v4059, %v4049
        %v5100 = vpack.c.b16 %v4060, %v4050
        %v5101 = vpack.c.b16 %v4061, %v4051
        %v5102 = vpack.c.b16 %v4072, %v4062
        %v5103 = vpack.c.b16 %v4073, %v4063
        %v5104 = vpack.c.b16 %v4074, %v4064
        %v5105 = vpack.c.b16 %v4075, %v4065
        %v5106 = vpack.c.b16 %v4076, %v4066
        %v5107 = vpack.c.b16 %v4077, %v4067
        %v5108 = vpack.c.b16 %v4078, %v4068
        %v5109 = vpack.c.b16 %v4079, %v4069
        %v5110 = vpack.c.b16 %v4080, %v4070
        %v5111 = vpack.c.b16 %v4081, %v4071
        %v5112 = vpack.c.b16 %v4092, %v4082
        %v5113 = vpack.c.b16 %v4093, %v4083
        %v5114 = vpack.c.b16 %v4094, %v4084
        %v5115 = vpack.c.b16 %v4095, %v4085
        %v5116 = vpack.c.b16 %v4096, %v4086
        %v5117 = vpack.c.b16 %v4097, %v4087
        %v5118 = vpack.c.b16 %v4098, %v4088
        %v5119 = vpack.c.b16 %v4099, %v4089
        %v5120 = vpack.c.b16 %v4100, %v4090
        %v5121 = vpack.c.b16 %v4101, %v4091
        %v5122 = vpack.c.b16 %v4112, %v4102
        %v5123 = vpack.c.b16 %v4113, %v4103
        %v5124 = vpack.c.b16 %v4114, %v4104
        %v5125 = vpack.c.b16 %v4115, %v4105
        %v5126 = vpack.c.b16 %v4116, %v4106
        %v5127 = vpack.c.b16 %v4117, %v4107
        %v5128 = vpack.c.b16 %v4118, %v4108
        %v5129 = vpack.c.b16 %v4119, %v4109
        %v5130 = vpack.c.b16 %v4120, %v4110
        %v5131 = vpack.c.b16 %v4121, %v4111
        %v5132 = vpack.c.b16 %v4132, %v4122
        %v5133 = vpack.c.b16 %v4133, %v4123
        %v5134 = vpack.c.b16 %v4134, %v4124
        %v5135 = vpack.c.b16 %v4135, %v4125
        %v5136 = vpack.c.b16 %v4136, %v4126
        %v5137 = vpack.c.b16 %v4137, %v4127
        %v5138 = vpack.c.b16 %v4138, %v4128
        %v5139 = vpack.c.b16 %v4139, %v4129
        %v5140 = vpack.c.b16 %v4140, %v4130
        %v5141 = vpack.c.b16 %v4141, %v4131
        %v5142 = vpack.c.b16 %v4152, %v4142
        %v5143 = vpack.c.b16 %v4153, %v4143
        %v5144 = vpack.c.b16 %v4154, %v4144
        %v5145 = vpack.c.b16 %v4155, %v4145
        %v5146 = vpack.c.b16 %v4156, %v4146
        %v5147 = vpack.c.b16 %v4157, %v4147
        %v5148 = vpack.c.b16 %v4158, %v4148
        %v5149 = vpack.c.b16 %v4159, %v4149
        %v5150 = vpack.c.b16 %v4160, %v4150
        %v5151 = vpack.c.b16 %v4161, %v4151
        %v5152 = vpack.c.b16 %v4172, %v4162
        %v5153 = vpack.c.b16 %v4173, %v4163
        %v5154 = vpack.c.b16 %v4174, %v4164
        %v5155 = vpack.c.b16 %v4175, %v4165
        %v5156 = vpack.c.b16 %v4176, %v4166
        %v5157 = vpack.c.b16 %v4177, %v4167
        %v5158 = vpack.c.b16 %v4178, %v4168
        %v5159 = vpack.c.b16 %v4179, %v4169
        %v5160 = vpack.c.b16 %v4180, %v4170
        %v5161 = vpack.c.b16 %v4181, %v4171
        %v5162 = vpack.c.b16 %v4192, %v4182
        %v5163 = vpack.c.b16 %v4193, %v4183
        %v5164 = vpack.c.b16 %v4194, %v4184
        %v5165 = vpack.c.b16 %v4195, %v4185
        %v5166 = vpack.c.b16 %v4196, %v4186
        %v5167 = vpack.c.b16 %v4197, %v4187
        %v5168 = vpack.c.b16 %v4198, %v4188
        %v5169 = vpack.c.b16 %v4199, %v4189
        %v5170 = vpack.c.b16 %v4200, %v4190
        %v5171 = vpack.c.b16 %v4201, %v4191
        %v5172 = vpack.c.b16 %v4212, %v4202
        %v5173 = vpack.c.b16 %v4213, %v4203
        %v5174 = vpack.c.b16 %v4214, %v4204
        %v5175 = vpack.c.b16 %v4215, %v4205
        %v5176 = vpack.c.b16 %v4216, %v4206
        %v5177 = vpack.c.b16 %v4217, %v4207
        %v5178 = vpack.c.b16 %v4218, %v4208
        %v5179 = vpack.c.b16 %v4219, %v4209
        %v5180 = vpack.c.b16 %v4220, %v4210
        %v5181 = vpack.c.b16 %v4221, %v4211
        %6142 = vmatprep.subr.bf16.mxu0 %v4223
        %6143 = vmatpush1.bf16.msra.mxu0 %v4222
        %6144 = vmatprep.subr.bf16.mxu0 %v4233
        %6145 = vmatpush1.bf16.msra.mxu0 %v4232
        %6146 = vmatprep.subr.bf16.mxu0 %v4243
        %6147 = vmatpush1.bf16.msra.mxu0 %v4242
        %6148 = vmatprep.subr.bf16.mxu0 %v4253
        %6149 = vmatpush1.bf16.msra.mxu0 %v4252
        %6150 = vmatprep.subr.bf16.mxu0 %v4263
        %6151 = vmatpush1.bf16.msra.mxu0 %v4262
        %6152 = vmatprep.subr.bf16.mxu0 %v4273
        %6153 = vmatpush1.bf16.msra.mxu0 %v4272
        %6154 = vmatprep.subr.bf16.mxu0 %v4283
        %6155 = vmatpush1.bf16.msra.mxu0 %v4282
        %6156 = vmatprep.subr.bf16.mxu0 %v4293
        %6157 = vmatpush1.bf16.msra.mxu0 %v4292
        %6158 = vmatprep.subr.bf16.mxu0 %v4303
        %6159 = vmatpush1.bf16.msra.mxu0 %v4302
        %6160 = vmatprep.subr.bf16.mxu0 %v4313
        %6161 = vmatpush1.bf16.msra.mxu0 %v4312
        %6162 = vmatprep.subr.bf16.mxu0 %v4323
        %6163 = vmatpush1.bf16.msra.mxu0 %v4322
        %6164 = vmatprep.subr.bf16.mxu0 %v4333
        %6165 = vmatpush1.bf16.msra.mxu0 %v4332
        %6166 = vmatprep.subr.bf16.mxu0 %v4343
        %6167 = vmatpush1.bf16.msra.mxu0 %v4342
        %6168 = vmatprep.subr.bf16.mxu0 %v4353
        %6169 = vmatpush1.bf16.msra.mxu0 %v4352
        %6170 = vmatprep.subr.bf16.mxu0 %v4363
        %6171 = vmatpush1.bf16.msra.mxu0 %v4362
        %6172 = vmatprep.subr.bf16.mxu0 %v4373
        %6173 = vmatpush1.bf16.msra.mxu0 %v4372
        %6174 = vmatprep.mubr.bf16.mxu0 %v1319
        %6175 = vmatmul.mubr.bf16.gmra.mrb[0].mxu0 %v1318
        %v6176 = vpop.f32.mrb[0].mxu0
        %v6177 = vadd.f32 0.0, %v6176
        %v6178 = vpop.f32.mrb[0].mxu0
        %v6179 = vadd.f32 0.0, %v6178
        %v6180 = vpop.f32.mrb[0].mxu0
        %v6181 = vpop.f32.mrb[0].mxu0
        %6182 = vdwg.mxu0
        %6183 = vmatprep.subr.bf16.mxu0 %v4383
        %6184 = vmatpush1.bf16.msra.mxu0 %v4382
        %6185 = vmatprep.subr.bf16.mxu0 %v4393
        %6186 = vmatpush1.bf16.msra.mxu0 %v4392
        %6187 = vmatprep.subr.bf16.mxu0 %v4403
        %6188 = vmatpush1.bf16.msra.mxu0 %v4402
        %6189 = vmatprep.subr.bf16.mxu0 %v4413
        %6190 = vmatpush1.bf16.msra.mxu0 %v4412
        %6191 = vmatprep.subr.bf16.mxu0 %v4423
        %6192 = vmatpush1.bf16.msra.mxu0 %v4422
        %6193 = vmatprep.subr.bf16.mxu0 %v4433
        %6194 = vmatpush1.bf16.msra.mxu0 %v4432
        %6195 = vmatprep.subr.bf16.mxu0 %v4443
        %6196 = vmatpush1.bf16.msra.mxu0 %v4442
        %6197 = vmatprep.subr.bf16.mxu0 %v4453
        %6198 = vmatpush1.bf16.msra.mxu0 %v4452
        %6199 = vmatprep.subr.bf16.mxu0 %v4463
        %6200 = vmatpush1.bf16.msra.mxu0 %v4462
        %6201 = vmatprep.subr.bf16.mxu0 %v4473
        %6202 = vmatpush1.bf16.msra.mxu0 %v4472
        %6203 = vmatprep.subr.bf16.mxu0 %v4483
        %6204 = vmatpush1.bf16.msra.mxu0 %v4482
        %6205 = vmatprep.subr.bf16.mxu0 %v4493
        %6206 = vmatpush1.bf16.msra.mxu0 %v4492
        %6207 = vmatprep.subr.bf16.mxu0 %v4503
        %6208 = vmatpush1.bf16.msra.mxu0 %v4502
        %6209 = vmatprep.subr.bf16.mxu0 %v4513
        %6210 = vmatpush1.bf16.msra.mxu0 %v4512
        %6211 = vmatprep.subr.bf16.mxu0 %v4523
        %6212 = vmatpush1.bf16.msra.mxu0 %v4522
        %6213 = vmatprep.subr.bf16.mxu0 %v4533
        %6214 = vmatpush1.bf16.msra.mxu0 %v4532
        %6215 = vmatprep.mubr.bf16.mxu0 %v1321
        %6216 = vmatmul.mubr.bf16.gmra.mrb[0].mxu0 %v1320
        %v6217 = vpop.f32.mrb[0].mxu0
        %v6218 = vadd.f32 %v6177, %v6217
        %v6219 = vpop.f32.mrb[0].mxu0
        %v6220 = vadd.f32 %v6179, %v6219
        %v6221 = vpop.f32.mrb[0].mxu0
        %v6222 = vpop.f32.mrb[0].mxu0
        %6223 = vdwg.mxu0
        %6224 = vmatprep.subr.bf16.mxu0 %v4543
        %6225 = vmatpush1.bf16.msra.mxu0 %v4542
        %6226 = vmatprep.subr.bf16.mxu0 %v4553
        %6227 = vmatpush1.bf16.msra.mxu0 %v4552
        %6228 = vmatprep.subr.bf16.mxu0 %v4563
        %6229 = vmatpush1.bf16.msra.mxu0 %v4562
        %6230 = vmatprep.subr.bf16.mxu0 %v4573
        %6231 = vmatpush1.bf16.msra.mxu0 %v4572
        %6232 = vmatprep.subr.bf16.mxu0 %v4583
        %6233 = vmatpush1.bf16.msra.mxu0 %v4582
        %6234 = vmatprep.subr.bf16.mxu0 %v4593
        %6235 = vmatpush1.bf16.msra.mxu0 %v4592
        %6236 = vmatprep.subr.bf16.mxu0 %v4603
        %6237 = vmatpush1.bf16.msra.mxu0 %v4602
        %6238 = vmatprep.subr.bf16.mxu0 %v4613
        %6239 = vmatpush1.bf16.msra.mxu0 %v4612
        %6240 = vmatprep.subr.bf16.mxu0 %v4623
        %6241 = vmatpush1.bf16.msra.mxu0 %v4622
        %6242 = vmatprep.subr.bf16.mxu0 %v4633
        %6243 = vmatpush1.bf16.msra.mxu0 %v4632
        %6244 = vmatprep.subr.bf16.mxu0 %v4643
        %6245 = vmatpush1.bf16.msra.mxu0 %v4642
        %6246 = vmatprep.subr.bf16.mxu0 %v4653
        %6247 = vmatpush1.bf16.msra.mxu0 %v4652
        %6248 = vmatprep.subr.bf16.mxu0 %v4663
        %6249 = vmatpush1.bf16.msra.mxu0 %v4662
        %6250 = vmatprep.subr.bf16.mxu0 %v4673
        %6251 = vmatpush1.bf16.msra.mxu0 %v4672
        %6252 = vmatprep.subr.bf16.mxu0 %v4683
        %6253 = vmatpush1.bf16.msra.mxu0 %v4682
        %6254 = vmatprep.subr.bf16.mxu0 %v4693
        %6255 = vmatpush1.bf16.msra.mxu0 %v4692
        %6256 = vmatprep.mubr.bf16.mxu0 %v1323
        %6257 = vmatmul.mubr.bf16.gmra.mrb[0].mxu0 %v1322
        %v6258 = vpop.f32.mrb[0].mxu0
        %v6259 = vadd.f32 %v6218, %v6258
        %v6260 = vpop.f32.mrb[0].mxu0
        %v6261 = vadd.f32 %v6220, %v6260
        %v6262 = vpop.f32.mrb[0].mxu0
        %v6263 = vpop.f32.mrb[0].mxu0
        %6264 = vdwg.mxu0
        %6265 = vmatprep.subr.bf16.mxu0 %v4703
        %6266 = vmatpush1.bf16.msra.mxu0 %v4702
        %6267 = vmatprep.subr.bf16.mxu0 %v4713
        %6268 = vmatpush1.bf16.msra.mxu0 %v4712
        %6269 = vmatprep.subr.bf16.mxu0 %v4723
        %6270 = vmatpush1.bf16.msra.mxu0 %v4722
        %6271 = vmatprep.subr.bf16.mxu0 %v4733
        %6272 = vmatpush1.bf16.msra.mxu0 %v4732
        %6273 = vmatprep.subr.bf16.mxu0 %v4743
        %6274 = vmatpush1.bf16.msra.mxu0 %v4742
        %6275 = vmatprep.subr.bf16.mxu0 %v4753
        %6276 = vmatpush1.bf16.msra.mxu0 %v4752
        %6277 = vmatprep.subr.bf16.mxu0 %v4763
        %6278 = vmatpush1.bf16.msra.mxu0 %v4762
        %6279 = vmatprep.subr.bf16.mxu0 %v4773
        %6280 = vmatpush1.bf16.msra.mxu0 %v4772
        %6281 = vmatprep.subr.bf16.mxu0 %v4783
        %6282 = vmatpush1.bf16.msra.mxu0 %v4782
        %6283 = vmatprep.subr.bf16.mxu0 %v4793
        %6284 = vmatpush1.bf16.msra.mxu0 %v4792
        %6285 = vmatprep.subr.bf16.mxu0 %v4803
        %6286 = vmatpush1.bf16.msra.mxu0 %v4802
        %6287 = vmatprep.subr.bf16.mxu0 %v4813
        %6288 = vmatpush1.bf16.msra.mxu0 %v4812
        %6289 = vmatprep.subr.bf16.mxu0 %v4823
        %6290 = vmatpush1.bf16.msra.mxu0 %v4822
        %6291 = vmatprep.subr.bf16.mxu0 %v4833
        %6292 = vmatpush1.bf16.msra.mxu0 %v4832
        %6293 = vmatprep.subr.bf16.mxu0 %v4843
        %6294 = vmatpush1.bf16.msra.mxu0 %v4842
        %6295 = vmatprep.subr.bf16.mxu0 %v4853
        %6296 = vmatpush1.bf16.msra.mxu0 %v4852
        %6297 = vmatprep.mubr.bf16.mxu0 %v1325
        %6298 = vmatmul.mubr.bf16.gmra.mrb[0].mxu0 %v1324
        %v6299 = vpop.f32.mrb[0].mxu0
        %v6300 = vadd.f32 %v6259, %v6299
        %v6301 = vpop.f32.mrb[0].mxu0
        %v6302 = vadd.f32 %v6261, %v6301
        %v6303 = vpop.f32.mrb[0].mxu0
        %v6304 = vpop.f32.mrb[0].mxu0
        %6305 = vdwg.mxu0
        %6306 = vmatprep.subr.bf16.mxu0 %v4863
        %6307 = vmatpush1.bf16.msra.mxu0 %v4862
        %6308 = vmatprep.subr.bf16.mxu0 %v4873
        %6309 = vmatpush1.bf16.msra.mxu0 %v4872
        %6310 = vmatprep.subr.bf16.mxu0 %v4883
        %6311 = vmatpush1.bf16.msra.mxu0 %v4882
        %6312 = vmatprep.subr.bf16.mxu0 %v4893
        %6313 = vmatpush1.bf16.msra.mxu0 %v4892
        %6314 = vmatprep.subr.bf16.mxu0 %v4903
        %6315 = vmatpush1.bf16.msra.mxu0 %v4902
        %6316 = vmatprep.subr.bf16.mxu0 %v4913
        %6317 = vmatpush1.bf16.msra.mxu0 %v4912
        %6318 = vmatprep.subr.bf16.mxu0 %v4923
        %6319 = vmatpush1.bf16.msra.mxu0 %v4922
        %6320 = vmatprep.subr.bf16.mxu0 %v4933
        %6321 = vmatpush1.bf16.msra.mxu0 %v4932
        %6322 = vmatprep.subr.bf16.mxu0 %v4943
        %6323 = vmatpush1.bf16.msra.mxu0 %v4942
        %6324 = vmatprep.subr.bf16.mxu0 %v4953
        %6325 = vmatpush1.bf16.msra.mxu0 %v4952
        %6326 = vmatprep.subr.bf16.mxu0 %v4963
        %6327 = vmatpush1.bf16.msra.mxu0 %v4962
        %6328 = vmatprep.subr.bf16.mxu0 %v4973
        %6329 = vmatpush1.bf16.msra.mxu0 %v4972
        %6330 = vmatprep.subr.bf16.mxu0 %v4983
        %6331 = vmatpush1.bf16.msra.mxu0 %v4982
        %6332 = vmatprep.subr.bf16.mxu0 %v4993
        %6333 = vmatpush1.bf16.msra.mxu0 %v4992
        %6334 = vmatprep.subr.bf16.mxu0 %v5003
        %6335 = vmatpush1.bf16.msra.mxu0 %v5002
        %6336 = vmatprep.subr.bf16.mxu0 %v5013
        %6337 = vmatpush1.bf16.msra.mxu0 %v5012
        %6338 = vmatprep.mubr.bf16.mxu0 %v1327
        %6339 = vmatmul.mubr.bf16.gmra.mrb[0].mxu0 %v1326
        %v6340 = vpop.f32.mrb[0].mxu0
        %v6341 = vadd.f32 %v6300, %v6340
        %v6342 = vpop.f32.mrb[0].mxu0
        %v6343 = vadd.f32 %v6302, %v6342
        %v6344 = vpop.f32.mrb[0].mxu0
        %v6345 = vpop.f32.mrb[0].mxu0
        %6346 = vdwg.mxu0
        %6347 = vmatprep.subr.bf16.mxu0 %v5023
        %6348 = vmatpush1.bf16.msra.mxu0 %v5022
        %6349 = vmatprep.subr.bf16.mxu0 %v5033
        %6350 = vmatpush1.bf16.msra.mxu0 %v5032
        %6351 = vmatprep.subr.bf16.mxu0 %v5043
        %6352 = vmatpush1.bf16.msra.mxu0 %v5042
        %6353 = vmatprep.subr.bf16.mxu0 %v5053
        %6354 = vmatpush1.bf16.msra.mxu0 %v5052
        %6355 = vmatprep.subr.bf16.mxu0 %v5063
        %6356 = vmatpush1.bf16.msra.mxu0 %v5062
        %6357 = vmatprep.subr.bf16.mxu0 %v5073
        %6358 = vmatpush1.bf16.msra.mxu0 %v5072
        %6359 = vmatprep.subr.bf16.mxu0 %v5083
        %6360 = vmatpush1.bf16.msra.mxu0 %v5082
        %6361 = vmatprep.subr.bf16.mxu0 %v5093
        %6362 = vmatpush1.bf16.msra.mxu0 %v5092
        %6363 = vmatprep.subr.bf16.mxu0 %v5103
        %6364 = vmatpush1.bf16.msra.mxu0 %v5102
        %6365 = vmatprep.subr.bf16.mxu0 %v5113
        %6366 = vmatpush1.bf16.msra.mxu0 %v5112
        %6367 = vmatprep.subr.bf16.mxu0 %v5123
        %6368 = vmatpush1.bf16.msra.mxu0 %v5122
        %6369 = vmatprep.subr.bf16.mxu0 %v5133
        %6370 = vmatpush1.bf16.msra.mxu0 %v5132
        %6371 = vmatprep.subr.bf16.mxu0 %v5143
        %6372 = vmatpush1.bf16.msra.mxu0 %v5142
        %6373 = vmatprep.subr.bf16.mxu0 %v5153
        %6374 = vmatpush1.bf16.msra.mxu0 %v5152
        %6375 = vmatprep.subr.bf16.mxu0 %v5163
        %6376 = vmatpush1.bf16.msra.mxu0 %v5162
        %6377 = vmatprep.subr.bf16.mxu0 %v5173
        %6378 = vmatpush1.bf16.msra.mxu0 %v5172
        %6379 = vmatprep.mubr.bf16.mxu0 %v1329
        %6380 = vmatmul.mubr.bf16.gmra.mrb[0].mxu0 %v1328
        %v6381 = vpop.f32.mrb[0].mxu0
        %v6382 = vadd.f32 %v6341, %v6381
        %v6383 = vpop.f32.mrb[0].mxu0
        %v6384 = vadd.f32 %v6343, %v6383
        %v6385 = vpop.f32.mrb[0].mxu0
        %v6386 = vpop.f32.mrb[0].mxu0
        %6387 = vdwg.mxu0
        %6388 = vmatprep.subr.bf16.mxu0 %v4225
        %6389 = vmatpush1.bf16.msra.mxu0 %v4224
        %6390 = vmatprep.subr.bf16.mxu0 %v4235
        %6391 = vmatpush1.bf16.msra.mxu0 %v4234
        %6392 = vmatprep.subr.bf16.mxu0 %v4245
        %6393 = vmatpush1.bf16.msra.mxu0 %v4244
        %6394 = vmatprep.subr.bf16.mxu0 %v4255
        %6395 = vmatpush1.bf16.msra.mxu0 %v4254
        %6396 = vmatprep.subr.bf16.mxu0 %v4265
        %6397 = vmatpush1.bf16.msra.mxu0 %v4264
        %6398 = vmatprep.subr.bf16.mxu0 %v4275
        %6399 = vmatpush1.bf16.msra.mxu0 %v4274
        %6400 = vmatprep.subr.bf16.mxu0 %v4285
        %6401 = vmatpush1.bf16.msra.mxu0 %v4284
        %6402 = vmatprep.subr.bf16.mxu0 %v4295
        %6403 = vmatpush1.bf16.msra.mxu0 %v4294
        %6404 = vmatprep.subr.bf16.mxu0 %v4305
        %6405 = vmatpush1.bf16.msra.mxu0 %v4304
        %6406 = vmatprep.subr.bf16.mxu0 %v4315
        %6407 = vmatpush1.bf16.msra.mxu0 %v4314
        %6408 = vmatprep.subr.bf16.mxu0 %v4325
        %6409 = vmatpush1.bf16.msra.mxu0 %v4324
        %6410 = vmatprep.subr.bf16.mxu0 %v4335
        %6411 = vmatpush1.bf16.msra.mxu0 %v4334
        %6412 = vmatprep.subr.bf16.mxu0 %v4345
        %6413 = vmatpush1.bf16.msra.mxu0 %v4344
        %6414 = vmatprep.subr.bf16.mxu0 %v4355
        %6415 = vmatpush1.bf16.msra.mxu0 %v4354
        %6416 = vmatprep.subr.bf16.mxu0 %v4365
        %6417 = vmatpush1.bf16.msra.mxu0 %v4364
        %6418 = vmatprep.subr.bf16.mxu0 %v4375
        %6419 = vmatpush1.bf16.msra.mxu0 %v4374
        %6420 = vmatprep.mubr.bf16.mxu0 %v1319
        %6421 = vmatmul.mubr.bf16.gmra.mrb[0].mxu0 %v1318
        %v6422 = vpop.f32.mrb[0].mxu0
        %v6423 = vadd.f32 0.0, %v6422
        %v6424 = vpop.f32.mrb[0].mxu0
        %v6425 = vadd.f32 0.0, %v6424
        %v6426 = vpop.f32.mrb[0].mxu0
        %v6427 = vpop.f32.mrb[0].mxu0
        %6428 = vdwg.mxu0
        %6429 = vmatprep.subr.bf16.mxu0 %v4385
        %6430 = vmatpush1.bf16.msra.mxu0 %v4384
        %6431 = vmatprep.subr.bf16.mxu0 %v4395
        %6432 = vmatpush1.bf16.msra.mxu0 %v4394
        %6433 = vmatprep.subr.bf16.mxu0 %v4405
        %6434 = vmatpush1.bf16.msra.mxu0 %v4404
        %6435 = vmatprep.subr.bf16.mxu0 %v4415
        %6436 = vmatpush1.bf16.msra.mxu0 %v4414
        %6437 = vmatprep.subr.bf16.mxu0 %v4425
        %6438 = vmatpush1.bf16.msra.mxu0 %v4424
        %6439 = vmatprep.subr.bf16.mxu0 %v4435
        %6440 = vmatpush1.bf16.msra.mxu0 %v4434
        %6441 = vmatprep.subr.bf16.mxu0 %v4445
        %6442 = vmatpush1.bf16.msra.mxu0 %v4444
        %6443 = vmatprep.subr.bf16.mxu0 %v4455
        %6444 = vmatpush1.bf16.msra.mxu0 %v4454
        %6445 = vmatprep.subr.bf16.mxu0 %v4465
        %6446 = vmatpush1.bf16.msra.mxu0 %v4464
        %6447 = vmatprep.subr.bf16.mxu0 %v4475
        %6448 = vmatpush1.bf16.msra.mxu0 %v4474
        %6449 = vmatprep.subr.bf16.mxu0 %v4485
        %6450 = vmatpush1.bf16.msra.mxu0 %v4484
        %6451 = vmatprep.subr.bf16.mxu0 %v4495
        %6452 = vmatpush1.bf16.msra.mxu0 %v4494
        %6453 = vmatprep.subr.bf16.mxu0 %v4505
        %6454 = vmatpush1.bf16.msra.mxu0 %v4504
        %6455 = vmatprep.subr.bf16.mxu0 %v4515
        %6456 = vmatpush1.bf16.msra.mxu0 %v4514
        %6457 = vmatprep.subr.bf16.mxu0 %v4525
        %6458 = vmatpush1.bf16.msra.mxu0 %v4524
        %6459 = vmatprep.subr.bf16.mxu0 %v4535
        %6460 = vmatpush1.bf16.msra.mxu0 %v4534
        %6461 = vmatprep.mubr.bf16.mxu0 %v1321
        %6462 = vmatmul.mubr.bf16.gmra.mrb[0].mxu0 %v1320
        %v6463 = vpop.f32.mrb[0].mxu0
        %v6464 = vadd.f32 %v6423, %v6463
        %v6465 = vpop.f32.mrb[0].mxu0
        %v6466 = vadd.f32 %v6425, %v6465
        %v6467 = vpop.f32.mrb[0].mxu0
        %v6468 = vpop.f32.mrb[0].mxu0
        %6469 = vdwg.mxu0
        %6470 = vmatprep.subr.bf16.mxu0 %v4545
        %6471 = vmatpush1.bf16.msra.mxu0 %v4544
        %6472 = vmatprep.subr.bf16.mxu0 %v4555
        %6473 = vmatpush1.bf16.msra.mxu0 %v4554
        %6474 = vmatprep.subr.bf16.mxu0 %v4565
        %6475 = vmatpush1.bf16.msra.mxu0 %v4564
        %6476 = vmatprep.subr.bf16.mxu0 %v4575
        %6477 = vmatpush1.bf16.msra.mxu0 %v4574
        %6478 = vmatprep.subr.bf16.mxu0 %v4585
        %6479 = vmatpush1.bf16.msra.mxu0 %v4584
        %6480 = vmatprep.subr.bf16.mxu0 %v4595
        %6481 = vmatpush1.bf16.msra.mxu0 %v4594
        %6482 = vmatprep.subr.bf16.mxu0 %v4605
        %6483 = vmatpush1.bf16.msra.mxu0 %v4604
        %6484 = vmatprep.subr.bf16.mxu0 %v4615
        %6485 = vmatpush1.bf16.msra.mxu0 %v4614
        %6486 = vmatprep.subr.bf16.mxu0 %v4625
        %6487 = vmatpush1.bf16.msra.mxu0 %v4624
        %6488 = vmatprep.subr.bf16.mxu0 %v4635
        %6489 = vmatpush1.bf16.msra.mxu0 %v4634
        %6490 = vmatprep.subr.bf16.mxu0 %v4645
        %6491 = vmatpush1.bf16.msra.mxu0 %v4644
        %6492 = vmatprep.subr.bf16.mxu0 %v4655
        %6493 = vmatpush1.bf16.msra.mxu0 %v4654
        %6494 = vmatprep.subr.bf16.mxu0 %v4665
        %6495 = vmatpush1.bf16.msra.mxu0 %v4664
        %6496 = vmatprep.subr.bf16.mxu0 %v4675
        %6497 = vmatpush1.bf16.msra.mxu0 %v4674
        %6498 = vmatprep.subr.bf16.mxu0 %v4685
        %6499 = vmatpush1.bf16.msra.mxu0 %v4684
        %6500 = vmatprep.subr.bf16.mxu0 %v4695
        %6501 = vmatpush1.bf16.msra.mxu0 %v4694
        %6502 = vmatprep.mubr.bf16.mxu0 %v1323
        %6503 = vmatmul.mubr.bf16.gmra.mrb[0].mxu0 %v1322
        %v6504 = vpop.f32.mrb[0].mxu0
        %v6505 = vadd.f32 %v6464, %v6504
        %v6506 = vpop.f32.mrb[0].mxu0
        %v6507 = vadd.f32 %v6466, %v6506
        %v6508 = vpop.f32.mrb[0].mxu0
        %v6509 = vpop.f32.mrb[0].mxu0
        %6510 = vdwg.mxu0
        %6511 = vmatprep.subr.bf16.mxu0 %v4705
        %6512 = vmatpush1.bf16.msra.mxu0 %v4704
        %6513 = vmatprep.subr.bf16.mxu0 %v4715
        %6514 = vmatpush1.bf16.msra.mxu0 %v4714
        %6515 = vmatprep.subr.bf16.mxu0 %v4725
        %6516 = vmatpush1.bf16.msra.mxu0 %v4724
        %6517 = vmatprep.subr.bf16.mxu0 %v4735
        %6518 = vmatpush1.bf16.msra.mxu0 %v4734
        %6519 = vmatprep.subr.bf16.mxu0 %v4745
        %6520 = vmatpush1.bf16.msra.mxu0 %v4744
        %6521 = vmatprep.subr.bf16.mxu0 %v4755
        %6522 = vmatpush1.bf16.msra.mxu0 %v4754
        %6523 = vmatprep.subr.bf16.mxu0 %v4765
        %6524 = vmatpush1.bf16.msra.mxu0 %v4764
        %6525 = vmatprep.subr.bf16.mxu0 %v4775
        %6526 = vmatpush1.bf16.msra.mxu0 %v4774
        %6527 = vmatprep.subr.bf16.mxu0 %v4785
        %6528 = vmatpush1.bf16.msra.mxu0 %v4784
        %6529 = vmatprep.subr.bf16.mxu0 %v4795
        %6530 = vmatpush1.bf16.msra.mxu0 %v4794
        %6531 = vmatprep.subr.bf16.mxu0 %v4805
        %6532 = vmatpush1.bf16.msra.mxu0 %v4804
        %6533 = vmatprep.subr.bf16.mxu0 %v4815
        %6534 = vmatpush1.bf16.msra.mxu0 %v4814
        %6535 = vmatprep.subr.bf16.mxu0 %v4825
        %6536 = vmatpush1.bf16.msra.mxu0 %v4824
        %6537 = vmatprep.subr.bf16.mxu0 %v4835
        %6538 = vmatpush1.bf16.msra.mxu0 %v4834
        %6539 = vmatprep.subr.bf16.mxu0 %v4845
        %6540 = vmatpush1.bf16.msra.mxu0 %v4844
        %6541 = vmatprep.subr.bf16.mxu0 %v4855
        %6542 = vmatpush1.bf16.msra.mxu0 %v4854
        %6543 = vmatprep.mubr.bf16.mxu0 %v1325
        %6544 = vmatmul.mubr.bf16.gmra.mrb[0].mxu0 %v1324
        %v6545 = vpop.f32.mrb[0].mxu0
        %v6546 = vadd.f32 %v6505, %v6545
        %v6547 = vpop.f32.mrb[0].mxu0
        %v6548 = vadd.f32 %v6507, %v6547
        %v6549 = vpop.f32.mrb[0].mxu0
        %v6550 = vpop.f32.mrb[0].mxu0
        %6551 = vdwg.mxu0
        %6552 = vmatprep.subr.bf16.mxu0 %v4865
        %6553 = vmatpush1.bf16.msra.mxu0 %v4864
        %6554 = vmatprep.subr.bf16.mxu0 %v4875
        %6555 = vmatpush1.bf16.msra.mxu0 %v4874
        %6556 = vmatprep.subr.bf16.mxu0 %v4885
        %6557 = vmatpush1.bf16.msra.mxu0 %v4884
        %6558 = vmatprep.subr.bf16.mxu0 %v4895
        %6559 = vmatpush1.bf16.msra.mxu0 %v4894
        %6560 = vmatprep.subr.bf16.mxu0 %v4905
        %6561 = vmatpush1.bf16.msra.mxu0 %v4904
        %6562 = vmatprep.subr.bf16.mxu0 %v4915
        %6563 = vmatpush1.bf16.msra.mxu0 %v4914
        %6564 = vmatprep.subr.bf16.mxu0 %v4925
        %6565 = vmatpush1.bf16.msra.mxu0 %v4924
        %6566 = vmatprep.subr.bf16.mxu0 %v4935
        %6567 = vmatpush1.bf16.msra.mxu0 %v4934
        %6568 = vmatprep.subr.bf16.mxu0 %v4945
        %6569 = vmatpush1.bf16.msra.mxu0 %v4944
        %6570 = vmatprep.subr.bf16.mxu0 %v4955
        %6571 = vmatpush1.bf16.msra.mxu0 %v4954
        %6572 = vmatprep.subr.bf16.mxu0 %v4965
        %6573 = vmatpush1.bf16.msra.mxu0 %v4964
        %6574 = vmatprep.subr.bf16.mxu0 %v4975
        %6575 = vmatpush1.bf16.msra.mxu0 %v4974
        %6576 = vmatprep.subr.bf16.mxu0 %v4985
        %6577 = vmatpush1.bf16.msra.mxu0 %v4984
        %6578 = vmatprep.subr.bf16.mxu0 %v4995
        %6579 = vmatpush1.bf16.msra.mxu0 %v4994
        %6580 = vmatprep.subr.bf16.mxu0 %v5005
        %6581 = vmatpush1.bf16.msra.mxu0 %v5004
        %6582 = vmatprep.subr.bf16.mxu0 %v5015
        %6583 = vmatpush1.bf16.msra.mxu0 %v5014
        %6584 = vmatprep.mubr.bf16.mxu0 %v1327
        %6585 = vmatmul.mubr.bf16.gmra.mrb[0].mxu0 %v1326
        %v6586 = vpop.f32.mrb[0].mxu0
        %v6587 = vadd.f32 %v6546, %v6586
        %v6588 = vpop.f32.mrb[0].mxu0
        %v6589 = vadd.f32 %v6548, %v6588
        %v6590 = vpop.f32.mrb[0].mxu0
        %v6591 = vpop.f32.mrb[0].mxu0
        %6592 = vdwg.mxu0
        %6593 = vmatprep.subr.bf16.mxu0 %v5025
        %6594 = vmatpush1.bf16.msra.mxu0 %v5024
        %6595 = vmatprep.subr.bf16.mxu0 %v5035
        %6596 = vmatpush1.bf16.msra.mxu0 %v5034
        %6597 = vmatprep.subr.bf16.mxu0 %v5045
        %6598 = vmatpush1.bf16.msra.mxu0 %v5044
        %6599 = vmatprep.subr.bf16.mxu0 %v5055
        %6600 = vmatpush1.bf16.msra.mxu0 %v5054
        %6601 = vmatprep.subr.bf16.mxu0 %v5065
        %6602 = vmatpush1.bf16.msra.mxu0 %v5064
        %6603 = vmatprep.subr.bf16.mxu0 %v5075
        %6604 = vmatpush1.bf16.msra.mxu0 %v5074
        %6605 = vmatprep.subr.bf16.mxu0 %v5085
        %6606 = vmatpush1.bf16.msra.mxu0 %v5084
        %6607 = vmatprep.subr.bf16.mxu0 %v5095
        %6608 = vmatpush1.bf16.msra.mxu0 %v5094
        %6609 = vmatprep.subr.bf16.mxu0 %v5105
        %6610 = vmatpush1.bf16.msra.mxu0 %v5104
        %6611 = vmatprep.subr.bf16.mxu0 %v5115
        %6612 = vmatpush1.bf16.msra.mxu0 %v5114
        %6613 = vmatprep.subr.bf16.mxu0 %v5125
        %6614 = vmatpush1.bf16.msra.mxu0 %v5124
        %6615 = vmatprep.subr.bf16.mxu0 %v5135
        %6616 = vmatpush1.bf16.msra.mxu0 %v5134
        %6617 = vmatprep.subr.bf16.mxu0 %v5145
        %6618 = vmatpush1.bf16.msra.mxu0 %v5144
        %6619 = vmatprep.subr.bf16.mxu0 %v5155
        %6620 = vmatpush1.bf16.msra.mxu0 %v5154
        %6621 = vmatprep.subr.bf16.mxu0 %v5165
        %6622 = vmatpush1.bf16.msra.mxu0 %v5164
        %6623 = vmatprep.subr.bf16.mxu0 %v5175
        %6624 = vmatpush1.bf16.msra.mxu0 %v5174
        %6625 = vmatprep.mubr.bf16.mxu0 %v1329
        %6626 = vmatmul.mubr.bf16.gmra.mrb[0].mxu0 %v1328
        %v6627 = vpop.f32.mrb[0].mxu0
        %v6628 = vadd.f32 %v6587, %v6627
        %v6629 = vpop.f32.mrb[0].mxu0
        %v6630 = vadd.f32 %v6589, %v6629
        %v6631 = vpop.f32.mrb[0].mxu0
        %v6632 = vpop.f32.mrb[0].mxu0
        %6633 = vdwg.mxu0
        %6634 = vmatprep.subr.bf16.mxu0 %v4227
        %6635 = vmatpush1.bf16.msra.mxu0 %v4226
        %6636 = vmatprep.subr.bf16.mxu0 %v4237
        %6637 = vmatpush1.bf16.msra.mxu0 %v4236
        %6638 = vmatprep.subr.bf16.mxu0 %v4247
        %6639 = vmatpush1.bf16.msra.mxu0 %v4246
        %6640 = vmatprep.subr.bf16.mxu0 %v4257
        %6641 = vmatpush1.bf16.msra.mxu0 %v4256
        %6642 = vmatprep.subr.bf16.mxu0 %v4267
        %6643 = vmatpush1.bf16.msra.mxu0 %v4266
        %6644 = vmatprep.subr.bf16.mxu0 %v4277
        %6645 = vmatpush1.bf16.msra.mxu0 %v4276
        %6646 = vmatprep.subr.bf16.mxu0 %v4287
        %6647 = vmatpush1.bf16.msra.mxu0 %v4286
        %6648 = vmatprep.subr.bf16.mxu0 %v4297
        %6649 = vmatpush1.bf16.msra.mxu0 %v4296
        %6650 = vmatprep.subr.bf16.mxu0 %v4307
        %6651 = vmatpush1.bf16.msra.mxu0 %v4306
        %6652 = vmatprep.subr.bf16.mxu0 %v4317
        %6653 = vmatpush1.bf16.msra.mxu0 %v4316
        %6654 = vmatprep.subr.bf16.mxu0 %v4327
        %6655 = vmatpush1.bf16.msra.mxu0 %v4326
        %6656 = vmatprep.subr.bf16.mxu0 %v4337
        %6657 = vmatpush1.bf16.msra.mxu0 %v4336
        %6658 = vmatprep.subr.bf16.mxu0 %v4347
        %6659 = vmatpush1.bf16.msra.mxu0 %v4346
        %6660 = vmatprep.subr.bf16.mxu0 %v4357
        %6661 = vmatpush1.bf16.msra.mxu0 %v4356
        %6662 = vmatprep.subr.bf16.mxu0 %v4367
        %6663 = vmatpush1.bf16.msra.mxu0 %v4366
        %6664 = vmatprep.subr.bf16.mxu0 %v4377
        %6665 = vmatpush1.bf16.msra.mxu0 %v4376
        %6666 = vmatprep.mubr.bf16.mxu0 %v1319
        %6667 = vmatmul.mubr.bf16.gmra.mrb[0].mxu0 %v1318
        %v6668 = vpop.f32.mrb[0].mxu0
        %v6669 = vadd.f32 0.0, %v6668
        %v6670 = vpop.f32.mrb[0].mxu0
        %v6671 = vadd.f32 0.0, %v6670
        %v6672 = vpop.f32.mrb[0].mxu0
        %v6673 = vpop.f32.mrb[0].mxu0
        %6674 = vdwg.mxu0
        %6675 = vmatprep.subr.bf16.mxu0 %v4387
        %6676 = vmatpush1.bf16.msra.mxu0 %v4386
        %6677 = vmatprep.subr.bf16.mxu0 %v4397
        %6678 = vmatpush1.bf16.msra.mxu0 %v4396
        %6679 = vmatprep.subr.bf16.mxu0 %v4407
        %6680 = vmatpush1.bf16.msra.mxu0 %v4406
        %6681 = vmatprep.subr.bf16.mxu0 %v4417
        %6682 = vmatpush1.bf16.msra.mxu0 %v4416
        %6683 = vmatprep.subr.bf16.mxu0 %v4427
        %6684 = vmatpush1.bf16.msra.mxu0 %v4426
        %6685 = vmatprep.subr.bf16.mxu0 %v4437
        %6686 = vmatpush1.bf16.msra.mxu0 %v4436
        %6687 = vmatprep.subr.bf16.mxu0 %v4447
        %6688 = vmatpush1.bf16.msra.mxu0 %v4446
        %6689 = vmatprep.subr.bf16.mxu0 %v4457
        %6690 = vmatpush1.bf16.msra.mxu0 %v4456
        %6691 = vmatprep.subr.bf16.mxu0 %v4467
        %6692 = vmatpush1.bf16.msra.mxu0 %v4466
        %6693 = vmatprep.subr.bf16.mxu0 %v4477
        %6694 = vmatpush1.bf16.msra.mxu0 %v4476
        %6695 = vmatprep.subr.bf16.mxu0 %v4487
        %6696 = vmatpush1.bf16.msra.mxu0 %v4486
        %6697 = vmatprep.subr.bf16.mxu0 %v4497
        %6698 = vmatpush1.bf16.msra.mxu0 %v4496
        %6699 = vmatprep.subr.bf16.mxu0 %v4507
        %6700 = vmatpush1.bf16.msra.mxu0 %v4506
        %6701 = vmatprep.subr.bf16.mxu0 %v4517
        %6702 = vmatpush1.bf16.msra.mxu0 %v4516
        %6703 = vmatprep.subr.bf16.mxu0 %v4527
        %6704 = vmatpush1.bf16.msra.mxu0 %v4526
        %6705 = vmatprep.subr.bf16.mxu0 %v4537
        %6706 = vmatpush1.bf16.msra.mxu0 %v4536
        %6707 = vmatprep.mubr.bf16.mxu0 %v1321
        %6708 = vmatmul.mubr.bf16.gmra.mrb[0].mxu0 %v1320
        %v6709 = vpop.f32.mrb[0].mxu0
        %v6710 = vadd.f32 %v6669, %v6709
        %v6711 = vpop.f32.mrb[0].mxu0
        %v6712 = vadd.f32 %v6671, %v6711
        %v6713 = vpop.f32.mrb[0].mxu0
        %v6714 = vpop.f32.mrb[0].mxu0
        %6715 = vdwg.mxu0
        %6716 = vmatprep.subr.bf16.mxu0 %v4547
        %6717 = vmatpush1.bf16.msra.mxu0 %v4546
        %6718 = vmatprep.subr.bf16.mxu0 %v4557
        %6719 = vmatpush1.bf16.msra.mxu0 %v4556
        %6720 = vmatprep.subr.bf16.mxu0 %v4567
        %6721 = vmatpush1.bf16.msra.mxu0 %v4566
        %6722 = vmatprep.subr.bf16.mxu0 %v4577
        %6723 = vmatpush1.bf16.msra.mxu0 %v4576
        %6724 = vmatprep.subr.bf16.mxu0 %v4587
        %6725 = vmatpush1.bf16.msra.mxu0 %v4586
        %6726 = vmatprep.subr.bf16.mxu0 %v4597
        %6727 = vmatpush1.bf16.msra.mxu0 %v4596
        %6728 = vmatprep.subr.bf16.mxu0 %v4607
        %6729 = vmatpush1.bf16.msra.mxu0 %v4606
        %6730 = vmatprep.subr.bf16.mxu0 %v4617
        %6731 = vmatpush1.bf16.msra.mxu0 %v4616
        %6732 = vmatprep.subr.bf16.mxu0 %v4627
        %6733 = vmatpush1.bf16.msra.mxu0 %v4626
        %6734 = vmatprep.subr.bf16.mxu0 %v4637
        %6735 = vmatpush1.bf16.msra.mxu0 %v4636
        %6736 = vmatprep.subr.bf16.mxu0 %v4647
        %6737 = vmatpush1.bf16.msra.mxu0 %v4646
        %6738 = vmatprep.subr.bf16.mxu0 %v4657
        %6739 = vmatpush1.bf16.msra.mxu0 %v4656
        %6740 = vmatprep.subr.bf16.mxu0 %v4667
        %6741 = vmatpush1.bf16.msra.mxu0 %v4666
        %6742 = vmatprep.subr.bf16.mxu0 %v4677
        %6743 = vmatpush1.bf16.msra.mxu0 %v4676
        %6744 = vmatprep.subr.bf16.mxu0 %v4687
        %6745 = vmatpush1.bf16.msra.mxu0 %v4686
        %6746 = vmatprep.subr.bf16.mxu0 %v4697
        %6747 = vmatpush1.bf16.msra.mxu0 %v4696
        %6748 = vmatprep.mubr.bf16.mxu0 %v1323
        %6749 = vmatmul.mubr.bf16.gmra.mrb[0].mxu0 %v1322
        %v6750 = vpop.f32.mrb[0].mxu0
        %v6751 = vadd.f32 %v6710, %v6750
        %v6752 = vpop.f32.mrb[0].mxu0
        %v6753 = vadd.f32 %v6712, %v6752
        %v6754 = vpop.f32.mrb[0].mxu0
        %v6755 = vpop.f32.mrb[0].mxu0
        %6756 = vdwg.mxu0
        %6757 = vmatprep.subr.bf16.mxu0 %v4707
        %6758 = vmatpush1.bf16.msra.mxu0 %v4706
        %6759 = vmatprep.subr.bf16.mxu0 %v4717
        %6760 = vmatpush1.bf16.msra.mxu0 %v4716
        %6761 = vmatprep.subr.bf16.mxu0 %v4727
        %6762 = vmatpush1.bf16.msra.mxu0 %v4726
        %6763 = vmatprep.subr.bf16.mxu0 %v4737
        %6764 = vmatpush1.bf16.msra.mxu0 %v4736
        %6765 = vmatprep.subr.bf16.mxu0 %v4747
        %6766 = vmatpush1.bf16.msra.mxu0 %v4746
        %6767 = vmatprep.subr.bf16.mxu0 %v4757
        %6768 = vmatpush1.bf16.msra.mxu0 %v4756
        %6769 = vmatprep.subr.bf16.mxu0 %v4767
        %6770 = vmatpush1.bf16.msra.mxu0 %v4766
        %6771 = vmatprep.subr.bf16.mxu0 %v4777
        %6772 = vmatpush1.bf16.msra.mxu0 %v4776
        %6773 = vmatprep.subr.bf16.mxu0 %v4787
        %6774 = vmatpush1.bf16.msra.mxu0 %v4786
        %6775 = vmatprep.subr.bf16.mxu0 %v4797
        %6776 = vmatpush1.bf16.msra.mxu0 %v4796
        %6777 = vmatprep.subr.bf16.mxu0 %v4807
        %6778 = vmatpush1.bf16.msra.mxu0 %v4806
        %6779 = vmatprep.subr.bf16.mxu0 %v4817
        %6780 = vmatpush1.bf16.msra.mxu0 %v4816
        %6781 = vmatprep.subr.bf16.mxu0 %v4827
        %6782 = vmatpush1.bf16.msra.mxu0 %v4826
        %6783 = vmatprep.subr.bf16.mxu0 %v4837
        %6784 = vmatpush1.bf16.msra.mxu0 %v4836
        %6785 = vmatprep.subr.bf16.mxu0 %v4847
        %6786 = vmatpush1.bf16.msra.mxu0 %v4846
        %6787 = vmatprep.subr.bf16.mxu0 %v4857
        %6788 = vmatpush1.bf16.msra.mxu0 %v4856
        %6789 = vmatprep.mubr.bf16.mxu0 %v1325
        %6790 = vmatmul.mubr.bf16.gmra.mrb[0].mxu0 %v1324
        %v6791 = vpop.f32.mrb[0].mxu0
        %v6792 = vadd.f32 %v6751, %v6791
        %v6793 = vpop.f32.mrb[0].mxu0
        %v6794 = vadd.f32 %v6753, %v6793
        %v6795 = vpop.f32.mrb[0].mxu0
        %v6796 = vpop.f32.mrb[0].mxu0
        %6797 = vdwg.mxu0
        %6798 = vmatprep.subr.bf16.mxu0 %v4867
        %6799 = vmatpush1.bf16.msra.mxu0 %v4866
        %6800 = vmatprep.subr.bf16.mxu0 %v4877
        %6801 = vmatpush1.bf16.msra.mxu0 %v4876
        %6802 = vmatprep.subr.bf16.mxu0 %v4887
        %6803 = vmatpush1.bf16.msra.mxu0 %v4886
        %6804 = vmatprep.subr.bf16.mxu0 %v4897
        %6805 = vmatpush1.bf16.msra.mxu0 %v4896
        %6806 = vmatprep.subr.bf16.mxu0 %v4907
        %6807 = vmatpush1.bf16.msra.mxu0 %v4906
        %6808 = vmatprep.subr.bf16.mxu0 %v4917
        %6809 = vmatpush1.bf16.msra.mxu0 %v4916
        %6810 = vmatprep.subr.bf16.mxu0 %v4927
        %6811 = vmatpush1.bf16.msra.mxu0 %v4926
        %6812 = vmatprep.subr.bf16.mxu0 %v4937
        %6813 = vmatpush1.bf16.msra.mxu0 %v4936
        %6814 = vmatprep.subr.bf16.mxu0 %v4947
        %6815 = vmatpush1.bf16.msra.mxu0 %v4946
        %6816 = vmatprep.subr.bf16.mxu0 %v4957
        %6817 = vmatpush1.bf16.msra.mxu0 %v4956
        %6818 = vmatprep.subr.bf16.mxu0 %v4967
        %6819 = vmatpush1.bf16.msra.mxu0 %v4966
        %6820 = vmatprep.subr.bf16.mxu0 %v4977
        %6821 = vmatpush1.bf16.msra.mxu0 %v4976
        %6822 = vmatprep.subr.bf16.mxu0 %v4987
        %6823 = vmatpush1.bf16.msra.mxu0 %v4986
        %6824 = vmatprep.subr.bf16.mxu0 %v4997
        %6825 = vmatpush1.bf16.msra.mxu0 %v4996
        %6826 = vmatprep.subr.bf16.mxu0 %v5007
        %6827 = vmatpush1.bf16.msra.mxu0 %v5006
        %6828 = vmatprep.subr.bf16.mxu0 %v5017
        %6829 = vmatpush1.bf16.msra.mxu0 %v5016
        %6830 = vmatprep.mubr.bf16.mxu0 %v1327
        %6831 = vmatmul.mubr.bf16.gmra.mrb[0].mxu0 %v1326
        %v6832 = vpop.f32.mrb[0].mxu0
        %v6833 = vadd.f32 %v6792, %v6832
        %v6834 = vpop.f32.mrb[0].mxu0
        %v6835 = vadd.f32 %v6794, %v6834
        %v6836 = vpop.f32.mrb[0].mxu0
        %v6837 = vpop.f32.mrb[0].mxu0
        %6838 = vdwg.mxu0
        %6839 = vmatprep.subr.bf16.mxu0 %v5027
        %6840 = vmatpush1.bf16.msra.mxu0 %v5026
        %6841 = vmatprep.subr.bf16.mxu0 %v5037
        %6842 = vmatpush1.bf16.msra.mxu0 %v5036
        %6843 = vmatprep.subr.bf16.mxu0 %v5047
        %6844 = vmatpush1.bf16.msra.mxu0 %v5046
        %6845 = vmatprep.subr.bf16.mxu0 %v5057
        %6846 = vmatpush1.bf16.msra.mxu0 %v5056
        %6847 = vmatprep.subr.bf16.mxu0 %v5067
        %6848 = vmatpush1.bf16.msra.mxu0 %v5066
        %6849 = vmatprep.subr.bf16.mxu0 %v5077
        %6850 = vmatpush1.bf16.msra.mxu0 %v5076
        %6851 = vmatprep.subr.bf16.mxu0 %v5087
        %6852 = vmatpush1.bf16.msra.mxu0 %v5086
        %6853 = vmatprep.subr.bf16.mxu0 %v5097
        %6854 = vmatpush1.bf16.msra.mxu0 %v5096
        %6855 = vmatprep.subr.bf16.mxu0 %v5107
        %6856 = vmatpush1.bf16.msra.mxu0 %v5106
        %6857 = vmatprep.subr.bf16.mxu0 %v5117
        %6858 = vmatpush1.bf16.msra.mxu0 %v5116
        %6859 = vmatprep.subr.bf16.mxu0 %v5127
        %6860 = vmatpush1.bf16.msra.mxu0 %v5126
        %6861 = vmatprep.subr.bf16.mxu0 %v5137
        %6862 = vmatpush1.bf16.msra.mxu0 %v5136
        %6863 = vmatprep.subr.bf16.mxu0 %v5147
        %6864 = vmatpush1.bf16.msra.mxu0 %v5146
        %6865 = vmatprep.subr.bf16.mxu0 %v5157
        %6866 = vmatpush1.bf16.msra.mxu0 %v5156
        %6867 = vmatprep.subr.bf16.mxu0 %v5167
        %6868 = vmatpush1.bf16.msra.mxu0 %v5166
        %6869 = vmatprep.subr.bf16.mxu0 %v5177
        %6870 = vmatpush1.bf16.msra.mxu0 %v5176
        %6871 = vmatprep.mubr.bf16.mxu0 %v1329
        %6872 = vmatmul.mubr.bf16.gmra.mrb[0].mxu0 %v1328
        %v6873 = vpop.f32.mrb[0].mxu0
        %v6874 = vadd.f32 %v6833, %v6873
        %v6875 = vpop.f32.mrb[0].mxu0
        %v6876 = vadd.f32 %v6835, %v6875
        %v6877 = vpop.f32.mrb[0].mxu0
        %v6878 = vpop.f32.mrb[0].mxu0
        %6879 = vdwg.mxu0
        %6880 = vmatprep.subr.bf16.mxu0 %v4229
        %6881 = vmatpush1.bf16.msra.mxu0 %v4228
        %6882 = vmatprep.subr.bf16.mxu0 %v4239
        %6883 = vmatpush1.bf16.msra.mxu0 %v4238
        %6884 = vmatprep.subr.bf16.mxu0 %v4249
        %6885 = vmatpush1.bf16.msra.mxu0 %v4248
        %6886 = vmatprep.subr.bf16.mxu0 %v4259
        %6887 = vmatpush1.bf16.msra.mxu0 %v4258
        %6888 = vmatprep.subr.bf16.mxu0 %v4269
        %6889 = vmatpush1.bf16.msra.mxu0 %v4268
        %6890 = vmatprep.subr.bf16.mxu0 %v4279
        %6891 = vmatpush1.bf16.msra.mxu0 %v4278
        %6892 = vmatprep.subr.bf16.mxu0 %v4289
        %6893 = vmatpush1.bf16.msra.mxu0 %v4288
        %6894 = vmatprep.subr.bf16.mxu0 %v4299
        %6895 = vmatpush1.bf16.msra.mxu0 %v4298
        %6896 = vmatprep.subr.bf16.mxu0 %v4309
        %6897 = vmatpush1.bf16.msra.mxu0 %v4308
        %6898 = vmatprep.subr.bf16.mxu0 %v4319
        %6899 = vmatpush1.bf16.msra.mxu0 %v4318
        %6900 = vmatprep.subr.bf16.mxu0 %v4329
        %6901 = vmatpush1.bf16.msra.mxu0 %v4328
        %6902 = vmatprep.subr.bf16.mxu0 %v4339
        %6903 = vmatpush1.bf16.msra.mxu0 %v4338
        %6904 = vmatprep.subr.bf16.mxu0 %v4349
        %6905 = vmatpush1.bf16.msra.mxu0 %v4348
        %6906 = vmatprep.subr.bf16.mxu0 %v4359
        %6907 = vmatpush1.bf16.msra.mxu0 %v4358
        %6908 = vmatprep.subr.bf16.mxu0 %v4369
        %6909 = vmatpush1.bf16.msra.mxu0 %v4368
        %6910 = vmatprep.subr.bf16.mxu0 %v4379
        %6911 = vmatpush1.bf16.msra.mxu0 %v4378
        %6912 = vmatprep.mubr.bf16.mxu0 %v1319
        %6913 = vmatmul.mubr.bf16.gmra.mrb[0].mxu0 %v1318
        %v6914 = vpop.f32.mrb[0].mxu0
        %v6915 = vadd.f32 0.0, %v6914
        %v6916 = vpop.f32.mrb[0].mxu0
        %v6917 = vadd.f32 0.0, %v6916
        %v6918 = vpop.f32.mrb[0].mxu0
        %v6919 = vpop.f32.mrb[0].mxu0
        %6920 = vdwg.mxu0
        %6921 = vmatprep.subr.bf16.mxu0 %v4389
        %6922 = vmatpush1.bf16.msra.mxu0 %v4388
        %6923 = vmatprep.subr.bf16.mxu0 %v4399
        %6924 = vmatpush1.bf16.msra.mxu0 %v4398
        %6925 = vmatprep.subr.bf16.mxu0 %v4409
        %6926 = vmatpush1.bf16.msra.mxu0 %v4408
        %6927 = vmatprep.subr.bf16.mxu0 %v4419
        %6928 = vmatpush1.bf16.msra.mxu0 %v4418
        %6929 = vmatprep.subr.bf16.mxu0 %v4429
        %6930 = vmatpush1.bf16.msra.mxu0 %v4428
        %6931 = vmatprep.subr.bf16.mxu0 %v4439
        %6932 = vmatpush1.bf16.msra.mxu0 %v4438
        %6933 = vmatprep.subr.bf16.mxu0 %v4449
        %6934 = vmatpush1.bf16.msra.mxu0 %v4448
        %6935 = vmatprep.subr.bf16.mxu0 %v4459
        %6936 = vmatpush1.bf16.msra.mxu0 %v4458
        %6937 = vmatprep.subr.bf16.mxu0 %v4469
        %6938 = vmatpush1.bf16.msra.mxu0 %v4468
        %6939 = vmatprep.subr.bf16.mxu0 %v4479
        %6940 = vmatpush1.bf16.msra.mxu0 %v4478
        %6941 = vmatprep.subr.bf16.mxu0 %v4489
        %6942 = vmatpush1.bf16.msra.mxu0 %v4488
        %6943 = vmatprep.subr.bf16.mxu0 %v4499
        %6944 = vmatpush1.bf16.msra.mxu0 %v4498
        %6945 = vmatprep.subr.bf16.mxu0 %v4509
        %6946 = vmatpush1.bf16.msra.mxu0 %v4508
        %6947 = vmatprep.subr.bf16.mxu0 %v4519
        %6948 = vmatpush1.bf16.msra.mxu0 %v4518
        %6949 = vmatprep.subr.bf16.mxu0 %v4529
        %6950 = vmatpush1.bf16.msra.mxu0 %v4528
        %6951 = vmatprep.subr.bf16.mxu0 %v4539
        %6952 = vmatpush1.bf16.msra.mxu0 %v4538
        %6953 = vmatprep.mubr.bf16.mxu0 %v1321
        %6954 = vmatmul.mubr.bf16.gmra.mrb[0].mxu0 %v1320
        %v6955 = vpop.f32.mrb[0].mxu0
        %v6956 = vadd.f32 %v6915, %v6955
        %v6957 = vpop.f32.mrb[0].mxu0
        %v6958 = vadd.f32 %v6917, %v6957
        %v6959 = vpop.f32.mrb[0].mxu0
        %v6960 = vpop.f32.mrb[0].mxu0
        %6961 = vdwg.mxu0
        %6962 = vmatprep.subr.bf16.mxu0 %v4549
        %6963 = vmatpush1.bf16.msra.mxu0 %v4548
        %6964 = vmatprep.subr.bf16.mxu0 %v4559
        %6965 = vmatpush1.bf16.msra.mxu0 %v4558
        %6966 = vmatprep.subr.bf16.mxu0 %v4569
        %6967 = vmatpush1.bf16.msra.mxu0 %v4568
        %6968 = vmatprep.subr.bf16.mxu0 %v4579
        %6969 = vmatpush1.bf16.msra.mxu0 %v4578
        %6970 = vmatprep.subr.bf16.mxu0 %v4589
        %6971 = vmatpush1.bf16.msra.mxu0 %v4588
        %6972 = vmatprep.subr.bf16.mxu0 %v4599
        %6973 = vmatpush1.bf16.msra.mxu0 %v4598
        %6974 = vmatprep.subr.bf16.mxu0 %v4609
        %6975 = vmatpush1.bf16.msra.mxu0 %v4608
        %6976 = vmatprep.subr.bf16.mxu0 %v4619
        %6977 = vmatpush1.bf16.msra.mxu0 %v4618
        %6978 = vmatprep.subr.bf16.mxu0 %v4629
        %6979 = vmatpush1.bf16.msra.mxu0 %v4628
        %6980 = vmatprep.subr.bf16.mxu0 %v4639
        %6981 = vmatpush1.bf16.msra.mxu0 %v4638
        %6982 = vmatprep.subr.bf16.mxu0 %v4649
        %6983 = vmatpush1.bf16.msra.mxu0 %v4648
        %6984 = vmatprep.subr.bf16.mxu0 %v4659
        %6985 = vmatpush1.bf16.msra.mxu0 %v4658
        %6986 = vmatprep.subr.bf16.mxu0 %v4669
        %6987 = vmatpush1.bf16.msra.mxu0 %v4668
        %6988 = vmatprep.subr.bf16.mxu0 %v4679
        %6989 = vmatpush1.bf16.msra.mxu0 %v4678
        %6990 = vmatprep.subr.bf16.mxu0 %v4689
        %6991 = vmatpush1.bf16.msra.mxu0 %v4688
        %6992 = vmatprep.subr.bf16.mxu0 %v4699
        %6993 = vmatpush1.bf16.msra.mxu0 %v4698
        %6994 = vmatprep.mubr.bf16.mxu0 %v1323
        %6995 = vmatmul.mubr.bf16.gmra.mrb[0].mxu0 %v1322
        %v6996 = vpop.f32.mrb[0].mxu0
        %v6997 = vadd.f32 %v6956, %v6996
        %v6998 = vpop.f32.mrb[0].mxu0
        %v6999 = vadd.f32 %v6958, %v6998
        %v7000 = vpop.f32.mrb[0].mxu0
        %v7001 = vpop.f32.mrb[0].mxu0
        %7002 = vdwg.mxu0
        %7003 = vmatprep.subr.bf16.mxu0 %v4709
        %7004 = vmatpush1.bf16.msra.mxu0 %v4708
        %7005 = vmatprep.subr.bf16.mxu0 %v4719
        %7006 = vmatpush1.bf16.msra.mxu0 %v4718
        %7007 = vmatprep.subr.bf16.mxu0 %v4729
        %7008 = vmatpush1.bf16.msra.mxu0 %v4728
        %7009 = vmatprep.subr.bf16.mxu0 %v4739
        %7010 = vmatpush1.bf16.msra.mxu0 %v4738
        %7011 = vmatprep.subr.bf16.mxu0 %v4749
        %7012 = vmatpush1.bf16.msra.mxu0 %v4748
        %7013 = vmatprep.subr.bf16.mxu0 %v4759
        %7014 = vmatpush1.bf16.msra.mxu0 %v4758
        %7015 = vmatprep.subr.bf16.mxu0 %v4769
        %7016 = vmatpush1.bf16.msra.mxu0 %v4768
        %7017 = vmatprep.subr.bf16.mxu0 %v4779
        %7018 = vmatpush1.bf16.msra.mxu0 %v4778
        %7019 = vmatprep.subr.bf16.mxu0 %v4789
        %7020 = vmatpush1.bf16.msra.mxu0 %v4788
        %7021 = vmatprep.subr.bf16.mxu0 %v4799
        %7022 = vmatpush1.bf16.msra.mxu0 %v4798
        %7023 = vmatprep.subr.bf16.mxu0 %v4809
        %7024 = vmatpush1.bf16.msra.mxu0 %v4808
        %7025 = vmatprep.subr.bf16.mxu0 %v4819
        %7026 = vmatpush1.bf16.msra.mxu0 %v4818
        %7027 = vmatprep.subr.bf16.mxu0 %v4829
        %7028 = vmatpush1.bf16.msra.mxu0 %v4828
        %7029 = vmatprep.subr.bf16.mxu0 %v4839
        %7030 = vmatpush1.bf16.msra.mxu0 %v4838
        %7031 = vmatprep.subr.bf16.mxu0 %v4849
        %7032 = vmatpush1.bf16.msra.mxu0 %v4848
        %7033 = vmatprep.subr.bf16.mxu0 %v4859
        %7034 = vmatpush1.bf16.msra.mxu0 %v4858
        %7035 = vmatprep.mubr.bf16.mxu0 %v1325
        %7036 = vmatmul.mubr.bf16.gmra.mrb[0].mxu0 %v1324
        %v7037 = vpop.f32.mrb[0].mxu0
        %v7038 = vadd.f32 %v6997, %v7037
        %v7039 = vpop.f32.mrb[0].mxu0
        %v7040 = vadd.f32 %v6999, %v7039
        %v7041 = vpop.f32.mrb[0].mxu0
        %v7042 = vpop.f32.mrb[0].mxu0
        %7043 = vdwg.mxu0
        %7044 = vmatprep.subr.bf16.mxu0 %v4869
        %7045 = vmatpush1.bf16.msra.mxu0 %v4868
        %7046 = vmatprep.subr.bf16.mxu0 %v4879
        %7047 = vmatpush1.bf16.msra.mxu0 %v4878
        %7048 = vmatprep.subr.bf16.mxu0 %v4889
        %7049 = vmatpush1.bf16.msra.mxu0 %v4888
        %7050 = vmatprep.subr.bf16.mxu0 %v4899
        %7051 = vmatpush1.bf16.msra.mxu0 %v4898
        %7052 = vmatprep.subr.bf16.mxu0 %v4909
        %7053 = vmatpush1.bf16.msra.mxu0 %v4908
        %7054 = vmatprep.subr.bf16.mxu0 %v4919
        %7055 = vmatpush1.bf16.msra.mxu0 %v4918
        %7056 = vmatprep.subr.bf16.mxu0 %v4929
        %7057 = vmatpush1.bf16.msra.mxu0 %v4928
        %7058 = vmatprep.subr.bf16.mxu0 %v4939
        %7059 = vmatpush1.bf16.msra.mxu0 %v4938
        %7060 = vmatprep.subr.bf16.mxu0 %v4949
        %7061 = vmatpush1.bf16.msra.mxu0 %v4948
        %7062 = vmatprep.subr.bf16.mxu0 %v4959
        %7063 = vmatpush1.bf16.msra.mxu0 %v4958
        %7064 = vmatprep.subr.bf16.mxu0 %v4969
        %7065 = vmatpush1.bf16.msra.mxu0 %v4968
        %7066 = vmatprep.subr.bf16.mxu0 %v4979
        %7067 = vmatpush1.bf16.msra.mxu0 %v4978
        %7068 = vmatprep.subr.bf16.mxu0 %v4989
        %7069 = vmatpush1.bf16.msra.mxu0 %v4988
        %7070 = vmatprep.subr.bf16.mxu0 %v4999
        %7071 = vmatpush1.bf16.msra.mxu0 %v4998
        %7072 = vmatprep.subr.bf16.mxu0 %v5009
        %7073 = vmatpush1.bf16.msra.mxu0 %v5008
        %7074 = vmatprep.subr.bf16.mxu0 %v5019
        %7075 = vmatpush1.bf16.msra.mxu0 %v5018
        %7076 = vmatprep.mubr.bf16.mxu0 %v1327
        %7077 = vmatmul.mubr.bf16.gmra.mrb[0].mxu0 %v1326
        %v7078 = vpop.f32.mrb[0].mxu0
        %v7079 = vadd.f32 %v7038, %v7078
        %v7080 = vpop.f32.mrb[0].mxu0
        %v7081 = vadd.f32 %v7040, %v7080
        %v7082 = vpop.f32.mrb[0].mxu0
        %v7083 = vpop.f32.mrb[0].mxu0
        %7084 = vdwg.mxu0
        %7085 = vmatprep.subr.bf16.mxu0 %v5029
        %7086 = vmatpush1.bf16.msra.mxu0 %v5028
        %7087 = vmatprep.subr.bf16.mxu0 %v5039
        %7088 = vmatpush1.bf16.msra.mxu0 %v5038
        %7089 = vmatprep.subr.bf16.mxu0 %v5049
        %7090 = vmatpush1.bf16.msra.mxu0 %v5048
        %7091 = vmatprep.subr.bf16.mxu0 %v5059
        %7092 = vmatpush1.bf16.msra.mxu0 %v5058
        %7093 = vmatprep.subr.bf16.mxu0 %v5069
        %7094 = vmatpush1.bf16.msra.mxu0 %v5068
        %7095 = vmatprep.subr.bf16.mxu0 %v5079
        %7096 = vmatpush1.bf16.msra.mxu0 %v5078
        %7097 = vmatprep.subr.bf16.mxu0 %v5089
        %7098 = vmatpush1.bf16.msra.mxu0 %v5088
        %7099 = vmatprep.subr.bf16.mxu0 %v5099
        %7100 = vmatpush1.bf16.msra.mxu0 %v5098
        %7101 = vmatprep.subr.bf16.mxu0 %v5109
        %7102 = vmatpush1.bf16.msra.mxu0 %v5108
        %7103 = vmatprep.subr.bf16.mxu0 %v5119
        %7104 = vmatpush1.bf16.msra.mxu0 %v5118
        %7105 = vmatprep.subr.bf16.mxu0 %v5129
        %7106 = vmatpush1.bf16.msra.mxu0 %v5128
        %7107 = vmatprep.subr.bf16.mxu0 %v5139
        %7108 = vmatpush1.bf16.msra.mxu0 %v5138
        %7109 = vmatprep.subr.bf16.mxu0 %v5149
        %7110 = vmatpush1.bf16.msra.mxu0 %v5148
        %7111 = vmatprep.subr.bf16.mxu0 %v5159
        %7112 = vmatpush1.bf16.msra.mxu0 %v5158
        %7113 = vmatprep.subr.bf16.mxu0 %v5169
        %7114 = vmatpush1.bf16.msra.mxu0 %v5168
        %7115 = vmatprep.subr.bf16.mxu0 %v5179
        %7116 = vmatpush1.bf16.msra.mxu0 %v5178
        %7117 = vmatprep.mubr.bf16.mxu0 %v1329
        %7118 = vmatmul.mubr.bf16.gmra.mrb[0].mxu0 %v1328
        %v7119 = vpop.f32.mrb[0].mxu0
        %v7120 = vadd.f32 %v7079, %v7119
        %v7121 = vpop.f32.mrb[0].mxu0
        %v7122 = vadd.f32 %v7081, %v7121
        %v7123 = vpop.f32.mrb[0].mxu0
        %v7124 = vpop.f32.mrb[0].mxu0
        %7125 = vdwg.mxu0
        %7126 = vmatprep.subr.bf16.mxu0 %v4231
        %7127 = vmatpush1.bf16.msra.mxu0 %v4230
        %7128 = vmatprep.subr.bf16.mxu0 %v4241
        %7129 = vmatpush1.bf16.msra.mxu0 %v4240
        %7130 = vmatprep.subr.bf16.mxu0 %v4251
        %7131 = vmatpush1.bf16.msra.mxu0 %v4250
        %7132 = vmatprep.subr.bf16.mxu0 %v4261
        %7133 = vmatpush1.bf16.msra.mxu0 %v4260
        %7134 = vmatprep.subr.bf16.mxu0 %v4271
        %7135 = vmatpush1.bf16.msra.mxu0 %v4270
        %7136 = vmatprep.subr.bf16.mxu0 %v4281
        %7137 = vmatpush1.bf16.msra.mxu0 %v4280
        %7138 = vmatprep.subr.bf16.mxu0 %v4291
        %7139 = vmatpush1.bf16.msra.mxu0 %v4290
        %7140 = vmatprep.subr.bf16.mxu0 %v4301
        %7141 = vmatpush1.bf16.msra.mxu0 %v4300
        %7142 = vmatprep.subr.bf16.mxu0 %v4311
        %7143 = vmatpush1.bf16.msra.mxu0 %v4310
        %7144 = vmatprep.subr.bf16.mxu0 %v4321
        %7145 = vmatpush1.bf16.msra.mxu0 %v4320
        %7146 = vmatprep.subr.bf16.mxu0 %v4331
        %7147 = vmatpush1.bf16.msra.mxu0 %v4330
        %7148 = vmatprep.subr.bf16.mxu0 %v4341
        %7149 = vmatpush1.bf16.msra.mxu0 %v4340
        %7150 = vmatprep.subr.bf16.mxu0 %v4351
        %7151 = vmatpush1.bf16.msra.mxu0 %v4350
        %7152 = vmatprep.subr.bf16.mxu0 %v4361
        %7153 = vmatpush1.bf16.msra.mxu0 %v4360
        %7154 = vmatprep.subr.bf16.mxu0 %v4371
        %7155 = vmatpush1.bf16.msra.mxu0 %v4370
        %7156 = vmatprep.subr.bf16.mxu0 %v4381
        %7157 = vmatpush1.bf16.msra.mxu0 %v4380
        %7158 = vmatprep.mubr.bf16.mxu0 %v1319
        %7159 = vmatmul.mubr.bf16.gmra.mrb[0].mxu0 %v1318
        %v7160 = vpop.f32.mrb[0].mxu0
        %v7161 = vadd.f32 0.0, %v7160
        %v7162 = vpop.f32.mrb[0].mxu0
        %v7163 = vadd.f32 0.0, %v7162
        %v7164 = vpop.f32.mrb[0].mxu0
        %v7165 = vpop.f32.mrb[0].mxu0
        %7166 = vdwg.mxu0
        %7167 = vmatprep.subr.bf16.mxu0 %v4391
        %7168 = vmatpush1.bf16.msra.mxu0 %v4390
        %7169 = vmatprep.subr.bf16.mxu0 %v4401
        %7170 = vmatpush1.bf16.msra.mxu0 %v4400
        %7171 = vmatprep.subr.bf16.mxu0 %v4411
        %7172 = vmatpush1.bf16.msra.mxu0 %v4410
        %7173 = vmatprep.subr.bf16.mxu0 %v4421
        %7174 = vmatpush1.bf16.msra.mxu0 %v4420
        %7175 = vmatprep.subr.bf16.mxu0 %v4431
        %7176 = vmatpush1.bf16.msra.mxu0 %v4430
        %7177 = vmatprep.subr.bf16.mxu0 %v4441
        %7178 = vmatpush1.bf16.msra.mxu0 %v4440
        %7179 = vmatprep.subr.bf16.mxu0 %v4451
        %7180 = vmatpush1.bf16.msra.mxu0 %v4450
        %7181 = vmatprep.subr.bf16.mxu0 %v4461
        %7182 = vmatpush1.bf16.msra.mxu0 %v4460
        %7183 = vmatprep.subr.bf16.mxu0 %v4471
        %7184 = vmatpush1.bf16.msra.mxu0 %v4470
        %7185 = vmatprep.subr.bf16.mxu0 %v4481
        %7186 = vmatpush1.bf16.msra.mxu0 %v4480
        %7187 = vmatprep.subr.bf16.mxu0 %v4491
        %7188 = vmatpush1.bf16.msra.mxu0 %v4490
        %7189 = vmatprep.subr.bf16.mxu0 %v4501
        %7190 = vmatpush1.bf16.msra.mxu0 %v4500
        %7191 = vmatprep.subr.bf16.mxu0 %v4511
        %7192 = vmatpush1.bf16.msra.mxu0 %v4510
        %7193 = vmatprep.subr.bf16.mxu0 %v4521
        %7194 = vmatpush1.bf16.msra.mxu0 %v4520
        %7195 = vmatprep.subr.bf16.mxu0 %v4531
        %7196 = vmatpush1.bf16.msra.mxu0 %v4530
        %7197 = vmatprep.subr.bf16.mxu0 %v4541
        %7198 = vmatpush1.bf16.msra.mxu0 %v4540
        %7199 = vmatprep.mubr.bf16.mxu0 %v1321
        %7200 = vmatmul.mubr.bf16.gmra.mrb[0].mxu0 %v1320
        %v7201 = vpop.f32.mrb[0].mxu0
        %v7202 = vadd.f32 %v7161, %v7201
        %v7203 = vpop.f32.mrb[0].mxu0
        %v7204 = vadd.f32 %v7163, %v7203
        %v7205 = vpop.f32.mrb[0].mxu0
        %v7206 = vpop.f32.mrb[0].mxu0
        %7207 = vdwg.mxu0
        %7208 = vmatprep.subr.bf16.mxu0 %v4551
        %7209 = vmatpush1.bf16.msra.mxu0 %v4550
        %7210 = vmatprep.subr.bf16.mxu0 %v4561
        %7211 = vmatpush1.bf16.msra.mxu0 %v4560
        %7212 = vmatprep.subr.bf16.mxu0 %v4571
        %7213 = vmatpush1.bf16.msra.mxu0 %v4570
        %7214 = vmatprep.subr.bf16.mxu0 %v4581
        %7215 = vmatpush1.bf16.msra.mxu0 %v4580
        %7216 = vmatprep.subr.bf16.mxu0 %v4591
        %7217 = vmatpush1.bf16.msra.mxu0 %v4590
        %7218 = vmatprep.subr.bf16.mxu0 %v4601
        %7219 = vmatpush1.bf16.msra.mxu0 %v4600
        %7220 = vmatprep.subr.bf16.mxu0 %v4611
        %7221 = vmatpush1.bf16.msra.mxu0 %v4610
        %7222 = vmatprep.subr.bf16.mxu0 %v4621
        %7223 = vmatpush1.bf16.msra.mxu0 %v4620
        %7224 = vmatprep.subr.bf16.mxu0 %v4631
        %7225 = vmatpush1.bf16.msra.mxu0 %v4630
        %7226 = vmatprep.subr.bf16.mxu0 %v4641
        %7227 = vmatpush1.bf16.msra.mxu0 %v4640
        %7228 = vmatprep.subr.bf16.mxu0 %v4651
        %7229 = vmatpush1.bf16.msra.mxu0 %v4650
        %7230 = vmatprep.subr.bf16.mxu0 %v4661
        %7231 = vmatpush1.bf16.msra.mxu0 %v4660
        %7232 = vmatprep.subr.bf16.mxu0 %v4671
        %7233 = vmatpush1.bf16.msra.mxu0 %v4670
        %7234 = vmatprep.subr.bf16.mxu0 %v4681
        %7235 = vmatpush1.bf16.msra.mxu0 %v4680
        %7236 = vmatprep.subr.bf16.mxu0 %v4691
        %7237 = vmatpush1.bf16.msra.mxu0 %v4690
        %7238 = vmatprep.subr.bf16.mxu0 %v4701
        %7239 = vmatpush1.bf16.msra.mxu0 %v4700
        %7240 = vmatprep.mubr.bf16.mxu0 %v1323
        %7241 = vmatmul.mubr.bf16.gmra.mrb[0].mxu0 %v1322
        %v7242 = vpop.f32.mrb[0].mxu0
        %v7243 = vadd.f32 %v7202, %v7242
        %v7244 = vpop.f32.mrb[0].mxu0
        %v7245 = vadd.f32 %v7204, %v7244
        %v7246 = vpop.f32.mrb[0].mxu0
        %v7247 = vpop.f32.mrb[0].mxu0
        %7248 = vdwg.mxu0
        %7249 = vmatprep.subr.bf16.mxu0 %v4711
        %7250 = vmatpush1.bf16.msra.mxu0 %v4710
        %7251 = vmatprep.subr.bf16.mxu0 %v4721
        %7252 = vmatpush1.bf16.msra.mxu0 %v4720
        %7253 = vmatprep.subr.bf16.mxu0 %v4731
        %7254 = vmatpush1.bf16.msra.mxu0 %v4730
        %7255 = vmatprep.subr.bf16.mxu0 %v4741
        %7256 = vmatpush1.bf16.msra.mxu0 %v4740
        %7257 = vmatprep.subr.bf16.mxu0 %v4751
        %7258 = vmatpush1.bf16.msra.mxu0 %v4750
        %7259 = vmatprep.subr.bf16.mxu0 %v4761
        %7260 = vmatpush1.bf16.msra.mxu0 %v4760
        %7261 = vmatprep.subr.bf16.mxu0 %v4771
        %7262 = vmatpush1.bf16.msra.mxu0 %v4770
        %7263 = vmatprep.subr.bf16.mxu0 %v4781
        %7264 = vmatpush1.bf16.msra.mxu0 %v4780
        %7265 = vmatprep.subr.bf16.mxu0 %v4791
        %7266 = vmatpush1.bf16.msra.mxu0 %v4790
        %7267 = vmatprep.subr.bf16.mxu0 %v4801
        %7268 = vmatpush1.bf16.msra.mxu0 %v4800
        %7269 = vmatprep.subr.bf16.mxu0 %v4811
        %7270 = vmatpush1.bf16.msra.mxu0 %v4810
        %7271 = vmatprep.subr.bf16.mxu0 %v4821
        %7272 = vmatpush1.bf16.msra.mxu0 %v4820
        %7273 = vmatprep.subr.bf16.mxu0 %v4831
        %7274 = vmatpush1.bf16.msra.mxu0 %v4830
        %7275 = vmatprep.subr.bf16.mxu0 %v4841
        %7276 = vmatpush1.bf16.msra.mxu0 %v4840
        %7277 = vmatprep.subr.bf16.mxu0 %v4851
        %7278 = vmatpush1.bf16.msra.mxu0 %v4850
        %7279 = vmatprep.subr.bf16.mxu0 %v4861
        %7280 = vmatpush1.bf16.msra.mxu0 %v4860
        %7281 = vmatprep.mubr.bf16.mxu0 %v1325
        %7282 = vmatmul.mubr.bf16.gmra.mrb[0].mxu0 %v1324
        %v7283 = vpop.f32.mrb[0].mxu0
        %v7284 = vadd.f32 %v7243, %v7283
        %v7285 = vpop.f32.mrb[0].mxu0
        %v7286 = vadd.f32 %v7245, %v7285
        %v7287 = vpop.f32.mrb[0].mxu0
        %v7288 = vpop.f32.mrb[0].mxu0
        %7289 = vdwg.mxu0
        %7290 = vmatprep.subr.bf16.mxu0 %v4871
        %7291 = vmatpush1.bf16.msra.mxu0 %v4870
        %7292 = vmatprep.subr.bf16.mxu0 %v4881
        %7293 = vmatpush1.bf16.msra.mxu0 %v4880
        %7294 = vmatprep.subr.bf16.mxu0 %v4891
        %7295 = vmatpush1.bf16.msra.mxu0 %v4890
        %7296 = vmatprep.subr.bf16.mxu0 %v4901
        %7297 = vmatpush1.bf16.msra.mxu0 %v4900
        %7298 = vmatprep.subr.bf16.mxu0 %v4911
        %7299 = vmatpush1.bf16.msra.mxu0 %v4910
        %7300 = vmatprep.subr.bf16.mxu0 %v4921
        %7301 = vmatpush1.bf16.msra.mxu0 %v4920
        %7302 = vmatprep.subr.bf16.mxu0 %v4931
        %7303 = vmatpush1.bf16.msra.mxu0 %v4930
        %7304 = vmatprep.subr.bf16.mxu0 %v4941
        %7305 = vmatpush1.bf16.msra.mxu0 %v4940
        %7306 = vmatprep.subr.bf16.mxu0 %v4951
        %7307 = vmatpush1.bf16.msra.mxu0 %v4950
        %7308 = vmatprep.subr.bf16.mxu0 %v4961
        %7309 = vmatpush1.bf16.msra.mxu0 %v4960
        %7310 = vmatprep.subr.bf16.mxu0 %v4971
        %7311 = vmatpush1.bf16.msra.mxu0 %v4970
        %7312 = vmatprep.subr.bf16.mxu0 %v4981
        %7313 = vmatpush1.bf16.msra.mxu0 %v4980
        %7314 = vmatprep.subr.bf16.mxu0 %v4991
        %7315 = vmatpush1.bf16.msra.mxu0 %v4990
        %7316 = vmatprep.subr.bf16.mxu0 %v5001
        %7317 = vmatpush1.bf16.msra.mxu0 %v5000
        %7318 = vmatprep.subr.bf16.mxu0 %v5011
        %7319 = vmatpush1.bf16.msra.mxu0 %v5010
        %7320 = vmatprep.subr.bf16.mxu0 %v5021
        %7321 = vmatpush1.bf16.msra.mxu0 %v5020
        %7322 = vmatprep.mubr.bf16.mxu0 %v1327
        %7323 = vmatmul.mubr.bf16.gmra.mrb[0].mxu0 %v1326
        %v7324 = vpop.f32.mrb[0].mxu0
        %v7325 = vadd.f32 %v7284, %v7324
        %v7326 = vpop.f32.mrb[0].mxu0
        %v7327 = vadd.f32 %v7286, %v7326
        %v7328 = vpop.f32.mrb[0].mxu0
        %v7329 = vpop.f32.mrb[0].mxu0
        %7330 = vdwg.mxu0
        %7331 = vmatprep.subr.bf16.mxu0 %v5031
        %7332 = vmatpush1.bf16.msra.mxu0 %v5030
        %7333 = vmatprep.subr.bf16.mxu0 %v5041
        %7334 = vmatpush1.bf16.msra.mxu0 %v5040
        %7335 = vmatprep.subr.bf16.mxu0 %v5051
        %7336 = vmatpush1.bf16.msra.mxu0 %v5050
        %7337 = vmatprep.subr.bf16.mxu0 %v5061
        %7338 = vmatpush1.bf16.msra.mxu0 %v5060
        %7339 = vmatprep.subr.bf16.mxu0 %v5071
        %7340 = vmatpush1.bf16.msra.mxu0 %v5070
        %7341 = vmatprep.subr.bf16.mxu0 %v5081
        %7342 = vmatpush1.bf16.msra.mxu0 %v5080
        %7343 = vmatprep.subr.bf16.mxu0 %v5091
        %7344 = vmatpush1.bf16.msra.mxu0 %v5090
        %7345 = vmatprep.subr.bf16.mxu0 %v5101
        %7346 = vmatpush1.bf16.msra.mxu0 %v5100
        %7347 = vmatprep.subr.bf16.mxu0 %v5111
        %7348 = vmatpush1.bf16.msra.mxu0 %v5110
        %7349 = vmatprep.subr.bf16.mxu0 %v5121
        %7350 = vmatpush1.bf16.msra.mxu0 %v5120
        %7351 = vmatprep.subr.bf16.mxu0 %v5131
        %7352 = vmatpush1.bf16.msra.mxu0 %v5130
        %7353 = vmatprep.subr.bf16.mxu0 %v5141
        %7354 = vmatpush1.bf16.msra.mxu0 %v5140
        %7355 = vmatprep.subr.bf16.mxu0 %v5151
        %7356 = vmatpush1.bf16.msra.mxu0 %v5150
        %7357 = vmatprep.subr.bf16.mxu0 %v5161
        %7358 = vmatpush1.bf16.msra.mxu0 %v5160
        %7359 = vmatprep.subr.bf16.mxu0 %v5171
        %7360 = vmatpush1.bf16.msra.mxu0 %v5170
        %7361 = vmatprep.subr.bf16.mxu0 %v5181
        %7362 = vmatpush1.bf16.msra.mxu0 %v5180
        %7363 = vmatprep.mubr.bf16.mxu0 %v1329
        %7364 = vmatmul.mubr.bf16.gmra.mrb[0].mxu0 %v1328
        %v7365 = vpop.f32.mrb[0].mxu0
        %v7366 = vadd.f32 %v7325, %v7365
        %v7367 = vpop.f32.mrb[0].mxu0
        %v7368 = vadd.f32 %v7327, %v7367
        %v7369 = vpop.f32.mrb[0].mxu0
        %v7370 = vpop.f32.mrb[0].mxu0
        %7371 = vdwg.mxu0
        %p7372 = scmp.eq.s32.totalorder %s26, 0
        // Predicated region
        $region57: #{just_efficientnet_forward.2} parent=39 // pred_check
          %p7373 = pneg %p7372
        $region58: #{just_efficientnet_forward.2} parent=39 // pred_check_branch
          %7375 = sbr.rel (%p7373) target = $region60
        $region59: #{just_efficientnet_forward.2} parent=39 // pred_region
          %7376 = vst [vmem:[#allocation2] sm:$0xff] %v6382
          %7377 = vst [vmem:[#allocation2 + $0x8] sm:$0xff] %v6384
          %7378 = vst [vmem:[#allocation2 + $0x10] sm:$0xff] %v6628
          %7379 = vst [vmem:[#allocation2 + $0x18] sm:$0xff] %v6630
          %7380 = vst [vmem:[#allocation2 + $0x20] sm:$0xff] %v6874
          %7381 = vst [vmem:[#allocation2 + $0x28] sm:$0xff] %v6876
          %7382 = vst [vmem:[#allocation2 + $0x30] sm:$0xff] %v7120
          %7383 = vst [vmem:[#allocation2 + $0x38] sm:$0xff] %v7122
          %7384 = vst [vmem:[#allocation2 + $0x40] sm:$0xff] %v7366
          %7385 = vst [vmem:[#allocation2 + $0x48] sm:$0xff] %v7368
        $region60: #{just_efficientnet_forward.2} parent=39 // pred_fallthru
          _
        %p7386 = scmp.gt.s32.totalorder %s26, 0
        // Predicated region
        $region61: #{just_efficientnet_forward.2} parent=39 // pred_check
          %p7387 = pneg %p7386
        $region62: #{just_efficientnet_forward.2} parent=39 // pred_check_branch
          %7389 = sbr.rel (%p7387) target = $region64
        $region63: #{just_efficientnet_forward.2} parent=39 // pred_region
          %v7390 = vld [vmem:[#allocation2] sm:$0xff]
          %v7391 = vld [vmem:[#allocation2 + $0x8] sm:$0xff]
          %v7392 = vld [vmem:[#allocation2 + $0x10] sm:$0xff]
          %v7393 = vld [vmem:[#allocation2 + $0x18] sm:$0xff]
          %v7394 = vld [vmem:[#allocation2 + $0x20] sm:$0xff]
          %v7395 = vld [vmem:[#allocation2 + $0x28] sm:$0xff]
          %v7396 = vld [vmem:[#allocation2 + $0x30] sm:$0xff]
          %v7397 = vld [vmem:[#allocation2 + $0x38] sm:$0xff]
          %v7398 = vld [vmem:[#allocation2 + $0x40] sm:$0xff]
          %v7399 = vld [vmem:[#allocation2 + $0x48] sm:$0xff]
          %v7400 = vadd.f32 %v7390, %v6382
          %v7401 = vadd.f32 %v7391, %v6384
          %v7402 = vadd.f32 %v7392, %v6628
          %v7403 = vadd.f32 %v7393, %v6630
          %v7404 = vadd.f32 %v7394, %v6874
          %v7405 = vadd.f32 %v7395, %v6876
          %v7406 = vadd.f32 %v7396, %v7120
          %v7407 = vadd.f32 %v7397, %v7122
          %v7408 = vadd.f32 %v7398, %v7366
          %v7409 = vadd.f32 %v7399, %v7368
          %7410 = vst [vmem:[#allocation2] sm:$0xff] %v7400
          %7411 = vst [vmem:[#allocation2 + $0x8] sm:$0xff] %v7401
          %7412 = vst [vmem:[#allocation2 + $0x10] sm:$0xff] %v7402
          %7413 = vst [vmem:[#allocation2 + $0x18] sm:$0xff] %v7403
          %7414 = vst [vmem:[#allocation2 + $0x20] sm:$0xff] %v7404
          %7415 = vst [vmem:[#allocation2 + $0x28] sm:$0xff] %v7405
          %7416 = vst [vmem:[#allocation2 + $0x30] sm:$0xff] %v7406
          %7417 = vst [vmem:[#allocation2 + $0x38] sm:$0xff] %v7407
          %7418 = vst [vmem:[#allocation2 + $0x40] sm:$0xff] %v7408
          %7419 = vst [vmem:[#allocation2 + $0x48] sm:$0xff] %v7409
        $region64: #{just_efficientnet_forward.2} parent=39 // pred_fallthru
          _
        %p7420 = scmp.eq.s32.totalorder %s26, 1
        // Predicated region
        $region65: #{just_efficientnet_forward.2} parent=39 // pred_check
          %p7421 = pneg %p7420
        $region66: #{just_efficientnet_forward.2} parent=39 // pred_check_branch
          %7423 = sbr.rel (%p7421) target = $region68
        $region67: #{just_efficientnet_forward.2} parent=39 // pred_region
          %v7424 = vld [vmem:[#allocation2] sm:$0xff]
          %v7425 = vld [vmem:[#allocation2 + $0x8] sm:$0xff]
          %v7426 = vld [vmem:[#allocation2 + $0x10] sm:$0xff]
          %v7427 = vld [vmem:[#allocation2 + $0x18] sm:$0xff]
          %v7428 = vld [vmem:[#allocation2 + $0x20] sm:$0xff]
          %v7429 = vld [vmem:[#allocation2 + $0x28] sm:$0xff]
          %v7430 = vld [vmem:[#allocation2 + $0x30] sm:$0xff]
          %v7431 = vld [vmem:[#allocation2 + $0x38] sm:$0xff]
          %v7432 = vld [vmem:[#allocation2 + $0x40] sm:$0xff]
          %v7433 = vld [vmem:[#allocation2 + $0x48] sm:$0xff]
          %v7434 = vld [vmem:[#allocation5] sm:$0xff]
          %v7435 = vld [vmem:[#allocation5 + $0x8] sm:$0x3]
          %v7438 = vlaneseq
          %v7439 = vshrl.u32 %v7438, 7
          %v7440 = vsub.s32 0, %v7439
          %v7441 = vrot.slane %v7434, %v7440
          %v7442 = vlaneseq
          %v7443 = vshrl.u32 %v7442, 7
          %v7444 = vsub.s32 1, %v7443
          %v7445 = vrot.slane %v7434, %v7444
          %v7446 = vlaneseq
          %v7447 = vshrl.u32 %v7446, 7
          %v7448 = vsub.s32 2, %v7447
          %v7449 = vrot.slane %v7434, %v7448
          %v7450 = vlaneseq
          %v7451 = vshrl.u32 %v7450, 7
          %v7452 = vsub.s32 3, %v7451
          %v7453 = vrot.slane %v7434, %v7452
          %v7454 = vlaneseq
          %v7455 = vshrl.u32 %v7454, 7
          %v7456 = vsub.s32 4, %v7455
          %v7457 = vrot.slane %v7434, %v7456
          %v7458 = vlaneseq
          %v7459 = vshrl.u32 %v7458, 7
          %v7460 = vsub.s32 5, %v7459
          %v7461 = vrot.slane %v7434, %v7460
          %v7462 = vlaneseq
          %v7463 = vshrl.u32 %v7462, 7
          %v7464 = vsub.s32 6, %v7463
          %v7465 = vrot.slane %v7434, %v7464
          %v7466 = vlaneseq
          %v7467 = vshrl.u32 %v7466, 7
          %v7468 = vsub.s32 7, %v7467
          %v7469 = vrot.slane %v7434, %v7468
          %v7470 = vlaneseq
          %v7471 = vshrl.u32 %v7470, 7
          %v7472 = vsub.s32 0, %v7471
          %v7473 = vrot.slane %v7435, %v7472
          %v7474 = vlaneseq
          %v7475 = vshrl.u32 %v7474, 7
          %v7476 = vsub.s32 1, %v7475
          %v7477 = vrot.slane %v7435, %v7476
          %v7488 = vadd.f32 %v7424, %v7441
          %v7489 = vadd.f32 %v7425, %v7445
          %v7490 = vadd.f32 %v7426, %v7449
          %v7491 = vadd.f32 %v7427, %v7453
          %v7492 = vadd.f32 %v7428, %v7457
          %v7493 = vadd.f32 %v7429, %v7461
          %v7494 = vadd.f32 %v7430, %v7465
          %v7495 = vadd.f32 %v7431, %v7469
          %v7496 = vadd.f32 %v7432, %v7473
          %v7497 = vadd.f32 %v7433, %v7477
          %v7498 = vxor.u32 %v7488, 2147483648
          %v7499 = vxor.u32 %v7489, 2147483648
          %v7500 = vxor.u32 %v7490, 2147483648
          %v7501 = vxor.u32 %v7491, 2147483648
          %v7502 = vxor.u32 %v7492, 2147483648
          %v7503 = vxor.u32 %v7493, 2147483648
          %v7504 = vxor.u32 %v7494, 2147483648
          %v7505 = vxor.u32 %v7495, 2147483648
          %v7506 = vxor.u32 %v7496, 2147483648
          %v7507 = vxor.u32 %v7497, 2147483648
          %v7508 = vmul.f32 %v7498, 1.442695
          %v7509 = vpow.pop %v7508
          %v7510 = vmul.f32 %v7499, 1.442695
          %v7511 = vpow.pop %v7510
          %v7512 = vmul.f32 %v7500, 1.442695
          %v7513 = vpow.pop %v7512
          %v7514 = vmul.f32 %v7501, 1.442695
          %v7515 = vpow.pop %v7514
          %v7516 = vmul.f32 %v7502, 1.442695
          %v7517 = vpow.pop %v7516
          %v7518 = vmul.f32 %v7503, 1.442695
          %v7519 = vpow.pop %v7518
          %v7520 = vmul.f32 %v7504, 1.442695
          %v7521 = vpow.pop %v7520
          %v7522 = vmul.f32 %v7505, 1.442695
          %v7523 = vpow.pop %v7522
          %v7524 = vmul.f32 %v7506, 1.442695
          %v7525 = vpow.pop %v7524
          %v7526 = vmul.f32 %v7507, 1.442695
          %v7527 = vpow.pop %v7526
          %v7528 = vadd.f32 %v7509, 1.0
          %v7529 = vadd.f32 %v7511, 1.0
          %v7530 = vadd.f32 %v7513, 1.0
          %v7531 = vadd.f32 %v7515, 1.0
          %v7532 = vadd.f32 %v7517, 1.0
          %v7533 = vadd.f32 %v7519, 1.0
          %v7534 = vadd.f32 %v7521, 1.0
          %v7535 = vadd.f32 %v7523, 1.0
          %v7536 = vadd.f32 %v7525, 1.0
          %v7537 = vadd.f32 %v7527, 1.0
          %v7538 = vrcp.pop %v7528
          %v7539 = vmul.f32 1.0, %v7538
          %v7540 = vrcp.pop %v7529
          %v7541 = vmul.f32 1.0, %v7540
          %v7542 = vrcp.pop %v7530
          %v7543 = vmul.f32 1.0, %v7542
          %v7544 = vrcp.pop %v7531
          %v7545 = vmul.f32 1.0, %v7544
          %v7546 = vrcp.pop %v7532
          %v7547 = vmul.f32 1.0, %v7546
          %v7548 = vrcp.pop %v7533
          %v7549 = vmul.f32 1.0, %v7548
          %v7550 = vrcp.pop %v7534
          %v7551 = vmul.f32 1.0, %v7550
          %v7552 = vrcp.pop %v7535
          %v7553 = vmul.f32 1.0, %v7552
          %v7554 = vrcp.pop %v7536
          %v7555 = vmul.f32 1.0, %v7554
          %v7556 = vrcp.pop %v7537
          %v7557 = vmul.f32 1.0, %v7556
          %v7558 = vmul.f32 %v7488, %v7539
          %v7559 = vmul.f32 %v7489, %v7541
          %v7560 = vmul.f32 %v7490, %v7543
          %v7561 = vmul.f32 %v7491, %v7545
          %v7562 = vmul.f32 %v7492, %v7547
          %v7563 = vmul.f32 %v7493, %v7549
          %v7564 = vmul.f32 %v7494, %v7551
          %v7565 = vmul.f32 %v7495, %v7553
          %v7566 = vmul.f32 %v7496, %v7555
          %v7567 = vmul.f32 %v7497, %v7557
          %v7568 = vpack.c.bf16 %v7558, %v7558
          %v7569 = vpack.c.bf16 %v7559, %v7559
          %v7570 = vpack.c.bf16 %v7560, %v7560
          %v7571 = vpack.c.bf16 %v7561, %v7561
          %v7572 = vpack.c.bf16 %v7562, %v7562
          %v7573 = vpack.c.bf16 %v7563, %v7563
          %v7574 = vpack.c.bf16 %v7564, %v7564
          %v7575 = vpack.c.bf16 %v7565, %v7565
          %v7576 = vpack.c.bf16 %v7566, %v7566
          %v7577 = vpack.c.bf16 %v7567, %v7567
          %v7578 = vld [vmem:[#allocation7] sm:$0xf]
          %v7579 = vld [vmem:[#allocation7 + $0x4] sm:$0xf]
          %v7580 = vld [vmem:[#allocation7 + $0x8] sm:$0xf]
          %v7581 = vld [vmem:[#allocation7 + $0xc] sm:$0xf]
          %v7582 = vld [vmem:[#allocation7 + $0x10] sm:$0xf]
          %v7583 = vld [vmem:[#allocation7 + $0x14] sm:$0xf]
          %v7584 = vld [vmem:[#allocation7 + $0x18] sm:$0xf]
          %v7585 = vld [vmem:[#allocation7 + $0x1c] sm:$0xf]
          %v7586 = vld [vmem:[#allocation7 + $0x20] sm:$0xf]
          %v7587 = vld [vmem:[#allocation7 + $0x24] sm:$0xf]
          %v7588 = vld [vmem:[#allocation7 + $0x28] sm:$0xf]
          %v7589 = vld [vmem:[#allocation7 + $0x2c] sm:$0xf]
          %v7590 = vld [vmem:[#allocation7 + $0x30] sm:$0xf]
          %v7591 = vld [vmem:[#allocation7 + $0x34] sm:$0xf]
          %v7592 = vld [vmem:[#allocation7 + $0x38] sm:$0xf]
          %v7593 = vld [vmem:[#allocation7 + $0x3c] sm:$0xf]
          %v7594 = vld [vmem:[#allocation7 + $0x40] sm:$0xf]
          %v7595 = vld [vmem:[#allocation7 + $0x44] sm:$0xf]
          %v7596 = vld [vmem:[#allocation7 + $0x48] sm:$0xf]
          %v7597 = vld [vmem:[#allocation7 + $0x4c] sm:$0xf]
          %v7598 = vld [vmem:[#allocation7 + $0x50] sm:$0xf]
          %v7599 = vld [vmem:[#allocation7 + $0x54] sm:$0xf]
          %v7600 = vld [vmem:[#allocation7 + $0x58] sm:$0xf]
          %v7601 = vld [vmem:[#allocation7 + $0x5c] sm:$0xf]
          %v7602 = vld [vmem:[#allocation7 + $0x60] sm:$0xf]
          %v7603 = vld [vmem:[#allocation7 + $0x64] sm:$0xf]
          %v7604 = vld [vmem:[#allocation7 + $0x68] sm:$0xf]
          %v7605 = vld [vmem:[#allocation7 + $0x6c] sm:$0xf]
          %v7606 = vld [vmem:[#allocation7 + $0x70] sm:$0xf]
          %v7607 = vld [vmem:[#allocation7 + $0x74] sm:$0xf]
          %v7608 = vld [vmem:[#allocation7 + $0x78] sm:$0xf]
          %v7609 = vld [vmem:[#allocation7 + $0x7c] sm:$0xf]
          %v7610 = vld [vmem:[#allocation7 + $0x80] sm:$0xf]
          %v7611 = vld [vmem:[#allocation7 + $0x84] sm:$0xf]
          %v7612 = vld [vmem:[#allocation7 + $0x88] sm:$0xf]
          %v7613 = vld [vmem:[#allocation7 + $0x8c] sm:$0xf]
          %v7614 = vld [vmem:[#allocation7 + $0x90] sm:$0xf]
          %v7615 = vld [vmem:[#allocation7 + $0x94] sm:$0xf]
          %v7616 = vld [vmem:[#allocation7 + $0x98] sm:$0xf]
          %v7617 = vld [vmem:[#allocation7 + $0x9c] sm:$0xf]
          %v7618 = vld [vmem:[#allocation7 + $0xa0] sm:$0xf]
          %v7619 = vld [vmem:[#allocation7 + $0xa4] sm:$0xf]
          %v7620 = vld [vmem:[#allocation7 + $0xa8] sm:$0xf]
          %v7621 = vld [vmem:[#allocation7 + $0xac] sm:$0xf]
          %v7622 = vld [vmem:[#allocation7 + $0xb0] sm:$0xf]
          %v7623 = vld [vmem:[#allocation7 + $0xb4] sm:$0xf]
          %v7624 = vld [vmem:[#allocation7 + $0xb8] sm:$0xf]
          %v7625 = vld [vmem:[#allocation7 + $0xbc] sm:$0xf]
          %v7626 = vld [vmem:[#allocation7 + $0xc0] sm:$0xf]
          %v7627 = vld [vmem:[#allocation7 + $0xc4] sm:$0xf]
          %v7628 = vld [vmem:[#allocation7 + $0xc8] sm:$0xf]
          %v7629 = vld [vmem:[#allocation7 + $0xcc] sm:$0xf]
          %v7630 = vld [vmem:[#allocation7 + $0xd0] sm:$0xf]
          %v7631 = vld [vmem:[#allocation7 + $0xd4] sm:$0xf]
          %v7632 = vld [vmem:[#allocation7 + $0xd8] sm:$0xf]
          %v7633 = vld [vmem:[#allocation7 + $0xdc] sm:$0xf]
          %v7634 = vld [vmem:[#allocation7 + $0xe0] sm:$0xf]
          %v7635 = vld [vmem:[#allocation7 + $0xe4] sm:$0xf]
          %v7636 = vld [vmem:[#allocation7 + $0xe8] sm:$0xf]
          %v7637 = vld [vmem:[#allocation7 + $0xec] sm:$0xf]
          %v7638 = vld [vmem:[#allocation7 + $0xf0] sm:$0xf]
          %v7639 = vld [vmem:[#allocation7 + $0xf4] sm:$0xf]
          %v7640 = vld [vmem:[#allocation7 + $0xf8] sm:$0xf]
          %v7641 = vld [vmem:[#allocation7 + $0xfc] sm:$0xf]
          %v7642 = vld [vmem:[#allocation7 + $0x100] sm:$0xf]
          %v7643 = vld [vmem:[#allocation7 + $0x104] sm:$0xf]
          %v7644 = vld [vmem:[#allocation7 + $0x108] sm:$0xf]
          %v7645 = vld [vmem:[#allocation7 + $0x10c] sm:$0xf]
          %v7646 = vld [vmem:[#allocation7 + $0x110] sm:$0xf]
          %v7647 = vld [vmem:[#allocation7 + $0x114] sm:$0xf]
          %v7648 = vld [vmem:[#allocation7 + $0x118] sm:$0xf]
          %v7649 = vld [vmem:[#allocation7 + $0x11c] sm:$0xf]
          %v7650 = vld [vmem:[#allocation7 + $0x120] sm:$0xf]
          %v7651 = vld [vmem:[#allocation7 + $0x124] sm:$0xf]
          %v7652 = vld [vmem:[#allocation7 + $0x128] sm:$0xf]
          %v7653 = vld [vmem:[#allocation7 + $0x12c] sm:$0xf]
          %v7654 = vld [vmem:[#allocation7 + $0x130] sm:$0xf]
          %v7655 = vld [vmem:[#allocation7 + $0x134] sm:$0xf]
          %v7656 = vld [vmem:[#allocation7 + $0x138] sm:$0xf]
          %v7657 = vld [vmem:[#allocation7 + $0x13c] sm:$0xf]
          %v7658 = vld [vmem:[#allocation7 + $0x140] sm:$0xf]
          %v7659 = vld [vmem:[#allocation7 + $0x144] sm:$0xf]
          %v7660 = vld [vmem:[#allocation7 + $0x148] sm:$0xf]
          %v7661 = vld [vmem:[#allocation7 + $0x14c] sm:$0xf]
          %v7662 = vld [vmem:[#allocation7 + $0x150] sm:$0xf]
          %v7663 = vld [vmem:[#allocation7 + $0x154] sm:$0xf]
          %v7664 = vld [vmem:[#allocation7 + $0x158] sm:$0xf]
          %v7665 = vld [vmem:[#allocation7 + $0x15c] sm:$0xf]
          %v7666 = vld [vmem:[#allocation7 + $0x160] sm:$0xf]
          %v7667 = vld [vmem:[#allocation7 + $0x164] sm:$0xf]
          %v7668 = vld [vmem:[#allocation7 + $0x168] sm:$0xf]
          %v7669 = vld [vmem:[#allocation7 + $0x16c] sm:$0xf]
          %v7670 = vld [vmem:[#allocation7 + $0x170] sm:$0xf]
          %v7671 = vld [vmem:[#allocation7 + $0x174] sm:$0xf]
          %v7672 = vld [vmem:[#allocation7 + $0x178] sm:$0xf]
          %v7673 = vld [vmem:[#allocation7 + $0x17c] sm:$0xf]
          %v7674 = vld [vmem:[#allocation7 + $0x180] sm:$0xf]
          %v7675 = vld [vmem:[#allocation7 + $0x184] sm:$0xf]
          %v7676 = vld [vmem:[#allocation7 + $0x188] sm:$0xf]
          %v7677 = vld [vmem:[#allocation7 + $0x18c] sm:$0xf]
          %v7678 = vld [vmem:[#allocation7 + $0x190] sm:$0xf]
          %v7679 = vld [vmem:[#allocation7 + $0x194] sm:$0xf]
          %v7680 = vld [vmem:[#allocation7 + $0x198] sm:$0xf]
          %v7681 = vld [vmem:[#allocation7 + $0x19c] sm:$0xf]
          %v7682 = vld [vmem:[#allocation7 + $0x1a0] sm:$0xf]
          %v7683 = vld [vmem:[#allocation7 + $0x1a4] sm:$0xf]
          %v7684 = vld [vmem:[#allocation7 + $0x1a8] sm:$0xf]
          %v7685 = vld [vmem:[#allocation7 + $0x1ac] sm:$0xf]
          %v7686 = vld [vmem:[#allocation7 + $0x1b0] sm:$0xf]
          %v7687 = vld [vmem:[#allocation7 + $0x1b4] sm:$0xf]
          %v7688 = vld [vmem:[#allocation7 + $0x1b8] sm:$0xf]
          %v7689 = vld [vmem:[#allocation7 + $0x1bc] sm:$0xf]
          %v7690 = vld [vmem:[#allocation7 + $0x1c0] sm:$0xf]
          %v7691 = vld [vmem:[#allocation7 + $0x1c4] sm:$0xf]
          %v7692 = vld [vmem:[#allocation7 + $0x1c8] sm:$0xf]
          %v7693 = vld [vmem:[#allocation7 + $0x1cc] sm:$0xf]
          %v7694 = vld [vmem:[#allocation7 + $0x1d0] sm:$0xf]
          %v7695 = vld [vmem:[#allocation7 + $0x1d4] sm:$0xf]
          %v7696 = vld [vmem:[#allocation7 + $0x1d8] sm:$0xf]
          %v7697 = vld [vmem:[#allocation7 + $0x1dc] sm:$0xf]
          %v7698 = vld [vmem:[#allocation7 + $0x1e0] sm:$0xf]
          %v7699 = vld [vmem:[#allocation7 + $0x1e4] sm:$0xf]
          %v7700 = vld [vmem:[#allocation7 + $0x1e8] sm:$0xf]
          %v7701 = vld [vmem:[#allocation7 + $0x1ec] sm:$0xf]
          %v7702 = vld [vmem:[#allocation7 + $0x1f0] sm:$0xf]
          %v7703 = vld [vmem:[#allocation7 + $0x1f4] sm:$0xf]
          %v7704 = vld [vmem:[#allocation7 + $0x1f8] sm:$0xf]
          %v7705 = vld [vmem:[#allocation7 + $0x1fc] sm:$0xf]
          %v7706 = vld [vmem:[#allocation7 + $0x200] sm:$0xf]
          %v7707 = vld [vmem:[#allocation7 + $0x204] sm:$0xf]
          %v7708 = vld [vmem:[#allocation7 + $0x208] sm:$0xf]
          %v7709 = vld [vmem:[#allocation7 + $0x20c] sm:$0xf]
          %v7710 = vld [vmem:[#allocation7 + $0x210] sm:$0xf]
          %v7711 = vld [vmem:[#allocation7 + $0x214] sm:$0xf]
          %v7712 = vld [vmem:[#allocation7 + $0x218] sm:$0xf]
          %v7713 = vld [vmem:[#allocation7 + $0x21c] sm:$0xf]
          %v7714 = vld [vmem:[#allocation7 + $0x220] sm:$0xf]
          %v7715 = vld [vmem:[#allocation7 + $0x224] sm:$0xf]
          %v7716 = vld [vmem:[#allocation7 + $0x228] sm:$0xf]
          %v7717 = vld [vmem:[#allocation7 + $0x22c] sm:$0xf]
          %v7718 = vld [vmem:[#allocation7 + $0x230] sm:$0xf]
          %v7719 = vld [vmem:[#allocation7 + $0x234] sm:$0xf]
          %v7720 = vld [vmem:[#allocation7 + $0x238] sm:$0xf]
          %v7721 = vld [vmem:[#allocation7 + $0x23c] sm:$0xf]
          %v7722 = vld [vmem:[#allocation7 + $0x240] sm:$0xf]
          %v7723 = vld [vmem:[#allocation7 + $0x244] sm:$0xf]
          %v7724 = vld [vmem:[#allocation7 + $0x248] sm:$0xf]
          %v7725 = vld [vmem:[#allocation7 + $0x24c] sm:$0xf]
          %v7726 = vld [vmem:[#allocation7 + $0x250] sm:$0xf]
          %v7727 = vld [vmem:[#allocation7 + $0x254] sm:$0xf]
          %v7728 = vld [vmem:[#allocation7 + $0x258] sm:$0xf]
          %v7729 = vld [vmem:[#allocation7 + $0x25c] sm:$0xf]
          %v7730 = vld [vmem:[#allocation7 + $0x260] sm:$0xf]
          %v7731 = vld [vmem:[#allocation7 + $0x264] sm:$0xf]
          %v7732 = vld [vmem:[#allocation7 + $0x268] sm:$0xf]
          %v7733 = vld [vmem:[#allocation7 + $0x26c] sm:$0xf]
          %v7734 = vld [vmem:[#allocation7 + $0x270] sm:$0xf]
          %v7735 = vld [vmem:[#allocation7 + $0x274] sm:$0xf]
          %v7736 = vld [vmem:[#allocation7 + $0x278] sm:$0xf]
          %v7737 = vld [vmem:[#allocation7 + $0x27c] sm:$0xf]
          %v7738 = vld [vmem:[#allocation8] sm:$0x1]
          %v7740 = vlaneseq
          %v7741 = vshrl.u32 %v7740, 7
          %v7742 = vsub.s32 0, %v7741
          %v7743 = vrot.slane %v7738, %v7742
          %v7905 = vunpack.c.l.b16 %v7578
          %v7906 = vunpack.c.l.b16 %v7579
          %v7907 = vunpack.c.l.b16 %v7580
          %v7908 = vunpack.c.l.b16 %v7581
          %v7909 = vunpack.c.l.b16 %v7582
          %v7910 = vunpack.c.l.b16 %v7583
          %v7911 = vunpack.c.l.b16 %v7584
          %v7912 = vunpack.c.l.b16 %v7585
          %v7913 = vunpack.c.l.b16 %v7586
          %v7914 = vunpack.c.l.b16 %v7587
          %v7915 = vunpack.c.l.b16 %v7588
          %v7916 = vunpack.c.l.b16 %v7589
          %v7917 = vunpack.c.l.b16 %v7590
          %v7918 = vunpack.c.l.b16 %v7591
          %v7919 = vunpack.c.l.b16 %v7592
          %v7920 = vunpack.c.l.b16 %v7593
          %v7921 = vunpack.c.l.b16 %v7594
          %v7922 = vunpack.c.l.b16 %v7595
          %v7923 = vunpack.c.l.b16 %v7596
          %v7924 = vunpack.c.l.b16 %v7597
          %v7925 = vunpack.c.l.b16 %v7598
          %v7926 = vunpack.c.l.b16 %v7599
          %v7927 = vunpack.c.l.b16 %v7600
          %v7928 = vunpack.c.l.b16 %v7601
          %v7929 = vunpack.c.l.b16 %v7602
          %v7930 = vunpack.c.l.b16 %v7603
          %v7931 = vunpack.c.l.b16 %v7604
          %v7932 = vunpack.c.l.b16 %v7605
          %v7933 = vunpack.c.l.b16 %v7606
          %v7934 = vunpack.c.l.b16 %v7607
          %v7935 = vunpack.c.l.b16 %v7608
          %v7936 = vunpack.c.l.b16 %v7609
          %v7937 = vunpack.c.l.b16 %v7610
          %v7938 = vunpack.c.l.b16 %v7611
          %v7939 = vunpack.c.l.b16 %v7612
          %v7940 = vunpack.c.l.b16 %v7613
          %v7941 = vunpack.c.l.b16 %v7614
          %v7942 = vunpack.c.l.b16 %v7615
          %v7943 = vunpack.c.l.b16 %v7616
          %v7944 = vunpack.c.l.b16 %v7617
          %v7945 = vunpack.c.l.b16 %v7618
          %v7946 = vunpack.c.l.b16 %v7619
          %v7947 = vunpack.c.l.b16 %v7620
          %v7948 = vunpack.c.l.b16 %v7621
          %v7949 = vunpack.c.l.b16 %v7622
          %v7950 = vunpack.c.l.b16 %v7623
          %v7951 = vunpack.c.l.b16 %v7624
          %v7952 = vunpack.c.l.b16 %v7625
          %v7953 = vunpack.c.l.b16 %v7626
          %v7954 = vunpack.c.l.b16 %v7627
          %v7955 = vunpack.c.l.b16 %v7628
          %v7956 = vunpack.c.l.b16 %v7629
          %v7957 = vunpack.c.l.b16 %v7630
          %v7958 = vunpack.c.l.b16 %v7631
          %v7959 = vunpack.c.l.b16 %v7632
          %v7960 = vunpack.c.l.b16 %v7633
          %v7961 = vunpack.c.l.b16 %v7634
          %v7962 = vunpack.c.l.b16 %v7635
          %v7963 = vunpack.c.l.b16 %v7636
          %v7964 = vunpack.c.l.b16 %v7637
          %v7965 = vunpack.c.l.b16 %v7638
          %v7966 = vunpack.c.l.b16 %v7639
          %v7967 = vunpack.c.l.b16 %v7640
          %v7968 = vunpack.c.l.b16 %v7641
          %v7969 = vunpack.c.l.b16 %v7642
          %v7970 = vunpack.c.l.b16 %v7643
          %v7971 = vunpack.c.l.b16 %v7644
          %v7972 = vunpack.c.l.b16 %v7645
          %v7973 = vunpack.c.l.b16 %v7646
          %v7974 = vunpack.c.l.b16 %v7647
          %v7975 = vunpack.c.l.b16 %v7648
          %v7976 = vunpack.c.l.b16 %v7649
          %v7977 = vunpack.c.l.b16 %v7650
          %v7978 = vunpack.c.l.b16 %v7651
          %v7979 = vunpack.c.l.b16 %v7652
          %v7980 = vunpack.c.l.b16 %v7653
          %v7981 = vunpack.c.l.b16 %v7654
          %v7982 = vunpack.c.l.b16 %v7655
          %v7983 = vunpack.c.l.b16 %v7656
          %v7984 = vunpack.c.l.b16 %v7657
          %v7985 = vunpack.c.l.b16 %v7658
          %v7986 = vunpack.c.l.b16 %v7659
          %v7987 = vunpack.c.l.b16 %v7660
          %v7988 = vunpack.c.l.b16 %v7661
          %v7989 = vunpack.c.l.b16 %v7662
          %v7990 = vunpack.c.l.b16 %v7663
          %v7991 = vunpack.c.l.b16 %v7664
          %v7992 = vunpack.c.l.b16 %v7665
          %v7993 = vunpack.c.l.b16 %v7666
          %v7994 = vunpack.c.l.b16 %v7667
          %v7995 = vunpack.c.l.b16 %v7668
          %v7996 = vunpack.c.l.b16 %v7669
          %v7997 = vunpack.c.l.b16 %v7670
          %v7998 = vunpack.c.l.b16 %v7671
          %v7999 = vunpack.c.l.b16 %v7672
          %v8000 = vunpack.c.l.b16 %v7673
          %v8001 = vunpack.c.l.b16 %v7674
          %v8002 = vunpack.c.l.b16 %v7675
          %v8003 = vunpack.c.l.b16 %v7676
          %v8004 = vunpack.c.l.b16 %v7677
          %v8005 = vunpack.c.l.b16 %v7678
          %v8006 = vunpack.c.l.b16 %v7679
          %v8007 = vunpack.c.l.b16 %v7680
          %v8008 = vunpack.c.l.b16 %v7681
          %v8009 = vunpack.c.l.b16 %v7682
          %v8010 = vunpack.c.l.b16 %v7683
          %v8011 = vunpack.c.l.b16 %v7684
          %v8012 = vunpack.c.l.b16 %v7685
          %v8013 = vunpack.c.l.b16 %v7686
          %v8014 = vunpack.c.l.b16 %v7687
          %v8015 = vunpack.c.l.b16 %v7688
          %v8016 = vunpack.c.l.b16 %v7689
          %v8017 = vunpack.c.l.b16 %v7690
          %v8018 = vunpack.c.l.b16 %v7691
          %v8019 = vunpack.c.l.b16 %v7692
          %v8020 = vunpack.c.l.b16 %v7693
          %v8021 = vunpack.c.l.b16 %v7694
          %v8022 = vunpack.c.l.b16 %v7695
          %v8023 = vunpack.c.l.b16 %v7696
          %v8024 = vunpack.c.l.b16 %v7697
          %v8025 = vunpack.c.l.b16 %v7698
          %v8026 = vunpack.c.l.b16 %v7699
          %v8027 = vunpack.c.l.b16 %v7700
          %v8028 = vunpack.c.l.b16 %v7701
          %v8029 = vunpack.c.l.b16 %v7702
          %v8030 = vunpack.c.l.b16 %v7703
          %v8031 = vunpack.c.l.b16 %v7704
          %v8032 = vunpack.c.l.b16 %v7705
          %v8033 = vunpack.c.l.b16 %v7706
          %v8034 = vunpack.c.l.b16 %v7707
          %v8035 = vunpack.c.l.b16 %v7708
          %v8036 = vunpack.c.l.b16 %v7709
          %v8037 = vunpack.c.l.b16 %v7710
          %v8038 = vunpack.c.l.b16 %v7711
          %v8039 = vunpack.c.l.b16 %v7712
          %v8040 = vunpack.c.l.b16 %v7713
          %v8041 = vunpack.c.l.b16 %v7714
          %v8042 = vunpack.c.l.b16 %v7715
          %v8043 = vunpack.c.l.b16 %v7716
          %v8044 = vunpack.c.l.b16 %v7717
          %v8045 = vunpack.c.l.b16 %v7718
          %v8046 = vunpack.c.l.b16 %v7719
          %v8047 = vunpack.c.l.b16 %v7720
          %v8048 = vunpack.c.l.b16 %v7721
          %v8049 = vunpack.c.l.b16 %v7722
          %v8050 = vunpack.c.l.b16 %v7723
          %v8051 = vunpack.c.l.b16 %v7724
          %v8052 = vunpack.c.l.b16 %v7725
          %v8053 = vunpack.c.l.b16 %v7726
          %v8054 = vunpack.c.l.b16 %v7727
          %v8055 = vunpack.c.l.b16 %v7728
          %v8056 = vunpack.c.l.b16 %v7729
          %v8057 = vunpack.c.l.b16 %v7730
          %v8058 = vunpack.c.l.b16 %v7731
          %v8059 = vunpack.c.l.b16 %v7732
          %v8060 = vunpack.c.l.b16 %v7733
          %v8061 = vunpack.c.l.b16 %v7734
          %v8062 = vunpack.c.l.b16 %v7735
          %v8063 = vunpack.c.l.b16 %v7736
          %v8064 = vunpack.c.l.b16 %v7737
          %v8065 = vpack.c.b16 %v7906, %v7905
          %v8066 = vpack.c.b16 %v7908, %v7907
          %v8067 = vpack.c.b16 %v7910, %v7909
          %v8068 = vpack.c.b16 %v7912, %v7911
          %v8069 = vpack.c.b16 %v7914, %v7913
          %v8070 = vpack.c.b16 %v7916, %v7915
          %v8071 = vpack.c.b16 %v7918, %v7917
          %v8072 = vpack.c.b16 %v7920, %v7919
          %v8073 = vpack.c.b16 %v7922, %v7921
          %v8074 = vpack.c.b16 %v7924, %v7923
          %v8075 = vpack.c.b16 %v7926, %v7925
          %v8076 = vpack.c.b16 %v7928, %v7927
          %v8077 = vpack.c.b16 %v7930, %v7929
          %v8078 = vpack.c.b16 %v7932, %v7931
          %v8079 = vpack.c.b16 %v7934, %v7933
          %v8080 = vpack.c.b16 %v7936, %v7935
          %v8081 = vpack.c.b16 %v7938, %v7937
          %v8082 = vpack.c.b16 %v7940, %v7939
          %v8083 = vpack.c.b16 %v7942, %v7941
          %v8084 = vpack.c.b16 %v7944, %v7943
          %v8085 = vpack.c.b16 %v7946, %v7945
          %v8086 = vpack.c.b16 %v7948, %v7947
          %v8087 = vpack.c.b16 %v7950, %v7949
          %v8088 = vpack.c.b16 %v7952, %v7951
          %v8089 = vpack.c.b16 %v7954, %v7953
          %v8090 = vpack.c.b16 %v7956, %v7955
          %v8091 = vpack.c.b16 %v7958, %v7957
          %v8092 = vpack.c.b16 %v7960, %v7959
          %v8093 = vpack.c.b16 %v7962, %v7961
          %v8094 = vpack.c.b16 %v7964, %v7963
          %v8095 = vpack.c.b16 %v7966, %v7965
          %v8096 = vpack.c.b16 %v7968, %v7967
          %v8097 = vpack.c.b16 %v7970, %v7969
          %v8098 = vpack.c.b16 %v7972, %v7971
          %v8099 = vpack.c.b16 %v7974, %v7973
          %v8100 = vpack.c.b16 %v7976, %v7975
          %v8101 = vpack.c.b16 %v7978, %v7977
          %v8102 = vpack.c.b16 %v7980, %v7979
          %v8103 = vpack.c.b16 %v7982, %v7981
          %v8104 = vpack.c.b16 %v7984, %v7983
          %v8105 = vpack.c.b16 %v7986, %v7985
          %v8106 = vpack.c.b16 %v7988, %v7987
          %v8107 = vpack.c.b16 %v7990, %v7989
          %v8108 = vpack.c.b16 %v7992, %v7991
          %v8109 = vpack.c.b16 %v7994, %v7993
          %v8110 = vpack.c.b16 %v7996, %v7995
          %v8111 = vpack.c.b16 %v7998, %v7997
          %v8112 = vpack.c.b16 %v8000, %v7999
          %v8113 = vpack.c.b16 %v8002, %v8001
          %v8114 = vpack.c.b16 %v8004, %v8003
          %v8115 = vpack.c.b16 %v8006, %v8005
          %v8116 = vpack.c.b16 %v8008, %v8007
          %v8117 = vpack.c.b16 %v8010, %v8009
          %v8118 = vpack.c.b16 %v8012, %v8011
          %v8119 = vpack.c.b16 %v8014, %v8013
          %v8120 = vpack.c.b16 %v8016, %v8015
          %v8121 = vpack.c.b16 %v8018, %v8017
          %v8122 = vpack.c.b16 %v8020, %v8019
          %v8123 = vpack.c.b16 %v8022, %v8021
          %v8124 = vpack.c.b16 %v8024, %v8023
          %v8125 = vpack.c.b16 %v8026, %v8025
          %v8126 = vpack.c.b16 %v8028, %v8027
          %v8127 = vpack.c.b16 %v8030, %v8029
          %v8128 = vpack.c.b16 %v8032, %v8031
          %v8129 = vpack.c.b16 %v8034, %v8033
          %v8130 = vpack.c.b16 %v8036, %v8035
          %v8131 = vpack.c.b16 %v8038, %v8037
          %v8132 = vpack.c.b16 %v8040, %v8039
          %v8133 = vpack.c.b16 %v8042, %v8041
          %v8134 = vpack.c.b16 %v8044, %v8043
          %v8135 = vpack.c.b16 %v8046, %v8045
          %v8136 = vpack.c.b16 %v8048, %v8047
          %v8137 = vpack.c.b16 %v8050, %v8049
          %v8138 = vpack.c.b16 %v8052, %v8051
          %v8139 = vpack.c.b16 %v8054, %v8053
          %v8140 = vpack.c.b16 %v8056, %v8055
          %v8141 = vpack.c.b16 %v8058, %v8057
          %v8142 = vpack.c.b16 %v8060, %v8059
          %v8143 = vpack.c.b16 %v8062, %v8061
          %v8144 = vpack.c.b16 %v8064, %v8063
          %8225 = vmatprep.subr.bf16.mxu0 0
          %8226 = vmatpush1.bf16.msra.mxu0 %v8065
          %8227 = vmatprep.subr.bf16.mxu0 0
          %8228 = vmatpush1.bf16.msra.mxu0 %v8066
          %8229 = vmatprep.subr.bf16.mxu0 0
          %8230 = vmatpush1.bf16.msra.mxu0 %v8067
          %8231 = vmatprep.subr.bf16.mxu0 0
          %8232 = vmatpush1.bf16.msra.mxu0 %v8068
          %8233 = vmatprep.subr.bf16.mxu0 0
          %8234 = vmatpush1.bf16.msra.mxu0 %v8069
          %8235 = vmatprep.subr.bf16.mxu0 0
          %8236 = vmatpush1.bf16.msra.mxu0 %v8070
          %8237 = vmatprep.subr.bf16.mxu0 0
          %8238 = vmatpush1.bf16.msra.mxu0 %v8071
          %8239 = vmatprep.subr.bf16.mxu0 0
          %8240 = vmatpush1.bf16.msra.mxu0 %v8072
          %8241 = vmatprep.subr.bf16.mxu0 0
          %8242 = vmatpush1.bf16.msra.mxu0 %v8073
          %8243 = vmatprep.subr.bf16.mxu0 0
          %8244 = vmatpush1.bf16.msra.mxu0 %v8074
          %8245 = vmatprep.subr.bf16.mxu0 0
          %8246 = vmatpush1.bf16.msra.mxu0 %v8075
          %8247 = vmatprep.subr.bf16.mxu0 0
          %8248 = vmatpush1.bf16.msra.mxu0 %v8076
          %8249 = vmatprep.subr.bf16.mxu0 0
          %8250 = vmatpush1.bf16.msra.mxu0 %v8077
          %8251 = vmatprep.subr.bf16.mxu0 0
          %8252 = vmatpush1.bf16.msra.mxu0 %v8078
          %8253 = vmatprep.subr.bf16.mxu0 0
          %8254 = vmatpush1.bf16.msra.mxu0 %v8079
          %8255 = vmatprep.subr.bf16.mxu0 0
          %8256 = vmatpush1.bf16.msra.mxu0 %v8080
          %8257 = vmatprep.mubr.bf16.mxu0 %v7569
          %8258 = vmatmul.mubr.bf16.gmra.mrb[0].mxu0 %v7568
          %v8259 = vpop.f32.mrb[0].mxu0
          %v8260 = vadd.f32 %v7743, %v8259
          %v8261 = vpop.f32.mrb[0].mxu0
          %v8262 = vpop.f32.mrb[0].mxu0
          %v8263 = vpop.f32.mrb[0].mxu0
          %8264 = vdwg.mxu0
          %8265 = vmatprep.subr.bf16.mxu0 0
          %8266 = vmatpush1.bf16.msra.mxu0 %v8081
          %8267 = vmatprep.subr.bf16.mxu0 0
          %8268 = vmatpush1.bf16.msra.mxu0 %v8082
          %8269 = vmatprep.subr.bf16.mxu0 0
          %8270 = vmatpush1.bf16.msra.mxu0 %v8083
          %8271 = vmatprep.subr.bf16.mxu0 0
          %8272 = vmatpush1.bf16.msra.mxu0 %v8084
          %8273 = vmatprep.subr.bf16.mxu0 0
          %8274 = vmatpush1.bf16.msra.mxu0 %v8085
          %8275 = vmatprep.subr.bf16.mxu0 0
          %8276 = vmatpush1.bf16.msra.mxu0 %v8086
          %8277 = vmatprep.subr.bf16.mxu0 0
          %8278 = vmatpush1.bf16.msra.mxu0 %v8087
          %8279 = vmatprep.subr.bf16.mxu0 0
          %8280 = vmatpush1.bf16.msra.mxu0 %v8088
          %8281 = vmatprep.subr.bf16.mxu0 0
          %8282 = vmatpush1.bf16.msra.mxu0 %v8089
          %8283 = vmatprep.subr.bf16.mxu0 0
          %8284 = vmatpush1.bf16.msra.mxu0 %v8090
          %8285 = vmatprep.subr.bf16.mxu0 0
          %8286 = vmatpush1.bf16.msra.mxu0 %v8091
          %8287 = vmatprep.subr.bf16.mxu0 0
          %8288 = vmatpush1.bf16.msra.mxu0 %v8092
          %8289 = vmatprep.subr.bf16.mxu0 0
          %8290 = vmatpush1.bf16.msra.mxu0 %v8093
          %8291 = vmatprep.subr.bf16.mxu0 0
          %8292 = vmatpush1.bf16.msra.mxu0 %v8094
          %8293 = vmatprep.subr.bf16.mxu0 0
          %8294 = vmatpush1.bf16.msra.mxu0 %v8095
          %8295 = vmatprep.subr.bf16.mxu0 0
          %8296 = vmatpush1.bf16.msra.mxu0 %v8096
          %8297 = vmatprep.mubr.bf16.mxu0 %v7571
          %8298 = vmatmul.mubr.bf16.gmra.mrb[0].mxu0 %v7570
          %v8299 = vpop.f32.mrb[0].mxu0
          %v8300 = vadd.f32 %v8260, %v8299
          %v8301 = vpop.f32.mrb[0].mxu0
          %v8302 = vpop.f32.mrb[0].mxu0
          %v8303 = vpop.f32.mrb[0].mxu0
          %8304 = vdwg.mxu0
          %8305 = vmatprep.subr.bf16.mxu0 0
          %8306 = vmatpush1.bf16.msra.mxu0 %v8097
          %8307 = vmatprep.subr.bf16.mxu0 0
          %8308 = vmatpush1.bf16.msra.mxu0 %v8098
          %8309 = vmatprep.subr.bf16.mxu0 0
          %8310 = vmatpush1.bf16.msra.mxu0 %v8099
          %8311 = vmatprep.subr.bf16.mxu0 0
          %8312 = vmatpush1.bf16.msra.mxu0 %v8100
          %8313 = vmatprep.subr.bf16.mxu0 0
          %8314 = vmatpush1.bf16.msra.mxu0 %v8101
          %8315 = vmatprep.subr.bf16.mxu0 0
          %8316 = vmatpush1.bf16.msra.mxu0 %v8102
          %8317 = vmatprep.subr.bf16.mxu0 0
          %8318 = vmatpush1.bf16.msra.mxu0 %v8103
          %8319 = vmatprep.subr.bf16.mxu0 0
          %8320 = vmatpush1.bf16.msra.mxu0 %v8104
          %8321 = vmatprep.subr.bf16.mxu0 0
          %8322 = vmatpush1.bf16.msra.mxu0 %v8105
          %8323 = vmatprep.subr.bf16.mxu0 0
          %8324 = vmatpush1.bf16.msra.mxu0 %v8106
          %8325 = vmatprep.subr.bf16.mxu0 0
          %8326 = vmatpush1.bf16.msra.mxu0 %v8107
          %8327 = vmatprep.subr.bf16.mxu0 0
          %8328 = vmatpush1.bf16.msra.mxu0 %v8108
          %8329 = vmatprep.subr.bf16.mxu0 0
          %8330 = vmatpush1.bf16.msra.mxu0 %v8109
          %8331 = vmatprep.subr.bf16.mxu0 0
          %8332 = vmatpush1.bf16.msra.mxu0 %v8110
          %8333 = vmatprep.subr.bf16.mxu0 0
          %8334 = vmatpush1.bf16.msra.mxu0 %v8111
          %8335 = vmatprep.subr.bf16.mxu0 0
          %8336 = vmatpush1.bf16.msra.mxu0 %v8112
          %8337 = vmatprep.mubr.bf16.mxu0 %v7573
          %8338 = vmatmul.mubr.bf16.gmra.mrb[0].mxu0 %v7572
          %v8339 = vpop.f32.mrb[0].mxu0
          %v8340 = vadd.f32 %v8300, %v8339
          %v8341 = vpop.f32.mrb[0].mxu0
          %v8342 = vpop.f32.mrb[0].mxu0
          %v8343 = vpop.f32.mrb[0].mxu0
          %8344 = vdwg.mxu0
          %8345 = vmatprep.subr.bf16.mxu0 0
          %8346 = vmatpush1.bf16.msra.mxu0 %v8113
          %8347 = vmatprep.subr.bf16.mxu0 0
          %8348 = vmatpush1.bf16.msra.mxu0 %v8114
          %8349 = vmatprep.subr.bf16.mxu0 0
          %8350 = vmatpush1.bf16.msra.mxu0 %v8115
          %8351 = vmatprep.subr.bf16.mxu0 0
          %8352 = vmatpush1.bf16.msra.mxu0 %v8116
          %8353 = vmatprep.subr.bf16.mxu0 0
          %8354 = vmatpush1.bf16.msra.mxu0 %v8117
          %8355 = vmatprep.subr.bf16.mxu0 0
          %8356 = vmatpush1.bf16.msra.mxu0 %v8118
          %8357 = vmatprep.subr.bf16.mxu0 0
          %8358 = vmatpush1.bf16.msra.mxu0 %v8119
          %8359 = vmatprep.subr.bf16.mxu0 0
          %8360 = vmatpush1.bf16.msra.mxu0 %v8120
          %8361 = vmatprep.subr.bf16.mxu0 0
          %8362 = vmatpush1.bf16.msra.mxu0 %v8121
          %8363 = vmatprep.subr.bf16.mxu0 0
          %8364 = vmatpush1.bf16.msra.mxu0 %v8122
          %8365 = vmatprep.subr.bf16.mxu0 0
          %8366 = vmatpush1.bf16.msra.mxu0 %v8123
          %8367 = vmatprep.subr.bf16.mxu0 0
          %8368 = vmatpush1.bf16.msra.mxu0 %v8124
          %8369 = vmatprep.subr.bf16.mxu0 0
          %8370 = vmatpush1.bf16.msra.mxu0 %v8125
          %8371 = vmatprep.subr.bf16.mxu0 0
          %8372 = vmatpush1.bf16.msra.mxu0 %v8126
          %8373 = vmatprep.subr.bf16.mxu0 0
          %8374 = vmatpush1.bf16.msra.mxu0 %v8127
          %8375 = vmatprep.subr.bf16.mxu0 0
          %8376 = vmatpush1.bf16.msra.mxu0 %v8128
          %8377 = vmatprep.mubr.bf16.mxu0 %v7575
          %8378 = vmatmul.mubr.bf16.gmra.mrb[0].mxu0 %v7574
          %v8379 = vpop.f32.mrb[0].mxu0
          %v8380 = vadd.f32 %v8340, %v8379
          %v8381 = vpop.f32.mrb[0].mxu0
          %v8382 = vpop.f32.mrb[0].mxu0
          %v8383 = vpop.f32.mrb[0].mxu0
          %8384 = vdwg.mxu0
          %8385 = vmatprep.subr.bf16.mxu0 0
          %8386 = vmatpush1.bf16.msra.mxu0 %v8129
          %8387 = vmatprep.subr.bf16.mxu0 0
          %8388 = vmatpush1.bf16.msra.mxu0 %v8130
          %8389 = vmatprep.subr.bf16.mxu0 0
          %8390 = vmatpush1.bf16.msra.mxu0 %v8131
          %8391 = vmatprep.subr.bf16.mxu0 0
          %8392 = vmatpush1.bf16.msra.mxu0 %v8132
          %8393 = vmatprep.subr.bf16.mxu0 0
          %8394 = vmatpush1.bf16.msra.mxu0 %v8133
          %8395 = vmatprep.subr.bf16.mxu0 0
          %8396 = vmatpush1.bf16.msra.mxu0 %v8134
          %8397 = vmatprep.subr.bf16.mxu0 0
          %8398 = vmatpush1.bf16.msra.mxu0 %v8135
          %8399 = vmatprep.subr.bf16.mxu0 0
          %8400 = vmatpush1.bf16.msra.mxu0 %v8136
          %8401 = vmatprep.subr.bf16.mxu0 0
          %8402 = vmatpush1.bf16.msra.mxu0 %v8137
          %8403 = vmatprep.subr.bf16.mxu0 0
          %8404 = vmatpush1.bf16.msra.mxu0 %v8138
          %8405 = vmatprep.subr.bf16.mxu0 0
          %8406 = vmatpush1.bf16.msra.mxu0 %v8139
          %8407 = vmatprep.subr.bf16.mxu0 0
          %8408 = vmatpush1.bf16.msra.mxu0 %v8140
          %8409 = vmatprep.subr.bf16.mxu0 0
          %8410 = vmatpush1.bf16.msra.mxu0 %v8141
          %8411 = vmatprep.subr.bf16.mxu0 0
          %8412 = vmatpush1.bf16.msra.mxu0 %v8142
          %8413 = vmatprep.subr.bf16.mxu0 0
          %8414 = vmatpush1.bf16.msra.mxu0 %v8143
          %8415 = vmatprep.subr.bf16.mxu0 0
          %8416 = vmatpush1.bf16.msra.mxu0 %v8144
          %8417 = vmatprep.mubr.bf16.mxu0 %v7577
          %8418 = vmatmul.mubr.bf16.gmra.mrb[0].mxu0 %v7576
          %v8419 = vpop.f32.mrb[0].mxu0
          %v8420 = vadd.f32 %v8380, %v8419
          %v8421 = vpop.f32.mrb[0].mxu0
          %v8422 = vpop.f32.mrb[0].mxu0
          %v8423 = vpop.f32.mrb[0].mxu0
          %8424 = vdwg.mxu0
          %8425 = vst [vmem:[%s332] sm:$0xff] %v8420
        $region68: #{just_efficientnet_forward.2} parent=39 // pred_fallthru
          _
        %p8426 = scmp.lt.s32.totalorder %s25, 0
        %s8427 = scalar_select %p8426, %s25, 0
        %s8428 = smul.addr %s8427, 8
        %s8429 = scalar_lea.vmem %s5, %s8428
        // Predicated region
        $region69: #{just_efficientnet_forward.2} parent=39 // pred_check
          %p8430 = pneg %p168
        $region70: #{just_efficientnet_forward.2} parent=39 // pred_check_branch
          %8432 = sbr.rel (%p8430) target = $region72
        $region71: #{just_efficientnet_forward.2} parent=39 // pred_region
          _
        $region72: #{just_efficientnet_forward.2} parent=39 // pred_fallthru
          _
        // Predicated region
        $region73: #{just_efficientnet_forward.2} parent=39 // pred_check
          %p8433 = pneg %p168
        $region74: #{just_efficientnet_forward.2} parent=39 // pred_check_branch
          %8435 = sbr.rel (%p8433) target = $region76
        $region75: #{just_efficientnet_forward.2} parent=39 // pred_region
          %p8436 = scmp.lt.s32.totalorder %s25, 0
          %s8437 = scalar_select %p8436, %s25, 0
          %s8438 = smul.addr %s8437, 8
          %s8439 = scalar_lea.vmem %s5, %s8438
        $region76: #{just_efficientnet_forward.2} parent=39 // pred_fallthru
          _
      $region40: #{just_efficientnet_forward.2} parent=5 // pred_fallthru
        _
      %p8440 = scmp.le.s32.totalorder 2, %s16
      // Predicated region
      $region77: #{just_efficientnet_forward.2} parent=5 // pred_check
        %p8441 = pneg %p8440
      $region78: #{just_efficientnet_forward.2} parent=5 // pred_check_branch
        %8443 = sbr.rel (%p8441) target = $region80
      $region79: #{just_efficientnet_forward.2} parent=5 // pred_region
        %s8444 = ssub.s32 %s16, 2
      $region80: #{just_efficientnet_forward.2} parent=5 // pred_fallthru
        _
    $region6: #{just_efficientnet_forward.2} parent=1 // loop_footer
      %s20 = sadd.s32 1, %s16
    $region7: #{just_efficientnet_forward.2} parent=1 // loop_footer_branch
      %15 = sbr.rel target = $region3
    $region8: #{just_efficientnet_forward.2} parent=1 // loop_exit
      _
    %8445 = vsyncpa [#allocation4], 1
    %s8446 = scalar_lea.sflag [#allocation4], 1
    %8447 = vsyncpa %s8446, 1
    %8448 = vsyncpa [#allocation6], 1
    %8449 = vsyncpa [#allocation9], 1

</llo_original>
